<compile_context>
chip_gen: v6e
topology: v6e:2x2x1
jax: 0.10.0
libtpu: 0.0.40
codegen_flags: <defaults>
</compile_context>

<pallas_src>
import functools

import jax
import jax.numpy as jnp
from jax.experimental import pallas as pl
from jax.experimental.pallas import tpu as pltpu


# ---------------------------------------------------------------------------
# Kernel A: global average pooling over spatial dims (lane axis = H*W).
# ---------------------------------------------------------------------------
def _gap_kernel(x_ref, gf_ref):
    gf_ref[...] = jnp.mean(x_ref[...].astype(jnp.float32), axis=2).astype(gf_ref.dtype)


def _pick_batch_tile(B, C, HW, bytes_budget=8 << 20):
    tb = max(1, min(B, bytes_budget // max(1, C * HW * 4)))
    while B % tb:
        tb -= 1
    return tb


def global_avg_pool(x_nchw):
    B, C, H, W = x_nchw.shape
    HW = H * W
    x3 = x_nchw.reshape(B, C, HW)
    TB = _pick_batch_tile(B, C, HW)
    return pl.pallas_call(
        _gap_kernel,
        out_shape=jax.ShapeDtypeStruct((B, C), jnp.float32),
        grid=(B // TB,),
        in_specs=[pl.BlockSpec((TB, C, HW), lambda b: (b, 0, 0))],
        out_specs=pl.BlockSpec((TB, C), lambda b: (b, 0)),
        compiler_params=pltpu.CompilerParams(dimension_semantics=("parallel",)),
    )(x3)


# ---------------------------------------------------------------------------
# Kernel B: fused BN-neck + VQ + classifier on the (D, B, G) transposed view.
#   gfT[d, b, g] = global_feat[b, 4*g + d]
# ---------------------------------------------------------------------------
def _bn_vq_cls_kernel(gfT_ref, gamma_ref, beta_ref, rmean_ref, rvar_ref,
                      cbt_ref, w_ref,
                      qsoftT_ref, qhardT_ref, cls_soft_ref, cls_hard_ref,
                      *, training, eps):
    gi = pl.program_id(0)

    gfT = gfT_ref[...].astype(jnp.float32)               # (D, B, TG)
    D, B, TG = gfT.shape
    K = cbt_ref.shape[1]

    # ---- BatchNorm1d (bnneck), channel layout (D, 1, G) ----------------------------------
    if training:
        mu = jnp.mean(gfT, axis=1, keepdims=True)                     # (D, 1, TG)
        var = jnp.mean((gfT - mu) ** 2, axis=1, keepdims=True)        # biased, PyTorch fwd
    else:
        mu = rmean_ref[...]
        var = rvar_ref[...]
    feat = (gfT - mu) * jax.lax.rsqrt(var + eps) * gamma_ref[...] + beta_ref[...]

    # ---- VQ distances, lane-dense over K (VPU FMAs; no (N,4) tensors, no D=4 MXU dot) ----
    cbt = cbt_ref[...].astype(jnp.float32)                            # (D, K)
    cb_sqr = jnp.sum(cbt * cbt, axis=0, keepdims=True).reshape(1, 1, K)
    cross = feat[0][:, :, None] * cbt[0:1, :].reshape(1, 1, K)
    for d in range(1, D):
        cross = cross + feat[d][:, :, None] * cbt[d:d + 1, :].reshape(1, 1, K)
    # ||x||^2 is constant along K, so it drops out of both softmax and argmin.
    distances = cb_sqr - 2.0 * cross                                  # (B, TG, K)

    # soft assignment: softmax(+distances), as written in VectorQuantization.forward
    dmax = jnp.max(distances, axis=-1, keepdims=True)
    e = jnp.exp(distances - dmax)
    soft_w = e * pl.reciprocal(jnp.sum(e, axis=-1, keepdims=True), approx=True)

    # hard assignment: first index attaining the minimum distance
    iota = jax.lax.broadcasted_iota(jnp.int32, (B, TG, K), 2)
    dmin = jnp.min(distances, axis=-1, keepdims=True)
    idx = jnp.min(jnp.where(distances <= dmin, iota, K), axis=-1, keepdims=True)
    onehot = (iota == idx).astype(jnp.float32)

    # ---- quantized features (per codebook sub-dim d) + fused classifier ------------------
    w = w_ref[...]                                                    # (D, TG, NC) bf16/f32
    cls = None
    for d in range(D):
        c_row = cbt[d:d + 1, :].reshape(1, 1, K)
        q_s = jnp.sum(soft_w * c_row, axis=-1)                        # (B, TG), lane reduce
        q_h = jnp.sum(onehot * c_row, axis=-1)                        # (B, TG)
        qsoftT_ref[d] = q_s.astype(qsoftT_ref.dtype)
        qhardT_ref[d] = q_h.astype(qhardT_ref.dtype)
        # stack soft+hard rows -> one MXU matmul per d, f32 accumulation
        q_cat = jnp.concatenate([q_s, q_h], axis=0).astype(w.dtype)   # (2B, TG)
        part = jnp.dot(q_cat, w[d], preferred_element_type=jnp.float32)   # (2B, NC)
        cls = part if cls is None else cls + part

    @pl.when(gi == 0)
    def _():
        cls_soft_ref[...] = jnp.zeros_like(cls_soft_ref)
        cls_hard_ref[...] = jnp.zeros_like(cls_hard_ref)

    cls_soft_ref[...] += cls[:B]
    cls_hard_ref[...] += cls[B:]


def _pick_g_tile(G, B, K, bytes_budget=12 << 20):
    # keep the (B, TG, K) f32 distance tensor within budget; prefer 128-multiple divisors
    limit = max(1, bytes_budget // max(1, B * K * 4))
    if G <= limit:
        return G
    best = None
    t = 128
    while t <= min(G, limit):
        if G % t == 0:
            best = t
        t += 128
    return best if best is not None else G


def bn_vq_classifier(global_feat, prepped, *, training, eps=1e-5):
    B, C = global_feat.shape
    D, K = prepped["cbt"].shape
    G = C // D
    NC = prepped["w3"].shape[-1]
    TG = _pick_g_tile(G, B, K)

    # layout plumbing (cheap XLA ops on a small (B,C) array): (B, C) -> (D, B, G)
    gfT = global_feat.reshape(B, G, D).transpose(2, 0, 1)

    kern = functools.partial(_bn_vq_cls_kernel, training=training, eps=eps)
    row_spec = pl.BlockSpec((D, B, TG), lambda g: (0, 0, g))
    par_spec = pl.BlockSpec((D, 1, TG), lambda g: (0, 0, g))
    cls_spec = pl.BlockSpec((B, NC), lambda g: (0, 0))

    qsT, qhT, cls_s, cls_h = pl.pallas_call(
        kern,
        out_shape=(jax.ShapeDtypeStruct((D, B, G), jnp.float32),
                   jax.ShapeDtypeStruct((D, B, G), jnp.float32),
                   jax.ShapeDtypeStruct((B, NC), jnp.float32),
                   jax.ShapeDtypeStruct((B, NC), jnp.float32)),
        grid=(G // TG,),
        in_specs=[row_spec, par_spec, par_spec, par_spec, par_spec,
                  pl.BlockSpec((D, K), lambda g: (0, 0)),
                  pl.BlockSpec((D, TG, NC), lambda g: (0, g, 0))],
        out_specs=(row_spec, row_spec, cls_spec, cls_spec),
        compiler_params=pltpu.CompilerParams(
            dimension_semantics=("arbitrary",),          # cls accumulates across G tiles
            vmem_limit_bytes=48 * 1024 * 1024),
    )(gfT, prepped["bn_gamma3"], prepped["bn_beta3"],
      prepped["bn_rmean3"], prepped["bn_rvar3"],
      prepped["cbt"], prepped["w3"])

    q_soft = qsT.transpose(1, 2, 0).reshape(B, C)
    q_hard = qhT.transpose(1, 2, 0).reshape(B, C)
    return q_soft, q_hard, cls_s, cls_h


# ---------------------------------------------------------------------------
# Parameter preparation (done once, outside the per-step forward): pre-transposed
# codebook, classifier weight in (D, G, NC) bf16, BN params in (D, 1, G).
# ---------------------------------------------------------------------------
def prepare_params(params, *, vq_D=4, classifier_dtype=jnp.bfloat16):
    C = params["bn_gamma"].shape[0]
    G = C // vq_D
    NC = params["cls_weight"].shape[0]

    def chan_to_dg(v):  # (C,) -> (D, 1, G), channel c = 4*g + d
        return v.reshape(G, vq_D).T.reshape(vq_D, 1, G).astype(jnp.float32)

    return {
        "bn_gamma3": chan_to_dg(params["bn_gamma"]),
        "bn_beta3": chan_to_dg(params["bn_beta"]),
        "bn_rmean3": chan_to_dg(params["bn_rmean"]),
        "bn_rvar3": chan_to_dg(params["bn_rvar"]),
        "cbt": params["vq_codebook"].T.astype(jnp.float32),                      # (D, K)
        "w3": params["cls_weight"].T.reshape(G, vq_D, NC)
                 .transpose(1, 0, 2).astype(classifier_dtype),                   # (D, G, NC)
    }


# ---------------------------------------------------------------------------
# Baseline forward (neck='bnneck', neck_feat='after')
# ---------------------------------------------------------------------------
def baseline_forward(x_nchw, prepped, *, training=True):
    global_feat = global_avg_pool(x_nchw)                                  # (B, C)
    q_soft, q_hard, cls_soft, cls_hard = bn_vq_classifier(
        global_feat, prepped, training=training)
    if training:
        return cls_soft, cls_hard, global_feat, q_soft, q_hard
    # eval: neck_feat == 'after' (and the else branch) both return q_feat_hard
    return q_hard


# ---------------------------------------------------------------------------
# Pure-JAX reference for correctness checking
# ---------------------------------------------------------------------------
def baseline_reference(x_nchw, params, *, training=True):
    B, C, H, W = x_nchw.shape
    gf = jnp.mean(x_nchw.reshape(B, C, H * W), axis=2)
    if training:
        mu = jnp.mean(gf, axis=0, keepdims=True)
        var = jnp.mean((gf - mu) ** 2, axis=0, keepdims=True)
    else:
        mu, var = params["bn_rmean"][None], params["bn_rvar"][None]
    feat = (gf - mu) / jnp.sqrt(var + 1e-5) * params["bn_gamma"][None] + params["bn_beta"][None]
    cb = params["vq_codebook"]
    K, D = cb.shape
    xf = feat.reshape(-1, D)
    dist = jnp.sum(cb ** 2, 1)[None, :] + jnp.sum(xf ** 2, 1, keepdims=True) - 2.0 * xf @ cb.T
    soft = jax.nn.softmax(dist, axis=1) @ cb
    hard = cb[jnp.argmin(dist, axis=1)]
    q_soft, q_hard = soft.reshape(B, C), hard.reshape(B, C)
    if training:
        wt = params["cls_weight"].T
        return q_soft @ wt, q_hard @ wt, gf, q_soft, q_hard
    return q_hard


if __name__ == "__main__":
    # Small, deterministic config (backbone output, shrunk)
    B, IN_PLANES, H, W = 2, 256, 8, 8
    NUM_CLASSES, VQ_K, VQ_D = 16, 256, 4

    key = jax.random.PRNGKey(0)
    kx, kcls, kvq = jax.random.split(key, 3)

    x = jax.random.normal(kx, (B, IN_PLANES, H, W), dtype=jnp.float32)

    params = {
        # bnneck: weights_init_kaiming -> gamma=1, beta=0; fresh running stats
        "bn_gamma": jnp.ones((IN_PLANES,), jnp.float32),
        "bn_beta": jnp.zeros((IN_PLANES,), jnp.float32),
        "bn_rmean": jnp.zeros((IN_PLANES,), jnp.float32),
        "bn_rvar": jnp.ones((IN_PLANES,), jnp.float32),
        # classifier: weights_init_classifier -> N(0, 0.001), no bias (bnneck)
        "cls_weight": 0.001 * jax.random.normal(kcls, (NUM_CLASSES, IN_PLANES), jnp.float32),
        # nn.Embedding(256, 4) default init ~ N(0, 1)
        "vq_codebook": jax.random.normal(kvq, (VQ_K, VQ_D), jnp.float32),
    }

    prepped = prepare_params(params, vq_D=VQ_D)
    fwd = jax.jit(baseline_forward, static_argnames=("training",))

    outs = jax.block_until_ready(fwd(x, prepped, training=True))
    refs = baseline_reference(x, params, training=True)
    # tolerances: cls_* use a bf16 weight + approx reciprocal, q_soft uses approx reciprocal,
    # global_feat / q_hard are (near-)exact.
    tols = [(1e-3, 5e-2), (1e-3, 5e-2), (1e-4, 1e-4), (5e-3, 5e-3), (1e-4, 1e-4)]
    for o, r, (atol, rtol) in zip(outs, refs, tols):
        assert o.shape == r.shape, (o.shape, r.shape)
        assert jnp.allclose(o, r, atol=atol, rtol=rtol), float(jnp.max(jnp.abs(o - r)))

    # eval path returns q_feat_hard only
    q_hard_eval = jax.block_until_ready(fwd(x, prepped, training=False))
    q_hard_ref = baseline_reference(x, params, training=False)
    assert q_hard_eval.shape == (B, IN_PLANES)
    assert jnp.allclose(q_hard_eval, q_hard_ref, atol=1e-4, rtol=1e-4)

    print("KERNEL_OK")
</pallas_src>

<mosaic_0001>
module attributes {stable_mosaic.version = 11 : i64} {
  func.func @_bn_vq_cls_kernel(%arg0: i32, %arg1: memref<4x2x64xf32, #tpu.memory_space<vmem>>, %arg2: memref<4x1x64xf32, #tpu.memory_space<vmem>>, %arg3: memref<4x1x64xf32, #tpu.memory_space<vmem>>, %arg4: memref<4x1x64xf32, #tpu.memory_space<vmem>>, %arg5: memref<4x1x64xf32, #tpu.memory_space<vmem>>, %arg6: memref<4x256xf32, #tpu.memory_space<vmem>>, %arg7: memref<4x64x16xbf16, #tpu.memory_space<vmem>>, %arg8: memref<4x2x64xf32, #tpu.memory_space<vmem>>, %arg9: memref<4x2x64xf32, #tpu.memory_space<vmem>>, %arg10: memref<2x16xf32, #tpu.memory_space<vmem>>, %arg11: memref<2x16xf32, #tpu.memory_space<vmem>>) attributes {dimension_semantics = [#tpu.dimension_semantics<arbitrary>], iteration_bounds = array<i64: 1>, scalar_prefetch = 0 : i64, scratch_operands = 0 : i64, tpu.core_type = #tpu.core_type<tc>, window_params = [{transform_indices = @transform_0, window_bounds = array<i64: 4, 2, 64>}, {transform_indices = @transform_1, window_bounds = array<i64: 4, 1, 64>}, {transform_indices = @transform_2, window_bounds = array<i64: 4, 1, 64>}, {transform_indices = @transform_3, window_bounds = array<i64: 4, 1, 64>}, {transform_indices = @transform_4, window_bounds = array<i64: 4, 1, 64>}, {pipeline_mode = #tpu.pipeline_mode<synchronous>, transform_indices = @transform_5, window_bounds = array<i64: 4, 256>}, {transform_indices = @transform_6, window_bounds = array<i64: 4, 64, 16>}, {transform_indices = @transform_7, window_bounds = array<i64: 4, 2, 64>}, {transform_indices = @transform_8, window_bounds = array<i64: 4, 2, 64>}, {pipeline_mode = #tpu.pipeline_mode<synchronous>, transform_indices = @transform_9, window_bounds = array<i64: 2, 16>}, {pipeline_mode = #tpu.pipeline_mode<synchronous>, transform_indices = @transform_10, window_bounds = array<i64: 2, 16>}]} {
    %c0 = arith.constant 0 : index
    %c0_0 = arith.constant 0 : index
    %c0_1 = arith.constant 0 : index
    %0 = vector.load %arg1[%c0, %c0_0, %c0_1] : memref<4x2x64xf32, #tpu.memory_space<vmem>>, vector<4x2x64xf32>
    %cst = arith.constant dense<0.000000e+00> : vector<4x64xf32>
    %1 = vector.multi_reduction <add>, %0, %cst [1] : vector<4x2x64xf32> to vector<4x64xf32>
    %2 = vector.shape_cast %1 : vector<4x64xf32> to vector<4x1x64xf32>
    %cst_2 = arith.constant 2.000000e+00 : f32
    %3 = vector.broadcast %cst_2 : f32 to vector<4x1x64xf32>
    %4 = arith.divf %2, %3 : vector<4x1x64xf32>
    %5 = vector.broadcast %4 : vector<4x1x64xf32> to vector<4x2x64xf32>
    %6 = arith.subf %0, %5 : vector<4x2x64xf32>
    %7 = arith.mulf %6, %6 : vector<4x2x64xf32>
    %cst_3 = arith.constant dense<0.000000e+00> : vector<4x64xf32>
    %8 = vector.multi_reduction <add>, %7, %cst_3 [1] : vector<4x2x64xf32> to vector<4x64xf32>
    %9 = vector.shape_cast %8 : vector<4x64xf32> to vector<4x1x64xf32>
    %cst_4 = arith.constant 2.000000e+00 : f32
    %10 = vector.broadcast %cst_4 : f32 to vector<4x1x64xf32>
    %11 = arith.divf %9, %10 : vector<4x1x64xf32>
    %12 = vector.broadcast %4 : vector<4x1x64xf32> to vector<4x2x64xf32>
    %13 = arith.subf %0, %12 : vector<4x2x64xf32>
    %cst_5 = arith.constant 9.99999974E-6 : f32
    %14 = vector.broadcast %cst_5 : f32 to vector<4x1x64xf32>
    %15 = arith.addf %11, %14 : vector<4x1x64xf32>
    %16 = math.rsqrt %15 : vector<4x1x64xf32>
    %17 = vector.broadcast %16 : vector<4x1x64xf32> to vector<4x2x64xf32>
    %18 = arith.mulf %13, %17 : vector<4x2x64xf32>
    %c0_6 = arith.constant 0 : index
    %c0_7 = arith.constant 0 : index
    %c0_8 = arith.constant 0 : index
    %19 = vector.load %arg2[%c0_6, %c0_7, %c0_8] : memref<4x1x64xf32, #tpu.memory_space<vmem>>, vector<4x1x64xf32>
    %20 = vector.broadcast %19 : vector<4x1x64xf32> to vector<4x2x64xf32>
    %21 = arith.mulf %18, %20 : vector<4x2x64xf32>
    %c0_9 = arith.constant 0 : index
    %c0_10 = arith.constant 0 : index
    %c0_11 = arith.constant 0 : index
    %22 = vector.load %arg3[%c0_9, %c0_10, %c0_11] : memref<4x1x64xf32, #tpu.memory_space<vmem>>, vector<4x1x64xf32>
    %23 = vector.broadcast %22 : vector<4x1x64xf32> to vector<4x2x64xf32>
    %24 = arith.addf %21, %23 : vector<4x2x64xf32>
    %c0_12 = arith.constant 0 : index
    %c0_13 = arith.constant 0 : index
    %25 = vector.load %arg6[%c0_12, %c0_13] : memref<4x256xf32, #tpu.memory_space<vmem>>, vector<4x256xf32>
    %26 = arith.mulf %25, %25 : vector<4x256xf32>
    %cst_14 = arith.constant dense<0.000000e+00> : vector<256xf32>
    %27 = vector.multi_reduction <add>, %26, %cst_14 [0] : vector<4x256xf32> to vector<256xf32>
    %28 = vector.shape_cast %27 : vector<256xf32> to vector<1x256xf32>
    %29 = vector.shape_cast %28 : vector<1x256xf32> to vector<1x1x256xf32>
    %30 = vector.extract_strided_slice %24 {offsets = [0, 0, 0], sizes = [1, 2, 64], strides = [1, 1, 1]} : vector<4x2x64xf32> to vector<1x2x64xf32>
    %31 = vector.shape_cast %30 : vector<1x2x64xf32> to vector<2x64xf32>
    %32 = vector.shape_cast %31 : vector<2x64xf32> to vector<2x64x1xf32>
    %33 = vector.extract_strided_slice %25 {offsets = [0, 0], sizes = [1, 256], strides = [1, 1]} : vector<4x256xf32> to vector<1x256xf32>
    %34 = vector.shape_cast %33 : vector<1x256xf32> to vector<1x1x256xf32>
    %35 = vector.broadcast %32 : vector<2x64x1xf32> to vector<2x64x256xf32>
    %36 = vector.broadcast %34 : vector<1x1x256xf32> to vector<2x64x256xf32>
    %37 = arith.mulf %35, %36 : vector<2x64x256xf32>
    %38 = vector.extract_strided_slice %24 {offsets = [1, 0, 0], sizes = [1, 2, 64], strides = [1, 1, 1]} : vector<4x2x64xf32> to vector<1x2x64xf32>
    %39 = vector.shape_cast %38 : vector<1x2x64xf32> to vector<2x64xf32>
    %40 = vector.shape_cast %39 : vector<2x64xf32> to vector<2x64x1xf32>
    %41 = vector.extract_strided_slice %25 {offsets = [1, 0], sizes = [1, 256], strides = [1, 1]} : vector<4x256xf32> to vector<1x256xf32>
    %42 = vector.shape_cast %41 : vector<1x256xf32> to vector<1x1x256xf32>
    %43 = vector.broadcast %40 : vector<2x64x1xf32> to vector<2x64x256xf32>
    %44 = vector.broadcast %42 : vector<1x1x256xf32> to vector<2x64x256xf32>
    %45 = arith.mulf %43, %44 : vector<2x64x256xf32>
    %46 = arith.addf %37, %45 : vector<2x64x256xf32>
    %47 = vector.extract_strided_slice %24 {offsets = [2, 0, 0], sizes = [1, 2, 64], strides = [1, 1, 1]} : vector<4x2x64xf32> to vector<1x2x64xf32>
    %48 = vector.shape_cast %47 : vector<1x2x64xf32> to vector<2x64xf32>
    %49 = vector.shape_cast %48 : vector<2x64xf32> to vector<2x64x1xf32>
    %50 = vector.extract_strided_slice %25 {offsets = [2, 0], sizes = [1, 256], strides = [1, 1]} : vector<4x256xf32> to vector<1x256xf32>
    %51 = vector.shape_cast %50 : vector<1x256xf32> to vector<1x1x256xf32>
    %52 = vector.broadcast %49 : vector<2x64x1xf32> to vector<2x64x256xf32>
    %53 = vector.broadcast %51 : vector<1x1x256xf32> to vector<2x64x256xf32>
    %54 = arith.mulf %52, %53 : vector<2x64x256xf32>
    %55 = arith.addf %46, %54 : vector<2x64x256xf32>
    %56 = vector.extract_strided_slice %24 {offsets = [3, 0, 0], sizes = [1, 2, 64], strides = [1, 1, 1]} : vector<4x2x64xf32> to vector<1x2x64xf32>
    %57 = vector.shape_cast %56 : vector<1x2x64xf32> to vector<2x64xf32>
    %58 = vector.shape_cast %57 : vector<2x64xf32> to vector<2x64x1xf32>
    %59 = vector.extract_strided_slice %25 {offsets = [3, 0], sizes = [1, 256], strides = [1, 1]} : vector<4x256xf32> to vector<1x256xf32>
    %60 = vector.shape_cast %59 : vector<1x256xf32> to vector<1x1x256xf32>
    %61 = vector.broadcast %58 : vector<2x64x1xf32> to vector<2x64x256xf32>
    %62 = vector.broadcast %60 : vector<1x1x256xf32> to vector<2x64x256xf32>
    %63 = arith.mulf %61, %62 : vector<2x64x256xf32>
    %64 = arith.addf %55, %63 : vector<2x64x256xf32>
    %cst_15 = arith.constant 2.000000e+00 : f32
    %65 = vector.broadcast %cst_15 : f32 to vector<2x64x256xf32>
    %66 = arith.mulf %65, %64 : vector<2x64x256xf32>
    %67 = vector.broadcast %29 : vector<1x1x256xf32> to vector<2x64x256xf32>
    %68 = arith.subf %67, %66 : vector<2x64x256xf32>
    %cst_16 = arith.constant dense<0xFF800000> : vector<2x64xf32>
    %69 = vector.multi_reduction <maximumf>, %68, %cst_16 [2] : vector<2x64x256xf32> to vector<2x64xf32>
    %70 = vector.shape_cast %69 : vector<2x64xf32> to vector<2x64x1xf32>
    %71 = vector.broadcast %70 : vector<2x64x1xf32> to vector<2x64x256xf32>
    %72 = arith.subf %68, %71 : vector<2x64x256xf32>
    %73 = math.exp %72 : vector<2x64x256xf32>
    %cst_17 = arith.constant dense<0.000000e+00> : vector<2x64xf32>
    %74 = vector.multi_reduction <add>, %73, %cst_17 [2] : vector<2x64x256xf32> to vector<2x64xf32>
    %75 = vector.shape_cast %74 : vector<2x64xf32> to vector<2x64x1xf32>
    %76 = tpu.reciprocal %75 {approx = true} : vector<2x64x1xf32> -> vector<2x64x1xf32>
    %77 = vector.broadcast %76 : vector<2x64x1xf32> to vector<2x64x256xf32>
    %78 = arith.mulf %73, %77 : vector<2x64x256xf32>
    %79 = tpu.iota {dimensions = array<i32: 2>} : vector<2x64x256xi32>
    %cst_18 = arith.constant dense<0x7F800000> : vector<2x64xf32>
    %80 = vector.multi_reduction <minimumf>, %68, %cst_18 [2] : vector<2x64x256xf32> to vector<2x64xf32>
    %81 = vector.shape_cast %80 : vector<2x64xf32> to vector<2x64x1xf32>
    %82 = vector.broadcast %81 : vector<2x64x1xf32> to vector<2x64x256xf32>
    %83 = arith.cmpf ole, %68, %82 : vector<2x64x256xf32>
    %c256_i32 = arith.constant 256 : i32
    %84 = vector.broadcast %c256_i32 : i32 to vector<2x64x256xi32>
    %85 = arith.select %83, %79, %84 : vector<2x64x256xi1>, vector<2x64x256xi32>
    %cst_19 = arith.constant dense<2147483647> : vector<2x64xi32>
    %86 = vector.multi_reduction <minsi>, %85, %cst_19 [2] : vector<2x64x256xi32> to vector<2x64xi32>
    %87 = vector.shape_cast %86 : vector<2x64xi32> to vector<2x64x1xi32>
    %88 = vector.broadcast %87 : vector<2x64x1xi32> to vector<2x64x256xi32>
    %89 = arith.cmpi eq, %79, %88 : vector<2x64x256xi32>
    %90 = arith.extui %89 : vector<2x64x256xi1> to vector<2x64x256xi32>
    %91 = arith.sitofp %90 : vector<2x64x256xi32> to vector<2x64x256xf32>
    %c0_20 = arith.constant 0 : index
    %c0_21 = arith.constant 0 : index
    %c0_22 = arith.constant 0 : index
    %92 = vector.load %arg7[%c0_20, %c0_21, %c0_22] : memref<4x64x16xbf16, #tpu.memory_space<vmem>>, vector<4x64x16xbf16>
    %93 = vector.extract_strided_slice %25 {offsets = [0, 0], sizes = [1, 256], strides = [1, 1]} : vector<4x256xf32> to vector<1x256xf32>
    %94 = vector.shape_cast %93 : vector<1x256xf32> to vector<1x1x256xf32>
    %95 = vector.broadcast %94 : vector<1x1x256xf32> to vector<2x64x256xf32>
    %96 = arith.mulf %78, %95 : vector<2x64x256xf32>
    %cst_23 = arith.constant dense<0.000000e+00> : vector<2x64xf32>
    %97 = vector.multi_reduction <add>, %96, %cst_23 [2] : vector<2x64x256xf32> to vector<2x64xf32>
    %98 = vector.broadcast %94 : vector<1x1x256xf32> to vector<2x64x256xf32>
    %99 = arith.mulf %91, %98 : vector<2x64x256xf32>
    %cst_24 = arith.constant dense<0.000000e+00> : vector<2x64xf32>
    %100 = vector.multi_reduction <add>, %99, %cst_24 [2] : vector<2x64x256xf32> to vector<2x64xf32>
    %c0_25 = arith.constant 0 : index
    %c0_26 = arith.constant 0 : index
    %c0_27 = arith.constant 0 : index
    %101 = vector.load %arg8[%c0_25, %c0_26, %c0_27] : memref<4x2x64xf32, #tpu.memory_space<vmem>>, vector<1x2x64xf32>
    %102 = vector.shape_cast %101 : vector<1x2x64xf32> to vector<2x64xf32>
    %103 = vector.shape_cast %97 : vector<2x64xf32> to vector<1x2x64xf32>
    tpu.vector_store %arg8[%c0_25, %c0_26, %c0_27], %103 {strides = array<i32>} : memref<4x2x64xf32, #tpu.memory_space<vmem>>, vector<1x2x64xf32>,
    %c0_28 = arith.constant 0 : index
    %c0_29 = arith.constant 0 : index
    %c0_30 = arith.constant 0 : index
    %104 = vector.load %arg9[%c0_28, %c0_29, %c0_30] : memref<4x2x64xf32, #tpu.memory_space<vmem>>, vector<1x2x64xf32>
    %105 = vector.shape_cast %104 : vector<1x2x64xf32> to vector<2x64xf32>
    %106 = vector.shape_cast %100 : vector<2x64xf32> to vector<1x2x64xf32>
    tpu.vector_store %arg9[%c0_28, %c0_29, %c0_30], %106 {strides = array<i32>} : memref<4x2x64xf32, #tpu.memory_space<vmem>>, vector<1x2x64xf32>,
    %107 = tpu.concatenate %97, %100 in 0 : vector<2x64xf32>, vector<2x64xf32> -> vector<4x64xf32>
    %108 = arith.truncf %107 : vector<4x64xf32> to vector<4x64xbf16>
    %109 = vector.extract_strided_slice %92 {offsets = [0, 0, 0], sizes = [1, 64, 16], strides = [1, 1, 1]} : vector<4x64x16xbf16> to vector<1x64x16xbf16>
    %110 = vector.shape_cast %109 : vector<1x64x16xbf16> to vector<64x16xbf16>
    %cst_31 = arith.constant dense<0.000000e+00> : vector<4x16xf32>
    %111 = tpu.matmul %108, %110, %cst_31 {dimension_numbers = #tpu.dot_dimension_numbers<[1], [0], [0], [1], [0, 0, 1, 1], [], []>} : vector<4x64xbf16>, vector<64x16xbf16>, vector<4x16xf32> -> vector<4x16xf32>
    %112 = vector.extract_strided_slice %25 {offsets = [1, 0], sizes = [1, 256], strides = [1, 1]} : vector<4x256xf32> to vector<1x256xf32>
    %113 = vector.shape_cast %112 : vector<1x256xf32> to vector<1x1x256xf32>
    %114 = vector.broadcast %113 : vector<1x1x256xf32> to vector<2x64x256xf32>
    %115 = arith.mulf %78, %114 : vector<2x64x256xf32>
    %cst_32 = arith.constant dense<0.000000e+00> : vector<2x64xf32>
    %116 = vector.multi_reduction <add>, %115, %cst_32 [2] : vector<2x64x256xf32> to vector<2x64xf32>
    %117 = vector.broadcast %113 : vector<1x1x256xf32> to vector<2x64x256xf32>
    %118 = arith.mulf %91, %117 : vector<2x64x256xf32>
    %cst_33 = arith.constant dense<0.000000e+00> : vector<2x64xf32>
    %119 = vector.multi_reduction <add>, %118, %cst_33 [2] : vector<2x64x256xf32> to vector<2x64xf32>
    %c1 = arith.constant 1 : index
    %c0_34 = arith.constant 0 : index
    %c0_35 = arith.constant 0 : index
    %120 = vector.load %arg8[%c1, %c0_34, %c0_35] : memref<4x2x64xf32, #tpu.memory_space<vmem>>, vector<1x2x64xf32>
    %121 = vector.shape_cast %120 : vector<1x2x64xf32> to vector<2x64xf32>
    %122 = vector.shape_cast %116 : vector<2x64xf32> to vector<1x2x64xf32>
    tpu.vector_store %arg8[%c1, %c0_34, %c0_35], %122 {strides = array<i32>} : memref<4x2x64xf32, #tpu.memory_space<vmem>>, vector<1x2x64xf32>,
    %c1_36 = arith.constant 1 : index
    %c0_37 = arith.constant 0 : index
    %c0_38 = arith.constant 0 : index
    %123 = vector.load %arg9[%c1_36, %c0_37, %c0_38] : memref<4x2x64xf32, #tpu.memory_space<vmem>>, vector<1x2x64xf32>
    %124 = vector.shape_cast %123 : vector<1x2x64xf32> to vector<2x64xf32>
    %125 = vector.shape_cast %119 : vector<2x64xf32> to vector<1x2x64xf32>
    tpu.vector_store %arg9[%c1_36, %c0_37, %c0_38], %125 {strides = array<i32>} : memref<4x2x64xf32, #tpu.memory_space<vmem>>, vector<1x2x64xf32>,
    %126 = tpu.concatenate %116, %119 in 0 : vector<2x64xf32>, vector<2x64xf32> -> vector<4x64xf32>
    %127 = arith.truncf %126 : vector<4x64xf32> to vector<4x64xbf16>
    %128 = vector.extract_strided_slice %92 {offsets = [1, 0, 0], sizes = [1, 64, 16], strides = [1, 1, 1]} : vector<4x64x16xbf16> to vector<1x64x16xbf16>
    %129 = vector.shape_cast %128 : vector<1x64x16xbf16> to vector<64x16xbf16>
    %cst_39 = arith.constant dense<0.000000e+00> : vector<4x16xf32>
    %130 = tpu.matmul %127, %129, %cst_39 {dimension_numbers = #tpu.dot_dimension_numbers<[1], [0], [0], [1], [0, 0, 1, 1], [], []>} : vector<4x64xbf16>, vector<64x16xbf16>, vector<4x16xf32> -> vector<4x16xf32>
    %131 = arith.addf %111, %130 : vector<4x16xf32>
    %132 = vector.extract_strided_slice %25 {offsets = [2, 0], sizes = [1, 256], strides = [1, 1]} : vector<4x256xf32> to vector<1x256xf32>
    %133 = vector.shape_cast %132 : vector<1x256xf32> to vector<1x1x256xf32>
    %134 = vector.broadcast %133 : vector<1x1x256xf32> to vector<2x64x256xf32>
    %135 = arith.mulf %78, %134 : vector<2x64x256xf32>
    %cst_40 = arith.constant dense<0.000000e+00> : vector<2x64xf32>
    %136 = vector.multi_reduction <add>, %135, %cst_40 [2] : vector<2x64x256xf32> to vector<2x64xf32>
    %137 = vector.broadcast %133 : vector<1x1x256xf32> to vector<2x64x256xf32>
    %138 = arith.mulf %91, %137 : vector<2x64x256xf32>
    %cst_41 = arith.constant dense<0.000000e+00> : vector<2x64xf32>
    %139 = vector.multi_reduction <add>, %138, %cst_41 [2] : vector<2x64x256xf32> to vector<2x64xf32>
    %c2 = arith.constant 2 : index
    %c0_42 = arith.constant 0 : index
    %c0_43 = arith.constant 0 : index
    %140 = vector.load %arg8[%c2, %c0_42, %c0_43] : memref<4x2x64xf32, #tpu.memory_space<vmem>>, vector<1x2x64xf32>
    %141 = vector.shape_cast %140 : vector<1x2x64xf32> to vector<2x64xf32>
    %142 = vector.shape_cast %136 : vector<2x64xf32> to vector<1x2x64xf32>
    tpu.vector_store %arg8[%c2, %c0_42, %c0_43], %142 {strides = array<i32>} : memref<4x2x64xf32, #tpu.memory_space<vmem>>, vector<1x2x64xf32>,
    %c2_44 = arith.constant 2 : index
    %c0_45 = arith.constant 0 : index
    %c0_46 = arith.constant 0 : index
    %143 = vector.load %arg9[%c2_44, %c0_45, %c0_46] : memref<4x2x64xf32, #tpu.memory_space<vmem>>, vector<1x2x64xf32>
    %144 = vector.shape_cast %143 : vector<1x2x64xf32> to vector<2x64xf32>
    %145 = vector.shape_cast %139 : vector<2x64xf32> to vector<1x2x64xf32>
    tpu.vector_store %arg9[%c2_44, %c0_45, %c0_46], %145 {strides = array<i32>} : memref<4x2x64xf32, #tpu.memory_space<vmem>>, vector<1x2x64xf32>,
    %146 = tpu.concatenate %136, %139 in 0 : vector<2x64xf32>, vector<2x64xf32> -> vector<4x64xf32>
    %147 = arith.truncf %146 : vector<4x64xf32> to vector<4x64xbf16>
    %148 = vector.extract_strided_slice %92 {offsets = [2, 0, 0], sizes = [1, 64, 16], strides = [1, 1, 1]} : vector<4x64x16xbf16> to vector<1x64x16xbf16>
    %149 = vector.shape_cast %148 : vector<1x64x16xbf16> to vector<64x16xbf16>
    %cst_47 = arith.constant dense<0.000000e+00> : vector<4x16xf32>
    %150 = tpu.matmul %147, %149, %cst_47 {dimension_numbers = #tpu.dot_dimension_numbers<[1], [0], [0], [1], [0, 0, 1, 1], [], []>} : vector<4x64xbf16>, vector<64x16xbf16>, vector<4x16xf32> -> vector<4x16xf32>
    %151 = arith.addf %131, %150 : vector<4x16xf32>
    %152 = vector.extract_strided_slice %25 {offsets = [3, 0], sizes = [1, 256], strides = [1, 1]} : vector<4x256xf32> to vector<1x256xf32>
    %153 = vector.shape_cast %152 : vector<1x256xf32> to vector<1x1x256xf32>
    %154 = vector.broadcast %153 : vector<1x1x256xf32> to vector<2x64x256xf32>
    %155 = arith.mulf %78, %154 : vector<2x64x256xf32>
    %cst_48 = arith.constant dense<0.000000e+00> : vector<2x64xf32>
    %156 = vector.multi_reduction <add>, %155, %cst_48 [2] : vector<2x64x256xf32> to vector<2x64xf32>
    %157 = vector.broadcast %153 : vector<1x1x256xf32> to vector<2x64x256xf32>
    %158 = arith.mulf %91, %157 : vector<2x64x256xf32>
    %cst_49 = arith.constant dense<0.000000e+00> : vector<2x64xf32>
    %159 = vector.multi_reduction <add>, %158, %cst_49 [2] : vector<2x64x256xf32> to vector<2x64xf32>
    %c3 = arith.constant 3 : index
    %c0_50 = arith.constant 0 : index
    %c0_51 = arith.constant 0 : index
    %160 = vector.load %arg8[%c3, %c0_50, %c0_51] : memref<4x2x64xf32, #tpu.memory_space<vmem>>, vector<1x2x64xf32>
    %161 = vector.shape_cast %160 : vector<1x2x64xf32> to vector<2x64xf32>
    %162 = vector.shape_cast %156 : vector<2x64xf32> to vector<1x2x64xf32>
    tpu.vector_store %arg8[%c3, %c0_50, %c0_51], %162 {strides = array<i32>} : memref<4x2x64xf32, #tpu.memory_space<vmem>>, vector<1x2x64xf32>,
    %c3_52 = arith.constant 3 : index
    %c0_53 = arith.constant 0 : index
    %c0_54 = arith.constant 0 : index
    %163 = vector.load %arg9[%c3_52, %c0_53, %c0_54] : memref<4x2x64xf32, #tpu.memory_space<vmem>>, vector<1x2x64xf32>
    %164 = vector.shape_cast %163 : vector<1x2x64xf32> to vector<2x64xf32>
    %165 = vector.shape_cast %159 : vector<2x64xf32> to vector<1x2x64xf32>
    tpu.vector_store %arg9[%c3_52, %c0_53, %c0_54], %165 {strides = array<i32>} : memref<4x2x64xf32, #tpu.memory_space<vmem>>, vector<1x2x64xf32>,
    %166 = tpu.concatenate %156, %159 in 0 : vector<2x64xf32>, vector<2x64xf32> -> vector<4x64xf32>
    %167 = arith.truncf %166 : vector<4x64xf32> to vector<4x64xbf16>
    %168 = vector.extract_strided_slice %92 {offsets = [3, 0, 0], sizes = [1, 64, 16], strides = [1, 1, 1]} : vector<4x64x16xbf16> to vector<1x64x16xbf16>
    %169 = vector.shape_cast %168 : vector<1x64x16xbf16> to vector<64x16xbf16>
    %cst_55 = arith.constant dense<0.000000e+00> : vector<4x16xf32>
    %170 = tpu.matmul %167, %169, %cst_55 {dimension_numbers = #tpu.dot_dimension_numbers<[1], [0], [0], [1], [0, 0, 1, 1], [], []>} : vector<4x64xbf16>, vector<64x16xbf16>, vector<4x16xf32> -> vector<4x16xf32>
    %171 = arith.addf %151, %170 : vector<4x16xf32>
    %c0_i32 = arith.constant 0 : i32
    %172 = arith.cmpi eq, %arg0, %c0_i32 : i32
    %173 = arith.extui %172 : i1 to i32
    %c0_i32_56 = arith.constant 0 : i32
    %174 = arith.cmpi ne, %173, %c0_i32_56 : i32
    scf.if %174 {
      %cst_65 = arith.constant 0.000000e+00 : f32
      %183 = vector.broadcast %cst_65 : f32 to vector<2x16xf32>
      %c0_66 = arith.constant 0 : index
      %c0_67 = arith.constant 0 : index
      %184 = vector.load %arg10[%c0_66, %c0_67] : memref<2x16xf32, #tpu.memory_space<vmem>>, vector<2x16xf32>
      tpu.vector_store %arg10[%c0_66, %c0_67], %183 {strides = array<i32>} : memref<2x16xf32, #tpu.memory_space<vmem>>, vector<2x16xf32>,
      %cst_68 = arith.constant 0.000000e+00 : f32
      %185 = vector.broadcast %cst_68 : f32 to vector<2x16xf32>
      %c0_69 = arith.constant 0 : index
      %c0_70 = arith.constant 0 : index
      %186 = vector.load %arg11[%c0_69, %c0_70] : memref<2x16xf32, #tpu.memory_space<vmem>>, vector<2x16xf32>
      tpu.vector_store %arg11[%c0_69, %c0_70], %185 {strides = array<i32>} : memref<2x16xf32, #tpu.memory_space<vmem>>, vector<2x16xf32>,
    } else {
    }
    %c0_57 = arith.constant 0 : index
    %c0_58 = arith.constant 0 : index
    %175 = vector.load %arg10[%c0_57, %c0_58] : memref<2x16xf32, #tpu.memory_space<vmem>>, vector<2x16xf32>
    %176 = vector.extract_strided_slice %171 {offsets = [0, 0], sizes = [2, 16], strides = [1, 1]} : vector<4x16xf32> to vector<2x16xf32>
    %177 = arith.addf %175, %176 : vector<2x16xf32>
    %c0_59 = arith.constant 0 : index
    %c0_60 = arith.constant 0 : index
    %178 = vector.load %arg10[%c0_59, %c0_60] : memref<2x16xf32, #tpu.memory_space<vmem>>, vector<2x16xf32>
    tpu.vector_store %arg10[%c0_59, %c0_60], %177 {strides = array<i32>} : memref<2x16xf32, #tpu.memory_space<vmem>>, vector<2x16xf32>,
    %c0_61 = arith.constant 0 : index
    %c0_62 = arith.constant 0 : index
    %179 = vector.load %arg11[%c0_61, %c0_62] : memref<2x16xf32, #tpu.memory_space<vmem>>, vector<2x16xf32>
    %180 = vector.extract_strided_slice %171 {offsets = [2, 0], sizes = [2, 16], strides = [1, 1]} : vector<4x16xf32> to vector<2x16xf32>
    %181 = arith.addf %179, %180 : vector<2x16xf32>
    %c0_63 = arith.constant 0 : index
    %c0_64 = arith.constant 0 : index
    %182 = vector.load %arg11[%c0_63, %c0_64] : memref<2x16xf32, #tpu.memory_space<vmem>>, vector<2x16xf32>
    tpu.vector_store %arg11[%c0_63, %c0_64], %181 {strides = array<i32>} : memref<2x16xf32, #tpu.memory_space<vmem>>, vector<2x16xf32>,
    return
  }
  func.func @transform_0(%arg0: i32) -> (i32, i32, i32) {
    %c0_i32 = arith.constant 0 : i32
    %c0_i32_0 = arith.constant 0 : i32
    %c0_i32_1 = arith.constant 0 : i32
    return %c0_i32, %c0_i32_0, %arg0 : i32, i32, i32
  }
  func.func @transform_1(%arg0: i32) -> (i32, i32, i32) {
    %c0_i32 = arith.constant 0 : i32
    %c0_i32_0 = arith.constant 0 : i32
    %c0_i32_1 = arith.constant 0 : i32
    return %c0_i32, %c0_i32_0, %arg0 : i32, i32, i32
  }
  func.func @transform_2(%arg0: i32) -> (i32, i32, i32) {
    %c0_i32 = arith.constant 0 : i32
    %c0_i32_0 = arith.constant 0 : i32
    %c0_i32_1 = arith.constant 0 : i32
    return %c0_i32, %c0_i32_0, %arg0 : i32, i32, i32
  }
  func.func @transform_3(%arg0: i32) -> (i32, i32, i32) {
    %c0_i32 = arith.constant 0 : i32
    %c0_i32_0 = arith.constant 0 : i32
    %c0_i32_1 = arith.constant 0 : i32
    return %c0_i32, %c0_i32_0, %arg0 : i32, i32, i32
  }
  func.func @transform_4(%arg0: i32) -> (i32, i32, i32) {
    %c0_i32 = arith.constant 0 : i32
    %c0_i32_0 = arith.constant 0 : i32
    %c0_i32_1 = arith.constant 0 : i32
    return %c0_i32, %c0_i32_0, %arg0 : i32, i32, i32
  }
  func.func @transform_5(%arg0: i32) -> (i32, i32) {
    %c0_i32 = arith.constant 0 : i32
    %c0_i32_0 = arith.constant 0 : i32
    %c0_i32_1 = arith.constant 0 : i32
    return %c0_i32, %c0_i32_0 : i32, i32
  }
  func.func @transform_6(%arg0: i32) -> (i32, i32, i32) {
    %c0_i32 = arith.constant 0 : i32
    %c0_i32_0 = arith.constant 0 : i32
    %c0_i32_1 = arith.constant 0 : i32
    return %c0_i32, %arg0, %c0_i32_0 : i32, i32, i32
  }
  func.func @transform_7(%arg0: i32) -> (i32, i32, i32) {
    %c0_i32 = arith.constant 0 : i32
    %c0_i32_0 = arith.constant 0 : i32
    %c0_i32_1 = arith.constant 0 : i32
    return %c0_i32, %c0_i32_0, %arg0 : i32, i32, i32
  }
  func.func @transform_8(%arg0: i32) -> (i32, i32, i32) {
    %c0_i32 = arith.constant 0 : i32
    %c0_i32_0 = arith.constant 0 : i32
    %c0_i32_1 = arith.constant 0 : i32
    return %c0_i32, %c0_i32_0, %arg0 : i32, i32, i32
  }
  func.func @transform_9(%arg0: i32) -> (i32, i32) {
    %c0_i32 = arith.constant 0 : i32
    %c0_i32_0 = arith.constant 0 : i32
    %c0_i32_1 = arith.constant 0 : i32
    return %c0_i32, %c0_i32_0 : i32, i32
  }
  func.func @transform_10(%arg0: i32) -> (i32, i32) {
    %c0_i32 = arith.constant 0 : i32
    %c0_i32_0 = arith.constant 0 : i32
    %c0_i32_1 = arith.constant 0 : i32
    return %c0_i32, %c0_i32_0 : i32, i32
  }
}

module attributes {stable_mosaic.version = 11 : i64} {
  func.func @_gap_kernel(%arg0: i32, %arg1: memref<2x256x64xf32, #tpu.memory_space<vmem>>, %arg2: memref<2x256xf32, #tpu.memory_space<vmem>>) attributes {dimension_semantics = [#tpu.dimension_semantics<parallel>], iteration_bounds = array<i64: 1>, scalar_prefetch = 0 : i64, scratch_operands = 0 : i64, tpu.core_type = #tpu.core_type<tc>, window_params = [{transform_indices = @transform_0, window_bounds = array<i64: 2, 256, 64>}, {transform_indices = @transform_1, window_bounds = array<i64: 2, 256>}]} {
    %c0 = arith.constant 0 : index
    %c0_0 = arith.constant 0 : index
    %c0_1 = arith.constant 0 : index
    %0 = vector.load %arg1[%c0, %c0_0, %c0_1] : memref<2x256x64xf32, #tpu.memory_space<vmem>>, vector<2x256x64xf32>
    %cst = arith.constant dense<0.000000e+00> : vector<2x256xf32>
    %1 = vector.multi_reduction <add>, %0, %cst [2] : vector<2x256x64xf32> to vector<2x256xf32>
    %cst_2 = arith.constant 6.400000e+01 : f32
    %2 = vector.broadcast %cst_2 : f32 to vector<2x256xf32>
    %3 = arith.divf %1, %2 : vector<2x256xf32>
    %c0_3 = arith.constant 0 : index
    %c0_4 = arith.constant 0 : index
    %4 = vector.load %arg2[%c0_3, %c0_4] : memref<2x256xf32, #tpu.memory_space<vmem>>, vector<2x256xf32>
    tpu.vector_store %arg2[%c0_3, %c0_4], %3 {strides = array<i32>} : memref<2x256xf32, #tpu.memory_space<vmem>>, vector<2x256xf32>,
    return
  }
  func.func @transform_0(%arg0: i32) -> (i32, i32, i32) {
    %c0_i32 = arith.constant 0 : i32
    %c0_i32_0 = arith.constant 0 : i32
    %c0_i32_1 = arith.constant 0 : i32
    return %arg0, %c0_i32, %c0_i32_0 : i32, i32, i32
  }
  func.func @transform_1(%arg0: i32) -> (i32, i32) {
    %c0_i32 = arith.constant 0 : i32
    %c0_i32_0 = arith.constant 0 : i32
    return %arg0, %c0_i32 : i32, i32
  }
}

</mosaic_0001>

<llo_original>
// kernel: baseline_forward.2
$region0: #{baseline_forward.2}
  #allocation0 [shape = 'u32[]', space=smem, size = 0x4, offset = 0x4, fixed_abs, tag = 'smem constant byte address 0x4 - core index']
  #allocation1 [shape = 'u32[144,128]{1,0:T(1,128)}', space=vmem, size = 0x12000, scoped, tag = 'internal scratch']
  %s0 = inlined_call_operand.vmem [shape: f32[2,256,64], index: 0, kind: input, shape index: {}]
  %s1 = inlined_call_operand.vmem [shape: f32[2,256], index: 1, kind: output, shape index: {}]
  %s2 = sld [smem:[#allocation0]]
  $region14: #{baseline_forward.2} parent=0
    _
  %s4 = ssub.s32 1, %s2
  %s5 = scalar_select 0, %s4, %s2
  // Predicated region
  $region2: #{baseline_forward.2} parent=0 // pred_check
    _
  $region3: #{baseline_forward.2} parent=0 // pred_check_branch
    %7 = sbr.rel (0) target = $region5
  $region4: #{baseline_forward.2} parent=0 // pred_region
    _
  $region5: #{baseline_forward.2} parent=0 // pred_fallthru
    _
  %v8 = vld [vmem:[%s0] sm:$0xff]
  %v9 = vld [vmem:[%s0 + $0x8] sm:$0xff]
  %v10 = vld [vmem:[%s0 + $0x10] sm:$0xff]
  %v11 = vld [vmem:[%s0 + $0x18] sm:$0xff]
  %v12 = vld [vmem:[%s0 + $0x20] sm:$0xff]
  %v13 = vld [vmem:[%s0 + $0x28] sm:$0xff]
  %v14 = vld [vmem:[%s0 + $0x30] sm:$0xff]
  %v15 = vld [vmem:[%s0 + $0x38] sm:$0xff]
  %v16 = vld [vmem:[%s0 + $0x40] sm:$0xff]
  %v17 = vld [vmem:[%s0 + $0x48] sm:$0xff]
  %v18 = vld [vmem:[%s0 + $0x50] sm:$0xff]
  %v19 = vld [vmem:[%s0 + $0x58] sm:$0xff]
  %v20 = vld [vmem:[%s0 + $0x60] sm:$0xff]
  %v21 = vld [vmem:[%s0 + $0x68] sm:$0xff]
  %v22 = vld [vmem:[%s0 + $0x70] sm:$0xff]
  %v23 = vld [vmem:[%s0 + $0x78] sm:$0xff]
  %v24 = vld [vmem:[%s0 + $0x80] sm:$0xff]
  %v25 = vld [vmem:[%s0 + $0x88] sm:$0xff]
  %v26 = vld [vmem:[%s0 + $0x90] sm:$0xff]
  %v27 = vld [vmem:[%s0 + $0x98] sm:$0xff]
  %v28 = vld [vmem:[%s0 + $0xa0] sm:$0xff]
  %v29 = vld [vmem:[%s0 + $0xa8] sm:$0xff]
  %v30 = vld [vmem:[%s0 + $0xb0] sm:$0xff]
  %v31 = vld [vmem:[%s0 + $0xb8] sm:$0xff]
  %v32 = vld [vmem:[%s0 + $0xc0] sm:$0xff]
  %v33 = vld [vmem:[%s0 + $0xc8] sm:$0xff]
  %v34 = vld [vmem:[%s0 + $0xd0] sm:$0xff]
  %v35 = vld [vmem:[%s0 + $0xd8] sm:$0xff]
  %v36 = vld [vmem:[%s0 + $0xe0] sm:$0xff]
  %v37 = vld [vmem:[%s0 + $0xe8] sm:$0xff]
  %v38 = vld [vmem:[%s0 + $0xf0] sm:$0xff]
  %v39 = vld [vmem:[%s0 + $0xf8] sm:$0xff]
  %v40 = vld [vmem:[%s0 + $0x100] sm:$0xff]
  %v41 = vld [vmem:[%s0 + $0x108] sm:$0xff]
  %v42 = vld [vmem:[%s0 + $0x110] sm:$0xff]
  %v43 = vld [vmem:[%s0 + $0x118] sm:$0xff]
  %v44 = vld [vmem:[%s0 + $0x120] sm:$0xff]
  %v45 = vld [vmem:[%s0 + $0x128] sm:$0xff]
  %v46 = vld [vmem:[%s0 + $0x130] sm:$0xff]
  %v47 = vld [vmem:[%s0 + $0x138] sm:$0xff]
  %v48 = vld [vmem:[%s0 + $0x140] sm:$0xff]
  %v49 = vld [vmem:[%s0 + $0x148] sm:$0xff]
  %v50 = vld [vmem:[%s0 + $0x150] sm:$0xff]
  %v51 = vld [vmem:[%s0 + $0x158] sm:$0xff]
  %v52 = vld [vmem:[%s0 + $0x160] sm:$0xff]
  %v53 = vld [vmem:[%s0 + $0x168] sm:$0xff]
  %v54 = vld [vmem:[%s0 + $0x170] sm:$0xff]
  %v55 = vld [vmem:[%s0 + $0x178] sm:$0xff]
  %v56 = vld [vmem:[%s0 + $0x180] sm:$0xff]
  %v57 = vld [vmem:[%s0 + $0x188] sm:$0xff]
  %v58 = vld [vmem:[%s0 + $0x190] sm:$0xff]
  %v59 = vld [vmem:[%s0 + $0x198] sm:$0xff]
  %v60 = vld [vmem:[%s0 + $0x1a0] sm:$0xff]
  %v61 = vld [vmem:[%s0 + $0x1a8] sm:$0xff]
  %v62 = vld [vmem:[%s0 + $0x1b0] sm:$0xff]
  %v63 = vld [vmem:[%s0 + $0x1b8] sm:$0xff]
  %v64 = vld [vmem:[%s0 + $0x1c0] sm:$0xff]
  %v65 = vld [vmem:[%s0 + $0x1c8] sm:$0xff]
  %v66 = vld [vmem:[%s0 + $0x1d0] sm:$0xff]
  %v67 = vld [vmem:[%s0 + $0x1d8] sm:$0xff]
  %v68 = vld [vmem:[%s0 + $0x1e0] sm:$0xff]
  %v69 = vld [vmem:[%s0 + $0x1e8] sm:$0xff]
  %v70 = vld [vmem:[%s0 + $0x1f0] sm:$0xff]
  %v71 = vld [vmem:[%s0 + $0x1f8] sm:$0xff]
  %vm72 = vcmask 523264
  %v73 = vsel %vm72, %v8, 0.0
  %74 = vadd.xlane.f32.xlu0 %v73
  %v75 = vpop.xlane.xlu0 %74
  %v76 = vsel %vm72, %v9, 0.0
  %77 = vadd.xlane.f32.xlu0 %v76
  %v78 = vpop.xlane.xlu0 %77
  %v79 = vsel %vm72, %v10, 0.0
  %80 = vadd.xlane.f32.xlu0 %v79
  %v81 = vpop.xlane.xlu0 %80
  %v82 = vsel %vm72, %v11, 0.0
  %83 = vadd.xlane.f32.xlu0 %v82
  %v84 = vpop.xlane.xlu0 %83
  %v85 = vsel %vm72, %v12, 0.0
  %86 = vadd.xlane.f32.xlu0 %v85
  %v87 = vpop.xlane.xlu0 %86
  %v88 = vsel %vm72, %v13, 0.0
  %89 = vadd.xlane.f32.xlu0 %v88
  %v90 = vpop.xlane.xlu0 %89
  %v91 = vsel %vm72, %v14, 0.0
  %92 = vadd.xlane.f32.xlu0 %v91
  %v93 = vpop.xlane.xlu0 %92
  %v94 = vsel %vm72, %v15, 0.0
  %95 = vadd.xlane.f32.xlu0 %v94
  %v96 = vpop.xlane.xlu0 %95
  %v97 = vsel %vm72, %v16, 0.0
  %98 = vadd.xlane.f32.xlu0 %v97
  %v99 = vpop.xlane.xlu0 %98
  %v100 = vsel %vm72, %v17, 0.0
  %101 = vadd.xlane.f32.xlu0 %v100
  %v102 = vpop.xlane.xlu0 %101
  %v103 = vsel %vm72, %v18, 0.0
  %104 = vadd.xlane.f32.xlu0 %v103
  %v105 = vpop.xlane.xlu0 %104
  %v106 = vsel %vm72, %v19, 0.0
  %107 = vadd.xlane.f32.xlu0 %v106
  %v108 = vpop.xlane.xlu0 %107
  %v109 = vsel %vm72, %v20, 0.0
  %110 = vadd.xlane.f32.xlu0 %v109
  %v111 = vpop.xlane.xlu0 %110
  %v112 = vsel %vm72, %v21, 0.0
  %113 = vadd.xlane.f32.xlu0 %v112
  %v114 = vpop.xlane.xlu0 %113
  %v115 = vsel %vm72, %v22, 0.0
  %116 = vadd.xlane.f32.xlu0 %v115
  %v117 = vpop.xlane.xlu0 %116
  %v118 = vsel %vm72, %v23, 0.0
  %119 = vadd.xlane.f32.xlu0 %v118
  %v120 = vpop.xlane.xlu0 %119
  %v121 = vsel %vm72, %v24, 0.0
  %122 = vadd.xlane.f32.xlu0 %v121
  %v123 = vpop.xlane.xlu0 %122
  %v124 = vsel %vm72, %v25, 0.0
  %125 = vadd.xlane.f32.xlu0 %v124
  %v126 = vpop.xlane.xlu0 %125
  %v127 = vsel %vm72, %v26, 0.0
  %128 = vadd.xlane.f32.xlu0 %v127
  %v129 = vpop.xlane.xlu0 %128
  %v130 = vsel %vm72, %v27, 0.0
  %131 = vadd.xlane.f32.xlu0 %v130
  %v132 = vpop.xlane.xlu0 %131
  %v133 = vsel %vm72, %v28, 0.0
  %134 = vadd.xlane.f32.xlu0 %v133
  %v135 = vpop.xlane.xlu0 %134
  %v136 = vsel %vm72, %v29, 0.0
  %137 = vadd.xlane.f32.xlu0 %v136
  %v138 = vpop.xlane.xlu0 %137
  %v139 = vsel %vm72, %v30, 0.0
  %140 = vadd.xlane.f32.xlu0 %v139
  %v141 = vpop.xlane.xlu0 %140
  %v142 = vsel %vm72, %v31, 0.0
  %143 = vadd.xlane.f32.xlu0 %v142
  %v144 = vpop.xlane.xlu0 %143
  %v145 = vsel %vm72, %v32, 0.0
  %146 = vadd.xlane.f32.xlu0 %v145
  %v147 = vpop.xlane.xlu0 %146
  %v148 = vsel %vm72, %v33, 0.0
  %149 = vadd.xlane.f32.xlu0 %v148
  %v150 = vpop.xlane.xlu0 %149
  %v151 = vsel %vm72, %v34, 0.0
  %152 = vadd.xlane.f32.xlu0 %v151
  %v153 = vpop.xlane.xlu0 %152
  %v154 = vsel %vm72, %v35, 0.0
  %155 = vadd.xlane.f32.xlu0 %v154
  %v156 = vpop.xlane.xlu0 %155
  %v157 = vsel %vm72, %v36, 0.0
  %158 = vadd.xlane.f32.xlu0 %v157
  %v159 = vpop.xlane.xlu0 %158
  %v160 = vsel %vm72, %v37, 0.0
  %161 = vadd.xlane.f32.xlu0 %v160
  %v162 = vpop.xlane.xlu0 %161
  %v163 = vsel %vm72, %v38, 0.0
  %164 = vadd.xlane.f32.xlu0 %v163
  %v165 = vpop.xlane.xlu0 %164
  %v166 = vsel %vm72, %v39, 0.0
  %167 = vadd.xlane.f32.xlu0 %v166
  %v168 = vpop.xlane.xlu0 %167
  %v169 = vsel %vm72, %v40, 0.0
  %170 = vadd.xlane.f32.xlu0 %v169
  %v171 = vpop.xlane.xlu0 %170
  %v172 = vsel %vm72, %v41, 0.0
  %173 = vadd.xlane.f32.xlu0 %v172
  %v174 = vpop.xlane.xlu0 %173
  %v175 = vsel %vm72, %v42, 0.0
  %176 = vadd.xlane.f32.xlu0 %v175
  %v177 = vpop.xlane.xlu0 %176
  %v178 = vsel %vm72, %v43, 0.0
  %179 = vadd.xlane.f32.xlu0 %v178
  %v180 = vpop.xlane.xlu0 %179
  %v181 = vsel %vm72, %v44, 0.0
  %182 = vadd.xlane.f32.xlu0 %v181
  %v183 = vpop.xlane.xlu0 %182
  %v184 = vsel %vm72, %v45, 0.0
  %185 = vadd.xlane.f32.xlu0 %v184
  %v186 = vpop.xlane.xlu0 %185
  %v187 = vsel %vm72, %v46, 0.0
  %188 = vadd.xlane.f32.xlu0 %v187
  %v189 = vpop.xlane.xlu0 %188
  %v190 = vsel %vm72, %v47, 0.0
  %191 = vadd.xlane.f32.xlu0 %v190
  %v192 = vpop.xlane.xlu0 %191
  %v193 = vsel %vm72, %v48, 0.0
  %194 = vadd.xlane.f32.xlu0 %v193
  %v195 = vpop.xlane.xlu0 %194
  %v196 = vsel %vm72, %v49, 0.0
  %197 = vadd.xlane.f32.xlu0 %v196
  %v198 = vpop.xlane.xlu0 %197
  %v199 = vsel %vm72, %v50, 0.0
  %200 = vadd.xlane.f32.xlu0 %v199
  %v201 = vpop.xlane.xlu0 %200
  %v202 = vsel %vm72, %v51, 0.0
  %203 = vadd.xlane.f32.xlu0 %v202
  %v204 = vpop.xlane.xlu0 %203
  %v205 = vsel %vm72, %v52, 0.0
  %206 = vadd.xlane.f32.xlu0 %v205
  %v207 = vpop.xlane.xlu0 %206
  %v208 = vsel %vm72, %v53, 0.0
  %209 = vadd.xlane.f32.xlu0 %v208
  %v210 = vpop.xlane.xlu0 %209
  %v211 = vsel %vm72, %v54, 0.0
  %212 = vadd.xlane.f32.xlu0 %v211
  %v213 = vpop.xlane.xlu0 %212
  %v214 = vsel %vm72, %v55, 0.0
  %215 = vadd.xlane.f32.xlu0 %v214
  %v216 = vpop.xlane.xlu0 %215
  %v217 = vsel %vm72, %v56, 0.0
  %218 = vadd.xlane.f32.xlu0 %v217
  %v219 = vpop.xlane.xlu0 %218
  %v220 = vsel %vm72, %v57, 0.0
  %221 = vadd.xlane.f32.xlu0 %v220
  %v222 = vpop.xlane.xlu0 %221
  %v223 = vsel %vm72, %v58, 0.0
  %224 = vadd.xlane.f32.xlu0 %v223
  %v225 = vpop.xlane.xlu0 %224
  %v226 = vsel %vm72, %v59, 0.0
  %227 = vadd.xlane.f32.xlu0 %v226
  %v228 = vpop.xlane.xlu0 %227
  %v229 = vsel %vm72, %v60, 0.0
  %230 = vadd.xlane.f32.xlu0 %v229
  %v231 = vpop.xlane.xlu0 %230
  %v232 = vsel %vm72, %v61, 0.0
  %233 = vadd.xlane.f32.xlu0 %v232
  %v234 = vpop.xlane.xlu0 %233
  %v235 = vsel %vm72, %v62, 0.0
  %236 = vadd.xlane.f32.xlu0 %v235
  %v237 = vpop.xlane.xlu0 %236
  %v238 = vsel %vm72, %v63, 0.0
  %239 = vadd.xlane.f32.xlu0 %v238
  %v240 = vpop.xlane.xlu0 %239
  %v241 = vsel %vm72, %v64, 0.0
  %242 = vadd.xlane.f32.xlu0 %v241
  %v243 = vpop.xlane.xlu0 %242
  %v244 = vsel %vm72, %v65, 0.0
  %245 = vadd.xlane.f32.xlu0 %v244
  %v246 = vpop.xlane.xlu0 %245
  %v247 = vsel %vm72, %v66, 0.0
  %248 = vadd.xlane.f32.xlu0 %v247
  %v249 = vpop.xlane.xlu0 %248
  %v250 = vsel %vm72, %v67, 0.0
  %251 = vadd.xlane.f32.xlu0 %v250
  %v252 = vpop.xlane.xlu0 %251
  %v253 = vsel %vm72, %v68, 0.0
  %254 = vadd.xlane.f32.xlu0 %v253
  %v255 = vpop.xlane.xlu0 %254
  %v256 = vsel %vm72, %v69, 0.0
  %257 = vadd.xlane.f32.xlu0 %v256
  %v258 = vpop.xlane.xlu0 %257
  %v259 = vsel %vm72, %v70, 0.0
  %260 = vadd.xlane.f32.xlu0 %v259
  %v261 = vpop.xlane.xlu0 %260
  %v262 = vsel %vm72, %v71, 0.0
  %263 = vadd.xlane.f32.xlu0 %v262
  %v264 = vpop.xlane.xlu0 %263
  %v265 = vrcp.pop 64.0
  %v266 = vmul.f32 %v75, %v265
  %v267 = vmul.f32 %v78, %v265
  %v268 = vmul.f32 %v81, %v265
  %v269 = vmul.f32 %v84, %v265
  %v270 = vmul.f32 %v87, %v265
  %v271 = vmul.f32 %v90, %v265
  %v272 = vmul.f32 %v93, %v265
  %v273 = vmul.f32 %v96, %v265
  %v274 = vmul.f32 %v99, %v265
  %v275 = vmul.f32 %v102, %v265
  %v276 = vmul.f32 %v105, %v265
  %v277 = vmul.f32 %v108, %v265
  %v278 = vmul.f32 %v111, %v265
  %v279 = vmul.f32 %v114, %v265
  %v280 = vmul.f32 %v117, %v265
  %v281 = vmul.f32 %v120, %v265
  %v282 = vmul.f32 %v123, %v265
  %v283 = vmul.f32 %v126, %v265
  %v284 = vmul.f32 %v129, %v265
  %v285 = vmul.f32 %v132, %v265
  %v286 = vmul.f32 %v135, %v265
  %v287 = vmul.f32 %v138, %v265
  %v288 = vmul.f32 %v141, %v265
  %v289 = vmul.f32 %v144, %v265
  %v290 = vmul.f32 %v147, %v265
  %v291 = vmul.f32 %v150, %v265
  %v292 = vmul.f32 %v153, %v265
  %v293 = vmul.f32 %v156, %v265
  %v294 = vmul.f32 %v159, %v265
  %v295 = vmul.f32 %v162, %v265
  %v296 = vmul.f32 %v165, %v265
  %v297 = vmul.f32 %v168, %v265
  %v298 = vmul.f32 %v171, %v265
  %v299 = vmul.f32 %v174, %v265
  %v300 = vmul.f32 %v177, %v265
  %v301 = vmul.f32 %v180, %v265
  %v302 = vmul.f32 %v183, %v265
  %v303 = vmul.f32 %v186, %v265
  %v304 = vmul.f32 %v189, %v265
  %v305 = vmul.f32 %v192, %v265
  %v306 = vmul.f32 %v195, %v265
  %v307 = vmul.f32 %v198, %v265
  %v308 = vmul.f32 %v201, %v265
  %v309 = vmul.f32 %v204, %v265
  %v310 = vmul.f32 %v207, %v265
  %v311 = vmul.f32 %v210, %v265
  %v312 = vmul.f32 %v213, %v265
  %v313 = vmul.f32 %v216, %v265
  %v314 = vmul.f32 %v219, %v265
  %v315 = vmul.f32 %v222, %v265
  %v316 = vmul.f32 %v225, %v265
  %v317 = vmul.f32 %v228, %v265
  %v318 = vmul.f32 %v231, %v265
  %v319 = vmul.f32 %v234, %v265
  %v320 = vmul.f32 %v237, %v265
  %v321 = vmul.f32 %v240, %v265
  %v322 = vmul.f32 %v243, %v265
  %v323 = vmul.f32 %v246, %v265
  %v324 = vmul.f32 %v249, %v265
  %v325 = vmul.f32 %v252, %v265
  %v326 = vmul.f32 %v255, %v265
  %v327 = vmul.f32 %v258, %v265
  %v328 = vmul.f32 %v261, %v265
  %v329 = vmul.f32 %v264, %v265
  %v395 = vunpack.c.l.s4 269488144
  %v396 = vunpack.c.0.s8 %v395
  %v397 = vlaneseq
  %v398 = vshrl.u32 %v397, 7
  %v399 = vsub.s32 %v396, %v398
  %v400 = vrot.slane %v266, %v399
  %v402 = vunpack.c.l.s4 842150450
  %v403 = vunpack.c.0.s8 %v402
  %v404 = vlaneseq
  %v405 = vshrl.u32 %v404, 7
  %v406 = vsub.s32 %v403, %v405
  %v407 = vrot.slane %v266, %v406
  %v409 = vunpack.c.l.s4 1414812756
  %v410 = vunpack.c.0.s8 %v409
  %v411 = vlaneseq
  %v412 = vshrl.u32 %v411, 7
  %v413 = vsub.s32 %v410, %v412
  %v414 = vrot.slane %v266, %v413
  %v416 = vunpack.c.l.s4 1987475062
  %v417 = vunpack.c.0.s8 %v416
  %v418 = vlaneseq
  %v419 = vshrl.u32 %v418, 7
  %v420 = vsub.s32 %v417, %v419
  %v421 = vrot.slane %v266, %v420
  %v423 = vunpack.c.l.s4 269488144
  %v424 = vunpack.c.0.s8 %v423
  %v425 = vlaneseq
  %v426 = vshrl.u32 %v425, 7
  %v427 = vsub.s32 %v424, %v426
  %v428 = vrot.slane %v267, %v427
  %v430 = vunpack.c.l.s4 842150450
  %v431 = vunpack.c.0.s8 %v430
  %v432 = vlaneseq
  %v433 = vshrl.u32 %v432, 7
  %v434 = vsub.s32 %v431, %v433
  %v435 = vrot.slane %v267, %v434
  %v437 = vunpack.c.l.s4 1414812756
  %v438 = vunpack.c.0.s8 %v437
  %v439 = vlaneseq
  %v440 = vshrl.u32 %v439, 7
  %v441 = vsub.s32 %v438, %v440
  %v442 = vrot.slane %v267, %v441
  %v444 = vunpack.c.l.s4 1987475062
  %v445 = vunpack.c.0.s8 %v444
  %v446 = vlaneseq
  %v447 = vshrl.u32 %v446, 7
  %v448 = vsub.s32 %v445, %v447
  %v449 = vrot.slane %v267, %v448
  %v451 = vunpack.c.l.s4 269488144
  %v452 = vunpack.c.0.s8 %v451
  %v453 = vlaneseq
  %v454 = vshrl.u32 %v453, 7
  %v455 = vsub.s32 %v452, %v454
  %v456 = vrot.slane %v268, %v455
  %v458 = vunpack.c.l.s4 842150450
  %v459 = vunpack.c.0.s8 %v458
  %v460 = vlaneseq
  %v461 = vshrl.u32 %v460, 7
  %v462 = vsub.s32 %v459, %v461
  %v463 = vrot.slane %v268, %v462
  %v465 = vunpack.c.l.s4 1414812756
  %v466 = vunpack.c.0.s8 %v465
  %v467 = vlaneseq
  %v468 = vshrl.u32 %v467, 7
  %v469 = vsub.s32 %v466, %v468
  %v470 = vrot.slane %v268, %v469
  %v472 = vunpack.c.l.s4 1987475062
  %v473 = vunpack.c.0.s8 %v472
  %v474 = vlaneseq
  %v475 = vshrl.u32 %v474, 7
  %v476 = vsub.s32 %v473, %v475
  %v477 = vrot.slane %v268, %v476
  %v479 = vunpack.c.l.s4 269488144
  %v480 = vunpack.c.0.s8 %v479
  %v481 = vlaneseq
  %v482 = vshrl.u32 %v481, 7
  %v483 = vsub.s32 %v480, %v482
  %v484 = vrot.slane %v269, %v483
  %v486 = vunpack.c.l.s4 842150450
  %v487 = vunpack.c.0.s8 %v486
  %v488 = vlaneseq
  %v489 = vshrl.u32 %v488, 7
  %v490 = vsub.s32 %v487, %v489
  %v491 = vrot.slane %v269, %v490
  %v493 = vunpack.c.l.s4 1414812756
  %v494 = vunpack.c.0.s8 %v493
  %v495 = vlaneseq
  %v496 = vshrl.u32 %v495, 7
  %v497 = vsub.s32 %v494, %v496
  %v498 = vrot.slane %v269, %v497
  %v500 = vunpack.c.l.s4 1987475062
  %v501 = vunpack.c.0.s8 %v500
  %v502 = vlaneseq
  %v503 = vshrl.u32 %v502, 7
  %v504 = vsub.s32 %v501, %v503
  %v505 = vrot.slane %v269, %v504
  %v507 = vunpack.c.l.s4 269488144
  %v508 = vunpack.c.0.s8 %v507
  %v509 = vlaneseq
  %v510 = vshrl.u32 %v509, 7
  %v511 = vsub.s32 %v508, %v510
  %v512 = vrot.slane %v270, %v511
  %v514 = vunpack.c.l.s4 842150450
  %v515 = vunpack.c.0.s8 %v514
  %v516 = vlaneseq
  %v517 = vshrl.u32 %v516, 7
  %v518 = vsub.s32 %v515, %v517
  %v519 = vrot.slane %v270, %v518
  %v521 = vunpack.c.l.s4 1414812756
  %v522 = vunpack.c.0.s8 %v521
  %v523 = vlaneseq
  %v524 = vshrl.u32 %v523, 7
  %v525 = vsub.s32 %v522, %v524
  %v526 = vrot.slane %v270, %v525
  %v528 = vunpack.c.l.s4 1987475062
  %v529 = vunpack.c.0.s8 %v528
  %v530 = vlaneseq
  %v531 = vshrl.u32 %v530, 7
  %v532 = vsub.s32 %v529, %v531
  %v533 = vrot.slane %v270, %v532
  %v535 = vunpack.c.l.s4 269488144
  %v536 = vunpack.c.0.s8 %v535
  %v537 = vlaneseq
  %v538 = vshrl.u32 %v537, 7
  %v539 = vsub.s32 %v536, %v538
  %v540 = vrot.slane %v271, %v539
  %v542 = vunpack.c.l.s4 842150450
  %v543 = vunpack.c.0.s8 %v542
  %v544 = vlaneseq
  %v545 = vshrl.u32 %v544, 7
  %v546 = vsub.s32 %v543, %v545
  %v547 = vrot.slane %v271, %v546
  %v549 = vunpack.c.l.s4 1414812756
  %v550 = vunpack.c.0.s8 %v549
  %v551 = vlaneseq
  %v552 = vshrl.u32 %v551, 7
  %v553 = vsub.s32 %v550, %v552
  %v554 = vrot.slane %v271, %v553
  %v556 = vunpack.c.l.s4 1987475062
  %v557 = vunpack.c.0.s8 %v556
  %v558 = vlaneseq
  %v559 = vshrl.u32 %v558, 7
  %v560 = vsub.s32 %v557, %v559
  %v561 = vrot.slane %v271, %v560
  %v563 = vunpack.c.l.s4 269488144
  %v564 = vunpack.c.0.s8 %v563
  %v565 = vlaneseq
  %v566 = vshrl.u32 %v565, 7
  %v567 = vsub.s32 %v564, %v566
  %v568 = vrot.slane %v272, %v567
  %v570 = vunpack.c.l.s4 842150450
  %v571 = vunpack.c.0.s8 %v570
  %v572 = vlaneseq
  %v573 = vshrl.u32 %v572, 7
  %v574 = vsub.s32 %v571, %v573
  %v575 = vrot.slane %v272, %v574
  %v577 = vunpack.c.l.s4 1414812756
  %v578 = vunpack.c.0.s8 %v577
  %v579 = vlaneseq
  %v580 = vshrl.u32 %v579, 7
  %v581 = vsub.s32 %v578, %v580
  %v582 = vrot.slane %v272, %v581
  %v584 = vunpack.c.l.s4 1987475062
  %v585 = vunpack.c.0.s8 %v584
  %v586 = vlaneseq
  %v587 = vshrl.u32 %v586, 7
  %v588 = vsub.s32 %v585, %v587
  %v589 = vrot.slane %v272, %v588
  %v591 = vunpack.c.l.s4 269488144
  %v592 = vunpack.c.0.s8 %v591
  %v593 = vlaneseq
  %v594 = vshrl.u32 %v593, 7
  %v595 = vsub.s32 %v592, %v594
  %v596 = vrot.slane %v273, %v595
  %v598 = vunpack.c.l.s4 842150450
  %v599 = vunpack.c.0.s8 %v598
  %v600 = vlaneseq
  %v601 = vshrl.u32 %v600, 7
  %v602 = vsub.s32 %v599, %v601
  %v603 = vrot.slane %v273, %v602
  %v605 = vunpack.c.l.s4 1414812756
  %v606 = vunpack.c.0.s8 %v605
  %v607 = vlaneseq
  %v608 = vshrl.u32 %v607, 7
  %v609 = vsub.s32 %v606, %v608
  %v610 = vrot.slane %v273, %v609
  %v612 = vunpack.c.l.s4 1987475062
  %v613 = vunpack.c.0.s8 %v612
  %v614 = vlaneseq
  %v615 = vshrl.u32 %v614, 7
  %v616 = vsub.s32 %v613, %v615
  %v617 = vrot.slane %v273, %v616
  %v619 = vunpack.c.l.s4 269488144
  %v620 = vunpack.c.0.s8 %v619
  %v621 = vlaneseq
  %v622 = vshrl.u32 %v621, 7
  %v623 = vsub.s32 %v620, %v622
  %v624 = vrot.slane %v274, %v623
  %v626 = vunpack.c.l.s4 842150450
  %v627 = vunpack.c.0.s8 %v626
  %v628 = vlaneseq
  %v629 = vshrl.u32 %v628, 7
  %v630 = vsub.s32 %v627, %v629
  %v631 = vrot.slane %v274, %v630
  %v633 = vunpack.c.l.s4 1414812756
  %v634 = vunpack.c.0.s8 %v633
  %v635 = vlaneseq
  %v636 = vshrl.u32 %v635, 7
  %v637 = vsub.s32 %v634, %v636
  %v638 = vrot.slane %v274, %v637
  %v640 = vunpack.c.l.s4 1987475062
  %v641 = vunpack.c.0.s8 %v640
  %v642 = vlaneseq
  %v643 = vshrl.u32 %v642, 7
  %v644 = vsub.s32 %v641, %v643
  %v645 = vrot.slane %v274, %v644
  %v647 = vunpack.c.l.s4 269488144
  %v648 = vunpack.c.0.s8 %v647
  %v649 = vlaneseq
  %v650 = vshrl.u32 %v649, 7
  %v651 = vsub.s32 %v648, %v650
  %v652 = vrot.slane %v275, %v651
  %v654 = vunpack.c.l.s4 842150450
  %v655 = vunpack.c.0.s8 %v654
  %v656 = vlaneseq
  %v657 = vshrl.u32 %v656, 7
  %v658 = vsub.s32 %v655, %v657
  %v659 = vrot.slane %v275, %v658
  %v661 = vunpack.c.l.s4 1414812756
  %v662 = vunpack.c.0.s8 %v661
  %v663 = vlaneseq
  %v664 = vshrl.u32 %v663, 7
  %v665 = vsub.s32 %v662, %v664
  %v666 = vrot.slane %v275, %v665
  %v668 = vunpack.c.l.s4 1987475062
  %v669 = vunpack.c.0.s8 %v668
  %v670 = vlaneseq
  %v671 = vshrl.u32 %v670, 7
  %v672 = vsub.s32 %v669, %v671
  %v673 = vrot.slane %v275, %v672
  %v675 = vunpack.c.l.s4 269488144
  %v676 = vunpack.c.0.s8 %v675
  %v677 = vlaneseq
  %v678 = vshrl.u32 %v677, 7
  %v679 = vsub.s32 %v676, %v678
  %v680 = vrot.slane %v276, %v679
  %v682 = vunpack.c.l.s4 842150450
  %v683 = vunpack.c.0.s8 %v682
  %v684 = vlaneseq
  %v685 = vshrl.u32 %v684, 7
  %v686 = vsub.s32 %v683, %v685
  %v687 = vrot.slane %v276, %v686
  %v689 = vunpack.c.l.s4 1414812756
  %v690 = vunpack.c.0.s8 %v689
  %v691 = vlaneseq
  %v692 = vshrl.u32 %v691, 7
  %v693 = vsub.s32 %v690, %v692
  %v694 = vrot.slane %v276, %v693
  %v696 = vunpack.c.l.s4 1987475062
  %v697 = vunpack.c.0.s8 %v696
  %v698 = vlaneseq
  %v699 = vshrl.u32 %v698, 7
  %v700 = vsub.s32 %v697, %v699
  %v701 = vrot.slane %v276, %v700
  %v703 = vunpack.c.l.s4 269488144
  %v704 = vunpack.c.0.s8 %v703
  %v705 = vlaneseq
  %v706 = vshrl.u32 %v705, 7
  %v707 = vsub.s32 %v704, %v706
  %v708 = vrot.slane %v277, %v707
  %v710 = vunpack.c.l.s4 842150450
  %v711 = vunpack.c.0.s8 %v710
  %v712 = vlaneseq
  %v713 = vshrl.u32 %v712, 7
  %v714 = vsub.s32 %v711, %v713
  %v715 = vrot.slane %v277, %v714
  %v717 = vunpack.c.l.s4 1414812756
  %v718 = vunpack.c.0.s8 %v717
  %v719 = vlaneseq
  %v720 = vshrl.u32 %v719, 7
  %v721 = vsub.s32 %v718, %v720
  %v722 = vrot.slane %v277, %v721
  %v724 = vunpack.c.l.s4 1987475062
  %v725 = vunpack.c.0.s8 %v724
  %v726 = vlaneseq
  %v727 = vshrl.u32 %v726, 7
  %v728 = vsub.s32 %v725, %v727
  %v729 = vrot.slane %v277, %v728
  %v731 = vunpack.c.l.s4 269488144
  %v732 = vunpack.c.0.s8 %v731
  %v733 = vlaneseq
  %v734 = vshrl.u32 %v733, 7
  %v735 = vsub.s32 %v732, %v734
  %v736 = vrot.slane %v278, %v735
  %v738 = vunpack.c.l.s4 842150450
  %v739 = vunpack.c.0.s8 %v738
  %v740 = vlaneseq
  %v741 = vshrl.u32 %v740, 7
  %v742 = vsub.s32 %v739, %v741
  %v743 = vrot.slane %v278, %v742
  %v745 = vunpack.c.l.s4 1414812756
  %v746 = vunpack.c.0.s8 %v745
  %v747 = vlaneseq
  %v748 = vshrl.u32 %v747, 7
  %v749 = vsub.s32 %v746, %v748
  %v750 = vrot.slane %v278, %v749
  %v752 = vunpack.c.l.s4 1987475062
  %v753 = vunpack.c.0.s8 %v752
  %v754 = vlaneseq
  %v755 = vshrl.u32 %v754, 7
  %v756 = vsub.s32 %v753, %v755
  %v757 = vrot.slane %v278, %v756
  %v759 = vunpack.c.l.s4 269488144
  %v760 = vunpack.c.0.s8 %v759
  %v761 = vlaneseq
  %v762 = vshrl.u32 %v761, 7
  %v763 = vsub.s32 %v760, %v762
  %v764 = vrot.slane %v279, %v763
  %v766 = vunpack.c.l.s4 842150450
  %v767 = vunpack.c.0.s8 %v766
  %v768 = vlaneseq
  %v769 = vshrl.u32 %v768, 7
  %v770 = vsub.s32 %v767, %v769
  %v771 = vrot.slane %v279, %v770
  %v773 = vunpack.c.l.s4 1414812756
  %v774 = vunpack.c.0.s8 %v773
  %v775 = vlaneseq
  %v776 = vshrl.u32 %v775, 7
  %v777 = vsub.s32 %v774, %v776
  %v778 = vrot.slane %v279, %v777
  %v780 = vunpack.c.l.s4 1987475062
  %v781 = vunpack.c.0.s8 %v780
  %v782 = vlaneseq
  %v783 = vshrl.u32 %v782, 7
  %v784 = vsub.s32 %v781, %v783
  %v785 = vrot.slane %v279, %v784
  %v787 = vunpack.c.l.s4 269488144
  %v788 = vunpack.c.0.s8 %v787
  %v789 = vlaneseq
  %v790 = vshrl.u32 %v789, 7
  %v791 = vsub.s32 %v788, %v790
  %v792 = vrot.slane %v280, %v791
  %v794 = vunpack.c.l.s4 842150450
  %v795 = vunpack.c.0.s8 %v794
  %v796 = vlaneseq
  %v797 = vshrl.u32 %v796, 7
  %v798 = vsub.s32 %v795, %v797
  %v799 = vrot.slane %v280, %v798
  %v801 = vunpack.c.l.s4 1414812756
  %v802 = vunpack.c.0.s8 %v801
  %v803 = vlaneseq
  %v804 = vshrl.u32 %v803, 7
  %v805 = vsub.s32 %v802, %v804
  %v806 = vrot.slane %v280, %v805
  %v808 = vunpack.c.l.s4 1987475062
  %v809 = vunpack.c.0.s8 %v808
  %v810 = vlaneseq
  %v811 = vshrl.u32 %v810, 7
  %v812 = vsub.s32 %v809, %v811
  %v813 = vrot.slane %v280, %v812
  %v815 = vunpack.c.l.s4 269488144
  %v816 = vunpack.c.0.s8 %v815
  %v817 = vlaneseq
  %v818 = vshrl.u32 %v817, 7
  %v819 = vsub.s32 %v816, %v818
  %v820 = vrot.slane %v281, %v819
  %v822 = vunpack.c.l.s4 842150450
  %v823 = vunpack.c.0.s8 %v822
  %v824 = vlaneseq
  %v825 = vshrl.u32 %v824, 7
  %v826 = vsub.s32 %v823, %v825
  %v827 = vrot.slane %v281, %v826
  %v829 = vunpack.c.l.s4 1414812756
  %v830 = vunpack.c.0.s8 %v829
  %v831 = vlaneseq
  %v832 = vshrl.u32 %v831, 7
  %v833 = vsub.s32 %v830, %v832
  %v834 = vrot.slane %v281, %v833
  %v836 = vunpack.c.l.s4 1987475062
  %v837 = vunpack.c.0.s8 %v836
  %v838 = vlaneseq
  %v839 = vshrl.u32 %v838, 7
  %v840 = vsub.s32 %v837, %v839
  %v841 = vrot.slane %v281, %v840
  %v843 = vunpack.c.l.s4 269488144
  %v844 = vunpack.c.0.s8 %v843
  %v845 = vlaneseq
  %v846 = vshrl.u32 %v845, 7
  %v847 = vsub.s32 %v844, %v846
  %v848 = vrot.slane %v282, %v847
  %v850 = vunpack.c.l.s4 842150450
  %v851 = vunpack.c.0.s8 %v850
  %v852 = vlaneseq
  %v853 = vshrl.u32 %v852, 7
  %v854 = vsub.s32 %v851, %v853
  %v855 = vrot.slane %v282, %v854
  %v857 = vunpack.c.l.s4 1414812756
  %v858 = vunpack.c.0.s8 %v857
  %v859 = vlaneseq
  %v860 = vshrl.u32 %v859, 7
  %v861 = vsub.s32 %v858, %v860
  %v862 = vrot.slane %v282, %v861
  %v864 = vunpack.c.l.s4 1987475062
  %v865 = vunpack.c.0.s8 %v864
  %v866 = vlaneseq
  %v867 = vshrl.u32 %v866, 7
  %v868 = vsub.s32 %v865, %v867
  %v869 = vrot.slane %v282, %v868
  %v871 = vunpack.c.l.s4 269488144
  %v872 = vunpack.c.0.s8 %v871
  %v873 = vlaneseq
  %v874 = vshrl.u32 %v873, 7
  %v875 = vsub.s32 %v872, %v874
  %v876 = vrot.slane %v283, %v875
  %v878 = vunpack.c.l.s4 842150450
  %v879 = vunpack.c.0.s8 %v878
  %v880 = vlaneseq
  %v881 = vshrl.u32 %v880, 7
  %v882 = vsub.s32 %v879, %v881
  %v883 = vrot.slane %v283, %v882
  %v885 = vunpack.c.l.s4 1414812756
  %v886 = vunpack.c.0.s8 %v885
  %v887 = vlaneseq
  %v888 = vshrl.u32 %v887, 7
  %v889 = vsub.s32 %v886, %v888
  %v890 = vrot.slane %v283, %v889
  %v892 = vunpack.c.l.s4 1987475062
  %v893 = vunpack.c.0.s8 %v892
  %v894 = vlaneseq
  %v895 = vshrl.u32 %v894, 7
  %v896 = vsub.s32 %v893, %v895
  %v897 = vrot.slane %v283, %v896
  %v899 = vunpack.c.l.s4 269488144
  %v900 = vunpack.c.0.s8 %v899
  %v901 = vlaneseq
  %v902 = vshrl.u32 %v901, 7
  %v903 = vsub.s32 %v900, %v902
  %v904 = vrot.slane %v284, %v903
  %v906 = vunpack.c.l.s4 842150450
  %v907 = vunpack.c.0.s8 %v906
  %v908 = vlaneseq
  %v909 = vshrl.u32 %v908, 7
  %v910 = vsub.s32 %v907, %v909
  %v911 = vrot.slane %v284, %v910
  %v913 = vunpack.c.l.s4 1414812756
  %v914 = vunpack.c.0.s8 %v913
  %v915 = vlaneseq
  %v916 = vshrl.u32 %v915, 7
  %v917 = vsub.s32 %v914, %v916
  %v918 = vrot.slane %v284, %v917
  %v920 = vunpack.c.l.s4 1987475062
  %v921 = vunpack.c.0.s8 %v920
  %v922 = vlaneseq
  %v923 = vshrl.u32 %v922, 7
  %v924 = vsub.s32 %v921, %v923
  %v925 = vrot.slane %v284, %v924
  %v927 = vunpack.c.l.s4 269488144
  %v928 = vunpack.c.0.s8 %v927
  %v929 = vlaneseq
  %v930 = vshrl.u32 %v929, 7
  %v931 = vsub.s32 %v928, %v930
  %v932 = vrot.slane %v285, %v931
  %v934 = vunpack.c.l.s4 842150450
  %v935 = vunpack.c.0.s8 %v934
  %v936 = vlaneseq
  %v937 = vshrl.u32 %v936, 7
  %v938 = vsub.s32 %v935, %v937
  %v939 = vrot.slane %v285, %v938
  %v941 = vunpack.c.l.s4 1414812756
  %v942 = vunpack.c.0.s8 %v941
  %v943 = vlaneseq
  %v944 = vshrl.u32 %v943, 7
  %v945 = vsub.s32 %v942, %v944
  %v946 = vrot.slane %v285, %v945
  %v948 = vunpack.c.l.s4 1987475062
  %v949 = vunpack.c.0.s8 %v948
  %v950 = vlaneseq
  %v951 = vshrl.u32 %v950, 7
  %v952 = vsub.s32 %v949, %v951
  %v953 = vrot.slane %v285, %v952
  %v955 = vunpack.c.l.s4 269488144
  %v956 = vunpack.c.0.s8 %v955
  %v957 = vlaneseq
  %v958 = vshrl.u32 %v957, 7
  %v959 = vsub.s32 %v956, %v958
  %v960 = vrot.slane %v286, %v959
  %v962 = vunpack.c.l.s4 842150450
  %v963 = vunpack.c.0.s8 %v962
  %v964 = vlaneseq
  %v965 = vshrl.u32 %v964, 7
  %v966 = vsub.s32 %v963, %v965
  %v967 = vrot.slane %v286, %v966
  %v969 = vunpack.c.l.s4 1414812756
  %v970 = vunpack.c.0.s8 %v969
  %v971 = vlaneseq
  %v972 = vshrl.u32 %v971, 7
  %v973 = vsub.s32 %v970, %v972
  %v974 = vrot.slane %v286, %v973
  %v976 = vunpack.c.l.s4 1987475062
  %v977 = vunpack.c.0.s8 %v976
  %v978 = vlaneseq
  %v979 = vshrl.u32 %v978, 7
  %v980 = vsub.s32 %v977, %v979
  %v981 = vrot.slane %v286, %v980
  %v983 = vunpack.c.l.s4 269488144
  %v984 = vunpack.c.0.s8 %v983
  %v985 = vlaneseq
  %v986 = vshrl.u32 %v985, 7
  %v987 = vsub.s32 %v984, %v986
  %v988 = vrot.slane %v287, %v987
  %v990 = vunpack.c.l.s4 842150450
  %v991 = vunpack.c.0.s8 %v990
  %v992 = vlaneseq
  %v993 = vshrl.u32 %v992, 7
  %v994 = vsub.s32 %v991, %v993
  %v995 = vrot.slane %v287, %v994
  %v997 = vunpack.c.l.s4 1414812756
  %v998 = vunpack.c.0.s8 %v997
  %v999 = vlaneseq
  %v1000 = vshrl.u32 %v999, 7
  %v1001 = vsub.s32 %v998, %v1000
  %v1002 = vrot.slane %v287, %v1001
  %v1004 = vunpack.c.l.s4 1987475062
  %v1005 = vunpack.c.0.s8 %v1004
  %v1006 = vlaneseq
  %v1007 = vshrl.u32 %v1006, 7
  %v1008 = vsub.s32 %v1005, %v1007
  %v1009 = vrot.slane %v287, %v1008
  %v1011 = vunpack.c.l.s4 269488144
  %v1012 = vunpack.c.0.s8 %v1011
  %v1013 = vlaneseq
  %v1014 = vshrl.u32 %v1013, 7
  %v1015 = vsub.s32 %v1012, %v1014
  %v1016 = vrot.slane %v288, %v1015
  %v1018 = vunpack.c.l.s4 842150450
  %v1019 = vunpack.c.0.s8 %v1018
  %v1020 = vlaneseq
  %v1021 = vshrl.u32 %v1020, 7
  %v1022 = vsub.s32 %v1019, %v1021
  %v1023 = vrot.slane %v288, %v1022
  %v1025 = vunpack.c.l.s4 1414812756
  %v1026 = vunpack.c.0.s8 %v1025
  %v1027 = vlaneseq
  %v1028 = vshrl.u32 %v1027, 7
  %v1029 = vsub.s32 %v1026, %v1028
  %v1030 = vrot.slane %v288, %v1029
  %v1032 = vunpack.c.l.s4 1987475062
  %v1033 = vunpack.c.0.s8 %v1032
  %v1034 = vlaneseq
  %v1035 = vshrl.u32 %v1034, 7
  %v1036 = vsub.s32 %v1033, %v1035
  %v1037 = vrot.slane %v288, %v1036
  %v1039 = vunpack.c.l.s4 269488144
  %v1040 = vunpack.c.0.s8 %v1039
  %v1041 = vlaneseq
  %v1042 = vshrl.u32 %v1041, 7
  %v1043 = vsub.s32 %v1040, %v1042
  %v1044 = vrot.slane %v289, %v1043
  %v1046 = vunpack.c.l.s4 842150450
  %v1047 = vunpack.c.0.s8 %v1046
  %v1048 = vlaneseq
  %v1049 = vshrl.u32 %v1048, 7
  %v1050 = vsub.s32 %v1047, %v1049
  %v1051 = vrot.slane %v289, %v1050
  %v1053 = vunpack.c.l.s4 1414812756
  %v1054 = vunpack.c.0.s8 %v1053
  %v1055 = vlaneseq
  %v1056 = vshrl.u32 %v1055, 7
  %v1057 = vsub.s32 %v1054, %v1056
  %v1058 = vrot.slane %v289, %v1057
  %v1060 = vunpack.c.l.s4 1987475062
  %v1061 = vunpack.c.0.s8 %v1060
  %v1062 = vlaneseq
  %v1063 = vshrl.u32 %v1062, 7
  %v1064 = vsub.s32 %v1061, %v1063
  %v1065 = vrot.slane %v289, %v1064
  %v1067 = vunpack.c.l.s4 269488144
  %v1068 = vunpack.c.0.s8 %v1067
  %v1069 = vlaneseq
  %v1070 = vshrl.u32 %v1069, 7
  %v1071 = vsub.s32 %v1068, %v1070
  %v1072 = vrot.slane %v290, %v1071
  %v1074 = vunpack.c.l.s4 842150450
  %v1075 = vunpack.c.0.s8 %v1074
  %v1076 = vlaneseq
  %v1077 = vshrl.u32 %v1076, 7
  %v1078 = vsub.s32 %v1075, %v1077
  %v1079 = vrot.slane %v290, %v1078
  %v1081 = vunpack.c.l.s4 1414812756
  %v1082 = vunpack.c.0.s8 %v1081
  %v1083 = vlaneseq
  %v1084 = vshrl.u32 %v1083, 7
  %v1085 = vsub.s32 %v1082, %v1084
  %v1086 = vrot.slane %v290, %v1085
  %v1088 = vunpack.c.l.s4 1987475062
  %v1089 = vunpack.c.0.s8 %v1088
  %v1090 = vlaneseq
  %v1091 = vshrl.u32 %v1090, 7
  %v1092 = vsub.s32 %v1089, %v1091
  %v1093 = vrot.slane %v290, %v1092
  %v1095 = vunpack.c.l.s4 269488144
  %v1096 = vunpack.c.0.s8 %v1095
  %v1097 = vlaneseq
  %v1098 = vshrl.u32 %v1097, 7
  %v1099 = vsub.s32 %v1096, %v1098
  %v1100 = vrot.slane %v291, %v1099
  %v1102 = vunpack.c.l.s4 842150450
  %v1103 = vunpack.c.0.s8 %v1102
  %v1104 = vlaneseq
  %v1105 = vshrl.u32 %v1104, 7
  %v1106 = vsub.s32 %v1103, %v1105
  %v1107 = vrot.slane %v291, %v1106
  %v1109 = vunpack.c.l.s4 1414812756
  %v1110 = vunpack.c.0.s8 %v1109
  %v1111 = vlaneseq
  %v1112 = vshrl.u32 %v1111, 7
  %v1113 = vsub.s32 %v1110, %v1112
  %v1114 = vrot.slane %v291, %v1113
  %v1116 = vunpack.c.l.s4 1987475062
  %v1117 = vunpack.c.0.s8 %v1116
  %v1118 = vlaneseq
  %v1119 = vshrl.u32 %v1118, 7
  %v1120 = vsub.s32 %v1117, %v1119
  %v1121 = vrot.slane %v291, %v1120
  %v1123 = vunpack.c.l.s4 269488144
  %v1124 = vunpack.c.0.s8 %v1123
  %v1125 = vlaneseq
  %v1126 = vshrl.u32 %v1125, 7
  %v1127 = vsub.s32 %v1124, %v1126
  %v1128 = vrot.slane %v292, %v1127
  %v1130 = vunpack.c.l.s4 842150450
  %v1131 = vunpack.c.0.s8 %v1130
  %v1132 = vlaneseq
  %v1133 = vshrl.u32 %v1132, 7
  %v1134 = vsub.s32 %v1131, %v1133
  %v1135 = vrot.slane %v292, %v1134
  %v1137 = vunpack.c.l.s4 1414812756
  %v1138 = vunpack.c.0.s8 %v1137
  %v1139 = vlaneseq
  %v1140 = vshrl.u32 %v1139, 7
  %v1141 = vsub.s32 %v1138, %v1140
  %v1142 = vrot.slane %v292, %v1141
  %v1144 = vunpack.c.l.s4 1987475062
  %v1145 = vunpack.c.0.s8 %v1144
  %v1146 = vlaneseq
  %v1147 = vshrl.u32 %v1146, 7
  %v1148 = vsub.s32 %v1145, %v1147
  %v1149 = vrot.slane %v292, %v1148
  %v1151 = vunpack.c.l.s4 269488144
  %v1152 = vunpack.c.0.s8 %v1151
  %v1153 = vlaneseq
  %v1154 = vshrl.u32 %v1153, 7
  %v1155 = vsub.s32 %v1152, %v1154
  %v1156 = vrot.slane %v293, %v1155
  %v1158 = vunpack.c.l.s4 842150450
  %v1159 = vunpack.c.0.s8 %v1158
  %v1160 = vlaneseq
  %v1161 = vshrl.u32 %v1160, 7
  %v1162 = vsub.s32 %v1159, %v1161
  %v1163 = vrot.slane %v293, %v1162
  %v1165 = vunpack.c.l.s4 1414812756
  %v1166 = vunpack.c.0.s8 %v1165
  %v1167 = vlaneseq
  %v1168 = vshrl.u32 %v1167, 7
  %v1169 = vsub.s32 %v1166, %v1168
  %v1170 = vrot.slane %v293, %v1169
  %v1172 = vunpack.c.l.s4 1987475062
  %v1173 = vunpack.c.0.s8 %v1172
  %v1174 = vlaneseq
  %v1175 = vshrl.u32 %v1174, 7
  %v1176 = vsub.s32 %v1173, %v1175
  %v1177 = vrot.slane %v293, %v1176
  %v1179 = vunpack.c.l.s4 269488144
  %v1180 = vunpack.c.0.s8 %v1179
  %v1181 = vlaneseq
  %v1182 = vshrl.u32 %v1181, 7
  %v1183 = vsub.s32 %v1180, %v1182
  %v1184 = vrot.slane %v294, %v1183
  %v1186 = vunpack.c.l.s4 842150450
  %v1187 = vunpack.c.0.s8 %v1186
  %v1188 = vlaneseq
  %v1189 = vshrl.u32 %v1188, 7
  %v1190 = vsub.s32 %v1187, %v1189
  %v1191 = vrot.slane %v294, %v1190
  %v1193 = vunpack.c.l.s4 1414812756
  %v1194 = vunpack.c.0.s8 %v1193
  %v1195 = vlaneseq
  %v1196 = vshrl.u32 %v1195, 7
  %v1197 = vsub.s32 %v1194, %v1196
  %v1198 = vrot.slane %v294, %v1197
  %v1200 = vunpack.c.l.s4 1987475062
  %v1201 = vunpack.c.0.s8 %v1200
  %v1202 = vlaneseq
  %v1203 = vshrl.u32 %v1202, 7
  %v1204 = vsub.s32 %v1201, %v1203
  %v1205 = vrot.slane %v294, %v1204
  %v1207 = vunpack.c.l.s4 269488144
  %v1208 = vunpack.c.0.s8 %v1207
  %v1209 = vlaneseq
  %v1210 = vshrl.u32 %v1209, 7
  %v1211 = vsub.s32 %v1208, %v1210
  %v1212 = vrot.slane %v295, %v1211
  %v1214 = vunpack.c.l.s4 842150450
  %v1215 = vunpack.c.0.s8 %v1214
  %v1216 = vlaneseq
  %v1217 = vshrl.u32 %v1216, 7
  %v1218 = vsub.s32 %v1215, %v1217
  %v1219 = vrot.slane %v295, %v1218
  %v1221 = vunpack.c.l.s4 1414812756
  %v1222 = vunpack.c.0.s8 %v1221
  %v1223 = vlaneseq
  %v1224 = vshrl.u32 %v1223, 7
  %v1225 = vsub.s32 %v1222, %v1224
  %v1226 = vrot.slane %v295, %v1225
  %v1228 = vunpack.c.l.s4 1987475062
  %v1229 = vunpack.c.0.s8 %v1228
  %v1230 = vlaneseq
  %v1231 = vshrl.u32 %v1230, 7
  %v1232 = vsub.s32 %v1229, %v1231
  %v1233 = vrot.slane %v295, %v1232
  %v1235 = vunpack.c.l.s4 269488144
  %v1236 = vunpack.c.0.s8 %v1235
  %v1237 = vlaneseq
  %v1238 = vshrl.u32 %v1237, 7
  %v1239 = vsub.s32 %v1236, %v1238
  %v1240 = vrot.slane %v296, %v1239
  %v1242 = vunpack.c.l.s4 842150450
  %v1243 = vunpack.c.0.s8 %v1242
  %v1244 = vlaneseq
  %v1245 = vshrl.u32 %v1244, 7
  %v1246 = vsub.s32 %v1243, %v1245
  %v1247 = vrot.slane %v296, %v1246
  %v1249 = vunpack.c.l.s4 1414812756
  %v1250 = vunpack.c.0.s8 %v1249
  %v1251 = vlaneseq
  %v1252 = vshrl.u32 %v1251, 7
  %v1253 = vsub.s32 %v1250, %v1252
  %v1254 = vrot.slane %v296, %v1253
  %v1256 = vunpack.c.l.s4 1987475062
  %v1257 = vunpack.c.0.s8 %v1256
  %v1258 = vlaneseq
  %v1259 = vshrl.u32 %v1258, 7
  %v1260 = vsub.s32 %v1257, %v1259
  %v1261 = vrot.slane %v296, %v1260
  %v1263 = vunpack.c.l.s4 269488144
  %v1264 = vunpack.c.0.s8 %v1263
  %v1265 = vlaneseq
  %v1266 = vshrl.u32 %v1265, 7
  %v1267 = vsub.s32 %v1264, %v1266
  %v1268 = vrot.slane %v297, %v1267
  %v1270 = vunpack.c.l.s4 842150450
  %v1271 = vunpack.c.0.s8 %v1270
  %v1272 = vlaneseq
  %v1273 = vshrl.u32 %v1272, 7
  %v1274 = vsub.s32 %v1271, %v1273
  %v1275 = vrot.slane %v297, %v1274
  %v1277 = vunpack.c.l.s4 1414812756
  %v1278 = vunpack.c.0.s8 %v1277
  %v1279 = vlaneseq
  %v1280 = vshrl.u32 %v1279, 7
  %v1281 = vsub.s32 %v1278, %v1280
  %v1282 = vrot.slane %v297, %v1281
  %v1284 = vunpack.c.l.s4 1987475062
  %v1285 = vunpack.c.0.s8 %v1284
  %v1286 = vlaneseq
  %v1287 = vshrl.u32 %v1286, 7
  %v1288 = vsub.s32 %v1285, %v1287
  %v1289 = vrot.slane %v297, %v1288
  %v1291 = vunpack.c.l.s4 269488144
  %v1292 = vunpack.c.0.s8 %v1291
  %v1293 = vlaneseq
  %v1294 = vshrl.u32 %v1293, 7
  %v1295 = vsub.s32 %v1292, %v1294
  %v1296 = vrot.slane %v298, %v1295
  %v1298 = vunpack.c.l.s4 842150450
  %v1299 = vunpack.c.0.s8 %v1298
  %v1300 = vlaneseq
  %v1301 = vshrl.u32 %v1300, 7
  %v1302 = vsub.s32 %v1299, %v1301
  %v1303 = vrot.slane %v298, %v1302
  %v1305 = vunpack.c.l.s4 1414812756
  %v1306 = vunpack.c.0.s8 %v1305
  %v1307 = vlaneseq
  %v1308 = vshrl.u32 %v1307, 7
  %v1309 = vsub.s32 %v1306, %v1308
  %v1310 = vrot.slane %v298, %v1309
  %v1312 = vunpack.c.l.s4 1987475062
  %v1313 = vunpack.c.0.s8 %v1312
  %v1314 = vlaneseq
  %v1315 = vshrl.u32 %v1314, 7
  %v1316 = vsub.s32 %v1313, %v1315
  %v1317 = vrot.slane %v298, %v1316
  %v1319 = vunpack.c.l.s4 269488144
  %v1320 = vunpack.c.0.s8 %v1319
  %v1321 = vlaneseq
  %v1322 = vshrl.u32 %v1321, 7
  %v1323 = vsub.s32 %v1320, %v1322
  %v1324 = vrot.slane %v299, %v1323
  %v1326 = vunpack.c.l.s4 842150450
  %v1327 = vunpack.c.0.s8 %v1326
  %v1328 = vlaneseq
  %v1329 = vshrl.u32 %v1328, 7
  %v1330 = vsub.s32 %v1327, %v1329
  %v1331 = vrot.slane %v299, %v1330
  %v1333 = vunpack.c.l.s4 1414812756
  %v1334 = vunpack.c.0.s8 %v1333
  %v1335 = vlaneseq
  %v1336 = vshrl.u32 %v1335, 7
  %v1337 = vsub.s32 %v1334, %v1336
  %v1338 = vrot.slane %v299, %v1337
  %v1340 = vunpack.c.l.s4 1987475062
  %v1341 = vunpack.c.0.s8 %v1340
  %v1342 = vlaneseq
  %v1343 = vshrl.u32 %v1342, 7
  %v1344 = vsub.s32 %v1341, %v1343
  %v1345 = vrot.slane %v299, %v1344
  %v1347 = vunpack.c.l.s4 269488144
  %v1348 = vunpack.c.0.s8 %v1347
  %v1349 = vlaneseq
  %v1350 = vshrl.u32 %v1349, 7
  %v1351 = vsub.s32 %v1348, %v1350
  %v1352 = vrot.slane %v300, %v1351
  %v1354 = vunpack.c.l.s4 842150450
  %v1355 = vunpack.c.0.s8 %v1354
  %v1356 = vlaneseq
  %v1357 = vshrl.u32 %v1356, 7
  %v1358 = vsub.s32 %v1355, %v1357
  %v1359 = vrot.slane %v300, %v1358
  %v1361 = vunpack.c.l.s4 1414812756
  %v1362 = vunpack.c.0.s8 %v1361
  %v1363 = vlaneseq
  %v1364 = vshrl.u32 %v1363, 7
  %v1365 = vsub.s32 %v1362, %v1364
  %v1366 = vrot.slane %v300, %v1365
  %v1368 = vunpack.c.l.s4 1987475062
  %v1369 = vunpack.c.0.s8 %v1368
  %v1370 = vlaneseq
  %v1371 = vshrl.u32 %v1370, 7
  %v1372 = vsub.s32 %v1369, %v1371
  %v1373 = vrot.slane %v300, %v1372
  %v1375 = vunpack.c.l.s4 269488144
  %v1376 = vunpack.c.0.s8 %v1375
  %v1377 = vlaneseq
  %v1378 = vshrl.u32 %v1377, 7
  %v1379 = vsub.s32 %v1376, %v1378
  %v1380 = vrot.slane %v301, %v1379
  %v1382 = vunpack.c.l.s4 842150450
  %v1383 = vunpack.c.0.s8 %v1382
  %v1384 = vlaneseq
  %v1385 = vshrl.u32 %v1384, 7
  %v1386 = vsub.s32 %v1383, %v1385
  %v1387 = vrot.slane %v301, %v1386
  %v1389 = vunpack.c.l.s4 1414812756
  %v1390 = vunpack.c.0.s8 %v1389
  %v1391 = vlaneseq
  %v1392 = vshrl.u32 %v1391, 7
  %v1393 = vsub.s32 %v1390, %v1392
  %v1394 = vrot.slane %v301, %v1393
  %v1396 = vunpack.c.l.s4 1987475062
  %v1397 = vunpack.c.0.s8 %v1396
  %v1398 = vlaneseq
  %v1399 = vshrl.u32 %v1398, 7
  %v1400 = vsub.s32 %v1397, %v1399
  %v1401 = vrot.slane %v301, %v1400
  %v1403 = vunpack.c.l.s4 269488144
  %v1404 = vunpack.c.0.s8 %v1403
  %v1405 = vlaneseq
  %v1406 = vshrl.u32 %v1405, 7
  %v1407 = vsub.s32 %v1404, %v1406
  %v1408 = vrot.slane %v302, %v1407
  %v1410 = vunpack.c.l.s4 842150450
  %v1411 = vunpack.c.0.s8 %v1410
  %v1412 = vlaneseq
  %v1413 = vshrl.u32 %v1412, 7
  %v1414 = vsub.s32 %v1411, %v1413
  %v1415 = vrot.slane %v302, %v1414
  %v1417 = vunpack.c.l.s4 1414812756
  %v1418 = vunpack.c.0.s8 %v1417
  %v1419 = vlaneseq
  %v1420 = vshrl.u32 %v1419, 7
  %v1421 = vsub.s32 %v1418, %v1420
  %v1422 = vrot.slane %v302, %v1421
  %v1424 = vunpack.c.l.s4 1987475062
  %v1425 = vunpack.c.0.s8 %v1424
  %v1426 = vlaneseq
  %v1427 = vshrl.u32 %v1426, 7
  %v1428 = vsub.s32 %v1425, %v1427
  %v1429 = vrot.slane %v302, %v1428
  %v1431 = vunpack.c.l.s4 269488144
  %v1432 = vunpack.c.0.s8 %v1431
  %v1433 = vlaneseq
  %v1434 = vshrl.u32 %v1433, 7
  %v1435 = vsub.s32 %v1432, %v1434
  %v1436 = vrot.slane %v303, %v1435
  %v1438 = vunpack.c.l.s4 842150450
  %v1439 = vunpack.c.0.s8 %v1438
  %v1440 = vlaneseq
  %v1441 = vshrl.u32 %v1440, 7
  %v1442 = vsub.s32 %v1439, %v1441
  %v1443 = vrot.slane %v303, %v1442
  %v1445 = vunpack.c.l.s4 1414812756
  %v1446 = vunpack.c.0.s8 %v1445
  %v1447 = vlaneseq
  %v1448 = vshrl.u32 %v1447, 7
  %v1449 = vsub.s32 %v1446, %v1448
  %v1450 = vrot.slane %v303, %v1449
  %v1452 = vunpack.c.l.s4 1987475062
  %v1453 = vunpack.c.0.s8 %v1452
  %v1454 = vlaneseq
  %v1455 = vshrl.u32 %v1454, 7
  %v1456 = vsub.s32 %v1453, %v1455
  %v1457 = vrot.slane %v303, %v1456
  %v1459 = vunpack.c.l.s4 269488144
  %v1460 = vunpack.c.0.s8 %v1459
  %v1461 = vlaneseq
  %v1462 = vshrl.u32 %v1461, 7
  %v1463 = vsub.s32 %v1460, %v1462
  %v1464 = vrot.slane %v304, %v1463
  %v1466 = vunpack.c.l.s4 842150450
  %v1467 = vunpack.c.0.s8 %v1466
  %v1468 = vlaneseq
  %v1469 = vshrl.u32 %v1468, 7
  %v1470 = vsub.s32 %v1467, %v1469
  %v1471 = vrot.slane %v304, %v1470
  %v1473 = vunpack.c.l.s4 1414812756
  %v1474 = vunpack.c.0.s8 %v1473
  %v1475 = vlaneseq
  %v1476 = vshrl.u32 %v1475, 7
  %v1477 = vsub.s32 %v1474, %v1476
  %v1478 = vrot.slane %v304, %v1477
  %v1480 = vunpack.c.l.s4 1987475062
  %v1481 = vunpack.c.0.s8 %v1480
  %v1482 = vlaneseq
  %v1483 = vshrl.u32 %v1482, 7
  %v1484 = vsub.s32 %v1481, %v1483
  %v1485 = vrot.slane %v304, %v1484
  %v1487 = vunpack.c.l.s4 269488144
  %v1488 = vunpack.c.0.s8 %v1487
  %v1489 = vlaneseq
  %v1490 = vshrl.u32 %v1489, 7
  %v1491 = vsub.s32 %v1488, %v1490
  %v1492 = vrot.slane %v305, %v1491
  %v1494 = vunpack.c.l.s4 842150450
  %v1495 = vunpack.c.0.s8 %v1494
  %v1496 = vlaneseq
  %v1497 = vshrl.u32 %v1496, 7
  %v1498 = vsub.s32 %v1495, %v1497
  %v1499 = vrot.slane %v305, %v1498
  %v1501 = vunpack.c.l.s4 1414812756
  %v1502 = vunpack.c.0.s8 %v1501
  %v1503 = vlaneseq
  %v1504 = vshrl.u32 %v1503, 7
  %v1505 = vsub.s32 %v1502, %v1504
  %v1506 = vrot.slane %v305, %v1505
  %v1508 = vunpack.c.l.s4 1987475062
  %v1509 = vunpack.c.0.s8 %v1508
  %v1510 = vlaneseq
  %v1511 = vshrl.u32 %v1510, 7
  %v1512 = vsub.s32 %v1509, %v1511
  %v1513 = vrot.slane %v305, %v1512
  %v1515 = vunpack.c.l.s4 269488144
  %v1516 = vunpack.c.0.s8 %v1515
  %v1517 = vlaneseq
  %v1518 = vshrl.u32 %v1517, 7
  %v1519 = vsub.s32 %v1516, %v1518
  %v1520 = vrot.slane %v306, %v1519
  %v1522 = vunpack.c.l.s4 842150450
  %v1523 = vunpack.c.0.s8 %v1522
  %v1524 = vlaneseq
  %v1525 = vshrl.u32 %v1524, 7
  %v1526 = vsub.s32 %v1523, %v1525
  %v1527 = vrot.slane %v306, %v1526
  %v1529 = vunpack.c.l.s4 1414812756
  %v1530 = vunpack.c.0.s8 %v1529
  %v1531 = vlaneseq
  %v1532 = vshrl.u32 %v1531, 7
  %v1533 = vsub.s32 %v1530, %v1532
  %v1534 = vrot.slane %v306, %v1533
  %v1536 = vunpack.c.l.s4 1987475062
  %v1537 = vunpack.c.0.s8 %v1536
  %v1538 = vlaneseq
  %v1539 = vshrl.u32 %v1538, 7
  %v1540 = vsub.s32 %v1537, %v1539
  %v1541 = vrot.slane %v306, %v1540
  %v1543 = vunpack.c.l.s4 269488144
  %v1544 = vunpack.c.0.s8 %v1543
  %v1545 = vlaneseq
  %v1546 = vshrl.u32 %v1545, 7
  %v1547 = vsub.s32 %v1544, %v1546
  %v1548 = vrot.slane %v307, %v1547
  %v1550 = vunpack.c.l.s4 842150450
  %v1551 = vunpack.c.0.s8 %v1550
  %v1552 = vlaneseq
  %v1553 = vshrl.u32 %v1552, 7
  %v1554 = vsub.s32 %v1551, %v1553
  %v1555 = vrot.slane %v307, %v1554
  %v1557 = vunpack.c.l.s4 1414812756
  %v1558 = vunpack.c.0.s8 %v1557
  %v1559 = vlaneseq
  %v1560 = vshrl.u32 %v1559, 7
  %v1561 = vsub.s32 %v1558, %v1560
  %v1562 = vrot.slane %v307, %v1561
  %v1564 = vunpack.c.l.s4 1987475062
  %v1565 = vunpack.c.0.s8 %v1564
  %v1566 = vlaneseq
  %v1567 = vshrl.u32 %v1566, 7
  %v1568 = vsub.s32 %v1565, %v1567
  %v1569 = vrot.slane %v307, %v1568
  %v1571 = vunpack.c.l.s4 269488144
  %v1572 = vunpack.c.0.s8 %v1571
  %v1573 = vlaneseq
  %v1574 = vshrl.u32 %v1573, 7
  %v1575 = vsub.s32 %v1572, %v1574
  %v1576 = vrot.slane %v308, %v1575
  %v1578 = vunpack.c.l.s4 842150450
  %v1579 = vunpack.c.0.s8 %v1578
  %v1580 = vlaneseq
  %v1581 = vshrl.u32 %v1580, 7
  %v1582 = vsub.s32 %v1579, %v1581
  %v1583 = vrot.slane %v308, %v1582
  %v1585 = vunpack.c.l.s4 1414812756
  %v1586 = vunpack.c.0.s8 %v1585
  %v1587 = vlaneseq
  %v1588 = vshrl.u32 %v1587, 7
  %v1589 = vsub.s32 %v1586, %v1588
  %v1590 = vrot.slane %v308, %v1589
  %v1592 = vunpack.c.l.s4 1987475062
  %v1593 = vunpack.c.0.s8 %v1592
  %v1594 = vlaneseq
  %v1595 = vshrl.u32 %v1594, 7
  %v1596 = vsub.s32 %v1593, %v1595
  %v1597 = vrot.slane %v308, %v1596
  %v1599 = vunpack.c.l.s4 269488144
  %v1600 = vunpack.c.0.s8 %v1599
  %v1601 = vlaneseq
  %v1602 = vshrl.u32 %v1601, 7
  %v1603 = vsub.s32 %v1600, %v1602
  %v1604 = vrot.slane %v309, %v1603
  %v1606 = vunpack.c.l.s4 842150450
  %v1607 = vunpack.c.0.s8 %v1606
  %v1608 = vlaneseq
  %v1609 = vshrl.u32 %v1608, 7
  %v1610 = vsub.s32 %v1607, %v1609
  %v1611 = vrot.slane %v309, %v1610
  %v1613 = vunpack.c.l.s4 1414812756
  %v1614 = vunpack.c.0.s8 %v1613
  %v1615 = vlaneseq
  %v1616 = vshrl.u32 %v1615, 7
  %v1617 = vsub.s32 %v1614, %v1616
  %v1618 = vrot.slane %v309, %v1617
  %v1620 = vunpack.c.l.s4 1987475062
  %v1621 = vunpack.c.0.s8 %v1620
  %v1622 = vlaneseq
  %v1623 = vshrl.u32 %v1622, 7
  %v1624 = vsub.s32 %v1621, %v1623
  %v1625 = vrot.slane %v309, %v1624
  %v1627 = vunpack.c.l.s4 269488144
  %v1628 = vunpack.c.0.s8 %v1627
  %v1629 = vlaneseq
  %v1630 = vshrl.u32 %v1629, 7
  %v1631 = vsub.s32 %v1628, %v1630
  %v1632 = vrot.slane %v310, %v1631
  %v1634 = vunpack.c.l.s4 842150450
  %v1635 = vunpack.c.0.s8 %v1634
  %v1636 = vlaneseq
  %v1637 = vshrl.u32 %v1636, 7
  %v1638 = vsub.s32 %v1635, %v1637
  %v1639 = vrot.slane %v310, %v1638
  %v1641 = vunpack.c.l.s4 1414812756
  %v1642 = vunpack.c.0.s8 %v1641
  %v1643 = vlaneseq
  %v1644 = vshrl.u32 %v1643, 7
  %v1645 = vsub.s32 %v1642, %v1644
  %v1646 = vrot.slane %v310, %v1645
  %v1648 = vunpack.c.l.s4 1987475062
  %v1649 = vunpack.c.0.s8 %v1648
  %v1650 = vlaneseq
  %v1651 = vshrl.u32 %v1650, 7
  %v1652 = vsub.s32 %v1649, %v1651
  %v1653 = vrot.slane %v310, %v1652
  %v1655 = vunpack.c.l.s4 269488144
  %v1656 = vunpack.c.0.s8 %v1655
  %v1657 = vlaneseq
  %v1658 = vshrl.u32 %v1657, 7
  %v1659 = vsub.s32 %v1656, %v1658
  %v1660 = vrot.slane %v311, %v1659
  %v1662 = vunpack.c.l.s4 842150450
  %v1663 = vunpack.c.0.s8 %v1662
  %v1664 = vlaneseq
  %v1665 = vshrl.u32 %v1664, 7
  %v1666 = vsub.s32 %v1663, %v1665
  %v1667 = vrot.slane %v311, %v1666
  %v1669 = vunpack.c.l.s4 1414812756
  %v1670 = vunpack.c.0.s8 %v1669
  %v1671 = vlaneseq
  %v1672 = vshrl.u32 %v1671, 7
  %v1673 = vsub.s32 %v1670, %v1672
  %v1674 = vrot.slane %v311, %v1673
  %v1676 = vunpack.c.l.s4 1987475062
  %v1677 = vunpack.c.0.s8 %v1676
  %v1678 = vlaneseq
  %v1679 = vshrl.u32 %v1678, 7
  %v1680 = vsub.s32 %v1677, %v1679
  %v1681 = vrot.slane %v311, %v1680
  %v1683 = vunpack.c.l.s4 269488144
  %v1684 = vunpack.c.0.s8 %v1683
  %v1685 = vlaneseq
  %v1686 = vshrl.u32 %v1685, 7
  %v1687 = vsub.s32 %v1684, %v1686
  %v1688 = vrot.slane %v312, %v1687
  %v1690 = vunpack.c.l.s4 842150450
  %v1691 = vunpack.c.0.s8 %v1690
  %v1692 = vlaneseq
  %v1693 = vshrl.u32 %v1692, 7
  %v1694 = vsub.s32 %v1691, %v1693
  %v1695 = vrot.slane %v312, %v1694
  %v1697 = vunpack.c.l.s4 1414812756
  %v1698 = vunpack.c.0.s8 %v1697
  %v1699 = vlaneseq
  %v1700 = vshrl.u32 %v1699, 7
  %v1701 = vsub.s32 %v1698, %v1700
  %v1702 = vrot.slane %v312, %v1701
  %v1704 = vunpack.c.l.s4 1987475062
  %v1705 = vunpack.c.0.s8 %v1704
  %v1706 = vlaneseq
  %v1707 = vshrl.u32 %v1706, 7
  %v1708 = vsub.s32 %v1705, %v1707
  %v1709 = vrot.slane %v312, %v1708
  %v1711 = vunpack.c.l.s4 269488144
  %v1712 = vunpack.c.0.s8 %v1711
  %v1713 = vlaneseq
  %v1714 = vshrl.u32 %v1713, 7
  %v1715 = vsub.s32 %v1712, %v1714
  %v1716 = vrot.slane %v313, %v1715
  %v1718 = vunpack.c.l.s4 842150450
  %v1719 = vunpack.c.0.s8 %v1718
  %v1720 = vlaneseq
  %v1721 = vshrl.u32 %v1720, 7
  %v1722 = vsub.s32 %v1719, %v1721
  %v1723 = vrot.slane %v313, %v1722
  %v1725 = vunpack.c.l.s4 1414812756
  %v1726 = vunpack.c.0.s8 %v1725
  %v1727 = vlaneseq
  %v1728 = vshrl.u32 %v1727, 7
  %v1729 = vsub.s32 %v1726, %v1728
  %v1730 = vrot.slane %v313, %v1729
  %v1732 = vunpack.c.l.s4 1987475062
  %v1733 = vunpack.c.0.s8 %v1732
  %v1734 = vlaneseq
  %v1735 = vshrl.u32 %v1734, 7
  %v1736 = vsub.s32 %v1733, %v1735
  %v1737 = vrot.slane %v313, %v1736
  %v1739 = vunpack.c.l.s4 269488144
  %v1740 = vunpack.c.0.s8 %v1739
  %v1741 = vlaneseq
  %v1742 = vshrl.u32 %v1741, 7
  %v1743 = vsub.s32 %v1740, %v1742
  %v1744 = vrot.slane %v314, %v1743
  %v1746 = vunpack.c.l.s4 842150450
  %v1747 = vunpack.c.0.s8 %v1746
  %v1748 = vlaneseq
  %v1749 = vshrl.u32 %v1748, 7
  %v1750 = vsub.s32 %v1747, %v1749
  %v1751 = vrot.slane %v314, %v1750
  %v1753 = vunpack.c.l.s4 1414812756
  %v1754 = vunpack.c.0.s8 %v1753
  %v1755 = vlaneseq
  %v1756 = vshrl.u32 %v1755, 7
  %v1757 = vsub.s32 %v1754, %v1756
  %v1758 = vrot.slane %v314, %v1757
  %v1760 = vunpack.c.l.s4 1987475062
  %v1761 = vunpack.c.0.s8 %v1760
  %v1762 = vlaneseq
  %v1763 = vshrl.u32 %v1762, 7
  %v1764 = vsub.s32 %v1761, %v1763
  %v1765 = vrot.slane %v314, %v1764
  %v1767 = vunpack.c.l.s4 269488144
  %v1768 = vunpack.c.0.s8 %v1767
  %v1769 = vlaneseq
  %v1770 = vshrl.u32 %v1769, 7
  %v1771 = vsub.s32 %v1768, %v1770
  %v1772 = vrot.slane %v315, %v1771
  %v1774 = vunpack.c.l.s4 842150450
  %v1775 = vunpack.c.0.s8 %v1774
  %v1776 = vlaneseq
  %v1777 = vshrl.u32 %v1776, 7
  %v1778 = vsub.s32 %v1775, %v1777
  %v1779 = vrot.slane %v315, %v1778
  %v1781 = vunpack.c.l.s4 1414812756
  %v1782 = vunpack.c.0.s8 %v1781
  %v1783 = vlaneseq
  %v1784 = vshrl.u32 %v1783, 7
  %v1785 = vsub.s32 %v1782, %v1784
  %v1786 = vrot.slane %v315, %v1785
  %v1788 = vunpack.c.l.s4 1987475062
  %v1789 = vunpack.c.0.s8 %v1788
  %v1790 = vlaneseq
  %v1791 = vshrl.u32 %v1790, 7
  %v1792 = vsub.s32 %v1789, %v1791
  %v1793 = vrot.slane %v315, %v1792
  %v1795 = vunpack.c.l.s4 269488144
  %v1796 = vunpack.c.0.s8 %v1795
  %v1797 = vlaneseq
  %v1798 = vshrl.u32 %v1797, 7
  %v1799 = vsub.s32 %v1796, %v1798
  %v1800 = vrot.slane %v316, %v1799
  %v1802 = vunpack.c.l.s4 842150450
  %v1803 = vunpack.c.0.s8 %v1802
  %v1804 = vlaneseq
  %v1805 = vshrl.u32 %v1804, 7
  %v1806 = vsub.s32 %v1803, %v1805
  %v1807 = vrot.slane %v316, %v1806
  %v1809 = vunpack.c.l.s4 1414812756
  %v1810 = vunpack.c.0.s8 %v1809
  %v1811 = vlaneseq
  %v1812 = vshrl.u32 %v1811, 7
  %v1813 = vsub.s32 %v1810, %v1812
  %v1814 = vrot.slane %v316, %v1813
  %v1816 = vunpack.c.l.s4 1987475062
  %v1817 = vunpack.c.0.s8 %v1816
  %v1818 = vlaneseq
  %v1819 = vshrl.u32 %v1818, 7
  %v1820 = vsub.s32 %v1817, %v1819
  %v1821 = vrot.slane %v316, %v1820
  %v1823 = vunpack.c.l.s4 269488144
  %v1824 = vunpack.c.0.s8 %v1823
  %v1825 = vlaneseq
  %v1826 = vshrl.u32 %v1825, 7
  %v1827 = vsub.s32 %v1824, %v1826
  %v1828 = vrot.slane %v317, %v1827
  %v1830 = vunpack.c.l.s4 842150450
  %v1831 = vunpack.c.0.s8 %v1830
  %v1832 = vlaneseq
  %v1833 = vshrl.u32 %v1832, 7
  %v1834 = vsub.s32 %v1831, %v1833
  %v1835 = vrot.slane %v317, %v1834
  %v1837 = vunpack.c.l.s4 1414812756
  %v1838 = vunpack.c.0.s8 %v1837
  %v1839 = vlaneseq
  %v1840 = vshrl.u32 %v1839, 7
  %v1841 = vsub.s32 %v1838, %v1840
  %v1842 = vrot.slane %v317, %v1841
  %v1844 = vunpack.c.l.s4 1987475062
  %v1845 = vunpack.c.0.s8 %v1844
  %v1846 = vlaneseq
  %v1847 = vshrl.u32 %v1846, 7
  %v1848 = vsub.s32 %v1845, %v1847
  %v1849 = vrot.slane %v317, %v1848
  %v1851 = vunpack.c.l.s4 269488144
  %v1852 = vunpack.c.0.s8 %v1851
  %v1853 = vlaneseq
  %v1854 = vshrl.u32 %v1853, 7
  %v1855 = vsub.s32 %v1852, %v1854
  %v1856 = vrot.slane %v318, %v1855
  %v1858 = vunpack.c.l.s4 842150450
  %v1859 = vunpack.c.0.s8 %v1858
  %v1860 = vlaneseq
  %v1861 = vshrl.u32 %v1860, 7
  %v1862 = vsub.s32 %v1859, %v1861
  %v1863 = vrot.slane %v318, %v1862
  %v1865 = vunpack.c.l.s4 1414812756
  %v1866 = vunpack.c.0.s8 %v1865
  %v1867 = vlaneseq
  %v1868 = vshrl.u32 %v1867, 7
  %v1869 = vsub.s32 %v1866, %v1868
  %v1870 = vrot.slane %v318, %v1869
  %v1872 = vunpack.c.l.s4 1987475062
  %v1873 = vunpack.c.0.s8 %v1872
  %v1874 = vlaneseq
  %v1875 = vshrl.u32 %v1874, 7
  %v1876 = vsub.s32 %v1873, %v1875
  %v1877 = vrot.slane %v318, %v1876
  %v1879 = vunpack.c.l.s4 269488144
  %v1880 = vunpack.c.0.s8 %v1879
  %v1881 = vlaneseq
  %v1882 = vshrl.u32 %v1881, 7
  %v1883 = vsub.s32 %v1880, %v1882
  %v1884 = vrot.slane %v319, %v1883
  %v1886 = vunpack.c.l.s4 842150450
  %v1887 = vunpack.c.0.s8 %v1886
  %v1888 = vlaneseq
  %v1889 = vshrl.u32 %v1888, 7
  %v1890 = vsub.s32 %v1887, %v1889
  %v1891 = vrot.slane %v319, %v1890
  %v1893 = vunpack.c.l.s4 1414812756
  %v1894 = vunpack.c.0.s8 %v1893
  %v1895 = vlaneseq
  %v1896 = vshrl.u32 %v1895, 7
  %v1897 = vsub.s32 %v1894, %v1896
  %v1898 = vrot.slane %v319, %v1897
  %v1900 = vunpack.c.l.s4 1987475062
  %v1901 = vunpack.c.0.s8 %v1900
  %v1902 = vlaneseq
  %v1903 = vshrl.u32 %v1902, 7
  %v1904 = vsub.s32 %v1901, %v1903
  %v1905 = vrot.slane %v319, %v1904
  %v1907 = vunpack.c.l.s4 269488144
  %v1908 = vunpack.c.0.s8 %v1907
  %v1909 = vlaneseq
  %v1910 = vshrl.u32 %v1909, 7
  %v1911 = vsub.s32 %v1908, %v1910
  %v1912 = vrot.slane %v320, %v1911
  %v1914 = vunpack.c.l.s4 842150450
  %v1915 = vunpack.c.0.s8 %v1914
  %v1916 = vlaneseq
  %v1917 = vshrl.u32 %v1916, 7
  %v1918 = vsub.s32 %v1915, %v1917
  %v1919 = vrot.slane %v320, %v1918
  %v1921 = vunpack.c.l.s4 1414812756
  %v1922 = vunpack.c.0.s8 %v1921
  %v1923 = vlaneseq
  %v1924 = vshrl.u32 %v1923, 7
  %v1925 = vsub.s32 %v1922, %v1924
  %v1926 = vrot.slane %v320, %v1925
  %v1928 = vunpack.c.l.s4 1987475062
  %v1929 = vunpack.c.0.s8 %v1928
  %v1930 = vlaneseq
  %v1931 = vshrl.u32 %v1930, 7
  %v1932 = vsub.s32 %v1929, %v1931
  %v1933 = vrot.slane %v320, %v1932
  %v1935 = vunpack.c.l.s4 269488144
  %v1936 = vunpack.c.0.s8 %v1935
  %v1937 = vlaneseq
  %v1938 = vshrl.u32 %v1937, 7
  %v1939 = vsub.s32 %v1936, %v1938
  %v1940 = vrot.slane %v321, %v1939
  %v1942 = vunpack.c.l.s4 842150450
  %v1943 = vunpack.c.0.s8 %v1942
  %v1944 = vlaneseq
  %v1945 = vshrl.u32 %v1944, 7
  %v1946 = vsub.s32 %v1943, %v1945
  %v1947 = vrot.slane %v321, %v1946
  %v1949 = vunpack.c.l.s4 1414812756
  %v1950 = vunpack.c.0.s8 %v1949
  %v1951 = vlaneseq
  %v1952 = vshrl.u32 %v1951, 7
  %v1953 = vsub.s32 %v1950, %v1952
  %v1954 = vrot.slane %v321, %v1953
  %v1956 = vunpack.c.l.s4 1987475062
  %v1957 = vunpack.c.0.s8 %v1956
  %v1958 = vlaneseq
  %v1959 = vshrl.u32 %v1958, 7
  %v1960 = vsub.s32 %v1957, %v1959
  %v1961 = vrot.slane %v321, %v1960
  %v1963 = vunpack.c.l.s4 269488144
  %v1964 = vunpack.c.0.s8 %v1963
  %v1965 = vlaneseq
  %v1966 = vshrl.u32 %v1965, 7
  %v1967 = vsub.s32 %v1964, %v1966
  %v1968 = vrot.slane %v322, %v1967
  %v1970 = vunpack.c.l.s4 842150450
  %v1971 = vunpack.c.0.s8 %v1970
  %v1972 = vlaneseq
  %v1973 = vshrl.u32 %v1972, 7
  %v1974 = vsub.s32 %v1971, %v1973
  %v1975 = vrot.slane %v322, %v1974
  %v1977 = vunpack.c.l.s4 1414812756
  %v1978 = vunpack.c.0.s8 %v1977
  %v1979 = vlaneseq
  %v1980 = vshrl.u32 %v1979, 7
  %v1981 = vsub.s32 %v1978, %v1980
  %v1982 = vrot.slane %v322, %v1981
  %v1984 = vunpack.c.l.s4 1987475062
  %v1985 = vunpack.c.0.s8 %v1984
  %v1986 = vlaneseq
  %v1987 = vshrl.u32 %v1986, 7
  %v1988 = vsub.s32 %v1985, %v1987
  %v1989 = vrot.slane %v322, %v1988
  %v1991 = vunpack.c.l.s4 269488144
  %v1992 = vunpack.c.0.s8 %v1991
  %v1993 = vlaneseq
  %v1994 = vshrl.u32 %v1993, 7
  %v1995 = vsub.s32 %v1992, %v1994
  %v1996 = vrot.slane %v323, %v1995
  %v1998 = vunpack.c.l.s4 842150450
  %v1999 = vunpack.c.0.s8 %v1998
  %v2000 = vlaneseq
  %v2001 = vshrl.u32 %v2000, 7
  %v2002 = vsub.s32 %v1999, %v2001
  %v2003 = vrot.slane %v323, %v2002
  %v2005 = vunpack.c.l.s4 1414812756
  %v2006 = vunpack.c.0.s8 %v2005
  %v2007 = vlaneseq
  %v2008 = vshrl.u32 %v2007, 7
  %v2009 = vsub.s32 %v2006, %v2008
  %v2010 = vrot.slane %v323, %v2009
  %v2012 = vunpack.c.l.s4 1987475062
  %v2013 = vunpack.c.0.s8 %v2012
  %v2014 = vlaneseq
  %v2015 = vshrl.u32 %v2014, 7
  %v2016 = vsub.s32 %v2013, %v2015
  %v2017 = vrot.slane %v323, %v2016
  %v2019 = vunpack.c.l.s4 269488144
  %v2020 = vunpack.c.0.s8 %v2019
  %v2021 = vlaneseq
  %v2022 = vshrl.u32 %v2021, 7
  %v2023 = vsub.s32 %v2020, %v2022
  %v2024 = vrot.slane %v324, %v2023
  %v2026 = vunpack.c.l.s4 842150450
  %v2027 = vunpack.c.0.s8 %v2026
  %v2028 = vlaneseq
  %v2029 = vshrl.u32 %v2028, 7
  %v2030 = vsub.s32 %v2027, %v2029
  %v2031 = vrot.slane %v324, %v2030
  %v2033 = vunpack.c.l.s4 1414812756
  %v2034 = vunpack.c.0.s8 %v2033
  %v2035 = vlaneseq
  %v2036 = vshrl.u32 %v2035, 7
  %v2037 = vsub.s32 %v2034, %v2036
  %v2038 = vrot.slane %v324, %v2037
  %v2040 = vunpack.c.l.s4 1987475062
  %v2041 = vunpack.c.0.s8 %v2040
  %v2042 = vlaneseq
  %v2043 = vshrl.u32 %v2042, 7
  %v2044 = vsub.s32 %v2041, %v2043
  %v2045 = vrot.slane %v324, %v2044
  %v2047 = vunpack.c.l.s4 269488144
  %v2048 = vunpack.c.0.s8 %v2047
  %v2049 = vlaneseq
  %v2050 = vshrl.u32 %v2049, 7
  %v2051 = vsub.s32 %v2048, %v2050
  %v2052 = vrot.slane %v325, %v2051
  %v2054 = vunpack.c.l.s4 842150450
  %v2055 = vunpack.c.0.s8 %v2054
  %v2056 = vlaneseq
  %v2057 = vshrl.u32 %v2056, 7
  %v2058 = vsub.s32 %v2055, %v2057
  %v2059 = vrot.slane %v325, %v2058
  %v2061 = vunpack.c.l.s4 1414812756
  %v2062 = vunpack.c.0.s8 %v2061
  %v2063 = vlaneseq
  %v2064 = vshrl.u32 %v2063, 7
  %v2065 = vsub.s32 %v2062, %v2064
  %v2066 = vrot.slane %v325, %v2065
  %v2068 = vunpack.c.l.s4 1987475062
  %v2069 = vunpack.c.0.s8 %v2068
  %v2070 = vlaneseq
  %v2071 = vshrl.u32 %v2070, 7
  %v2072 = vsub.s32 %v2069, %v2071
  %v2073 = vrot.slane %v325, %v2072
  %v2075 = vunpack.c.l.s4 269488144
  %v2076 = vunpack.c.0.s8 %v2075
  %v2077 = vlaneseq
  %v2078 = vshrl.u32 %v2077, 7
  %v2079 = vsub.s32 %v2076, %v2078
  %v2080 = vrot.slane %v326, %v2079
  %v2082 = vunpack.c.l.s4 842150450
  %v2083 = vunpack.c.0.s8 %v2082
  %v2084 = vlaneseq
  %v2085 = vshrl.u32 %v2084, 7
  %v2086 = vsub.s32 %v2083, %v2085
  %v2087 = vrot.slane %v326, %v2086
  %v2089 = vunpack.c.l.s4 1414812756
  %v2090 = vunpack.c.0.s8 %v2089
  %v2091 = vlaneseq
  %v2092 = vshrl.u32 %v2091, 7
  %v2093 = vsub.s32 %v2090, %v2092
  %v2094 = vrot.slane %v326, %v2093
  %v2096 = vunpack.c.l.s4 1987475062
  %v2097 = vunpack.c.0.s8 %v2096
  %v2098 = vlaneseq
  %v2099 = vshrl.u32 %v2098, 7
  %v2100 = vsub.s32 %v2097, %v2099
  %v2101 = vrot.slane %v326, %v2100
  %v2103 = vunpack.c.l.s4 269488144
  %v2104 = vunpack.c.0.s8 %v2103
  %v2105 = vlaneseq
  %v2106 = vshrl.u32 %v2105, 7
  %v2107 = vsub.s32 %v2104, %v2106
  %v2108 = vrot.slane %v327, %v2107
  %v2110 = vunpack.c.l.s4 842150450
  %v2111 = vunpack.c.0.s8 %v2110
  %v2112 = vlaneseq
  %v2113 = vshrl.u32 %v2112, 7
  %v2114 = vsub.s32 %v2111, %v2113
  %v2115 = vrot.slane %v327, %v2114
  %v2117 = vunpack.c.l.s4 1414812756
  %v2118 = vunpack.c.0.s8 %v2117
  %v2119 = vlaneseq
  %v2120 = vshrl.u32 %v2119, 7
  %v2121 = vsub.s32 %v2118, %v2120
  %v2122 = vrot.slane %v327, %v2121
  %v2124 = vunpack.c.l.s4 1987475062
  %v2125 = vunpack.c.0.s8 %v2124
  %v2126 = vlaneseq
  %v2127 = vshrl.u32 %v2126, 7
  %v2128 = vsub.s32 %v2125, %v2127
  %v2129 = vrot.slane %v327, %v2128
  %v2131 = vunpack.c.l.s4 269488144
  %v2132 = vunpack.c.0.s8 %v2131
  %v2133 = vlaneseq
  %v2134 = vshrl.u32 %v2133, 7
  %v2135 = vsub.s32 %v2132, %v2134
  %v2136 = vrot.slane %v328, %v2135
  %v2138 = vunpack.c.l.s4 842150450
  %v2139 = vunpack.c.0.s8 %v2138
  %v2140 = vlaneseq
  %v2141 = vshrl.u32 %v2140, 7
  %v2142 = vsub.s32 %v2139, %v2141
  %v2143 = vrot.slane %v328, %v2142
  %v2145 = vunpack.c.l.s4 1414812756
  %v2146 = vunpack.c.0.s8 %v2145
  %v2147 = vlaneseq
  %v2148 = vshrl.u32 %v2147, 7
  %v2149 = vsub.s32 %v2146, %v2148
  %v2150 = vrot.slane %v328, %v2149
  %v2152 = vunpack.c.l.s4 1987475062
  %v2153 = vunpack.c.0.s8 %v2152
  %v2154 = vlaneseq
  %v2155 = vshrl.u32 %v2154, 7
  %v2156 = vsub.s32 %v2153, %v2155
  %v2157 = vrot.slane %v328, %v2156
  %v2159 = vunpack.c.l.s4 269488144
  %v2160 = vunpack.c.0.s8 %v2159
  %v2161 = vlaneseq
  %v2162 = vshrl.u32 %v2161, 7
  %v2163 = vsub.s32 %v2160, %v2162
  %v2164 = vrot.slane %v329, %v2163
  %v2166 = vunpack.c.l.s4 842150450
  %v2167 = vunpack.c.0.s8 %v2166
  %v2168 = vlaneseq
  %v2169 = vshrl.u32 %v2168, 7
  %v2170 = vsub.s32 %v2167, %v2169
  %v2171 = vrot.slane %v329, %v2170
  %v2173 = vunpack.c.l.s4 1414812756
  %v2174 = vunpack.c.0.s8 %v2173
  %v2175 = vlaneseq
  %v2176 = vshrl.u32 %v2175, 7
  %v2177 = vsub.s32 %v2174, %v2176
  %v2178 = vrot.slane %v329, %v2177
  %v2180 = vunpack.c.l.s4 1987475062
  %v2181 = vunpack.c.0.s8 %v2180
  %v2182 = vlaneseq
  %v2183 = vshrl.u32 %v2182, 7
  %v2184 = vsub.s32 %v2181, %v2183
  %v2185 = vrot.slane %v329, %v2184
  %v2186 = vcombine.low %v400, %v407
  %v2187 = vcombine.low %v414, %v421
  %v2189 = vunpack.c.l.s4 1983009808
  %v2190 = vunpack.c.0.s8 %v2189
  %v2191 = vlaneseq
  %v2192 = vshrl.u32 %v2191, 7
  %v2193 = vsub.s32 %v2190, %v2192
  %v2194 = vrot.slane %v2186, %v2193
  %v2196 = vunpack.c.l.s4 1983009808
  %v2197 = vunpack.c.0.s8 %v2196
  %v2198 = vlaneseq
  %v2199 = vshrl.u32 %v2198, 7
  %v2200 = vsub.s32 %v2197, %v2199
  %v2201 = vrot.slane %v2187, %v2200
  %v2202 = vcombine.low %v2194, %v2201
  %v2203 = vcombine.low %v428, %v435
  %v2204 = vcombine.low %v442, %v449
  %v2206 = vunpack.c.l.s4 1983009808
  %v2207 = vunpack.c.0.s8 %v2206
  %v2208 = vlaneseq
  %v2209 = vshrl.u32 %v2208, 7
  %v2210 = vsub.s32 %v2207, %v2209
  %v2211 = vrot.slane %v2203, %v2210
  %v2213 = vunpack.c.l.s4 1983009808
  %v2214 = vunpack.c.0.s8 %v2213
  %v2215 = vlaneseq
  %v2216 = vshrl.u32 %v2215, 7
  %v2217 = vsub.s32 %v2214, %v2216
  %v2218 = vrot.slane %v2204, %v2217
  %v2219 = vcombine.low %v2211, %v2218
  %v2220 = vcombine.low %v456, %v463
  %v2221 = vcombine.low %v470, %v477
  %v2223 = vunpack.c.l.s4 1983009808
  %v2224 = vunpack.c.0.s8 %v2223
  %v2225 = vlaneseq
  %v2226 = vshrl.u32 %v2225, 7
  %v2227 = vsub.s32 %v2224, %v2226
  %v2228 = vrot.slane %v2220, %v2227
  %v2230 = vunpack.c.l.s4 1983009808
  %v2231 = vunpack.c.0.s8 %v2230
  %v2232 = vlaneseq
  %v2233 = vshrl.u32 %v2232, 7
  %v2234 = vsub.s32 %v2231, %v2233
  %v2235 = vrot.slane %v2221, %v2234
  %v2236 = vcombine.low %v2228, %v2235
  %v2237 = vcombine.low %v484, %v491
  %v2238 = vcombine.low %v498, %v505
  %v2240 = vunpack.c.l.s4 1983009808
  %v2241 = vunpack.c.0.s8 %v2240
  %v2242 = vlaneseq
  %v2243 = vshrl.u32 %v2242, 7
  %v2244 = vsub.s32 %v2241, %v2243
  %v2245 = vrot.slane %v2237, %v2244
  %v2247 = vunpack.c.l.s4 1983009808
  %v2248 = vunpack.c.0.s8 %v2247
  %v2249 = vlaneseq
  %v2250 = vshrl.u32 %v2249, 7
  %v2251 = vsub.s32 %v2248, %v2250
  %v2252 = vrot.slane %v2238, %v2251
  %v2253 = vcombine.low %v2245, %v2252
  %v2254 = vcombine.low %v512, %v519
  %v2255 = vcombine.low %v526, %v533
  %v2257 = vunpack.c.l.s4 1983009808
  %v2258 = vunpack.c.0.s8 %v2257
  %v2259 = vlaneseq
  %v2260 = vshrl.u32 %v2259, 7
  %v2261 = vsub.s32 %v2258, %v2260
  %v2262 = vrot.slane %v2254, %v2261
  %v2264 = vunpack.c.l.s4 1983009808
  %v2265 = vunpack.c.0.s8 %v2264
  %v2266 = vlaneseq
  %v2267 = vshrl.u32 %v2266, 7
  %v2268 = vsub.s32 %v2265, %v2267
  %v2269 = vrot.slane %v2255, %v2268
  %v2270 = vcombine.low %v2262, %v2269
  %v2271 = vcombine.low %v540, %v547
  %v2272 = vcombine.low %v554, %v561
  %v2274 = vunpack.c.l.s4 1983009808
  %v2275 = vunpack.c.0.s8 %v2274
  %v2276 = vlaneseq
  %v2277 = vshrl.u32 %v2276, 7
  %v2278 = vsub.s32 %v2275, %v2277
  %v2279 = vrot.slane %v2271, %v2278
  %v2281 = vunpack.c.l.s4 1983009808
  %v2282 = vunpack.c.0.s8 %v2281
  %v2283 = vlaneseq
  %v2284 = vshrl.u32 %v2283, 7
  %v2285 = vsub.s32 %v2282, %v2284
  %v2286 = vrot.slane %v2272, %v2285
  %v2287 = vcombine.low %v2279, %v2286
  %v2288 = vcombine.low %v568, %v575
  %v2289 = vcombine.low %v582, %v589
  %v2291 = vunpack.c.l.s4 1983009808
  %v2292 = vunpack.c.0.s8 %v2291
  %v2293 = vlaneseq
  %v2294 = vshrl.u32 %v2293, 7
  %v2295 = vsub.s32 %v2292, %v2294
  %v2296 = vrot.slane %v2288, %v2295
  %v2298 = vunpack.c.l.s4 1983009808
  %v2299 = vunpack.c.0.s8 %v2298
  %v2300 = vlaneseq
  %v2301 = vshrl.u32 %v2300, 7
  %v2302 = vsub.s32 %v2299, %v2301
  %v2303 = vrot.slane %v2289, %v2302
  %v2304 = vcombine.low %v2296, %v2303
  %v2305 = vcombine.low %v596, %v603
  %v2306 = vcombine.low %v610, %v617
  %v2308 = vunpack.c.l.s4 1983009808
  %v2309 = vunpack.c.0.s8 %v2308
  %v2310 = vlaneseq
  %v2311 = vshrl.u32 %v2310, 7
  %v2312 = vsub.s32 %v2309, %v2311
  %v2313 = vrot.slane %v2305, %v2312
  %v2315 = vunpack.c.l.s4 1983009808
  %v2316 = vunpack.c.0.s8 %v2315
  %v2317 = vlaneseq
  %v2318 = vshrl.u32 %v2317, 7
  %v2319 = vsub.s32 %v2316, %v2318
  %v2320 = vrot.slane %v2306, %v2319
  %v2321 = vcombine.low %v2313, %v2320
  %v2322 = vcombine.low %v624, %v631
  %v2323 = vcombine.low %v638, %v645
  %v2325 = vunpack.c.l.s4 1983009808
  %v2326 = vunpack.c.0.s8 %v2325
  %v2327 = vlaneseq
  %v2328 = vshrl.u32 %v2327, 7
  %v2329 = vsub.s32 %v2326, %v2328
  %v2330 = vrot.slane %v2322, %v2329
  %v2332 = vunpack.c.l.s4 1983009808
  %v2333 = vunpack.c.0.s8 %v2332
  %v2334 = vlaneseq
  %v2335 = vshrl.u32 %v2334, 7
  %v2336 = vsub.s32 %v2333, %v2335
  %v2337 = vrot.slane %v2323, %v2336
  %v2338 = vcombine.low %v2330, %v2337
  %v2339 = vcombine.low %v652, %v659
  %v2340 = vcombine.low %v666, %v673
  %v2342 = vunpack.c.l.s4 1983009808
  %v2343 = vunpack.c.0.s8 %v2342
  %v2344 = vlaneseq
  %v2345 = vshrl.u32 %v2344, 7
  %v2346 = vsub.s32 %v2343, %v2345
  %v2347 = vrot.slane %v2339, %v2346
  %v2349 = vunpack.c.l.s4 1983009808
  %v2350 = vunpack.c.0.s8 %v2349
  %v2351 = vlaneseq
  %v2352 = vshrl.u32 %v2351, 7
  %v2353 = vsub.s32 %v2350, %v2352
  %v2354 = vrot.slane %v2340, %v2353
  %v2355 = vcombine.low %v2347, %v2354
  %v2356 = vcombine.low %v680, %v687
  %v2357 = vcombine.low %v694, %v701
  %v2359 = vunpack.c.l.s4 1983009808
  %v2360 = vunpack.c.0.s8 %v2359
  %v2361 = vlaneseq
  %v2362 = vshrl.u32 %v2361, 7
  %v2363 = vsub.s32 %v2360, %v2362
  %v2364 = vrot.slane %v2356, %v2363
  %v2366 = vunpack.c.l.s4 1983009808
  %v2367 = vunpack.c.0.s8 %v2366
  %v2368 = vlaneseq
  %v2369 = vshrl.u32 %v2368, 7
  %v2370 = vsub.s32 %v2367, %v2369
  %v2371 = vrot.slane %v2357, %v2370
  %v2372 = vcombine.low %v2364, %v2371
  %v2373 = vcombine.low %v708, %v715
  %v2374 = vcombine.low %v722, %v729
  %v2376 = vunpack.c.l.s4 1983009808
  %v2377 = vunpack.c.0.s8 %v2376
  %v2378 = vlaneseq
  %v2379 = vshrl.u32 %v2378, 7
  %v2380 = vsub.s32 %v2377, %v2379
  %v2381 = vrot.slane %v2373, %v2380
  %v2383 = vunpack.c.l.s4 1983009808
  %v2384 = vunpack.c.0.s8 %v2383
  %v2385 = vlaneseq
  %v2386 = vshrl.u32 %v2385, 7
  %v2387 = vsub.s32 %v2384, %v2386
  %v2388 = vrot.slane %v2374, %v2387
  %v2389 = vcombine.low %v2381, %v2388
  %v2390 = vcombine.low %v736, %v743
  %v2391 = vcombine.low %v750, %v757
  %v2393 = vunpack.c.l.s4 1983009808
  %v2394 = vunpack.c.0.s8 %v2393
  %v2395 = vlaneseq
  %v2396 = vshrl.u32 %v2395, 7
  %v2397 = vsub.s32 %v2394, %v2396
  %v2398 = vrot.slane %v2390, %v2397
  %v2400 = vunpack.c.l.s4 1983009808
  %v2401 = vunpack.c.0.s8 %v2400
  %v2402 = vlaneseq
  %v2403 = vshrl.u32 %v2402, 7
  %v2404 = vsub.s32 %v2401, %v2403
  %v2405 = vrot.slane %v2391, %v2404
  %v2406 = vcombine.low %v2398, %v2405
  %v2407 = vcombine.low %v764, %v771
  %v2408 = vcombine.low %v778, %v785
  %v2410 = vunpack.c.l.s4 1983009808
  %v2411 = vunpack.c.0.s8 %v2410
  %v2412 = vlaneseq
  %v2413 = vshrl.u32 %v2412, 7
  %v2414 = vsub.s32 %v2411, %v2413
  %v2415 = vrot.slane %v2407, %v2414
  %v2417 = vunpack.c.l.s4 1983009808
  %v2418 = vunpack.c.0.s8 %v2417
  %v2419 = vlaneseq
  %v2420 = vshrl.u32 %v2419, 7
  %v2421 = vsub.s32 %v2418, %v2420
  %v2422 = vrot.slane %v2408, %v2421
  %v2423 = vcombine.low %v2415, %v2422
  %v2424 = vcombine.low %v792, %v799
  %v2425 = vcombine.low %v806, %v813
  %v2427 = vunpack.c.l.s4 1983009808
  %v2428 = vunpack.c.0.s8 %v2427
  %v2429 = vlaneseq
  %v2430 = vshrl.u32 %v2429, 7
  %v2431 = vsub.s32 %v2428, %v2430
  %v2432 = vrot.slane %v2424, %v2431
  %v2434 = vunpack.c.l.s4 1983009808
  %v2435 = vunpack.c.0.s8 %v2434
  %v2436 = vlaneseq
  %v2437 = vshrl.u32 %v2436, 7
  %v2438 = vsub.s32 %v2435, %v2437
  %v2439 = vrot.slane %v2425, %v2438
  %v2440 = vcombine.low %v2432, %v2439
  %v2441 = vcombine.low %v820, %v827
  %v2442 = vcombine.low %v834, %v841
  %v2444 = vunpack.c.l.s4 1983009808
  %v2445 = vunpack.c.0.s8 %v2444
  %v2446 = vlaneseq
  %v2447 = vshrl.u32 %v2446, 7
  %v2448 = vsub.s32 %v2445, %v2447
  %v2449 = vrot.slane %v2441, %v2448
  %v2451 = vunpack.c.l.s4 1983009808
  %v2452 = vunpack.c.0.s8 %v2451
  %v2453 = vlaneseq
  %v2454 = vshrl.u32 %v2453, 7
  %v2455 = vsub.s32 %v2452, %v2454
  %v2456 = vrot.slane %v2442, %v2455
  %v2457 = vcombine.low %v2449, %v2456
  %v2458 = vcombine.low %v848, %v855
  %v2459 = vcombine.low %v862, %v869
  %v2461 = vunpack.c.l.s4 1983009808
  %v2462 = vunpack.c.0.s8 %v2461
  %v2463 = vlaneseq
  %v2464 = vshrl.u32 %v2463, 7
  %v2465 = vsub.s32 %v2462, %v2464
  %v2466 = vrot.slane %v2458, %v2465
  %v2468 = vunpack.c.l.s4 1983009808
  %v2469 = vunpack.c.0.s8 %v2468
  %v2470 = vlaneseq
  %v2471 = vshrl.u32 %v2470, 7
  %v2472 = vsub.s32 %v2469, %v2471
  %v2473 = vrot.slane %v2459, %v2472
  %v2474 = vcombine.low %v2466, %v2473
  %v2475 = vcombine.low %v876, %v883
  %v2476 = vcombine.low %v890, %v897
  %v2478 = vunpack.c.l.s4 1983009808
  %v2479 = vunpack.c.0.s8 %v2478
  %v2480 = vlaneseq
  %v2481 = vshrl.u32 %v2480, 7
  %v2482 = vsub.s32 %v2479, %v2481
  %v2483 = vrot.slane %v2475, %v2482
  %v2485 = vunpack.c.l.s4 1983009808
  %v2486 = vunpack.c.0.s8 %v2485
  %v2487 = vlaneseq
  %v2488 = vshrl.u32 %v2487, 7
  %v2489 = vsub.s32 %v2486, %v2488
  %v2490 = vrot.slane %v2476, %v2489
  %v2491 = vcombine.low %v2483, %v2490
  %v2492 = vcombine.low %v904, %v911
  %v2493 = vcombine.low %v918, %v925
  %v2495 = vunpack.c.l.s4 1983009808
  %v2496 = vunpack.c.0.s8 %v2495
  %v2497 = vlaneseq
  %v2498 = vshrl.u32 %v2497, 7
  %v2499 = vsub.s32 %v2496, %v2498
  %v2500 = vrot.slane %v2492, %v2499
  %v2502 = vunpack.c.l.s4 1983009808
  %v2503 = vunpack.c.0.s8 %v2502
  %v2504 = vlaneseq
  %v2505 = vshrl.u32 %v2504, 7
  %v2506 = vsub.s32 %v2503, %v2505
  %v2507 = vrot.slane %v2493, %v2506
  %v2508 = vcombine.low %v2500, %v2507
  %v2509 = vcombine.low %v932, %v939
  %v2510 = vcombine.low %v946, %v953
  %v2512 = vunpack.c.l.s4 1983009808
  %v2513 = vunpack.c.0.s8 %v2512
  %v2514 = vlaneseq
  %v2515 = vshrl.u32 %v2514, 7
  %v2516 = vsub.s32 %v2513, %v2515
  %v2517 = vrot.slane %v2509, %v2516
  %v2519 = vunpack.c.l.s4 1983009808
  %v2520 = vunpack.c.0.s8 %v2519
  %v2521 = vlaneseq
  %v2522 = vshrl.u32 %v2521, 7
  %v2523 = vsub.s32 %v2520, %v2522
  %v2524 = vrot.slane %v2510, %v2523
  %v2525 = vcombine.low %v2517, %v2524
  %v2526 = vcombine.low %v960, %v967
  %v2527 = vcombine.low %v974, %v981
  %v2529 = vunpack.c.l.s4 1983009808
  %v2530 = vunpack.c.0.s8 %v2529
  %v2531 = vlaneseq
  %v2532 = vshrl.u32 %v2531, 7
  %v2533 = vsub.s32 %v2530, %v2532
  %v2534 = vrot.slane %v2526, %v2533
  %v2536 = vunpack.c.l.s4 1983009808
  %v2537 = vunpack.c.0.s8 %v2536
  %v2538 = vlaneseq
  %v2539 = vshrl.u32 %v2538, 7
  %v2540 = vsub.s32 %v2537, %v2539
  %v2541 = vrot.slane %v2527, %v2540
  %v2542 = vcombine.low %v2534, %v2541
  %v2543 = vcombine.low %v988, %v995
  %v2544 = vcombine.low %v1002, %v1009
  %v2546 = vunpack.c.l.s4 1983009808
  %v2547 = vunpack.c.0.s8 %v2546
  %v2548 = vlaneseq
  %v2549 = vshrl.u32 %v2548, 7
  %v2550 = vsub.s32 %v2547, %v2549
  %v2551 = vrot.slane %v2543, %v2550
  %v2553 = vunpack.c.l.s4 1983009808
  %v2554 = vunpack.c.0.s8 %v2553
  %v2555 = vlaneseq
  %v2556 = vshrl.u32 %v2555, 7
  %v2557 = vsub.s32 %v2554, %v2556
  %v2558 = vrot.slane %v2544, %v2557
  %v2559 = vcombine.low %v2551, %v2558
  %v2560 = vcombine.low %v1016, %v1023
  %v2561 = vcombine.low %v1030, %v1037
  %v2563 = vunpack.c.l.s4 1983009808
  %v2564 = vunpack.c.0.s8 %v2563
  %v2565 = vlaneseq
  %v2566 = vshrl.u32 %v2565, 7
  %v2567 = vsub.s32 %v2564, %v2566
  %v2568 = vrot.slane %v2560, %v2567
  %v2570 = vunpack.c.l.s4 1983009808
  %v2571 = vunpack.c.0.s8 %v2570
  %v2572 = vlaneseq
  %v2573 = vshrl.u32 %v2572, 7
  %v2574 = vsub.s32 %v2571, %v2573
  %v2575 = vrot.slane %v2561, %v2574
  %v2576 = vcombine.low %v2568, %v2575
  %v2577 = vcombine.low %v1044, %v1051
  %v2578 = vcombine.low %v1058, %v1065
  %v2580 = vunpack.c.l.s4 1983009808
  %v2581 = vunpack.c.0.s8 %v2580
  %v2582 = vlaneseq
  %v2583 = vshrl.u32 %v2582, 7
  %v2584 = vsub.s32 %v2581, %v2583
  %v2585 = vrot.slane %v2577, %v2584
  %v2587 = vunpack.c.l.s4 1983009808
  %v2588 = vunpack.c.0.s8 %v2587
  %v2589 = vlaneseq
  %v2590 = vshrl.u32 %v2589, 7
  %v2591 = vsub.s32 %v2588, %v2590
  %v2592 = vrot.slane %v2578, %v2591
  %v2593 = vcombine.low %v2585, %v2592
  %v2594 = vcombine.low %v1072, %v1079
  %v2595 = vcombine.low %v1086, %v1093
  %v2597 = vunpack.c.l.s4 1983009808
  %v2598 = vunpack.c.0.s8 %v2597
  %v2599 = vlaneseq
  %v2600 = vshrl.u32 %v2599, 7
  %v2601 = vsub.s32 %v2598, %v2600
  %v2602 = vrot.slane %v2594, %v2601
  %v2604 = vunpack.c.l.s4 1983009808
  %v2605 = vunpack.c.0.s8 %v2604
  %v2606 = vlaneseq
  %v2607 = vshrl.u32 %v2606, 7
  %v2608 = vsub.s32 %v2605, %v2607
  %v2609 = vrot.slane %v2595, %v2608
  %v2610 = vcombine.low %v2602, %v2609
  %v2611 = vcombine.low %v1100, %v1107
  %v2612 = vcombine.low %v1114, %v1121
  %v2614 = vunpack.c.l.s4 1983009808
  %v2615 = vunpack.c.0.s8 %v2614
  %v2616 = vlaneseq
  %v2617 = vshrl.u32 %v2616, 7
  %v2618 = vsub.s32 %v2615, %v2617
  %v2619 = vrot.slane %v2611, %v2618
  %v2621 = vunpack.c.l.s4 1983009808
  %v2622 = vunpack.c.0.s8 %v2621
  %v2623 = vlaneseq
  %v2624 = vshrl.u32 %v2623, 7
  %v2625 = vsub.s32 %v2622, %v2624
  %v2626 = vrot.slane %v2612, %v2625
  %v2627 = vcombine.low %v2619, %v2626
  %v2628 = vcombine.low %v1128, %v1135
  %v2629 = vcombine.low %v1142, %v1149
  %v2631 = vunpack.c.l.s4 1983009808
  %v2632 = vunpack.c.0.s8 %v2631
  %v2633 = vlaneseq
  %v2634 = vshrl.u32 %v2633, 7
  %v2635 = vsub.s32 %v2632, %v2634
  %v2636 = vrot.slane %v2628, %v2635
  %v2638 = vunpack.c.l.s4 1983009808
  %v2639 = vunpack.c.0.s8 %v2638
  %v2640 = vlaneseq
  %v2641 = vshrl.u32 %v2640, 7
  %v2642 = vsub.s32 %v2639, %v2641
  %v2643 = vrot.slane %v2629, %v2642
  %v2644 = vcombine.low %v2636, %v2643
  %v2645 = vcombine.low %v1156, %v1163
  %v2646 = vcombine.low %v1170, %v1177
  %v2648 = vunpack.c.l.s4 1983009808
  %v2649 = vunpack.c.0.s8 %v2648
  %v2650 = vlaneseq
  %v2651 = vshrl.u32 %v2650, 7
  %v2652 = vsub.s32 %v2649, %v2651
  %v2653 = vrot.slane %v2645, %v2652
  %v2655 = vunpack.c.l.s4 1983009808
  %v2656 = vunpack.c.0.s8 %v2655
  %v2657 = vlaneseq
  %v2658 = vshrl.u32 %v2657, 7
  %v2659 = vsub.s32 %v2656, %v2658
  %v2660 = vrot.slane %v2646, %v2659
  %v2661 = vcombine.low %v2653, %v2660
  %v2662 = vcombine.low %v1184, %v1191
  %v2663 = vcombine.low %v1198, %v1205
  %v2665 = vunpack.c.l.s4 1983009808
  %v2666 = vunpack.c.0.s8 %v2665
  %v2667 = vlaneseq
  %v2668 = vshrl.u32 %v2667, 7
  %v2669 = vsub.s32 %v2666, %v2668
  %v2670 = vrot.slane %v2662, %v2669
  %v2672 = vunpack.c.l.s4 1983009808
  %v2673 = vunpack.c.0.s8 %v2672
  %v2674 = vlaneseq
  %v2675 = vshrl.u32 %v2674, 7
  %v2676 = vsub.s32 %v2673, %v2675
  %v2677 = vrot.slane %v2663, %v2676
  %v2678 = vcombine.low %v2670, %v2677
  %v2679 = vcombine.low %v1212, %v1219
  %v2680 = vcombine.low %v1226, %v1233
  %v2682 = vunpack.c.l.s4 1983009808
  %v2683 = vunpack.c.0.s8 %v2682
  %v2684 = vlaneseq
  %v2685 = vshrl.u32 %v2684, 7
  %v2686 = vsub.s32 %v2683, %v2685
  %v2687 = vrot.slane %v2679, %v2686
  %v2689 = vunpack.c.l.s4 1983009808
  %v2690 = vunpack.c.0.s8 %v2689
  %v2691 = vlaneseq
  %v2692 = vshrl.u32 %v2691, 7
  %v2693 = vsub.s32 %v2690, %v2692
  %v2694 = vrot.slane %v2680, %v2693
  %v2695 = vcombine.low %v2687, %v2694
  %v2696 = vcombine.low %v1240, %v1247
  %v2697 = vcombine.low %v1254, %v1261
  %v2699 = vunpack.c.l.s4 1983009808
  %v2700 = vunpack.c.0.s8 %v2699
  %v2701 = vlaneseq
  %v2702 = vshrl.u32 %v2701, 7
  %v2703 = vsub.s32 %v2700, %v2702
  %v2704 = vrot.slane %v2696, %v2703
  %v2706 = vunpack.c.l.s4 1983009808
  %v2707 = vunpack.c.0.s8 %v2706
  %v2708 = vlaneseq
  %v2709 = vshrl.u32 %v2708, 7
  %v2710 = vsub.s32 %v2707, %v2709
  %v2711 = vrot.slane %v2697, %v2710
  %v2712 = vcombine.low %v2704, %v2711
  %v2713 = vcombine.low %v1268, %v1275
  %v2714 = vcombine.low %v1282, %v1289
  %v2716 = vunpack.c.l.s4 1983009808
  %v2717 = vunpack.c.0.s8 %v2716
  %v2718 = vlaneseq
  %v2719 = vshrl.u32 %v2718, 7
  %v2720 = vsub.s32 %v2717, %v2719
  %v2721 = vrot.slane %v2713, %v2720
  %v2723 = vunpack.c.l.s4 1983009808
  %v2724 = vunpack.c.0.s8 %v2723
  %v2725 = vlaneseq
  %v2726 = vshrl.u32 %v2725, 7
  %v2727 = vsub.s32 %v2724, %v2726
  %v2728 = vrot.slane %v2714, %v2727
  %v2729 = vcombine.low %v2721, %v2728
  %v2730 = vcombine.low %v1296, %v1303
  %v2731 = vcombine.low %v1310, %v1317
  %v2733 = vunpack.c.l.s4 1983009808
  %v2734 = vunpack.c.0.s8 %v2733
  %v2735 = vlaneseq
  %v2736 = vshrl.u32 %v2735, 7
  %v2737 = vsub.s32 %v2734, %v2736
  %v2738 = vrot.slane %v2730, %v2737
  %v2740 = vunpack.c.l.s4 1983009808
  %v2741 = vunpack.c.0.s8 %v2740
  %v2742 = vlaneseq
  %v2743 = vshrl.u32 %v2742, 7
  %v2744 = vsub.s32 %v2741, %v2743
  %v2745 = vrot.slane %v2731, %v2744
  %v2746 = vcombine.low %v2738, %v2745
  %v2747 = vcombine.low %v1324, %v1331
  %v2748 = vcombine.low %v1338, %v1345
  %v2750 = vunpack.c.l.s4 1983009808
  %v2751 = vunpack.c.0.s8 %v2750
  %v2752 = vlaneseq
  %v2753 = vshrl.u32 %v2752, 7
  %v2754 = vsub.s32 %v2751, %v2753
  %v2755 = vrot.slane %v2747, %v2754
  %v2757 = vunpack.c.l.s4 1983009808
  %v2758 = vunpack.c.0.s8 %v2757
  %v2759 = vlaneseq
  %v2760 = vshrl.u32 %v2759, 7
  %v2761 = vsub.s32 %v2758, %v2760
  %v2762 = vrot.slane %v2748, %v2761
  %v2763 = vcombine.low %v2755, %v2762
  %v2764 = vcombine.low %v1352, %v1359
  %v2765 = vcombine.low %v1366, %v1373
  %v2767 = vunpack.c.l.s4 1983009808
  %v2768 = vunpack.c.0.s8 %v2767
  %v2769 = vlaneseq
  %v2770 = vshrl.u32 %v2769, 7
  %v2771 = vsub.s32 %v2768, %v2770
  %v2772 = vrot.slane %v2764, %v2771
  %v2774 = vunpack.c.l.s4 1983009808
  %v2775 = vunpack.c.0.s8 %v2774
  %v2776 = vlaneseq
  %v2777 = vshrl.u32 %v2776, 7
  %v2778 = vsub.s32 %v2775, %v2777
  %v2779 = vrot.slane %v2765, %v2778
  %v2780 = vcombine.low %v2772, %v2779
  %v2781 = vcombine.low %v1380, %v1387
  %v2782 = vcombine.low %v1394, %v1401
  %v2784 = vunpack.c.l.s4 1983009808
  %v2785 = vunpack.c.0.s8 %v2784
  %v2786 = vlaneseq
  %v2787 = vshrl.u32 %v2786, 7
  %v2788 = vsub.s32 %v2785, %v2787
  %v2789 = vrot.slane %v2781, %v2788
  %v2791 = vunpack.c.l.s4 1983009808
  %v2792 = vunpack.c.0.s8 %v2791
  %v2793 = vlaneseq
  %v2794 = vshrl.u32 %v2793, 7
  %v2795 = vsub.s32 %v2792, %v2794
  %v2796 = vrot.slane %v2782, %v2795
  %v2797 = vcombine.low %v2789, %v2796
  %v2798 = vcombine.low %v1408, %v1415
  %v2799 = vcombine.low %v1422, %v1429
  %v2801 = vunpack.c.l.s4 1983009808
  %v2802 = vunpack.c.0.s8 %v2801
  %v2803 = vlaneseq
  %v2804 = vshrl.u32 %v2803, 7
  %v2805 = vsub.s32 %v2802, %v2804
  %v2806 = vrot.slane %v2798, %v2805
  %v2808 = vunpack.c.l.s4 1983009808
  %v2809 = vunpack.c.0.s8 %v2808
  %v2810 = vlaneseq
  %v2811 = vshrl.u32 %v2810, 7
  %v2812 = vsub.s32 %v2809, %v2811
  %v2813 = vrot.slane %v2799, %v2812
  %v2814 = vcombine.low %v2806, %v2813
  %v2815 = vcombine.low %v1436, %v1443
  %v2816 = vcombine.low %v1450, %v1457
  %v2818 = vunpack.c.l.s4 1983009808
  %v2819 = vunpack.c.0.s8 %v2818
  %v2820 = vlaneseq
  %v2821 = vshrl.u32 %v2820, 7
  %v2822 = vsub.s32 %v2819, %v2821
  %v2823 = vrot.slane %v2815, %v2822
  %v2825 = vunpack.c.l.s4 1983009808
  %v2826 = vunpack.c.0.s8 %v2825
  %v2827 = vlaneseq
  %v2828 = vshrl.u32 %v2827, 7
  %v2829 = vsub.s32 %v2826, %v2828
  %v2830 = vrot.slane %v2816, %v2829
  %v2831 = vcombine.low %v2823, %v2830
  %v2832 = vcombine.low %v1464, %v1471
  %v2833 = vcombine.low %v1478, %v1485
  %v2835 = vunpack.c.l.s4 1983009808
  %v2836 = vunpack.c.0.s8 %v2835
  %v2837 = vlaneseq
  %v2838 = vshrl.u32 %v2837, 7
  %v2839 = vsub.s32 %v2836, %v2838
  %v2840 = vrot.slane %v2832, %v2839
  %v2842 = vunpack.c.l.s4 1983009808
  %v2843 = vunpack.c.0.s8 %v2842
  %v2844 = vlaneseq
  %v2845 = vshrl.u32 %v2844, 7
  %v2846 = vsub.s32 %v2843, %v2845
  %v2847 = vrot.slane %v2833, %v2846
  %v2848 = vcombine.low %v2840, %v2847
  %v2849 = vcombine.low %v1492, %v1499
  %v2850 = vcombine.low %v1506, %v1513
  %v2852 = vunpack.c.l.s4 1983009808
  %v2853 = vunpack.c.0.s8 %v2852
  %v2854 = vlaneseq
  %v2855 = vshrl.u32 %v2854, 7
  %v2856 = vsub.s32 %v2853, %v2855
  %v2857 = vrot.slane %v2849, %v2856
  %v2859 = vunpack.c.l.s4 1983009808
  %v2860 = vunpack.c.0.s8 %v2859
  %v2861 = vlaneseq
  %v2862 = vshrl.u32 %v2861, 7
  %v2863 = vsub.s32 %v2860, %v2862
  %v2864 = vrot.slane %v2850, %v2863
  %v2865 = vcombine.low %v2857, %v2864
  %v2866 = vcombine.low %v1520, %v1527
  %v2867 = vcombine.low %v1534, %v1541
  %v2869 = vunpack.c.l.s4 1983009808
  %v2870 = vunpack.c.0.s8 %v2869
  %v2871 = vlaneseq
  %v2872 = vshrl.u32 %v2871, 7
  %v2873 = vsub.s32 %v2870, %v2872
  %v2874 = vrot.slane %v2866, %v2873
  %v2876 = vunpack.c.l.s4 1983009808
  %v2877 = vunpack.c.0.s8 %v2876
  %v2878 = vlaneseq
  %v2879 = vshrl.u32 %v2878, 7
  %v2880 = vsub.s32 %v2877, %v2879
  %v2881 = vrot.slane %v2867, %v2880
  %v2882 = vcombine.low %v2874, %v2881
  %v2883 = vcombine.low %v1548, %v1555
  %v2884 = vcombine.low %v1562, %v1569
  %v2886 = vunpack.c.l.s4 1983009808
  %v2887 = vunpack.c.0.s8 %v2886
  %v2888 = vlaneseq
  %v2889 = vshrl.u32 %v2888, 7
  %v2890 = vsub.s32 %v2887, %v2889
  %v2891 = vrot.slane %v2883, %v2890
  %v2893 = vunpack.c.l.s4 1983009808
  %v2894 = vunpack.c.0.s8 %v2893
  %v2895 = vlaneseq
  %v2896 = vshrl.u32 %v2895, 7
  %v2897 = vsub.s32 %v2894, %v2896
  %v2898 = vrot.slane %v2884, %v2897
  %v2899 = vcombine.low %v2891, %v2898
  %v2900 = vcombine.low %v1576, %v1583
  %v2901 = vcombine.low %v1590, %v1597
  %v2903 = vunpack.c.l.s4 1983009808
  %v2904 = vunpack.c.0.s8 %v2903
  %v2905 = vlaneseq
  %v2906 = vshrl.u32 %v2905, 7
  %v2907 = vsub.s32 %v2904, %v2906
  %v2908 = vrot.slane %v2900, %v2907
  %v2910 = vunpack.c.l.s4 1983009808
  %v2911 = vunpack.c.0.s8 %v2910
  %v2912 = vlaneseq
  %v2913 = vshrl.u32 %v2912, 7
  %v2914 = vsub.s32 %v2911, %v2913
  %v2915 = vrot.slane %v2901, %v2914
  %v2916 = vcombine.low %v2908, %v2915
  %v2917 = vcombine.low %v1604, %v1611
  %v2918 = vcombine.low %v1618, %v1625
  %v2920 = vunpack.c.l.s4 1983009808
  %v2921 = vunpack.c.0.s8 %v2920
  %v2922 = vlaneseq
  %v2923 = vshrl.u32 %v2922, 7
  %v2924 = vsub.s32 %v2921, %v2923
  %v2925 = vrot.slane %v2917, %v2924
  %v2927 = vunpack.c.l.s4 1983009808
  %v2928 = vunpack.c.0.s8 %v2927
  %v2929 = vlaneseq
  %v2930 = vshrl.u32 %v2929, 7
  %v2931 = vsub.s32 %v2928, %v2930
  %v2932 = vrot.slane %v2918, %v2931
  %v2933 = vcombine.low %v2925, %v2932
  %v2934 = vcombine.low %v1632, %v1639
  %v2935 = vcombine.low %v1646, %v1653
  %v2937 = vunpack.c.l.s4 1983009808
  %v2938 = vunpack.c.0.s8 %v2937
  %v2939 = vlaneseq
  %v2940 = vshrl.u32 %v2939, 7
  %v2941 = vsub.s32 %v2938, %v2940
  %v2942 = vrot.slane %v2934, %v2941
  %v2944 = vunpack.c.l.s4 1983009808
  %v2945 = vunpack.c.0.s8 %v2944
  %v2946 = vlaneseq
  %v2947 = vshrl.u32 %v2946, 7
  %v2948 = vsub.s32 %v2945, %v2947
  %v2949 = vrot.slane %v2935, %v2948
  %v2950 = vcombine.low %v2942, %v2949
  %v2951 = vcombine.low %v1660, %v1667
  %v2952 = vcombine.low %v1674, %v1681
  %v2954 = vunpack.c.l.s4 1983009808
  %v2955 = vunpack.c.0.s8 %v2954
  %v2956 = vlaneseq
  %v2957 = vshrl.u32 %v2956, 7
  %v2958 = vsub.s32 %v2955, %v2957
  %v2959 = vrot.slane %v2951, %v2958
  %v2961 = vunpack.c.l.s4 1983009808
  %v2962 = vunpack.c.0.s8 %v2961
  %v2963 = vlaneseq
  %v2964 = vshrl.u32 %v2963, 7
  %v2965 = vsub.s32 %v2962, %v2964
  %v2966 = vrot.slane %v2952, %v2965
  %v2967 = vcombine.low %v2959, %v2966
  %v2968 = vcombine.low %v1688, %v1695
  %v2969 = vcombine.low %v1702, %v1709
  %v2971 = vunpack.c.l.s4 1983009808
  %v2972 = vunpack.c.0.s8 %v2971
  %v2973 = vlaneseq
  %v2974 = vshrl.u32 %v2973, 7
  %v2975 = vsub.s32 %v2972, %v2974
  %v2976 = vrot.slane %v2968, %v2975
  %v2978 = vunpack.c.l.s4 1983009808
  %v2979 = vunpack.c.0.s8 %v2978
  %v2980 = vlaneseq
  %v2981 = vshrl.u32 %v2980, 7
  %v2982 = vsub.s32 %v2979, %v2981
  %v2983 = vrot.slane %v2969, %v2982
  %v2984 = vcombine.low %v2976, %v2983
  %v2985 = vcombine.low %v1716, %v1723
  %v2986 = vcombine.low %v1730, %v1737
  %v2988 = vunpack.c.l.s4 1983009808
  %v2989 = vunpack.c.0.s8 %v2988
  %v2990 = vlaneseq
  %v2991 = vshrl.u32 %v2990, 7
  %v2992 = vsub.s32 %v2989, %v2991
  %v2993 = vrot.slane %v2985, %v2992
  %v2995 = vunpack.c.l.s4 1983009808
  %v2996 = vunpack.c.0.s8 %v2995
  %v2997 = vlaneseq
  %v2998 = vshrl.u32 %v2997, 7
  %v2999 = vsub.s32 %v2996, %v2998
  %v3000 = vrot.slane %v2986, %v2999
  %v3001 = vcombine.low %v2993, %v3000
  %v3002 = vcombine.low %v1744, %v1751
  %v3003 = vcombine.low %v1758, %v1765
  %v3005 = vunpack.c.l.s4 1983009808
  %v3006 = vunpack.c.0.s8 %v3005
  %v3007 = vlaneseq
  %v3008 = vshrl.u32 %v3007, 7
  %v3009 = vsub.s32 %v3006, %v3008
  %v3010 = vrot.slane %v3002, %v3009
  %v3012 = vunpack.c.l.s4 1983009808
  %v3013 = vunpack.c.0.s8 %v3012
  %v3014 = vlaneseq
  %v3015 = vshrl.u32 %v3014, 7
  %v3016 = vsub.s32 %v3013, %v3015
  %v3017 = vrot.slane %v3003, %v3016
  %v3018 = vcombine.low %v3010, %v3017
  %v3019 = vcombine.low %v1772, %v1779
  %v3020 = vcombine.low %v1786, %v1793
  %v3022 = vunpack.c.l.s4 1983009808
  %v3023 = vunpack.c.0.s8 %v3022
  %v3024 = vlaneseq
  %v3025 = vshrl.u32 %v3024, 7
  %v3026 = vsub.s32 %v3023, %v3025
  %v3027 = vrot.slane %v3019, %v3026
  %v3029 = vunpack.c.l.s4 1983009808
  %v3030 = vunpack.c.0.s8 %v3029
  %v3031 = vlaneseq
  %v3032 = vshrl.u32 %v3031, 7
  %v3033 = vsub.s32 %v3030, %v3032
  %v3034 = vrot.slane %v3020, %v3033
  %v3035 = vcombine.low %v3027, %v3034
  %v3036 = vcombine.low %v1800, %v1807
  %v3037 = vcombine.low %v1814, %v1821
  %v3039 = vunpack.c.l.s4 1983009808
  %v3040 = vunpack.c.0.s8 %v3039
  %v3041 = vlaneseq
  %v3042 = vshrl.u32 %v3041, 7
  %v3043 = vsub.s32 %v3040, %v3042
  %v3044 = vrot.slane %v3036, %v3043
  %v3046 = vunpack.c.l.s4 1983009808
  %v3047 = vunpack.c.0.s8 %v3046
  %v3048 = vlaneseq
  %v3049 = vshrl.u32 %v3048, 7
  %v3050 = vsub.s32 %v3047, %v3049
  %v3051 = vrot.slane %v3037, %v3050
  %v3052 = vcombine.low %v3044, %v3051
  %v3053 = vcombine.low %v1828, %v1835
  %v3054 = vcombine.low %v1842, %v1849
  %v3056 = vunpack.c.l.s4 1983009808
  %v3057 = vunpack.c.0.s8 %v3056
  %v3058 = vlaneseq
  %v3059 = vshrl.u32 %v3058, 7
  %v3060 = vsub.s32 %v3057, %v3059
  %v3061 = vrot.slane %v3053, %v3060
  %v3063 = vunpack.c.l.s4 1983009808
  %v3064 = vunpack.c.0.s8 %v3063
  %v3065 = vlaneseq
  %v3066 = vshrl.u32 %v3065, 7
  %v3067 = vsub.s32 %v3064, %v3066
  %v3068 = vrot.slane %v3054, %v3067
  %v3069 = vcombine.low %v3061, %v3068
  %v3070 = vcombine.low %v1856, %v1863
  %v3071 = vcombine.low %v1870, %v1877
  %v3073 = vunpack.c.l.s4 1983009808
  %v3074 = vunpack.c.0.s8 %v3073
  %v3075 = vlaneseq
  %v3076 = vshrl.u32 %v3075, 7
  %v3077 = vsub.s32 %v3074, %v3076
  %v3078 = vrot.slane %v3070, %v3077
  %v3080 = vunpack.c.l.s4 1983009808
  %v3081 = vunpack.c.0.s8 %v3080
  %v3082 = vlaneseq
  %v3083 = vshrl.u32 %v3082, 7
  %v3084 = vsub.s32 %v3081, %v3083
  %v3085 = vrot.slane %v3071, %v3084
  %v3086 = vcombine.low %v3078, %v3085
  %v3087 = vcombine.low %v1884, %v1891
  %v3088 = vcombine.low %v1898, %v1905
  %v3090 = vunpack.c.l.s4 1983009808
  %v3091 = vunpack.c.0.s8 %v3090
  %v3092 = vlaneseq
  %v3093 = vshrl.u32 %v3092, 7
  %v3094 = vsub.s32 %v3091, %v3093
  %v3095 = vrot.slane %v3087, %v3094
  %v3097 = vunpack.c.l.s4 1983009808
  %v3098 = vunpack.c.0.s8 %v3097
  %v3099 = vlaneseq
  %v3100 = vshrl.u32 %v3099, 7
  %v3101 = vsub.s32 %v3098, %v3100
  %v3102 = vrot.slane %v3088, %v3101
  %v3103 = vcombine.low %v3095, %v3102
  %v3104 = vcombine.low %v1912, %v1919
  %v3105 = vcombine.low %v1926, %v1933
  %v3107 = vunpack.c.l.s4 1983009808
  %v3108 = vunpack.c.0.s8 %v3107
  %v3109 = vlaneseq
  %v3110 = vshrl.u32 %v3109, 7
  %v3111 = vsub.s32 %v3108, %v3110
  %v3112 = vrot.slane %v3104, %v3111
  %v3114 = vunpack.c.l.s4 1983009808
  %v3115 = vunpack.c.0.s8 %v3114
  %v3116 = vlaneseq
  %v3117 = vshrl.u32 %v3116, 7
  %v3118 = vsub.s32 %v3115, %v3117
  %v3119 = vrot.slane %v3105, %v3118
  %v3120 = vcombine.low %v3112, %v3119
  %v3121 = vcombine.low %v1940, %v1947
  %v3122 = vcombine.low %v1954, %v1961
  %v3124 = vunpack.c.l.s4 1983009808
  %v3125 = vunpack.c.0.s8 %v3124
  %v3126 = vlaneseq
  %v3127 = vshrl.u32 %v3126, 7
  %v3128 = vsub.s32 %v3125, %v3127
  %v3129 = vrot.slane %v3121, %v3128
  %v3131 = vunpack.c.l.s4 1983009808
  %v3132 = vunpack.c.0.s8 %v3131
  %v3133 = vlaneseq
  %v3134 = vshrl.u32 %v3133, 7
  %v3135 = vsub.s32 %v3132, %v3134
  %v3136 = vrot.slane %v3122, %v3135
  %v3137 = vcombine.low %v3129, %v3136
  %v3138 = vcombine.low %v1968, %v1975
  %v3139 = vcombine.low %v1982, %v1989
  %v3141 = vunpack.c.l.s4 1983009808
  %v3142 = vunpack.c.0.s8 %v3141
  %v3143 = vlaneseq
  %v3144 = vshrl.u32 %v3143, 7
  %v3145 = vsub.s32 %v3142, %v3144
  %v3146 = vrot.slane %v3138, %v3145
  %v3148 = vunpack.c.l.s4 1983009808
  %v3149 = vunpack.c.0.s8 %v3148
  %v3150 = vlaneseq
  %v3151 = vshrl.u32 %v3150, 7
  %v3152 = vsub.s32 %v3149, %v3151
  %v3153 = vrot.slane %v3139, %v3152
  %v3154 = vcombine.low %v3146, %v3153
  %v3155 = vcombine.low %v1996, %v2003
  %v3156 = vcombine.low %v2010, %v2017
  %v3158 = vunpack.c.l.s4 1983009808
  %v3159 = vunpack.c.0.s8 %v3158
  %v3160 = vlaneseq
  %v3161 = vshrl.u32 %v3160, 7
  %v3162 = vsub.s32 %v3159, %v3161
  %v3163 = vrot.slane %v3155, %v3162
  %v3165 = vunpack.c.l.s4 1983009808
  %v3166 = vunpack.c.0.s8 %v3165
  %v3167 = vlaneseq
  %v3168 = vshrl.u32 %v3167, 7
  %v3169 = vsub.s32 %v3166, %v3168
  %v3170 = vrot.slane %v3156, %v3169
  %v3171 = vcombine.low %v3163, %v3170
  %v3172 = vcombine.low %v2024, %v2031
  %v3173 = vcombine.low %v2038, %v2045
  %v3175 = vunpack.c.l.s4 1983009808
  %v3176 = vunpack.c.0.s8 %v3175
  %v3177 = vlaneseq
  %v3178 = vshrl.u32 %v3177, 7
  %v3179 = vsub.s32 %v3176, %v3178
  %v3180 = vrot.slane %v3172, %v3179
  %v3182 = vunpack.c.l.s4 1983009808
  %v3183 = vunpack.c.0.s8 %v3182
  %v3184 = vlaneseq
  %v3185 = vshrl.u32 %v3184, 7
  %v3186 = vsub.s32 %v3183, %v3185
  %v3187 = vrot.slane %v3173, %v3186
  %v3188 = vcombine.low %v3180, %v3187
  %v3189 = vcombine.low %v2052, %v2059
  %v3190 = vcombine.low %v2066, %v2073
  %v3192 = vunpack.c.l.s4 1983009808
  %v3193 = vunpack.c.0.s8 %v3192
  %v3194 = vlaneseq
  %v3195 = vshrl.u32 %v3194, 7
  %v3196 = vsub.s32 %v3193, %v3195
  %v3197 = vrot.slane %v3189, %v3196
  %v3199 = vunpack.c.l.s4 1983009808
  %v3200 = vunpack.c.0.s8 %v3199
  %v3201 = vlaneseq
  %v3202 = vshrl.u32 %v3201, 7
  %v3203 = vsub.s32 %v3200, %v3202
  %v3204 = vrot.slane %v3190, %v3203
  %v3205 = vcombine.low %v3197, %v3204
  %v3206 = vcombine.low %v2080, %v2087
  %v3207 = vcombine.low %v2094, %v2101
  %v3209 = vunpack.c.l.s4 1983009808
  %v3210 = vunpack.c.0.s8 %v3209
  %v3211 = vlaneseq
  %v3212 = vshrl.u32 %v3211, 7
  %v3213 = vsub.s32 %v3210, %v3212
  %v3214 = vrot.slane %v3206, %v3213
  %v3216 = vunpack.c.l.s4 1983009808
  %v3217 = vunpack.c.0.s8 %v3216
  %v3218 = vlaneseq
  %v3219 = vshrl.u32 %v3218, 7
  %v3220 = vsub.s32 %v3217, %v3219
  %v3221 = vrot.slane %v3207, %v3220
  %v3222 = vcombine.low %v3214, %v3221
  %v3223 = vcombine.low %v2108, %v2115
  %v3224 = vcombine.low %v2122, %v2129
  %v3226 = vunpack.c.l.s4 1983009808
  %v3227 = vunpack.c.0.s8 %v3226
  %v3228 = vlaneseq
  %v3229 = vshrl.u32 %v3228, 7
  %v3230 = vsub.s32 %v3227, %v3229
  %v3231 = vrot.slane %v3223, %v3230
  %v3233 = vunpack.c.l.s4 1983009808
  %v3234 = vunpack.c.0.s8 %v3233
  %v3235 = vlaneseq
  %v3236 = vshrl.u32 %v3235, 7
  %v3237 = vsub.s32 %v3234, %v3236
  %v3238 = vrot.slane %v3224, %v3237
  %v3239 = vcombine.low %v3231, %v3238
  %v3240 = vcombine.low %v2136, %v2143
  %v3241 = vcombine.low %v2150, %v2157
  %v3243 = vunpack.c.l.s4 1983009808
  %v3244 = vunpack.c.0.s8 %v3243
  %v3245 = vlaneseq
  %v3246 = vshrl.u32 %v3245, 7
  %v3247 = vsub.s32 %v3244, %v3246
  %v3248 = vrot.slane %v3240, %v3247
  %v3250 = vunpack.c.l.s4 1983009808
  %v3251 = vunpack.c.0.s8 %v3250
  %v3252 = vlaneseq
  %v3253 = vshrl.u32 %v3252, 7
  %v3254 = vsub.s32 %v3251, %v3253
  %v3255 = vrot.slane %v3241, %v3254
  %v3256 = vcombine.low %v3248, %v3255
  %v3257 = vcombine.low %v2164, %v2171
  %v3258 = vcombine.low %v2178, %v2185
  %v3260 = vunpack.c.l.s4 1983009808
  %v3261 = vunpack.c.0.s8 %v3260
  %v3262 = vlaneseq
  %v3263 = vshrl.u32 %v3262, 7
  %v3264 = vsub.s32 %v3261, %v3263
  %v3265 = vrot.slane %v3257, %v3264
  %v3267 = vunpack.c.l.s4 1983009808
  %v3268 = vunpack.c.0.s8 %v3267
  %v3269 = vlaneseq
  %v3270 = vshrl.u32 %v3269, 7
  %v3271 = vsub.s32 %v3268, %v3270
  %v3272 = vrot.slane %v3258, %v3271
  %v3273 = vcombine.low %v3265, %v3272
  %3274 = vset.pattern.permute.xlu0 0
  %3275 = vperm.xlu0 %3274, %v2202
  %v3276 = vpop.permute.xlu0 %3275
  %3277 = vset.pattern.permute.xlu0 0
  %3278 = vperm.xlu0 %3277, %v2219
  %v3279 = vpop.permute.xlu0 %3278
  %3280 = vset.pattern.permute.xlu0 0
  %3281 = vperm.xlu0 %3280, %v2236
  %v3282 = vpop.permute.xlu0 %3281
  %3283 = vset.pattern.permute.xlu0 0
  %3284 = vperm.xlu0 %3283, %v2253
  %v3285 = vpop.permute.xlu0 %3284
  %3286 = vset.pattern.permute.xlu0 0
  %3287 = vperm.xlu0 %3286, %v2270
  %v3288 = vpop.permute.xlu0 %3287
  %3289 = vset.pattern.permute.xlu0 0
  %3290 = vperm.xlu0 %3289, %v2287
  %v3291 = vpop.permute.xlu0 %3290
  %3292 = vset.pattern.permute.xlu0 0
  %3293 = vperm.xlu0 %3292, %v2304
  %v3294 = vpop.permute.xlu0 %3293
  %3295 = vset.pattern.permute.xlu0 0
  %3296 = vperm.xlu0 %3295, %v2321
  %v3297 = vpop.permute.xlu0 %3296
  %3298 = vset.pattern.permute.xlu0 0
  %3299 = vperm.xlu0 %3298, %v2338
  %v3300 = vpop.permute.xlu0 %3299
  %3301 = vset.pattern.permute.xlu0 0
  %3302 = vperm.xlu0 %3301, %v2355
  %v3303 = vpop.permute.xlu0 %3302
  %3304 = vset.pattern.permute.xlu0 0
  %3305 = vperm.xlu0 %3304, %v2372
  %v3306 = vpop.permute.xlu0 %3305
  %3307 = vset.pattern.permute.xlu0 0
  %3308 = vperm.xlu0 %3307, %v2389
  %v3309 = vpop.permute.xlu0 %3308
  %3310 = vset.pattern.permute.xlu0 0
  %3311 = vperm.xlu0 %3310, %v2406
  %v3312 = vpop.permute.xlu0 %3311
  %3313 = vset.pattern.permute.xlu0 0
  %3314 = vperm.xlu0 %3313, %v2423
  %v3315 = vpop.permute.xlu0 %3314
  %3316 = vset.pattern.permute.xlu0 0
  %3317 = vperm.xlu0 %3316, %v2440
  %v3318 = vpop.permute.xlu0 %3317
  %3319 = vset.pattern.permute.xlu0 0
  %3320 = vperm.xlu0 %3319, %v2457
  %v3321 = vpop.permute.xlu0 %3320
  %3322 = vset.pattern.permute.xlu0 0
  %3323 = vperm.xlu0 %3322, %v2474
  %v3324 = vpop.permute.xlu0 %3323
  %3325 = vset.pattern.permute.xlu0 0
  %3326 = vperm.xlu0 %3325, %v2491
  %v3327 = vpop.permute.xlu0 %3326
  %3328 = vset.pattern.permute.xlu0 0
  %3329 = vperm.xlu0 %3328, %v2508
  %v3330 = vpop.permute.xlu0 %3329
  %3331 = vset.pattern.permute.xlu0 0
  %3332 = vperm.xlu0 %3331, %v2525
  %v3333 = vpop.permute.xlu0 %3332
  %3334 = vset.pattern.permute.xlu0 0
  %3335 = vperm.xlu0 %3334, %v2542
  %v3336 = vpop.permute.xlu0 %3335
  %3337 = vset.pattern.permute.xlu0 0
  %3338 = vperm.xlu0 %3337, %v2559
  %v3339 = vpop.permute.xlu0 %3338
  %3340 = vset.pattern.permute.xlu0 0
  %3341 = vperm.xlu0 %3340, %v2576
  %v3342 = vpop.permute.xlu0 %3341
  %3343 = vset.pattern.permute.xlu0 0
  %3344 = vperm.xlu0 %3343, %v2593
  %v3345 = vpop.permute.xlu0 %3344
  %3346 = vset.pattern.permute.xlu0 0
  %3347 = vperm.xlu0 %3346, %v2610
  %v3348 = vpop.permute.xlu0 %3347
  %3349 = vset.pattern.permute.xlu0 0
  %3350 = vperm.xlu0 %3349, %v2627
  %v3351 = vpop.permute.xlu0 %3350
  %3352 = vset.pattern.permute.xlu0 0
  %3353 = vperm.xlu0 %3352, %v2644
  %v3354 = vpop.permute.xlu0 %3353
  %3355 = vset.pattern.permute.xlu0 0
  %3356 = vperm.xlu0 %3355, %v2661
  %v3357 = vpop.permute.xlu0 %3356
  %3358 = vset.pattern.permute.xlu0 0
  %3359 = vperm.xlu0 %3358, %v2678
  %v3360 = vpop.permute.xlu0 %3359
  %3361 = vset.pattern.permute.xlu0 0
  %3362 = vperm.xlu0 %3361, %v2695
  %v3363 = vpop.permute.xlu0 %3362
  %3364 = vset.pattern.permute.xlu0 0
  %3365 = vperm.xlu0 %3364, %v2712
  %v3366 = vpop.permute.xlu0 %3365
  %3367 = vset.pattern.permute.xlu0 0
  %3368 = vperm.xlu0 %3367, %v2729
  %v3369 = vpop.permute.xlu0 %3368
  %3370 = vset.pattern.permute.xlu0 0
  %3371 = vperm.xlu0 %3370, %v2746
  %v3372 = vpop.permute.xlu0 %3371
  %3373 = vset.pattern.permute.xlu0 0
  %3374 = vperm.xlu0 %3373, %v2763
  %v3375 = vpop.permute.xlu0 %3374
  %3376 = vset.pattern.permute.xlu0 0
  %3377 = vperm.xlu0 %3376, %v2780
  %v3378 = vpop.permute.xlu0 %3377
  %3379 = vset.pattern.permute.xlu0 0
  %3380 = vperm.xlu0 %3379, %v2797
  %v3381 = vpop.permute.xlu0 %3380
  %3382 = vset.pattern.permute.xlu0 0
  %3383 = vperm.xlu0 %3382, %v2814
  %v3384 = vpop.permute.xlu0 %3383
  %3385 = vset.pattern.permute.xlu0 0
  %3386 = vperm.xlu0 %3385, %v2831
  %v3387 = vpop.permute.xlu0 %3386
  %3388 = vset.pattern.permute.xlu0 0
  %3389 = vperm.xlu0 %3388, %v2848
  %v3390 = vpop.permute.xlu0 %3389
  %3391 = vset.pattern.permute.xlu0 0
  %3392 = vperm.xlu0 %3391, %v2865
  %v3393 = vpop.permute.xlu0 %3392
  %3394 = vset.pattern.permute.xlu0 0
  %3395 = vperm.xlu0 %3394, %v2882
  %v3396 = vpop.permute.xlu0 %3395
  %3397 = vset.pattern.permute.xlu0 0
  %3398 = vperm.xlu0 %3397, %v2899
  %v3399 = vpop.permute.xlu0 %3398
  %3400 = vset.pattern.permute.xlu0 0
  %3401 = vperm.xlu0 %3400, %v2916
  %v3402 = vpop.permute.xlu0 %3401
  %3403 = vset.pattern.permute.xlu0 0
  %3404 = vperm.xlu0 %3403, %v2933
  %v3405 = vpop.permute.xlu0 %3404
  %3406 = vset.pattern.permute.xlu0 0
  %3407 = vperm.xlu0 %3406, %v2950
  %v3408 = vpop.permute.xlu0 %3407
  %3409 = vset.pattern.permute.xlu0 0
  %3410 = vperm.xlu0 %3409, %v2967
  %v3411 = vpop.permute.xlu0 %3410
  %3412 = vset.pattern.permute.xlu0 0
  %3413 = vperm.xlu0 %3412, %v2984
  %v3414 = vpop.permute.xlu0 %3413
  %3415 = vset.pattern.permute.xlu0 0
  %3416 = vperm.xlu0 %3415, %v3001
  %v3417 = vpop.permute.xlu0 %3416
  %3418 = vset.pattern.permute.xlu0 0
  %3419 = vperm.xlu0 %3418, %v3018
  %v3420 = vpop.permute.xlu0 %3419
  %3421 = vset.pattern.permute.xlu0 0
  %3422 = vperm.xlu0 %3421, %v3035
  %v3423 = vpop.permute.xlu0 %3422
  %3424 = vset.pattern.permute.xlu0 0
  %3425 = vperm.xlu0 %3424, %v3052
  %v3426 = vpop.permute.xlu0 %3425
  %3427 = vset.pattern.permute.xlu0 0
  %3428 = vperm.xlu0 %3427, %v3069
  %v3429 = vpop.permute.xlu0 %3428
  %3430 = vset.pattern.permute.xlu0 0
  %3431 = vperm.xlu0 %3430, %v3086
  %v3432 = vpop.permute.xlu0 %3431
  %3433 = vset.pattern.permute.xlu0 0
  %3434 = vperm.xlu0 %3433, %v3103
  %v3435 = vpop.permute.xlu0 %3434
  %3436 = vset.pattern.permute.xlu0 0
  %3437 = vperm.xlu0 %3436, %v3120
  %v3438 = vpop.permute.xlu0 %3437
  %3439 = vset.pattern.permute.xlu0 0
  %3440 = vperm.xlu0 %3439, %v3137
  %v3441 = vpop.permute.xlu0 %3440
  %3442 = vset.pattern.permute.xlu0 0
  %3443 = vperm.xlu0 %3442, %v3154
  %v3444 = vpop.permute.xlu0 %3443
  %3445 = vset.pattern.permute.xlu0 0
  %3446 = vperm.xlu0 %3445, %v3171
  %v3447 = vpop.permute.xlu0 %3446
  %3448 = vset.pattern.permute.xlu0 0
  %3449 = vperm.xlu0 %3448, %v3188
  %v3450 = vpop.permute.xlu0 %3449
  %3451 = vset.pattern.permute.xlu0 0
  %3452 = vperm.xlu0 %3451, %v3205
  %v3453 = vpop.permute.xlu0 %3452
  %3454 = vset.pattern.permute.xlu0 0
  %3455 = vperm.xlu0 %3454, %v3222
  %v3456 = vpop.permute.xlu0 %3455
  %3457 = vset.pattern.permute.xlu0 0
  %3458 = vperm.xlu0 %3457, %v3239
  %v3459 = vpop.permute.xlu0 %3458
  %3460 = vset.pattern.permute.xlu0 0
  %3461 = vperm.xlu0 %3460, %v3256
  %v3462 = vpop.permute.xlu0 %3461
  %3463 = vset.pattern.permute.xlu0 0
  %3464 = vperm.xlu0 %3463, %v3273
  %v3465 = vpop.permute.xlu0 %3464
  %v3466 = vlaneseq
  %v3467 = vand.u32 %v3466, 127
  %v3468 = vlaneseq
  %v3469 = vshrl.u32 %v3468, 7
  %v3470 = vsub.s32 %v3467, %v3469
  %v3471 = vrot.slane %v3276, %v3470
  %v3472 = vadd.s32 %v3467, 4294967288
  %v3473 = vlaneseq
  %v3474 = vshrl.u32 %v3473, 7
  %v3475 = vsub.s32 %v3472, %v3474
  %v3476 = vrot.slane %v3279, %v3475
  %vm3477 = vcmask 130112
  %v3478 = vsel %vm3477, %v3476, %v3471
  %v3479 = vadd.s32 %v3467, 4294967280
  %v3480 = vlaneseq
  %v3481 = vshrl.u32 %v3480, 7
  %v3482 = vsub.s32 %v3479, %v3481
  %v3483 = vrot.slane %v3282, %v3482
  %vm3484 = vcmask 195712
  %v3485 = vsel %vm3484, %v3483, %v3478
  %v3486 = vadd.s32 %v3467, 4294967272
  %v3487 = vlaneseq
  %v3488 = vshrl.u32 %v3487, 7
  %v3489 = vsub.s32 %v3486, %v3488
  %v3490 = vrot.slane %v3285, %v3489
  %vm3491 = vcmask 261312
  %v3492 = vsel %vm3491, %v3490, %v3485
  %v3493 = vadd.s32 %v3467, 4294967264
  %v3494 = vlaneseq
  %v3495 = vshrl.u32 %v3494, 7
  %v3496 = vsub.s32 %v3493, %v3495
  %v3497 = vrot.slane %v3288, %v3496
  %vm3498 = vcmask 326912
  %v3499 = vsel %vm3498, %v3497, %v3492
  %v3500 = vadd.s32 %v3467, 4294967256
  %v3501 = vlaneseq
  %v3502 = vshrl.u32 %v3501, 7
  %v3503 = vsub.s32 %v3500, %v3502
  %v3504 = vrot.slane %v3291, %v3503
  %vm3505 = vcmask 392512
  %v3506 = vsel %vm3505, %v3504, %v3499
  %v3507 = vadd.s32 %v3467, 4294967248
  %v3508 = vlaneseq
  %v3509 = vshrl.u32 %v3508, 7
  %v3510 = vsub.s32 %v3507, %v3509
  %v3511 = vrot.slane %v3294, %v3510
  %vm3512 = vcmask 458112
  %v3513 = vsel %vm3512, %v3511, %v3506
  %v3514 = vadd.s32 %v3467, 4294967240
  %v3515 = vlaneseq
  %v3516 = vshrl.u32 %v3515, 7
  %v3517 = vsub.s32 %v3514, %v3516
  %v3518 = vrot.slane %v3297, %v3517
  %vm3519 = vcmask 523712
  %v3520 = vsel %vm3519, %v3518, %v3513
  %v3521 = vadd.s32 %v3467, 4294967232
  %v3522 = vlaneseq
  %v3523 = vshrl.u32 %v3522, 7
  %v3524 = vsub.s32 %v3521, %v3523
  %v3525 = vrot.slane %v3300, %v3524
  %vm3526 = vcmask 589312
  %v3527 = vsel %vm3526, %v3525, %v3520
  %v3528 = vadd.s32 %v3467, 4294967224
  %v3529 = vlaneseq
  %v3530 = vshrl.u32 %v3529, 7
  %v3531 = vsub.s32 %v3528, %v3530
  %v3532 = vrot.slane %v3303, %v3531
  %vm3533 = vcmask 654912
  %v3534 = vsel %vm3533, %v3532, %v3527
  %v3535 = vadd.s32 %v3467, 4294967216
  %v3536 = vlaneseq
  %v3537 = vshrl.u32 %v3536, 7
  %v3538 = vsub.s32 %v3535, %v3537
  %v3539 = vrot.slane %v3306, %v3538
  %vm3540 = vcmask 720512
  %v3541 = vsel %vm3540, %v3539, %v3534
  %v3542 = vadd.s32 %v3467, 4294967208
  %v3543 = vlaneseq
  %v3544 = vshrl.u32 %v3543, 7
  %v3545 = vsub.s32 %v3542, %v3544
  %v3546 = vrot.slane %v3309, %v3545
  %vm3547 = vcmask 786112
  %v3548 = vsel %vm3547, %v3546, %v3541
  %v3549 = vadd.s32 %v3467, 4294967200
  %v3550 = vlaneseq
  %v3551 = vshrl.u32 %v3550, 7
  %v3552 = vsub.s32 %v3549, %v3551
  %v3553 = vrot.slane %v3312, %v3552
  %vm3554 = vcmask 851712
  %v3555 = vsel %vm3554, %v3553, %v3548
  %v3556 = vadd.s32 %v3467, 4294967192
  %v3557 = vlaneseq
  %v3558 = vshrl.u32 %v3557, 7
  %v3559 = vsub.s32 %v3556, %v3558
  %v3560 = vrot.slane %v3315, %v3559
  %vm3561 = vcmask 917312
  %v3562 = vsel %vm3561, %v3560, %v3555
  %v3563 = vadd.s32 %v3467, 4294967184
  %v3564 = vlaneseq
  %v3565 = vshrl.u32 %v3564, 7
  %v3566 = vsub.s32 %v3563, %v3565
  %v3567 = vrot.slane %v3318, %v3566
  %vm3568 = vcmask 982912
  %v3569 = vsel %vm3568, %v3567, %v3562
  %v3570 = vadd.s32 %v3467, 4294967176
  %v3571 = vlaneseq
  %v3572 = vshrl.u32 %v3571, 7
  %v3573 = vsub.s32 %v3570, %v3572
  %v3574 = vrot.slane %v3321, %v3573
  %vm3575 = vcmask 1048512
  %v3576 = vsel %vm3575, %v3574, %v3569
  %v3577 = vlaneseq
  %v3578 = vshrl.u32 %v3577, 7
  %v3579 = vsub.s32 %v3467, %v3578
  %v3580 = vrot.slane %v3324, %v3579
  %v3581 = vlaneseq
  %v3582 = vshrl.u32 %v3581, 7
  %v3583 = vsub.s32 %v3472, %v3582
  %v3584 = vrot.slane %v3327, %v3583
  %v3585 = vsel %vm3477, %v3584, %v3580
  %v3586 = vlaneseq
  %v3587 = vshrl.u32 %v3586, 7
  %v3588 = vsub.s32 %v3479, %v3587
  %v3589 = vrot.slane %v3330, %v3588
  %v3590 = vsel %vm3484, %v3589, %v3585
  %v3591 = vlaneseq
  %v3592 = vshrl.u32 %v3591, 7
  %v3593 = vsub.s32 %v3486, %v3592
  %v3594 = vrot.slane %v3333, %v3593
  %v3595 = vsel %vm3491, %v3594, %v3590
  %v3596 = vlaneseq
  %v3597 = vshrl.u32 %v3596, 7
  %v3598 = vsub.s32 %v3493, %v3597
  %v3599 = vrot.slane %v3336, %v3598
  %v3600 = vsel %vm3498, %v3599, %v3595
  %v3601 = vlaneseq
  %v3602 = vshrl.u32 %v3601, 7
  %v3603 = vsub.s32 %v3500, %v3602
  %v3604 = vrot.slane %v3339, %v3603
  %v3605 = vsel %vm3505, %v3604, %v3600
  %v3606 = vlaneseq
  %v3607 = vshrl.u32 %v3606, 7
  %v3608 = vsub.s32 %v3507, %v3607
  %v3609 = vrot.slane %v3342, %v3608
  %v3610 = vsel %vm3512, %v3609, %v3605
  %v3611 = vlaneseq
  %v3612 = vshrl.u32 %v3611, 7
  %v3613 = vsub.s32 %v3514, %v3612
  %v3614 = vrot.slane %v3345, %v3613
  %v3615 = vsel %vm3519, %v3614, %v3610
  %v3616 = vlaneseq
  %v3617 = vshrl.u32 %v3616, 7
  %v3618 = vsub.s32 %v3521, %v3617
  %v3619 = vrot.slane %v3348, %v3618
  %v3620 = vsel %vm3526, %v3619, %v3615
  %v3621 = vlaneseq
  %v3622 = vshrl.u32 %v3621, 7
  %v3623 = vsub.s32 %v3528, %v3622
  %v3624 = vrot.slane %v3351, %v3623
  %v3625 = vsel %vm3533, %v3624, %v3620
  %v3626 = vlaneseq
  %v3627 = vshrl.u32 %v3626, 7
  %v3628 = vsub.s32 %v3535, %v3627
  %v3629 = vrot.slane %v3354, %v3628
  %v3630 = vsel %vm3540, %v3629, %v3625
  %v3631 = vlaneseq
  %v3632 = vshrl.u32 %v3631, 7
  %v3633 = vsub.s32 %v3542, %v3632
  %v3634 = vrot.slane %v3357, %v3633
  %v3635 = vsel %vm3547, %v3634, %v3630
  %v3636 = vlaneseq
  %v3637 = vshrl.u32 %v3636, 7
  %v3638 = vsub.s32 %v3549, %v3637
  %v3639 = vrot.slane %v3360, %v3638
  %v3640 = vsel %vm3554, %v3639, %v3635
  %v3641 = vlaneseq
  %v3642 = vshrl.u32 %v3641, 7
  %v3643 = vsub.s32 %v3556, %v3642
  %v3644 = vrot.slane %v3363, %v3643
  %v3645 = vsel %vm3561, %v3644, %v3640
  %v3646 = vlaneseq
  %v3647 = vshrl.u32 %v3646, 7
  %v3648 = vsub.s32 %v3563, %v3647
  %v3649 = vrot.slane %v3366, %v3648
  %v3650 = vsel %vm3568, %v3649, %v3645
  %v3651 = vlaneseq
  %v3652 = vshrl.u32 %v3651, 7
  %v3653 = vsub.s32 %v3570, %v3652
  %v3654 = vrot.slane %v3369, %v3653
  %v3655 = vsel %vm3575, %v3654, %v3650
  %v3656 = vlaneseq
  %v3657 = vshrl.u32 %v3656, 7
  %v3658 = vsub.s32 %v3467, %v3657
  %v3659 = vrot.slane %v3372, %v3658
  %v3660 = vlaneseq
  %v3661 = vshrl.u32 %v3660, 7
  %v3662 = vsub.s32 %v3472, %v3661
  %v3663 = vrot.slane %v3375, %v3662
  %v3664 = vsel %vm3477, %v3663, %v3659
  %v3665 = vlaneseq
  %v3666 = vshrl.u32 %v3665, 7
  %v3667 = vsub.s32 %v3479, %v3666
  %v3668 = vrot.slane %v3378, %v3667
  %v3669 = vsel %vm3484, %v3668, %v3664
  %v3670 = vlaneseq
  %v3671 = vshrl.u32 %v3670, 7
  %v3672 = vsub.s32 %v3486, %v3671
  %v3673 = vrot.slane %v3381, %v3672
  %v3674 = vsel %vm3491, %v3673, %v3669
  %v3675 = vlaneseq
  %v3676 = vshrl.u32 %v3675, 7
  %v3677 = vsub.s32 %v3493, %v3676
  %v3678 = vrot.slane %v3384, %v3677
  %v3679 = vsel %vm3498, %v3678, %v3674
  %v3680 = vlaneseq
  %v3681 = vshrl.u32 %v3680, 7
  %v3682 = vsub.s32 %v3500, %v3681
  %v3683 = vrot.slane %v3387, %v3682
  %v3684 = vsel %vm3505, %v3683, %v3679
  %v3685 = vlaneseq
  %v3686 = vshrl.u32 %v3685, 7
  %v3687 = vsub.s32 %v3507, %v3686
  %v3688 = vrot.slane %v3390, %v3687
  %v3689 = vsel %vm3512, %v3688, %v3684
  %v3690 = vlaneseq
  %v3691 = vshrl.u32 %v3690, 7
  %v3692 = vsub.s32 %v3514, %v3691
  %v3693 = vrot.slane %v3393, %v3692
  %v3694 = vsel %vm3519, %v3693, %v3689
  %v3695 = vlaneseq
  %v3696 = vshrl.u32 %v3695, 7
  %v3697 = vsub.s32 %v3521, %v3696
  %v3698 = vrot.slane %v3396, %v3697
  %v3699 = vsel %vm3526, %v3698, %v3694
  %v3700 = vlaneseq
  %v3701 = vshrl.u32 %v3700, 7
  %v3702 = vsub.s32 %v3528, %v3701
  %v3703 = vrot.slane %v3399, %v3702
  %v3704 = vsel %vm3533, %v3703, %v3699
  %v3705 = vlaneseq
  %v3706 = vshrl.u32 %v3705, 7
  %v3707 = vsub.s32 %v3535, %v3706
  %v3708 = vrot.slane %v3402, %v3707
  %v3709 = vsel %vm3540, %v3708, %v3704
  %v3710 = vlaneseq
  %v3711 = vshrl.u32 %v3710, 7
  %v3712 = vsub.s32 %v3542, %v3711
  %v3713 = vrot.slane %v3405, %v3712
  %v3714 = vsel %vm3547, %v3713, %v3709
  %v3715 = vlaneseq
  %v3716 = vshrl.u32 %v3715, 7
  %v3717 = vsub.s32 %v3549, %v3716
  %v3718 = vrot.slane %v3408, %v3717
  %v3719 = vsel %vm3554, %v3718, %v3714
  %v3720 = vlaneseq
  %v3721 = vshrl.u32 %v3720, 7
  %v3722 = vsub.s32 %v3556, %v3721
  %v3723 = vrot.slane %v3411, %v3722
  %v3724 = vsel %vm3561, %v3723, %v3719
  %v3725 = vlaneseq
  %v3726 = vshrl.u32 %v3725, 7
  %v3727 = vsub.s32 %v3563, %v3726
  %v3728 = vrot.slane %v3414, %v3727
  %v3729 = vsel %vm3568, %v3728, %v3724
  %v3730 = vlaneseq
  %v3731 = vshrl.u32 %v3730, 7
  %v3732 = vsub.s32 %v3570, %v3731
  %v3733 = vrot.slane %v3417, %v3732
  %v3734 = vsel %vm3575, %v3733, %v3729
  %v3735 = vlaneseq
  %v3736 = vshrl.u32 %v3735, 7
  %v3737 = vsub.s32 %v3467, %v3736
  %v3738 = vrot.slane %v3420, %v3737
  %v3739 = vlaneseq
  %v3740 = vshrl.u32 %v3739, 7
  %v3741 = vsub.s32 %v3472, %v3740
  %v3742 = vrot.slane %v3423, %v3741
  %v3743 = vsel %vm3477, %v3742, %v3738
  %v3744 = vlaneseq
  %v3745 = vshrl.u32 %v3744, 7
  %v3746 = vsub.s32 %v3479, %v3745
  %v3747 = vrot.slane %v3426, %v3746
  %v3748 = vsel %vm3484, %v3747, %v3743
  %v3749 = vlaneseq
  %v3750 = vshrl.u32 %v3749, 7
  %v3751 = vsub.s32 %v3486, %v3750
  %v3752 = vrot.slane %v3429, %v3751
  %v3753 = vsel %vm3491, %v3752, %v3748
  %v3754 = vlaneseq
  %v3755 = vshrl.u32 %v3754, 7
  %v3756 = vsub.s32 %v3493, %v3755
  %v3757 = vrot.slane %v3432, %v3756
  %v3758 = vsel %vm3498, %v3757, %v3753
  %v3759 = vlaneseq
  %v3760 = vshrl.u32 %v3759, 7
  %v3761 = vsub.s32 %v3500, %v3760
  %v3762 = vrot.slane %v3435, %v3761
  %v3763 = vsel %vm3505, %v3762, %v3758
  %v3764 = vlaneseq
  %v3765 = vshrl.u32 %v3764, 7
  %v3766 = vsub.s32 %v3507, %v3765
  %v3767 = vrot.slane %v3438, %v3766
  %v3768 = vsel %vm3512, %v3767, %v3763
  %v3769 = vlaneseq
  %v3770 = vshrl.u32 %v3769, 7
  %v3771 = vsub.s32 %v3514, %v3770
  %v3772 = vrot.slane %v3441, %v3771
  %v3773 = vsel %vm3519, %v3772, %v3768
  %v3774 = vlaneseq
  %v3775 = vshrl.u32 %v3774, 7
  %v3776 = vsub.s32 %v3521, %v3775
  %v3777 = vrot.slane %v3444, %v3776
  %v3778 = vsel %vm3526, %v3777, %v3773
  %v3779 = vlaneseq
  %v3780 = vshrl.u32 %v3779, 7
  %v3781 = vsub.s32 %v3528, %v3780
  %v3782 = vrot.slane %v3447, %v3781
  %v3783 = vsel %vm3533, %v3782, %v3778
  %v3784 = vlaneseq
  %v3785 = vshrl.u32 %v3784, 7
  %v3786 = vsub.s32 %v3535, %v3785
  %v3787 = vrot.slane %v3450, %v3786
  %v3788 = vsel %vm3540, %v3787, %v3783
  %v3789 = vlaneseq
  %v3790 = vshrl.u32 %v3789, 7
  %v3791 = vsub.s32 %v3542, %v3790
  %v3792 = vrot.slane %v3453, %v3791
  %v3793 = vsel %vm3547, %v3792, %v3788
  %v3794 = vlaneseq
  %v3795 = vshrl.u32 %v3794, 7
  %v3796 = vsub.s32 %v3549, %v3795
  %v3797 = vrot.slane %v3456, %v3796
  %v3798 = vsel %vm3554, %v3797, %v3793
  %v3799 = vlaneseq
  %v3800 = vshrl.u32 %v3799, 7
  %v3801 = vsub.s32 %v3556, %v3800
  %v3802 = vrot.slane %v3459, %v3801
  %v3803 = vsel %vm3561, %v3802, %v3798
  %v3804 = vlaneseq
  %v3805 = vshrl.u32 %v3804, 7
  %v3806 = vsub.s32 %v3563, %v3805
  %v3807 = vrot.slane %v3462, %v3806
  %v3808 = vsel %vm3568, %v3807, %v3803
  %v3809 = vlaneseq
  %v3810 = vshrl.u32 %v3809, 7
  %v3811 = vsub.s32 %v3570, %v3810
  %v3812 = vrot.slane %v3465, %v3811
  %v3813 = vsel %vm3575, %v3812, %v3808
  %vm3814 = vcmask 1041409
  %v3815 = vsel %vm3814, %v3734, %v3576
  %v3816 = vsel %vm3814, %v3813, %v3655
  %v3817 = vcombine.low %v3815, %v3816
  %v3819 = vunpack.c.l.s4 1983009808
  %v3820 = vunpack.c.0.s8 %v3819
  %v3821 = vlaneseq
  %v3822 = vshrl.u32 %v3821, 7
  %v3823 = vsub.s32 %v3820, %v3822
  %v3824 = vrot.slane %v3817, %v3823
  %3826 = vst [vmem:[%s1] sm:$0xf] %v3824
  // Predicated region
  $region6: #{baseline_forward.2} parent=0 // pred_check
    _
  $region7: #{baseline_forward.2} parent=0 // pred_check_branch
    %3828 = sbr.rel (0) target = $region9
  $region8: #{baseline_forward.2} parent=0 // pred_region
    _
  $region9: #{baseline_forward.2} parent=0 // pred_fallthru
    _
  // Predicated region
  $region10: #{baseline_forward.2} parent=0 // pred_check
    _
  $region11: #{baseline_forward.2} parent=0 // pred_check_branch
    %3830 = sbr.rel (0) target = $region13
  $region12: #{baseline_forward.2} parent=0 // pred_region
    _
  $region13: #{baseline_forward.2} parent=0 // pred_fallthru
    _

// kernel: baseline_forward.3
$region0: #{baseline_forward.3}
  #allocation0 [shape = 'u32[]', space=smem, size = 0x4, offset = 0x4, fixed_abs, tag = 'smem constant byte address 0x4 - core index']
  #allocation1 [shape = 'u32[144,128]{1,0:T(1,128)}', space=vmem, size = 0x12000, scoped, tag = 'internal scratch']
  %s0 = inlined_call_operand.vmem [shape: f32[4,2,64], index: 0, kind: input, shape index: {}]
  %s1 = inlined_call_operand.vmem [shape: f32[4,1,64], index: 1, kind: input, shape index: {}]
  %s2 = inlined_call_operand.vmem [shape: f32[4,1,64], index: 2, kind: input, shape index: {}]
  %s3 = inlined_call_operand.vmem [shape: f32[4,1,64], index: 3, kind: input, shape index: {}]
  %s4 = inlined_call_operand.vmem [shape: f32[4,1,64], index: 4, kind: input, shape index: {}]
  %s5 = inlined_call_operand.vmem [shape: f32[4,256], index: 5, kind: input, shape index: {}]
  %s6 = inlined_call_operand.vmem [shape: bf16[4,64,16], index: 6, kind: input, shape index: {}]
  %s7 = inlined_call_operand.vmem [shape: f32[4,2,64], index: 7, kind: output, shape index: {0}]
  %s8 = inlined_call_operand.vmem [shape: f32[4,2,64], index: 8, kind: output, shape index: {1}]
  %s9 = inlined_call_operand.hbm [shape: f32[2,16], index: 9, kind: output, shape index: {2}]
  %s10 = inlined_call_operand.hbm [shape: f32[2,16], index: 10, kind: output, shape index: {3}]
  %11 = xla_tuple %s7, %s8, %s9, %s10
  %s12 = sld [smem:[#allocation0]]
  $region66: #{baseline_forward.3} parent=0
    _
  %s14 = ssub.s32 1, %s12
  %s15 = scalar_select 0, %s14, %s12
  $region1: #{baseline_forward.3} parent=0
    #allocation2 [shape = 'u8[1024]{0}', space=vmem, size = 0x400, scoped, tag = 'output window, operand 2, single buffered']
    #allocation3 [shape = 's32[1]{0}', space=sflag, size = 0x4, scoped, tag = 'scoped memory for baseline_forward.3']
    #allocation4 [shape = 'u8[1024]{0}', space=vmem, size = 0x400, scoped, tag = 'output window, operand 3, single buffered']
    #allocation5 [shape = 's32[1]{0}', space=sflag, size = 0x4, scoped, tag = 'scoped memory for baseline_forward.3']
    %16 = vsyncpa [#allocation3], 0
    %17 = vsyncpa [#allocation5], 0
    // Predicated region
    $region2: #{baseline_forward.3} parent=1 // pred_check
      _
    $region3: #{baseline_forward.3} parent=1 // pred_check_branch
      %19 = sbr.rel (0) target = $region5
    $region4: #{baseline_forward.3} parent=1 // pred_region
      _
    $region5: #{baseline_forward.3} parent=1 // pred_fallthru
      _
    // Predicated region
    $region6: #{baseline_forward.3} parent=1 // pred_check
      _
    $region7: #{baseline_forward.3} parent=1 // pred_check_branch
      %21 = sbr.rel (0) target = $region9
    $region8: #{baseline_forward.3} parent=1 // pred_region
      _
    $region9: #{baseline_forward.3} parent=1 // pred_fallthru
      _
    // Predicated region
    $region10: #{baseline_forward.3} parent=1 // pred_check
      _
    $region11: #{baseline_forward.3} parent=1 // pred_check_branch
      %23 = sbr.rel (0) target = $region13
    $region12: #{baseline_forward.3} parent=1 // pred_region
      _
    $region13: #{baseline_forward.3} parent=1 // pred_fallthru
      _
    // Predicated region
    $region14: #{baseline_forward.3} parent=1 // pred_check
      _
    $region15: #{baseline_forward.3} parent=1 // pred_check_branch
      %25 = sbr.rel (0) target = $region17
    $region16: #{baseline_forward.3} parent=1 // pred_region
      _
    $region17: #{baseline_forward.3} parent=1 // pred_fallthru
      _
    // Predicated region
    $region18: #{baseline_forward.3} parent=1 // pred_check
      _
    $region19: #{baseline_forward.3} parent=1 // pred_check_branch
      %27 = sbr.rel (0) target = $region21
    $region20: #{baseline_forward.3} parent=1 // pred_region
      _
    $region21: #{baseline_forward.3} parent=1 // pred_fallthru
      _
    // Predicated region
    $region22: #{baseline_forward.3} parent=1 // pred_check
      _
    $region23: #{baseline_forward.3} parent=1 // pred_check_branch
      %29 = sbr.rel (0) target = $region25
    $region24: #{baseline_forward.3} parent=1 // pred_region
      _
    $region25: #{baseline_forward.3} parent=1 // pred_fallthru
      _
    // Predicated region
    $region26: #{baseline_forward.3} parent=1 // pred_check
      _
    $region27: #{baseline_forward.3} parent=1 // pred_check_branch
      %31 = sbr.rel (0) target = $region29
    $region28: #{baseline_forward.3} parent=1 // pred_region
      _
    $region29: #{baseline_forward.3} parent=1 // pred_fallthru
      _
    %v33 = vld [vmem:[%s0] sm:$0x3]
    %v34 = vld [vmem:[%s0 + $0x2] sm:$0x3]
    %v35 = vld [vmem:[%s0 + $0x4] sm:$0x3]
    %v36 = vld [vmem:[%s0 + $0x6] sm:$0x3]
    %vm37 = vcmask 517120
    %v38 = vsel %vm37, %v33, 0.0
    %v39 = vrot.slane %v38, 4
    %v40 = vadd.f32 %v38, %v39
    %v41 = vrot.slane %v40, 2
    %v42 = vadd.f32 %v40, %v41
    %v43 = vrot.slane %v42, 1
    %v44 = vadd.f32 %v42, %v43
    %v45 = vsel %vm37, %v34, 0.0
    %v46 = vrot.slane %v45, 4
    %v47 = vadd.f32 %v45, %v46
    %v48 = vrot.slane %v47, 2
    %v49 = vadd.f32 %v47, %v48
    %v50 = vrot.slane %v49, 1
    %v51 = vadd.f32 %v49, %v50
    %v52 = vsel %vm37, %v35, 0.0
    %v53 = vrot.slane %v52, 4
    %v54 = vadd.f32 %v52, %v53
    %v55 = vrot.slane %v54, 2
    %v56 = vadd.f32 %v54, %v55
    %v57 = vrot.slane %v56, 1
    %v58 = vadd.f32 %v56, %v57
    %v59 = vsel %vm37, %v36, 0.0
    %v60 = vrot.slane %v59, 4
    %v61 = vadd.f32 %v59, %v60
    %v62 = vrot.slane %v61, 2
    %v63 = vadd.f32 %v61, %v62
    %v64 = vrot.slane %v63, 1
    %v65 = vadd.f32 %v63, %v64
    %v66 = vrcp.pop 2.0
    %v67 = vmul.f32 %v44, %v66
    %v68 = vmul.f32 %v51, %v66
    %v69 = vmul.f32 %v58, %v66
    %v70 = vmul.f32 %v65, %v66
    %v71 = vsub.f32 %v33, %v67
    %v72 = vsub.f32 %v34, %v68
    %v73 = vsub.f32 %v35, %v69
    %v74 = vsub.f32 %v36, %v70
    %v75 = vmul.f32 %v71, %v71
    %v76 = vmul.f32 %v72, %v72
    %v77 = vmul.f32 %v73, %v73
    %v78 = vmul.f32 %v74, %v74
    %v79 = vsel %vm37, %v75, 0.0
    %v80 = vrot.slane %v79, 4
    %v81 = vadd.f32 %v79, %v80
    %v82 = vrot.slane %v81, 2
    %v83 = vadd.f32 %v81, %v82
    %v84 = vrot.slane %v83, 1
    %v85 = vadd.f32 %v83, %v84
    %v86 = vsel %vm37, %v76, 0.0
    %v87 = vrot.slane %v86, 4
    %v88 = vadd.f32 %v86, %v87
    %v89 = vrot.slane %v88, 2
    %v90 = vadd.f32 %v88, %v89
    %v91 = vrot.slane %v90, 1
    %v92 = vadd.f32 %v90, %v91
    %v93 = vsel %vm37, %v77, 0.0
    %v94 = vrot.slane %v93, 4
    %v95 = vadd.f32 %v93, %v94
    %v96 = vrot.slane %v95, 2
    %v97 = vadd.f32 %v95, %v96
    %v98 = vrot.slane %v97, 1
    %v99 = vadd.f32 %v97, %v98
    %v100 = vsel %vm37, %v78, 0.0
    %v101 = vrot.slane %v100, 4
    %v102 = vadd.f32 %v100, %v101
    %v103 = vrot.slane %v102, 2
    %v104 = vadd.f32 %v102, %v103
    %v105 = vrot.slane %v104, 1
    %v106 = vadd.f32 %v104, %v105
    %v107 = vmul.f32 %v85, %v66
    %v108 = vmul.f32 %v92, %v66
    %v109 = vmul.f32 %v99, %v66
    %v110 = vmul.f32 %v106, %v66
    %v111 = vadd.f32 %v107, 1e-05
    %v112 = vadd.f32 %v108, 1e-05
    %v113 = vadd.f32 %v109, 1e-05
    %v114 = vadd.f32 %v110, 1e-05
    %v115 = vrsqrt.pop %v111
    %v116 = vrsqrt.pop %v112
    %v117 = vrsqrt.pop %v113
    %v118 = vrsqrt.pop %v114
    %v119 = vmul.f32 %v71, %v115
    %v120 = vmul.f32 %v72, %v116
    %v121 = vmul.f32 %v73, %v117
    %v122 = vmul.f32 %v74, %v118
    %v123 = vld [vmem:[%s1] sm:$0x1]
    %v124 = vld [vmem:[%s1 + $0x1] sm:$0x1]
    %v125 = vld [vmem:[%s1 + $0x2] sm:$0x1]
    %v126 = vld [vmem:[%s1 + $0x3] sm:$0x1]
    %v131 = vlaneseq
    %v132 = vshrl.u32 %v131, 7
    %v133 = vsub.s32 0, %v132
    %v134 = vrot.slane %v123, %v133
    %v135 = vlaneseq
    %v136 = vshrl.u32 %v135, 7
    %v137 = vsub.s32 0, %v136
    %v138 = vrot.slane %v124, %v137
    %v139 = vlaneseq
    %v140 = vshrl.u32 %v139, 7
    %v141 = vsub.s32 0, %v140
    %v142 = vrot.slane %v125, %v141
    %v143 = vlaneseq
    %v144 = vshrl.u32 %v143, 7
    %v145 = vsub.s32 0, %v144
    %v146 = vrot.slane %v126, %v145
    %v151 = vmul.f32 %v119, %v134
    %v152 = vmul.f32 %v120, %v138
    %v153 = vmul.f32 %v121, %v142
    %v154 = vmul.f32 %v122, %v146
    %v155 = vld [vmem:[%s2] sm:$0x1]
    %v156 = vld [vmem:[%s2 + $0x1] sm:$0x1]
    %v157 = vld [vmem:[%s2 + $0x2] sm:$0x1]
    %v158 = vld [vmem:[%s2 + $0x3] sm:$0x1]
    %v163 = vlaneseq
    %v164 = vshrl.u32 %v163, 7
    %v165 = vsub.s32 0, %v164
    %v166 = vrot.slane %v155, %v165
    %v167 = vlaneseq
    %v168 = vshrl.u32 %v167, 7
    %v169 = vsub.s32 0, %v168
    %v170 = vrot.slane %v156, %v169
    %v171 = vlaneseq
    %v172 = vshrl.u32 %v171, 7
    %v173 = vsub.s32 0, %v172
    %v174 = vrot.slane %v157, %v173
    %v175 = vlaneseq
    %v176 = vshrl.u32 %v175, 7
    %v177 = vsub.s32 0, %v176
    %v178 = vrot.slane %v158, %v177
    %v183 = vadd.f32 %v151, %v166
    %v184 = vadd.f32 %v152, %v170
    %v185 = vadd.f32 %v153, %v174
    %v186 = vadd.f32 %v154, %v178
    %v187 = vld [vmem:[%s5] sm:$0xff]
    %v188 = vmul.f32 %v187, %v187
    %v190 = vcombine.high %v188, %v188
    %vm192 = vcmask 1043456
    %v193 = vsel %vm192, %v188, 0.0
    %v194 = vrot.slane %v193, 4
    %v195 = vadd.f32 %v193, %v194
    %v196 = vrot.slane %v195, 2
    %v197 = vadd.f32 %v195, %v196
    %v198 = vrot.slane %v197, 1
    %v199 = vadd.f32 %v197, %v198
    %v200 = vsel %vm192, %v190, 0.0
    %v201 = vrot.slane %v200, 4
    %v202 = vadd.f32 %v200, %v201
    %v203 = vrot.slane %v202, 2
    %v204 = vadd.f32 %v202, %v203
    %v205 = vrot.slane %v204, 1
    %v206 = vadd.f32 %v204, %v205
    %v207 = vlaneseq
    %v208 = vshrl.u32 %v207, 7
    %v209 = vsub.s32 0, %v208
    %v210 = vrot.slane %v183, %v209
    %212 = vbcast.lane.b32.xlu0 %v210, 256
    %v213 = vpop.permute.xlu0 %212
    %s215 = sor.u32 256, 8
    %216 = vbcast.lane.b32.xlu0 %v210, %s215
    %v217 = vpop.permute.xlu0 %216
    %s219 = sor.u32 256, 16
    %220 = vbcast.lane.b32.xlu0 %v210, %s219
    %v221 = vpop.permute.xlu0 %220
    %s223 = sor.u32 256, 24
    %224 = vbcast.lane.b32.xlu0 %v210, %s223
    %v225 = vpop.permute.xlu0 %224
    %s227 = sor.u32 256, 32
    %228 = vbcast.lane.b32.xlu0 %v210, %s227
    %v229 = vpop.permute.xlu0 %228
    %s231 = sor.u32 256, 40
    %232 = vbcast.lane.b32.xlu0 %v210, %s231
    %v233 = vpop.permute.xlu0 %232
    %s235 = sor.u32 256, 48
    %236 = vbcast.lane.b32.xlu0 %v210, %s235
    %v237 = vpop.permute.xlu0 %236
    %s239 = sor.u32 256, 56
    %240 = vbcast.lane.b32.xlu0 %v210, %s239
    %v241 = vpop.permute.xlu0 %240
    %v242 = vlaneseq
    %v243 = vshrl.u32 %v242, 7
    %v244 = vsub.s32 1, %v243
    %v245 = vrot.slane %v183, %v244
    %247 = vbcast.lane.b32.xlu0 %v245, 256
    %v248 = vpop.permute.xlu0 %247
    %s250 = sor.u32 256, 8
    %251 = vbcast.lane.b32.xlu0 %v245, %s250
    %v252 = vpop.permute.xlu0 %251
    %s254 = sor.u32 256, 16
    %255 = vbcast.lane.b32.xlu0 %v245, %s254
    %v256 = vpop.permute.xlu0 %255
    %s258 = sor.u32 256, 24
    %259 = vbcast.lane.b32.xlu0 %v245, %s258
    %v260 = vpop.permute.xlu0 %259
    %s262 = sor.u32 256, 32
    %263 = vbcast.lane.b32.xlu0 %v245, %s262
    %v264 = vpop.permute.xlu0 %263
    %s266 = sor.u32 256, 40
    %267 = vbcast.lane.b32.xlu0 %v245, %s266
    %v268 = vpop.permute.xlu0 %267
    %s270 = sor.u32 256, 48
    %271 = vbcast.lane.b32.xlu0 %v245, %s270
    %v272 = vpop.permute.xlu0 %271
    %s274 = sor.u32 256, 56
    %275 = vbcast.lane.b32.xlu0 %v245, %s274
    %v276 = vpop.permute.xlu0 %275
    %v278 = vlaneseq
    %v279 = vshrl.u32 %v278, 7
    %v280 = vsub.s32 0, %v279
    %v281 = vrot.slane %v187, %v280
    %v282 = vlaneseq
    %v283 = vshrl.u32 %v282, 7
    %v284 = vsub.s32 4, %v283
    %v285 = vrot.slane %v187, %v284
    %v288 = vlaneseq
    %v289 = vshrl.u32 %v288, 7
    %v290 = vsub.s32 0, %v289
    %v291 = vrot.slane %v281, %v290
    %v292 = vlaneseq
    %v293 = vshrl.u32 %v292, 7
    %v294 = vsub.s32 0, %v293
    %v295 = vrot.slane %v285, %v294
    %v296 = vmul.f32 %v213, %v291
    %v297 = vmul.f32 %v213, %v295
    %v298 = vmul.f32 %v217, %v291
    %v299 = vmul.f32 %v217, %v295
    %v300 = vmul.f32 %v221, %v291
    %v301 = vmul.f32 %v221, %v295
    %v302 = vmul.f32 %v225, %v291
    %v303 = vmul.f32 %v225, %v295
    %v304 = vmul.f32 %v229, %v291
    %v305 = vmul.f32 %v229, %v295
    %v306 = vmul.f32 %v233, %v291
    %v307 = vmul.f32 %v233, %v295
    %v308 = vmul.f32 %v237, %v291
    %v309 = vmul.f32 %v237, %v295
    %v310 = vmul.f32 %v241, %v291
    %v311 = vmul.f32 %v241, %v295
    %v312 = vmul.f32 %v248, %v291
    %v313 = vmul.f32 %v248, %v295
    %v314 = vmul.f32 %v252, %v291
    %v315 = vmul.f32 %v252, %v295
    %v316 = vmul.f32 %v256, %v291
    %v317 = vmul.f32 %v256, %v295
    %v318 = vmul.f32 %v260, %v291
    %v319 = vmul.f32 %v260, %v295
    %v320 = vmul.f32 %v264, %v291
    %v321 = vmul.f32 %v264, %v295
    %v322 = vmul.f32 %v268, %v291
    %v323 = vmul.f32 %v268, %v295
    %v324 = vmul.f32 %v272, %v291
    %v325 = vmul.f32 %v272, %v295
    %v326 = vmul.f32 %v276, %v291
    %v327 = vmul.f32 %v276, %v295
    %v328 = vlaneseq
    %v329 = vshrl.u32 %v328, 7
    %v330 = vsub.s32 0, %v329
    %v331 = vrot.slane %v184, %v330
    %333 = vbcast.lane.b32.xlu0 %v331, 256
    %v334 = vpop.permute.xlu0 %333
    %s336 = sor.u32 256, 8
    %337 = vbcast.lane.b32.xlu0 %v331, %s336
    %v338 = vpop.permute.xlu0 %337
    %s340 = sor.u32 256, 16
    %341 = vbcast.lane.b32.xlu0 %v331, %s340
    %v342 = vpop.permute.xlu0 %341
    %s344 = sor.u32 256, 24
    %345 = vbcast.lane.b32.xlu0 %v331, %s344
    %v346 = vpop.permute.xlu0 %345
    %s348 = sor.u32 256, 32
    %349 = vbcast.lane.b32.xlu0 %v331, %s348
    %v350 = vpop.permute.xlu0 %349
    %s352 = sor.u32 256, 40
    %353 = vbcast.lane.b32.xlu0 %v331, %s352
    %v354 = vpop.permute.xlu0 %353
    %s356 = sor.u32 256, 48
    %357 = vbcast.lane.b32.xlu0 %v331, %s356
    %v358 = vpop.permute.xlu0 %357
    %s360 = sor.u32 256, 56
    %361 = vbcast.lane.b32.xlu0 %v331, %s360
    %v362 = vpop.permute.xlu0 %361
    %v363 = vlaneseq
    %v364 = vshrl.u32 %v363, 7
    %v365 = vsub.s32 1, %v364
    %v366 = vrot.slane %v184, %v365
    %368 = vbcast.lane.b32.xlu0 %v366, 256
    %v369 = vpop.permute.xlu0 %368
    %s371 = sor.u32 256, 8
    %372 = vbcast.lane.b32.xlu0 %v366, %s371
    %v373 = vpop.permute.xlu0 %372
    %s375 = sor.u32 256, 16
    %376 = vbcast.lane.b32.xlu0 %v366, %s375
    %v377 = vpop.permute.xlu0 %376
    %s379 = sor.u32 256, 24
    %380 = vbcast.lane.b32.xlu0 %v366, %s379
    %v381 = vpop.permute.xlu0 %380
    %s383 = sor.u32 256, 32
    %384 = vbcast.lane.b32.xlu0 %v366, %s383
    %v385 = vpop.permute.xlu0 %384
    %s387 = sor.u32 256, 40
    %388 = vbcast.lane.b32.xlu0 %v366, %s387
    %v389 = vpop.permute.xlu0 %388
    %s391 = sor.u32 256, 48
    %392 = vbcast.lane.b32.xlu0 %v366, %s391
    %v393 = vpop.permute.xlu0 %392
    %s395 = sor.u32 256, 56
    %396 = vbcast.lane.b32.xlu0 %v366, %s395
    %v397 = vpop.permute.xlu0 %396
    %v398 = vlaneseq
    %v399 = vshrl.u32 %v398, 7
    %v400 = vsub.s32 1, %v399
    %v401 = vrot.slane %v187, %v400
    %v402 = vlaneseq
    %v403 = vshrl.u32 %v402, 7
    %v404 = vsub.s32 5, %v403
    %v405 = vrot.slane %v187, %v404
    %v408 = vlaneseq
    %v409 = vshrl.u32 %v408, 7
    %v410 = vsub.s32 1, %v409
    %v411 = vrot.slane %v401, %v410
    %v412 = vlaneseq
    %v413 = vshrl.u32 %v412, 7
    %v414 = vsub.s32 1, %v413
    %v415 = vrot.slane %v405, %v414
    %v416 = vmul.f32 %v334, %v411
    %v417 = vmul.f32 %v334, %v415
    %v418 = vmul.f32 %v338, %v411
    %v419 = vmul.f32 %v338, %v415
    %v420 = vmul.f32 %v342, %v411
    %v421 = vmul.f32 %v342, %v415
    %v422 = vmul.f32 %v346, %v411
    %v423 = vmul.f32 %v346, %v415
    %v424 = vmul.f32 %v350, %v411
    %v425 = vmul.f32 %v350, %v415
    %v426 = vmul.f32 %v354, %v411
    %v427 = vmul.f32 %v354, %v415
    %v428 = vmul.f32 %v358, %v411
    %v429 = vmul.f32 %v358, %v415
    %v430 = vmul.f32 %v362, %v411
    %v431 = vmul.f32 %v362, %v415
    %v432 = vmul.f32 %v369, %v411
    %v433 = vmul.f32 %v369, %v415
    %v434 = vmul.f32 %v373, %v411
    %v435 = vmul.f32 %v373, %v415
    %v436 = vmul.f32 %v377, %v411
    %v437 = vmul.f32 %v377, %v415
    %v438 = vmul.f32 %v381, %v411
    %v439 = vmul.f32 %v381, %v415
    %v440 = vmul.f32 %v385, %v411
    %v441 = vmul.f32 %v385, %v415
    %v442 = vmul.f32 %v389, %v411
    %v443 = vmul.f32 %v389, %v415
    %v444 = vmul.f32 %v393, %v411
    %v445 = vmul.f32 %v393, %v415
    %v446 = vmul.f32 %v397, %v411
    %v447 = vmul.f32 %v397, %v415
    %v448 = vadd.f32 %v296, %v416
    %v449 = vadd.f32 %v297, %v417
    %v450 = vadd.f32 %v298, %v418
    %v451 = vadd.f32 %v299, %v419
    %v452 = vadd.f32 %v300, %v420
    %v453 = vadd.f32 %v301, %v421
    %v454 = vadd.f32 %v302, %v422
    %v455 = vadd.f32 %v303, %v423
    %v456 = vadd.f32 %v304, %v424
    %v457 = vadd.f32 %v305, %v425
    %v458 = vadd.f32 %v306, %v426
    %v459 = vadd.f32 %v307, %v427
    %v460 = vadd.f32 %v308, %v428
    %v461 = vadd.f32 %v309, %v429
    %v462 = vadd.f32 %v310, %v430
    %v463 = vadd.f32 %v311, %v431
    %v464 = vadd.f32 %v312, %v432
    %v465 = vadd.f32 %v313, %v433
    %v466 = vadd.f32 %v314, %v434
    %v467 = vadd.f32 %v315, %v435
    %v468 = vadd.f32 %v316, %v436
    %v469 = vadd.f32 %v317, %v437
    %v470 = vadd.f32 %v318, %v438
    %v471 = vadd.f32 %v319, %v439
    %v472 = vadd.f32 %v320, %v440
    %v473 = vadd.f32 %v321, %v441
    %v474 = vadd.f32 %v322, %v442
    %v475 = vadd.f32 %v323, %v443
    %v476 = vadd.f32 %v324, %v444
    %v477 = vadd.f32 %v325, %v445
    %v478 = vadd.f32 %v326, %v446
    %v479 = vadd.f32 %v327, %v447
    %v480 = vlaneseq
    %v481 = vshrl.u32 %v480, 7
    %v482 = vsub.s32 0, %v481
    %v483 = vrot.slane %v185, %v482
    %485 = vbcast.lane.b32.xlu0 %v483, 256
    %v486 = vpop.permute.xlu0 %485
    %s488 = sor.u32 256, 8
    %489 = vbcast.lane.b32.xlu0 %v483, %s488
    %v490 = vpop.permute.xlu0 %489
    %s492 = sor.u32 256, 16
    %493 = vbcast.lane.b32.xlu0 %v483, %s492
    %v494 = vpop.permute.xlu0 %493
    %s496 = sor.u32 256, 24
    %497 = vbcast.lane.b32.xlu0 %v483, %s496
    %v498 = vpop.permute.xlu0 %497
    %s500 = sor.u32 256, 32
    %501 = vbcast.lane.b32.xlu0 %v483, %s500
    %v502 = vpop.permute.xlu0 %501
    %s504 = sor.u32 256, 40
    %505 = vbcast.lane.b32.xlu0 %v483, %s504
    %v506 = vpop.permute.xlu0 %505
    %s508 = sor.u32 256, 48
    %509 = vbcast.lane.b32.xlu0 %v483, %s508
    %v510 = vpop.permute.xlu0 %509
    %s512 = sor.u32 256, 56
    %513 = vbcast.lane.b32.xlu0 %v483, %s512
    %v514 = vpop.permute.xlu0 %513
    %v515 = vlaneseq
    %v516 = vshrl.u32 %v515, 7
    %v517 = vsub.s32 1, %v516
    %v518 = vrot.slane %v185, %v517
    %520 = vbcast.lane.b32.xlu0 %v518, 256
    %v521 = vpop.permute.xlu0 %520
    %s523 = sor.u32 256, 8
    %524 = vbcast.lane.b32.xlu0 %v518, %s523
    %v525 = vpop.permute.xlu0 %524
    %s527 = sor.u32 256, 16
    %528 = vbcast.lane.b32.xlu0 %v518, %s527
    %v529 = vpop.permute.xlu0 %528
    %s531 = sor.u32 256, 24
    %532 = vbcast.lane.b32.xlu0 %v518, %s531
    %v533 = vpop.permute.xlu0 %532
    %s535 = sor.u32 256, 32
    %536 = vbcast.lane.b32.xlu0 %v518, %s535
    %v537 = vpop.permute.xlu0 %536
    %s539 = sor.u32 256, 40
    %540 = vbcast.lane.b32.xlu0 %v518, %s539
    %v541 = vpop.permute.xlu0 %540
    %s543 = sor.u32 256, 48
    %544 = vbcast.lane.b32.xlu0 %v518, %s543
    %v545 = vpop.permute.xlu0 %544
    %s547 = sor.u32 256, 56
    %548 = vbcast.lane.b32.xlu0 %v518, %s547
    %v549 = vpop.permute.xlu0 %548
    %v550 = vlaneseq
    %v551 = vshrl.u32 %v550, 7
    %v552 = vsub.s32 2, %v551
    %v553 = vrot.slane %v187, %v552
    %v554 = vlaneseq
    %v555 = vshrl.u32 %v554, 7
    %v556 = vsub.s32 6, %v555
    %v557 = vrot.slane %v187, %v556
    %v560 = vlaneseq
    %v561 = vshrl.u32 %v560, 7
    %v562 = vsub.s32 2, %v561
    %v563 = vrot.slane %v553, %v562
    %v564 = vlaneseq
    %v565 = vshrl.u32 %v564, 7
    %v566 = vsub.s32 2, %v565
    %v567 = vrot.slane %v557, %v566
    %v568 = vmul.f32 %v486, %v563
    %v569 = vmul.f32 %v486, %v567
    %v570 = vmul.f32 %v490, %v563
    %v571 = vmul.f32 %v490, %v567
    %v572 = vmul.f32 %v494, %v563
    %v573 = vmul.f32 %v494, %v567
    %v574 = vmul.f32 %v498, %v563
    %v575 = vmul.f32 %v498, %v567
    %v576 = vmul.f32 %v502, %v563
    %v577 = vmul.f32 %v502, %v567
    %v578 = vmul.f32 %v506, %v563
    %v579 = vmul.f32 %v506, %v567
    %v580 = vmul.f32 %v510, %v563
    %v581 = vmul.f32 %v510, %v567
    %v582 = vmul.f32 %v514, %v563
    %v583 = vmul.f32 %v514, %v567
    %v584 = vmul.f32 %v521, %v563
    %v585 = vmul.f32 %v521, %v567
    %v586 = vmul.f32 %v525, %v563
    %v587 = vmul.f32 %v525, %v567
    %v588 = vmul.f32 %v529, %v563
    %v589 = vmul.f32 %v529, %v567
    %v590 = vmul.f32 %v533, %v563
    %v591 = vmul.f32 %v533, %v567
    %v592 = vmul.f32 %v537, %v563
    %v593 = vmul.f32 %v537, %v567
    %v594 = vmul.f32 %v541, %v563
    %v595 = vmul.f32 %v541, %v567
    %v596 = vmul.f32 %v545, %v563
    %v597 = vmul.f32 %v545, %v567
    %v598 = vmul.f32 %v549, %v563
    %v599 = vmul.f32 %v549, %v567
    %v600 = vadd.f32 %v448, %v568
    %v601 = vadd.f32 %v449, %v569
    %v602 = vadd.f32 %v450, %v570
    %v603 = vadd.f32 %v451, %v571
    %v604 = vadd.f32 %v452, %v572
    %v605 = vadd.f32 %v453, %v573
    %v606 = vadd.f32 %v454, %v574
    %v607 = vadd.f32 %v455, %v575
    %v608 = vadd.f32 %v456, %v576
    %v609 = vadd.f32 %v457, %v577
    %v610 = vadd.f32 %v458, %v578
    %v611 = vadd.f32 %v459, %v579
    %v612 = vadd.f32 %v460, %v580
    %v613 = vadd.f32 %v461, %v581
    %v614 = vadd.f32 %v462, %v582
    %v615 = vadd.f32 %v463, %v583
    %v616 = vadd.f32 %v464, %v584
    %v617 = vadd.f32 %v465, %v585
    %v618 = vadd.f32 %v466, %v586
    %v619 = vadd.f32 %v467, %v587
    %v620 = vadd.f32 %v468, %v588
    %v621 = vadd.f32 %v469, %v589
    %v622 = vadd.f32 %v470, %v590
    %v623 = vadd.f32 %v471, %v591
    %v624 = vadd.f32 %v472, %v592
    %v625 = vadd.f32 %v473, %v593
    %v626 = vadd.f32 %v474, %v594
    %v627 = vadd.f32 %v475, %v595
    %v628 = vadd.f32 %v476, %v596
    %v629 = vadd.f32 %v477, %v597
    %v630 = vadd.f32 %v478, %v598
    %v631 = vadd.f32 %v479, %v599
    %v632 = vlaneseq
    %v633 = vshrl.u32 %v632, 7
    %v634 = vsub.s32 0, %v633
    %v635 = vrot.slane %v186, %v634
    %637 = vbcast.lane.b32.xlu0 %v635, 256
    %v638 = vpop.permute.xlu0 %637
    %s640 = sor.u32 256, 8
    %641 = vbcast.lane.b32.xlu0 %v635, %s640
    %v642 = vpop.permute.xlu0 %641
    %s644 = sor.u32 256, 16
    %645 = vbcast.lane.b32.xlu0 %v635, %s644
    %v646 = vpop.permute.xlu0 %645
    %s648 = sor.u32 256, 24
    %649 = vbcast.lane.b32.xlu0 %v635, %s648
    %v650 = vpop.permute.xlu0 %649
    %s652 = sor.u32 256, 32
    %653 = vbcast.lane.b32.xlu0 %v635, %s652
    %v654 = vpop.permute.xlu0 %653
    %s656 = sor.u32 256, 40
    %657 = vbcast.lane.b32.xlu0 %v635, %s656
    %v658 = vpop.permute.xlu0 %657
    %s660 = sor.u32 256, 48
    %661 = vbcast.lane.b32.xlu0 %v635, %s660
    %v662 = vpop.permute.xlu0 %661
    %s664 = sor.u32 256, 56
    %665 = vbcast.lane.b32.xlu0 %v635, %s664
    %v666 = vpop.permute.xlu0 %665
    %v667 = vlaneseq
    %v668 = vshrl.u32 %v667, 7
    %v669 = vsub.s32 1, %v668
    %v670 = vrot.slane %v186, %v669
    %672 = vbcast.lane.b32.xlu0 %v670, 256
    %v673 = vpop.permute.xlu0 %672
    %s675 = sor.u32 256, 8
    %676 = vbcast.lane.b32.xlu0 %v670, %s675
    %v677 = vpop.permute.xlu0 %676
    %s679 = sor.u32 256, 16
    %680 = vbcast.lane.b32.xlu0 %v670, %s679
    %v681 = vpop.permute.xlu0 %680
    %s683 = sor.u32 256, 24
    %684 = vbcast.lane.b32.xlu0 %v670, %s683
    %v685 = vpop.permute.xlu0 %684
    %s687 = sor.u32 256, 32
    %688 = vbcast.lane.b32.xlu0 %v670, %s687
    %v689 = vpop.permute.xlu0 %688
    %s691 = sor.u32 256, 40
    %692 = vbcast.lane.b32.xlu0 %v670, %s691
    %v693 = vpop.permute.xlu0 %692
    %s695 = sor.u32 256, 48
    %696 = vbcast.lane.b32.xlu0 %v670, %s695
    %v697 = vpop.permute.xlu0 %696
    %s699 = sor.u32 256, 56
    %700 = vbcast.lane.b32.xlu0 %v670, %s699
    %v701 = vpop.permute.xlu0 %700
    %v702 = vlaneseq
    %v703 = vshrl.u32 %v702, 7
    %v704 = vsub.s32 3, %v703
    %v705 = vrot.slane %v187, %v704
    %v706 = vlaneseq
    %v707 = vshrl.u32 %v706, 7
    %v708 = vsub.s32 7, %v707
    %v709 = vrot.slane %v187, %v708
    %v712 = vlaneseq
    %v713 = vshrl.u32 %v712, 7
    %v714 = vsub.s32 3, %v713
    %v715 = vrot.slane %v705, %v714
    %v716 = vlaneseq
    %v717 = vshrl.u32 %v716, 7
    %v718 = vsub.s32 3, %v717
    %v719 = vrot.slane %v709, %v718
    %v720 = vmul.f32 %v638, %v715
    %v721 = vmul.f32 %v638, %v719
    %v722 = vmul.f32 %v642, %v715
    %v723 = vmul.f32 %v642, %v719
    %v724 = vmul.f32 %v646, %v715
    %v725 = vmul.f32 %v646, %v719
    %v726 = vmul.f32 %v650, %v715
    %v727 = vmul.f32 %v650, %v719
    %v728 = vmul.f32 %v654, %v715
    %v729 = vmul.f32 %v654, %v719
    %v730 = vmul.f32 %v658, %v715
    %v731 = vmul.f32 %v658, %v719
    %v732 = vmul.f32 %v662, %v715
    %v733 = vmul.f32 %v662, %v719
    %v734 = vmul.f32 %v666, %v715
    %v735 = vmul.f32 %v666, %v719
    %v736 = vmul.f32 %v673, %v715
    %v737 = vmul.f32 %v673, %v719
    %v738 = vmul.f32 %v677, %v715
    %v739 = vmul.f32 %v677, %v719
    %v740 = vmul.f32 %v681, %v715
    %v741 = vmul.f32 %v681, %v719
    %v742 = vmul.f32 %v685, %v715
    %v743 = vmul.f32 %v685, %v719
    %v744 = vmul.f32 %v689, %v715
    %v745 = vmul.f32 %v689, %v719
    %v746 = vmul.f32 %v693, %v715
    %v747 = vmul.f32 %v693, %v719
    %v748 = vmul.f32 %v697, %v715
    %v749 = vmul.f32 %v697, %v719
    %v750 = vmul.f32 %v701, %v715
    %v751 = vmul.f32 %v701, %v719
    %v752 = vadd.f32 %v600, %v720
    %v753 = vadd.f32 %v601, %v721
    %v754 = vadd.f32 %v602, %v722
    %v755 = vadd.f32 %v603, %v723
    %v756 = vadd.f32 %v604, %v724
    %v757 = vadd.f32 %v605, %v725
    %v758 = vadd.f32 %v606, %v726
    %v759 = vadd.f32 %v607, %v727
    %v760 = vadd.f32 %v608, %v728
    %v761 = vadd.f32 %v609, %v729
    %v762 = vadd.f32 %v610, %v730
    %v763 = vadd.f32 %v611, %v731
    %v764 = vadd.f32 %v612, %v732
    %v765 = vadd.f32 %v613, %v733
    %v766 = vadd.f32 %v614, %v734
    %v767 = vadd.f32 %v615, %v735
    %v768 = vadd.f32 %v616, %v736
    %v769 = vadd.f32 %v617, %v737
    %v770 = vadd.f32 %v618, %v738
    %v771 = vadd.f32 %v619, %v739
    %v772 = vadd.f32 %v620, %v740
    %v773 = vadd.f32 %v621, %v741
    %v774 = vadd.f32 %v622, %v742
    %v775 = vadd.f32 %v623, %v743
    %v776 = vadd.f32 %v624, %v744
    %v777 = vadd.f32 %v625, %v745
    %v778 = vadd.f32 %v626, %v746
    %v779 = vadd.f32 %v627, %v747
    %v780 = vadd.f32 %v628, %v748
    %v781 = vadd.f32 %v629, %v749
    %v782 = vadd.f32 %v630, %v750
    %v783 = vadd.f32 %v631, %v751
    %v784 = vmul.f32 %v752, 2.0
    %v785 = vmul.f32 %v753, 2.0
    %v786 = vmul.f32 %v754, 2.0
    %v787 = vmul.f32 %v755, 2.0
    %v788 = vmul.f32 %v756, 2.0
    %v789 = vmul.f32 %v757, 2.0
    %v790 = vmul.f32 %v758, 2.0
    %v791 = vmul.f32 %v759, 2.0
    %v792 = vmul.f32 %v760, 2.0
    %v793 = vmul.f32 %v761, 2.0
    %v794 = vmul.f32 %v762, 2.0
    %v795 = vmul.f32 %v763, 2.0
    %v796 = vmul.f32 %v764, 2.0
    %v797 = vmul.f32 %v765, 2.0
    %v798 = vmul.f32 %v766, 2.0
    %v799 = vmul.f32 %v767, 2.0
    %v800 = vmul.f32 %v768, 2.0
    %v801 = vmul.f32 %v769, 2.0
    %v802 = vmul.f32 %v770, 2.0
    %v803 = vmul.f32 %v771, 2.0
    %v804 = vmul.f32 %v772, 2.0
    %v805 = vmul.f32 %v773, 2.0
    %v806 = vmul.f32 %v774, 2.0
    %v807 = vmul.f32 %v775, 2.0
    %v808 = vmul.f32 %v776, 2.0
    %v809 = vmul.f32 %v777, 2.0
    %v810 = vmul.f32 %v778, 2.0
    %v811 = vmul.f32 %v779, 2.0
    %v812 = vmul.f32 %v780, 2.0
    %v813 = vmul.f32 %v781, 2.0
    %v814 = vmul.f32 %v782, 2.0
    %v815 = vmul.f32 %v783, 2.0
    %v816 = vsub.f32 %v199, %v784
    %v817 = vsub.f32 %v206, %v785
    %v818 = vsub.f32 %v199, %v786
    %v819 = vsub.f32 %v206, %v787
    %v820 = vsub.f32 %v199, %v788
    %v821 = vsub.f32 %v206, %v789
    %v822 = vsub.f32 %v199, %v790
    %v823 = vsub.f32 %v206, %v791
    %v824 = vsub.f32 %v199, %v792
    %v825 = vsub.f32 %v206, %v793
    %v826 = vsub.f32 %v199, %v794
    %v827 = vsub.f32 %v206, %v795
    %v828 = vsub.f32 %v199, %v796
    %v829 = vsub.f32 %v206, %v797
    %v830 = vsub.f32 %v199, %v798
    %v831 = vsub.f32 %v206, %v799
    %v832 = vsub.f32 %v199, %v800
    %v833 = vsub.f32 %v206, %v801
    %v834 = vsub.f32 %v199, %v802
    %v835 = vsub.f32 %v206, %v803
    %v836 = vsub.f32 %v199, %v804
    %v837 = vsub.f32 %v206, %v805
    %v838 = vsub.f32 %v199, %v806
    %v839 = vsub.f32 %v206, %v807
    %v840 = vsub.f32 %v199, %v808
    %v841 = vsub.f32 %v206, %v809
    %v842 = vsub.f32 %v199, %v810
    %v843 = vsub.f32 %v206, %v811
    %v844 = vsub.f32 %v199, %v812
    %v845 = vsub.f32 %v206, %v813
    %v846 = vsub.f32 %v199, %v814
    %v847 = vsub.f32 %v206, %v815
    %v848 = vmax.f32 %v816, %v817
    %849 = vmax.xlane.f32.xlu0 %v848
    %v850 = vpop.xlane.xlu0 %849
    %v851 = vmax.f32 %v818, %v819
    %852 = vmax.xlane.f32.xlu0 %v851
    %v853 = vpop.xlane.xlu0 %852
    %v854 = vmax.f32 %v820, %v821
    %855 = vmax.xlane.f32.xlu0 %v854
    %v856 = vpop.xlane.xlu0 %855
    %v857 = vmax.f32 %v822, %v823
    %858 = vmax.xlane.f32.xlu0 %v857
    %v859 = vpop.xlane.xlu0 %858
    %v860 = vmax.f32 %v824, %v825
    %861 = vmax.xlane.f32.xlu0 %v860
    %v862 = vpop.xlane.xlu0 %861
    %v863 = vmax.f32 %v826, %v827
    %864 = vmax.xlane.f32.xlu0 %v863
    %v865 = vpop.xlane.xlu0 %864
    %v866 = vmax.f32 %v828, %v829
    %867 = vmax.xlane.f32.xlu0 %v866
    %v868 = vpop.xlane.xlu0 %867
    %v869 = vmax.f32 %v830, %v831
    %870 = vmax.xlane.f32.xlu0 %v869
    %v871 = vpop.xlane.xlu0 %870
    %v872 = vmax.f32 %v832, %v833
    %873 = vmax.xlane.f32.xlu0 %v872
    %v874 = vpop.xlane.xlu0 %873
    %v875 = vmax.f32 %v834, %v835
    %876 = vmax.xlane.f32.xlu0 %v875
    %v877 = vpop.xlane.xlu0 %876
    %v878 = vmax.f32 %v836, %v837
    %879 = vmax.xlane.f32.xlu0 %v878
    %v880 = vpop.xlane.xlu0 %879
    %v881 = vmax.f32 %v838, %v839
    %882 = vmax.xlane.f32.xlu0 %v881
    %v883 = vpop.xlane.xlu0 %882
    %v884 = vmax.f32 %v840, %v841
    %885 = vmax.xlane.f32.xlu0 %v884
    %v886 = vpop.xlane.xlu0 %885
    %v887 = vmax.f32 %v842, %v843
    %888 = vmax.xlane.f32.xlu0 %v887
    %v889 = vpop.xlane.xlu0 %888
    %v890 = vmax.f32 %v844, %v845
    %891 = vmax.xlane.f32.xlu0 %v890
    %v892 = vpop.xlane.xlu0 %891
    %v893 = vmax.f32 %v846, %v847
    %894 = vmax.xlane.f32.xlu0 %v893
    %v895 = vpop.xlane.xlu0 %894
    %v896 = vsub.f32 %v816, %v850
    %v897 = vsub.f32 %v817, %v850
    %v898 = vsub.f32 %v818, %v853
    %v899 = vsub.f32 %v819, %v853
    %v900 = vsub.f32 %v820, %v856
    %v901 = vsub.f32 %v821, %v856
    %v902 = vsub.f32 %v822, %v859
    %v903 = vsub.f32 %v823, %v859
    %v904 = vsub.f32 %v824, %v862
    %v905 = vsub.f32 %v825, %v862
    %v906 = vsub.f32 %v826, %v865
    %v907 = vsub.f32 %v827, %v865
    %v908 = vsub.f32 %v828, %v868
    %v909 = vsub.f32 %v829, %v868
    %v910 = vsub.f32 %v830, %v871
    %v911 = vsub.f32 %v831, %v871
    %v912 = vsub.f32 %v832, %v874
    %v913 = vsub.f32 %v833, %v874
    %v914 = vsub.f32 %v834, %v877
    %v915 = vsub.f32 %v835, %v877
    %v916 = vsub.f32 %v836, %v880
    %v917 = vsub.f32 %v837, %v880
    %v918 = vsub.f32 %v838, %v883
    %v919 = vsub.f32 %v839, %v883
    %v920 = vsub.f32 %v840, %v886
    %v921 = vsub.f32 %v841, %v886
    %v922 = vsub.f32 %v842, %v889
    %v923 = vsub.f32 %v843, %v889
    %v924 = vsub.f32 %v844, %v892
    %v925 = vsub.f32 %v845, %v892
    %v926 = vsub.f32 %v846, %v895
    %v927 = vsub.f32 %v847, %v895
    %v928 = vmul.f32 %v896, 1.442695
    %v929 = vpow.pop %v928
    %v930 = vmul.f32 %v897, 1.442695
    %v931 = vpow.pop %v930
    %v932 = vmul.f32 %v898, 1.442695
    %v933 = vpow.pop %v932
    %v934 = vmul.f32 %v899, 1.442695
    %v935 = vpow.pop %v934
    %v936 = vmul.f32 %v900, 1.442695
    %v937 = vpow.pop %v936
    %v938 = vmul.f32 %v901, 1.442695
    %v939 = vpow.pop %v938
    %v940 = vmul.f32 %v902, 1.442695
    %v941 = vpow.pop %v940
    %v942 = vmul.f32 %v903, 1.442695
    %v943 = vpow.pop %v942
    %v944 = vmul.f32 %v904, 1.442695
    %v945 = vpow.pop %v944
    %v946 = vmul.f32 %v905, 1.442695
    %v947 = vpow.pop %v946
    %v948 = vmul.f32 %v906, 1.442695
    %v949 = vpow.pop %v948
    %v950 = vmul.f32 %v907, 1.442695
    %v951 = vpow.pop %v950
    %v952 = vmul.f32 %v908, 1.442695
    %v953 = vpow.pop %v952
    %v954 = vmul.f32 %v909, 1.442695
    %v955 = vpow.pop %v954
    %v956 = vmul.f32 %v910, 1.442695
    %v957 = vpow.pop %v956
    %v958 = vmul.f32 %v911, 1.442695
    %v959 = vpow.pop %v958
    %v960 = vmul.f32 %v912, 1.442695
    %v961 = vpow.pop %v960
    %v962 = vmul.f32 %v913, 1.442695
    %v963 = vpow.pop %v962
    %v964 = vmul.f32 %v914, 1.442695
    %v965 = vpow.pop %v964
    %v966 = vmul.f32 %v915, 1.442695
    %v967 = vpow.pop %v966
    %v968 = vmul.f32 %v916, 1.442695
    %v969 = vpow.pop %v968
    %v970 = vmul.f32 %v917, 1.442695
    %v971 = vpow.pop %v970
    %v972 = vmul.f32 %v918, 1.442695
    %v973 = vpow.pop %v972
    %v974 = vmul.f32 %v919, 1.442695
    %v975 = vpow.pop %v974
    %v976 = vmul.f32 %v920, 1.442695
    %v977 = vpow.pop %v976
    %v978 = vmul.f32 %v921, 1.442695
    %v979 = vpow.pop %v978
    %v980 = vmul.f32 %v922, 1.442695
    %v981 = vpow.pop %v980
    %v982 = vmul.f32 %v923, 1.442695
    %v983 = vpow.pop %v982
    %v984 = vmul.f32 %v924, 1.442695
    %v985 = vpow.pop %v984
    %v986 = vmul.f32 %v925, 1.442695
    %v987 = vpow.pop %v986
    %v988 = vmul.f32 %v926, 1.442695
    %v989 = vpow.pop %v988
    %v990 = vmul.f32 %v927, 1.442695
    %v991 = vpow.pop %v990
    %v992 = vadd.f32 %v929, %v931
    %993 = vadd.xlane.f32.xlu0 %v992
    %v994 = vpop.xlane.xlu0 %993
    %v995 = vadd.f32 %v933, %v935
    %996 = vadd.xlane.f32.xlu0 %v995
    %v997 = vpop.xlane.xlu0 %996
    %v998 = vadd.f32 %v937, %v939
    %999 = vadd.xlane.f32.xlu0 %v998
    %v1000 = vpop.xlane.xlu0 %999
    %v1001 = vadd.f32 %v941, %v943
    %1002 = vadd.xlane.f32.xlu0 %v1001
    %v1003 = vpop.xlane.xlu0 %1002
    %v1004 = vadd.f32 %v945, %v947
    %1005 = vadd.xlane.f32.xlu0 %v1004
    %v1006 = vpop.xlane.xlu0 %1005
    %v1007 = vadd.f32 %v949, %v951
    %1008 = vadd.xlane.f32.xlu0 %v1007
    %v1009 = vpop.xlane.xlu0 %1008
    %v1010 = vadd.f32 %v953, %v955
    %1011 = vadd.xlane.f32.xlu0 %v1010
    %v1012 = vpop.xlane.xlu0 %1011
    %v1013 = vadd.f32 %v957, %v959
    %1014 = vadd.xlane.f32.xlu0 %v1013
    %v1015 = vpop.xlane.xlu0 %1014
    %v1016 = vadd.f32 %v961, %v963
    %1017 = vadd.xlane.f32.xlu0 %v1016
    %v1018 = vpop.xlane.xlu0 %1017
    %v1019 = vadd.f32 %v965, %v967
    %1020 = vadd.xlane.f32.xlu0 %v1019
    %v1021 = vpop.xlane.xlu0 %1020
    %v1022 = vadd.f32 %v969, %v971
    %1023 = vadd.xlane.f32.xlu0 %v1022
    %v1024 = vpop.xlane.xlu0 %1023
    %v1025 = vadd.f32 %v973, %v975
    %1026 = vadd.xlane.f32.xlu0 %v1025
    %v1027 = vpop.xlane.xlu0 %1026
    %v1028 = vadd.f32 %v977, %v979
    %1029 = vadd.xlane.f32.xlu0 %v1028
    %v1030 = vpop.xlane.xlu0 %1029
    %v1031 = vadd.f32 %v981, %v983
    %1032 = vadd.xlane.f32.xlu0 %v1031
    %v1033 = vpop.xlane.xlu0 %1032
    %v1034 = vadd.f32 %v985, %v987
    %1035 = vadd.xlane.f32.xlu0 %v1034
    %v1036 = vpop.xlane.xlu0 %1035
    %v1037 = vadd.f32 %v989, %v991
    %1038 = vadd.xlane.f32.xlu0 %v1037
    %v1039 = vpop.xlane.xlu0 %1038
    %v1040 = vrcp.pop %v994
    %v1041 = vrcp.pop %v997
    %v1042 = vrcp.pop %v1000
    %v1043 = vrcp.pop %v1003
    %v1044 = vrcp.pop %v1006
    %v1045 = vrcp.pop %v1009
    %v1046 = vrcp.pop %v1012
    %v1047 = vrcp.pop %v1015
    %v1048 = vrcp.pop %v1018
    %v1049 = vrcp.pop %v1021
    %v1050 = vrcp.pop %v1024
    %v1051 = vrcp.pop %v1027
    %v1052 = vrcp.pop %v1030
    %v1053 = vrcp.pop %v1033
    %v1054 = vrcp.pop %v1036
    %v1055 = vrcp.pop %v1039
    %v1056 = vmul.f32 %v929, %v1040
    %v1057 = vmul.f32 %v931, %v1040
    %v1058 = vmul.f32 %v933, %v1041
    %v1059 = vmul.f32 %v935, %v1041
    %v1060 = vmul.f32 %v937, %v1042
    %v1061 = vmul.f32 %v939, %v1042
    %v1062 = vmul.f32 %v941, %v1043
    %v1063 = vmul.f32 %v943, %v1043
    %v1064 = vmul.f32 %v945, %v1044
    %v1065 = vmul.f32 %v947, %v1044
    %v1066 = vmul.f32 %v949, %v1045
    %v1067 = vmul.f32 %v951, %v1045
    %v1068 = vmul.f32 %v953, %v1046
    %v1069 = vmul.f32 %v955, %v1046
    %v1070 = vmul.f32 %v957, %v1047
    %v1071 = vmul.f32 %v959, %v1047
    %v1072 = vmul.f32 %v961, %v1048
    %v1073 = vmul.f32 %v963, %v1048
    %v1074 = vmul.f32 %v965, %v1049
    %v1075 = vmul.f32 %v967, %v1049
    %v1076 = vmul.f32 %v969, %v1050
    %v1077 = vmul.f32 %v971, %v1050
    %v1078 = vmul.f32 %v973, %v1051
    %v1079 = vmul.f32 %v975, %v1051
    %v1080 = vmul.f32 %v977, %v1052
    %v1081 = vmul.f32 %v979, %v1052
    %v1082 = vmul.f32 %v981, %v1053
    %v1083 = vmul.f32 %v983, %v1053
    %v1084 = vmul.f32 %v985, %v1054
    %v1085 = vmul.f32 %v987, %v1054
    %v1086 = vmul.f32 %v989, %v1055
    %v1087 = vmul.f32 %v991, %v1055
    %v1088 = vlaneseq
    %v1089 = vand.u32 %v1088, 127
    %v1090 = vadd.s32 %v1089, 128
    %v1091 = vmin.f32 %v816, %v817
    %1092 = vmin.xlane.f32.xlu0 %v1091
    %v1093 = vpop.xlane.xlu0 %1092
    %v1094 = vmin.f32 %v818, %v819
    %1095 = vmin.xlane.f32.xlu0 %v1094
    %v1096 = vpop.xlane.xlu0 %1095
    %v1097 = vmin.f32 %v820, %v821
    %1098 = vmin.xlane.f32.xlu0 %v1097
    %v1099 = vpop.xlane.xlu0 %1098
    %v1100 = vmin.f32 %v822, %v823
    %1101 = vmin.xlane.f32.xlu0 %v1100
    %v1102 = vpop.xlane.xlu0 %1101
    %v1103 = vmin.f32 %v824, %v825
    %1104 = vmin.xlane.f32.xlu0 %v1103
    %v1105 = vpop.xlane.xlu0 %1104
    %v1106 = vmin.f32 %v826, %v827
    %1107 = vmin.xlane.f32.xlu0 %v1106
    %v1108 = vpop.xlane.xlu0 %1107
    %v1109 = vmin.f32 %v828, %v829
    %1110 = vmin.xlane.f32.xlu0 %v1109
    %v1111 = vpop.xlane.xlu0 %1110
    %v1112 = vmin.f32 %v830, %v831
    %1113 = vmin.xlane.f32.xlu0 %v1112
    %v1114 = vpop.xlane.xlu0 %1113
    %v1115 = vmin.f32 %v832, %v833
    %1116 = vmin.xlane.f32.xlu0 %v1115
    %v1117 = vpop.xlane.xlu0 %1116
    %v1118 = vmin.f32 %v834, %v835
    %1119 = vmin.xlane.f32.xlu0 %v1118
    %v1120 = vpop.xlane.xlu0 %1119
    %v1121 = vmin.f32 %v836, %v837
    %1122 = vmin.xlane.f32.xlu0 %v1121
    %v1123 = vpop.xlane.xlu0 %1122
    %v1124 = vmin.f32 %v838, %v839
    %1125 = vmin.xlane.f32.xlu0 %v1124
    %v1126 = vpop.xlane.xlu0 %1125
    %v1127 = vmin.f32 %v840, %v841
    %1128 = vmin.xlane.f32.xlu0 %v1127
    %v1129 = vpop.xlane.xlu0 %1128
    %v1130 = vmin.f32 %v842, %v843
    %1131 = vmin.xlane.f32.xlu0 %v1130
    %v1132 = vpop.xlane.xlu0 %1131
    %v1133 = vmin.f32 %v844, %v845
    %1134 = vmin.xlane.f32.xlu0 %v1133
    %v1135 = vpop.xlane.xlu0 %1134
    %v1136 = vmin.f32 %v846, %v847
    %1137 = vmin.xlane.f32.xlu0 %v1136
    %v1138 = vpop.xlane.xlu0 %1137
    %vm1139 = vcmp.le.f32.partialorder %v816, %v1093
    %vm1140 = vcmp.le.f32.partialorder %v817, %v1093
    %vm1141 = vcmp.le.f32.partialorder %v818, %v1096
    %vm1142 = vcmp.le.f32.partialorder %v819, %v1096
    %vm1143 = vcmp.le.f32.partialorder %v820, %v1099
    %vm1144 = vcmp.le.f32.partialorder %v821, %v1099
    %vm1145 = vcmp.le.f32.partialorder %v822, %v1102
    %vm1146 = vcmp.le.f32.partialorder %v823, %v1102
    %vm1147 = vcmp.le.f32.partialorder %v824, %v1105
    %vm1148 = vcmp.le.f32.partialorder %v825, %v1105
    %vm1149 = vcmp.le.f32.partialorder %v826, %v1108
    %vm1150 = vcmp.le.f32.partialorder %v827, %v1108
    %vm1151 = vcmp.le.f32.partialorder %v828, %v1111
    %vm1152 = vcmp.le.f32.partialorder %v829, %v1111
    %vm1153 = vcmp.le.f32.partialorder %v830, %v1114
    %vm1154 = vcmp.le.f32.partialorder %v831, %v1114
    %vm1155 = vcmp.le.f32.partialorder %v832, %v1117
    %vm1156 = vcmp.le.f32.partialorder %v833, %v1117
    %vm1157 = vcmp.le.f32.partialorder %v834, %v1120
    %vm1158 = vcmp.le.f32.partialorder %v835, %v1120
    %vm1159 = vcmp.le.f32.partialorder %v836, %v1123
    %vm1160 = vcmp.le.f32.partialorder %v837, %v1123
    %vm1161 = vcmp.le.f32.partialorder %v838, %v1126
    %vm1162 = vcmp.le.f32.partialorder %v839, %v1126
    %vm1163 = vcmp.le.f32.partialorder %v840, %v1129
    %vm1164 = vcmp.le.f32.partialorder %v841, %v1129
    %vm1165 = vcmp.le.f32.partialorder %v842, %v1132
    %vm1166 = vcmp.le.f32.partialorder %v843, %v1132
    %vm1167 = vcmp.le.f32.partialorder %v844, %v1135
    %vm1168 = vcmp.le.f32.partialorder %v845, %v1135
    %vm1169 = vcmp.le.f32.partialorder %v846, %v1138
    %vm1170 = vcmp.le.f32.partialorder %v847, %v1138
    %v1171 = vsel %vm1139, %v1089, 256
    %v1172 = vsel %vm1140, %v1090, 256
    %v1173 = vsel %vm1141, %v1089, 256
    %v1174 = vsel %vm1142, %v1090, 256
    %v1175 = vsel %vm1143, %v1089, 256
    %v1176 = vsel %vm1144, %v1090, 256
    %v1177 = vsel %vm1145, %v1089, 256
    %v1178 = vsel %vm1146, %v1090, 256
    %v1179 = vsel %vm1147, %v1089, 256
    %v1180 = vsel %vm1148, %v1090, 256
    %v1181 = vsel %vm1149, %v1089, 256
    %v1182 = vsel %vm1150, %v1090, 256
    %v1183 = vsel %vm1151, %v1089, 256
    %v1184 = vsel %vm1152, %v1090, 256
    %v1185 = vsel %vm1153, %v1089, 256
    %v1186 = vsel %vm1154, %v1090, 256
    %v1187 = vsel %vm1155, %v1089, 256
    %v1188 = vsel %vm1156, %v1090, 256
    %v1189 = vsel %vm1157, %v1089, 256
    %v1190 = vsel %vm1158, %v1090, 256
    %v1191 = vsel %vm1159, %v1089, 256
    %v1192 = vsel %vm1160, %v1090, 256
    %v1193 = vsel %vm1161, %v1089, 256
    %v1194 = vsel %vm1162, %v1090, 256
    %v1195 = vsel %vm1163, %v1089, 256
    %v1196 = vsel %vm1164, %v1090, 256
    %v1197 = vsel %vm1165, %v1089, 256
    %v1198 = vsel %vm1166, %v1090, 256
    %v1199 = vsel %vm1167, %v1089, 256
    %v1200 = vsel %vm1168, %v1090, 256
    %v1201 = vsel %vm1169, %v1089, 256
    %v1202 = vsel %vm1170, %v1090, 256
    %vm1203 = vcmp.lt.s32.totalorder %v1171, %v1172
    %v1204 = vsel %vm1203, %v1171, %v1172
    %v1205 = vand.u32 %v1204, 65535
    %v1206 = vshra.s32 %v1204, 16
    %v1207 = vcvt.s32.f32 %v1205
    %v1208 = vcvt.s32.f32 %v1206
    %1209 = vmin.xlane.f32.xlu0 %v1208
    %v1210 = vpop.xlane.xlu0 %1209
    %vm1211 = vcmp.eq.f32.partialorder %v1208, %v1210
    %v1212 = vsel %vm1211, %v1207, inf
    %1213 = vmin.xlane.f32.xlu0 %v1212
    %v1214 = vpop.xlane.xlu0 %1213
    %v1215 = vcvt.f32.s32 %v1214
    %v1216 = vcvt.f32.s32 %v1210
    %v1217 = vshll.u32 %v1216, 16
    %v1218 = vadd.s32 %v1217, %v1215
    %vm1219 = vcmp.lt.s32.totalorder %v1173, %v1174
    %v1220 = vsel %vm1219, %v1173, %v1174
    %v1221 = vand.u32 %v1220, 65535
    %v1222 = vshra.s32 %v1220, 16
    %v1223 = vcvt.s32.f32 %v1221
    %v1224 = vcvt.s32.f32 %v1222
    %1225 = vmin.xlane.f32.xlu0 %v1224
    %v1226 = vpop.xlane.xlu0 %1225
    %vm1227 = vcmp.eq.f32.partialorder %v1224, %v1226
    %v1228 = vsel %vm1227, %v1223, inf
    %1229 = vmin.xlane.f32.xlu0 %v1228
    %v1230 = vpop.xlane.xlu0 %1229
    %v1231 = vcvt.f32.s32 %v1230
    %v1232 = vcvt.f32.s32 %v1226
    %v1233 = vshll.u32 %v1232, 16
    %v1234 = vadd.s32 %v1233, %v1231
    %vm1235 = vcmp.lt.s32.totalorder %v1175, %v1176
    %v1236 = vsel %vm1235, %v1175, %v1176
    %v1237 = vand.u32 %v1236, 65535
    %v1238 = vshra.s32 %v1236, 16
    %v1239 = vcvt.s32.f32 %v1237
    %v1240 = vcvt.s32.f32 %v1238
    %1241 = vmin.xlane.f32.xlu0 %v1240
    %v1242 = vpop.xlane.xlu0 %1241
    %vm1243 = vcmp.eq.f32.partialorder %v1240, %v1242
    %v1244 = vsel %vm1243, %v1239, inf
    %1245 = vmin.xlane.f32.xlu0 %v1244
    %v1246 = vpop.xlane.xlu0 %1245
    %v1247 = vcvt.f32.s32 %v1246
    %v1248 = vcvt.f32.s32 %v1242
    %v1249 = vshll.u32 %v1248, 16
    %v1250 = vadd.s32 %v1249, %v1247
    %vm1251 = vcmp.lt.s32.totalorder %v1177, %v1178
    %v1252 = vsel %vm1251, %v1177, %v1178
    %v1253 = vand.u32 %v1252, 65535
    %v1254 = vshra.s32 %v1252, 16
    %v1255 = vcvt.s32.f32 %v1253
    %v1256 = vcvt.s32.f32 %v1254
    %1257 = vmin.xlane.f32.xlu0 %v1256
    %v1258 = vpop.xlane.xlu0 %1257
    %vm1259 = vcmp.eq.f32.partialorder %v1256, %v1258
    %v1260 = vsel %vm1259, %v1255, inf
    %1261 = vmin.xlane.f32.xlu0 %v1260
    %v1262 = vpop.xlane.xlu0 %1261
    %v1263 = vcvt.f32.s32 %v1262
    %v1264 = vcvt.f32.s32 %v1258
    %v1265 = vshll.u32 %v1264, 16
    %v1266 = vadd.s32 %v1265, %v1263
    %vm1267 = vcmp.lt.s32.totalorder %v1179, %v1180
    %v1268 = vsel %vm1267, %v1179, %v1180
    %v1269 = vand.u32 %v1268, 65535
    %v1270 = vshra.s32 %v1268, 16
    %v1271 = vcvt.s32.f32 %v1269
    %v1272 = vcvt.s32.f32 %v1270
    %1273 = vmin.xlane.f32.xlu0 %v1272
    %v1274 = vpop.xlane.xlu0 %1273
    %vm1275 = vcmp.eq.f32.partialorder %v1272, %v1274
    %v1276 = vsel %vm1275, %v1271, inf
    %1277 = vmin.xlane.f32.xlu0 %v1276
    %v1278 = vpop.xlane.xlu0 %1277
    %v1279 = vcvt.f32.s32 %v1278
    %v1280 = vcvt.f32.s32 %v1274
    %v1281 = vshll.u32 %v1280, 16
    %v1282 = vadd.s32 %v1281, %v1279
    %vm1283 = vcmp.lt.s32.totalorder %v1181, %v1182
    %v1284 = vsel %vm1283, %v1181, %v1182
    %v1285 = vand.u32 %v1284, 65535
    %v1286 = vshra.s32 %v1284, 16
    %v1287 = vcvt.s32.f32 %v1285
    %v1288 = vcvt.s32.f32 %v1286
    %1289 = vmin.xlane.f32.xlu0 %v1288
    %v1290 = vpop.xlane.xlu0 %1289
    %vm1291 = vcmp.eq.f32.partialorder %v1288, %v1290
    %v1292 = vsel %vm1291, %v1287, inf
    %1293 = vmin.xlane.f32.xlu0 %v1292
    %v1294 = vpop.xlane.xlu0 %1293
    %v1295 = vcvt.f32.s32 %v1294
    %v1296 = vcvt.f32.s32 %v1290
    %v1297 = vshll.u32 %v1296, 16
    %v1298 = vadd.s32 %v1297, %v1295
    %vm1299 = vcmp.lt.s32.totalorder %v1183, %v1184
    %v1300 = vsel %vm1299, %v1183, %v1184
    %v1301 = vand.u32 %v1300, 65535
    %v1302 = vshra.s32 %v1300, 16
    %v1303 = vcvt.s32.f32 %v1301
    %v1304 = vcvt.s32.f32 %v1302
    %1305 = vmin.xlane.f32.xlu0 %v1304
    %v1306 = vpop.xlane.xlu0 %1305
    %vm1307 = vcmp.eq.f32.partialorder %v1304, %v1306
    %v1308 = vsel %vm1307, %v1303, inf
    %1309 = vmin.xlane.f32.xlu0 %v1308
    %v1310 = vpop.xlane.xlu0 %1309
    %v1311 = vcvt.f32.s32 %v1310
    %v1312 = vcvt.f32.s32 %v1306
    %v1313 = vshll.u32 %v1312, 16
    %v1314 = vadd.s32 %v1313, %v1311
    %vm1315 = vcmp.lt.s32.totalorder %v1185, %v1186
    %v1316 = vsel %vm1315, %v1185, %v1186
    %v1317 = vand.u32 %v1316, 65535
    %v1318 = vshra.s32 %v1316, 16
    %v1319 = vcvt.s32.f32 %v1317
    %v1320 = vcvt.s32.f32 %v1318
    %1321 = vmin.xlane.f32.xlu0 %v1320
    %v1322 = vpop.xlane.xlu0 %1321
    %vm1323 = vcmp.eq.f32.partialorder %v1320, %v1322
    %v1324 = vsel %vm1323, %v1319, inf
    %1325 = vmin.xlane.f32.xlu0 %v1324
    %v1326 = vpop.xlane.xlu0 %1325
    %v1327 = vcvt.f32.s32 %v1326
    %v1328 = vcvt.f32.s32 %v1322
    %v1329 = vshll.u32 %v1328, 16
    %v1330 = vadd.s32 %v1329, %v1327
    %vm1331 = vcmp.lt.s32.totalorder %v1187, %v1188
    %v1332 = vsel %vm1331, %v1187, %v1188
    %v1333 = vand.u32 %v1332, 65535
    %v1334 = vshra.s32 %v1332, 16
    %v1335 = vcvt.s32.f32 %v1333
    %v1336 = vcvt.s32.f32 %v1334
    %1337 = vmin.xlane.f32.xlu0 %v1336
    %v1338 = vpop.xlane.xlu0 %1337
    %vm1339 = vcmp.eq.f32.partialorder %v1336, %v1338
    %v1340 = vsel %vm1339, %v1335, inf
    %1341 = vmin.xlane.f32.xlu0 %v1340
    %v1342 = vpop.xlane.xlu0 %1341
    %v1343 = vcvt.f32.s32 %v1342
    %v1344 = vcvt.f32.s32 %v1338
    %v1345 = vshll.u32 %v1344, 16
    %v1346 = vadd.s32 %v1345, %v1343
    %vm1347 = vcmp.lt.s32.totalorder %v1189, %v1190
    %v1348 = vsel %vm1347, %v1189, %v1190
    %v1349 = vand.u32 %v1348, 65535
    %v1350 = vshra.s32 %v1348, 16
    %v1351 = vcvt.s32.f32 %v1349
    %v1352 = vcvt.s32.f32 %v1350
    %1353 = vmin.xlane.f32.xlu0 %v1352
    %v1354 = vpop.xlane.xlu0 %1353
    %vm1355 = vcmp.eq.f32.partialorder %v1352, %v1354
    %v1356 = vsel %vm1355, %v1351, inf
    %1357 = vmin.xlane.f32.xlu0 %v1356
    %v1358 = vpop.xlane.xlu0 %1357
    %v1359 = vcvt.f32.s32 %v1358
    %v1360 = vcvt.f32.s32 %v1354
    %v1361 = vshll.u32 %v1360, 16
    %v1362 = vadd.s32 %v1361, %v1359
    %vm1363 = vcmp.lt.s32.totalorder %v1191, %v1192
    %v1364 = vsel %vm1363, %v1191, %v1192
    %v1365 = vand.u32 %v1364, 65535
    %v1366 = vshra.s32 %v1364, 16
    %v1367 = vcvt.s32.f32 %v1365
    %v1368 = vcvt.s32.f32 %v1366
    %1369 = vmin.xlane.f32.xlu0 %v1368
    %v1370 = vpop.xlane.xlu0 %1369
    %vm1371 = vcmp.eq.f32.partialorder %v1368, %v1370
    %v1372 = vsel %vm1371, %v1367, inf
    %1373 = vmin.xlane.f32.xlu0 %v1372
    %v1374 = vpop.xlane.xlu0 %1373
    %v1375 = vcvt.f32.s32 %v1374
    %v1376 = vcvt.f32.s32 %v1370
    %v1377 = vshll.u32 %v1376, 16
    %v1378 = vadd.s32 %v1377, %v1375
    %vm1379 = vcmp.lt.s32.totalorder %v1193, %v1194
    %v1380 = vsel %vm1379, %v1193, %v1194
    %v1381 = vand.u32 %v1380, 65535
    %v1382 = vshra.s32 %v1380, 16
    %v1383 = vcvt.s32.f32 %v1381
    %v1384 = vcvt.s32.f32 %v1382
    %1385 = vmin.xlane.f32.xlu0 %v1384
    %v1386 = vpop.xlane.xlu0 %1385
    %vm1387 = vcmp.eq.f32.partialorder %v1384, %v1386
    %v1388 = vsel %vm1387, %v1383, inf
    %1389 = vmin.xlane.f32.xlu0 %v1388
    %v1390 = vpop.xlane.xlu0 %1389
    %v1391 = vcvt.f32.s32 %v1390
    %v1392 = vcvt.f32.s32 %v1386
    %v1393 = vshll.u32 %v1392, 16
    %v1394 = vadd.s32 %v1393, %v1391
    %vm1395 = vcmp.lt.s32.totalorder %v1195, %v1196
    %v1396 = vsel %vm1395, %v1195, %v1196
    %v1397 = vand.u32 %v1396, 65535
    %v1398 = vshra.s32 %v1396, 16
    %v1399 = vcvt.s32.f32 %v1397
    %v1400 = vcvt.s32.f32 %v1398
    %1401 = vmin.xlane.f32.xlu0 %v1400
    %v1402 = vpop.xlane.xlu0 %1401
    %vm1403 = vcmp.eq.f32.partialorder %v1400, %v1402
    %v1404 = vsel %vm1403, %v1399, inf
    %1405 = vmin.xlane.f32.xlu0 %v1404
    %v1406 = vpop.xlane.xlu0 %1405
    %v1407 = vcvt.f32.s32 %v1406
    %v1408 = vcvt.f32.s32 %v1402
    %v1409 = vshll.u32 %v1408, 16
    %v1410 = vadd.s32 %v1409, %v1407
    %vm1411 = vcmp.lt.s32.totalorder %v1197, %v1198
    %v1412 = vsel %vm1411, %v1197, %v1198
    %v1413 = vand.u32 %v1412, 65535
    %v1414 = vshra.s32 %v1412, 16
    %v1415 = vcvt.s32.f32 %v1413
    %v1416 = vcvt.s32.f32 %v1414
    %1417 = vmin.xlane.f32.xlu0 %v1416
    %v1418 = vpop.xlane.xlu0 %1417
    %vm1419 = vcmp.eq.f32.partialorder %v1416, %v1418
    %v1420 = vsel %vm1419, %v1415, inf
    %1421 = vmin.xlane.f32.xlu0 %v1420
    %v1422 = vpop.xlane.xlu0 %1421
    %v1423 = vcvt.f32.s32 %v1422
    %v1424 = vcvt.f32.s32 %v1418
    %v1425 = vshll.u32 %v1424, 16
    %v1426 = vadd.s32 %v1425, %v1423
    %vm1427 = vcmp.lt.s32.totalorder %v1199, %v1200
    %v1428 = vsel %vm1427, %v1199, %v1200
    %v1429 = vand.u32 %v1428, 65535
    %v1430 = vshra.s32 %v1428, 16
    %v1431 = vcvt.s32.f32 %v1429
    %v1432 = vcvt.s32.f32 %v1430
    %1433 = vmin.xlane.f32.xlu0 %v1432
    %v1434 = vpop.xlane.xlu0 %1433
    %vm1435 = vcmp.eq.f32.partialorder %v1432, %v1434
    %v1436 = vsel %vm1435, %v1431, inf
    %1437 = vmin.xlane.f32.xlu0 %v1436
    %v1438 = vpop.xlane.xlu0 %1437
    %v1439 = vcvt.f32.s32 %v1438
    %v1440 = vcvt.f32.s32 %v1434
    %v1441 = vshll.u32 %v1440, 16
    %v1442 = vadd.s32 %v1441, %v1439
    %vm1443 = vcmp.lt.s32.totalorder %v1201, %v1202
    %v1444 = vsel %vm1443, %v1201, %v1202
    %v1445 = vand.u32 %v1444, 65535
    %v1446 = vshra.s32 %v1444, 16
    %v1447 = vcvt.s32.f32 %v1445
    %v1448 = vcvt.s32.f32 %v1446
    %1449 = vmin.xlane.f32.xlu0 %v1448
    %v1450 = vpop.xlane.xlu0 %1449
    %vm1451 = vcmp.eq.f32.partialorder %v1448, %v1450
    %v1452 = vsel %vm1451, %v1447, inf
    %1453 = vmin.xlane.f32.xlu0 %v1452
    %v1454 = vpop.xlane.xlu0 %1453
    %v1455 = vcvt.f32.s32 %v1454
    %v1456 = vcvt.f32.s32 %v1450
    %v1457 = vshll.u32 %v1456, 16
    %v1458 = vadd.s32 %v1457, %v1455
    %vm1459 = vcmp.eq.s32.totalorder %v1089, %v1218
    %vm1460 = vcmp.eq.s32.totalorder %v1090, %v1218
    %vm1461 = vcmp.eq.s32.totalorder %v1089, %v1234
    %vm1462 = vcmp.eq.s32.totalorder %v1090, %v1234
    %vm1463 = vcmp.eq.s32.totalorder %v1089, %v1250
    %vm1464 = vcmp.eq.s32.totalorder %v1090, %v1250
    %vm1465 = vcmp.eq.s32.totalorder %v1089, %v1266
    %vm1466 = vcmp.eq.s32.totalorder %v1090, %v1266
    %vm1467 = vcmp.eq.s32.totalorder %v1089, %v1282
    %vm1468 = vcmp.eq.s32.totalorder %v1090, %v1282
    %vm1469 = vcmp.eq.s32.totalorder %v1089, %v1298
    %vm1470 = vcmp.eq.s32.totalorder %v1090, %v1298
    %vm1471 = vcmp.eq.s32.totalorder %v1089, %v1314
    %vm1472 = vcmp.eq.s32.totalorder %v1090, %v1314
    %vm1473 = vcmp.eq.s32.totalorder %v1089, %v1330
    %vm1474 = vcmp.eq.s32.totalorder %v1090, %v1330
    %vm1475 = vcmp.eq.s32.totalorder %v1089, %v1346
    %vm1476 = vcmp.eq.s32.totalorder %v1090, %v1346
    %vm1477 = vcmp.eq.s32.totalorder %v1089, %v1362
    %vm1478 = vcmp.eq.s32.totalorder %v1090, %v1362
    %vm1479 = vcmp.eq.s32.totalorder %v1089, %v1378
    %vm1480 = vcmp.eq.s32.totalorder %v1090, %v1378
    %vm1481 = vcmp.eq.s32.totalorder %v1089, %v1394
    %vm1482 = vcmp.eq.s32.totalorder %v1090, %v1394
    %vm1483 = vcmp.eq.s32.totalorder %v1089, %v1410
    %vm1484 = vcmp.eq.s32.totalorder %v1090, %v1410
    %vm1485 = vcmp.eq.s32.totalorder %v1089, %v1426
    %vm1486 = vcmp.eq.s32.totalorder %v1090, %v1426
    %vm1487 = vcmp.eq.s32.totalorder %v1089, %v1442
    %vm1488 = vcmp.eq.s32.totalorder %v1090, %v1442
    %vm1489 = vcmp.eq.s32.totalorder %v1089, %v1458
    %vm1490 = vcmp.eq.s32.totalorder %v1090, %v1458
    %v1491 = vsel %vm1459, 1, 0
    %v1492 = vsel %vm1460, 1, 0
    %v1493 = vsel %vm1461, 1, 0
    %v1494 = vsel %vm1462, 1, 0
    %v1495 = vsel %vm1463, 1, 0
    %v1496 = vsel %vm1464, 1, 0
    %v1497 = vsel %vm1465, 1, 0
    %v1498 = vsel %vm1466, 1, 0
    %v1499 = vsel %vm1467, 1, 0
    %v1500 = vsel %vm1468, 1, 0
    %v1501 = vsel %vm1469, 1, 0
    %v1502 = vsel %vm1470, 1, 0
    %v1503 = vsel %vm1471, 1, 0
    %v1504 = vsel %vm1472, 1, 0
    %v1505 = vsel %vm1473, 1, 0
    %v1506 = vsel %vm1474, 1, 0
    %v1507 = vsel %vm1475, 1, 0
    %v1508 = vsel %vm1476, 1, 0
    %v1509 = vsel %vm1477, 1, 0
    %v1510 = vsel %vm1478, 1, 0
    %v1511 = vsel %vm1479, 1, 0
    %v1512 = vsel %vm1480, 1, 0
    %v1513 = vsel %vm1481, 1, 0
    %v1514 = vsel %vm1482, 1, 0
    %v1515 = vsel %vm1483, 1, 0
    %v1516 = vsel %vm1484, 1, 0
    %v1517 = vsel %vm1485, 1, 0
    %v1518 = vsel %vm1486, 1, 0
    %v1519 = vsel %vm1487, 1, 0
    %v1520 = vsel %vm1488, 1, 0
    %v1521 = vsel %vm1489, 1, 0
    %v1522 = vsel %vm1490, 1, 0
    %v1523 = vcvt.s32.f32 %v1491
    %v1524 = vcvt.s32.f32 %v1492
    %v1525 = vcvt.s32.f32 %v1493
    %v1526 = vcvt.s32.f32 %v1494
    %v1527 = vcvt.s32.f32 %v1495
    %v1528 = vcvt.s32.f32 %v1496
    %v1529 = vcvt.s32.f32 %v1497
    %v1530 = vcvt.s32.f32 %v1498
    %v1531 = vcvt.s32.f32 %v1499
    %v1532 = vcvt.s32.f32 %v1500
    %v1533 = vcvt.s32.f32 %v1501
    %v1534 = vcvt.s32.f32 %v1502
    %v1535 = vcvt.s32.f32 %v1503
    %v1536 = vcvt.s32.f32 %v1504
    %v1537 = vcvt.s32.f32 %v1505
    %v1538 = vcvt.s32.f32 %v1506
    %v1539 = vcvt.s32.f32 %v1507
    %v1540 = vcvt.s32.f32 %v1508
    %v1541 = vcvt.s32.f32 %v1509
    %v1542 = vcvt.s32.f32 %v1510
    %v1543 = vcvt.s32.f32 %v1511
    %v1544 = vcvt.s32.f32 %v1512
    %v1545 = vcvt.s32.f32 %v1513
    %v1546 = vcvt.s32.f32 %v1514
    %v1547 = vcvt.s32.f32 %v1515
    %v1548 = vcvt.s32.f32 %v1516
    %v1549 = vcvt.s32.f32 %v1517
    %v1550 = vcvt.s32.f32 %v1518
    %v1551 = vcvt.s32.f32 %v1519
    %v1552 = vcvt.s32.f32 %v1520
    %v1553 = vcvt.s32.f32 %v1521
    %v1554 = vcvt.s32.f32 %v1522
    %v1555 = vld [vmem:[%s6] sm:$0xf]
    %v1556 = vld [vmem:[%s6 + $0x4] sm:$0xf]
    %v1557 = vld [vmem:[%s6 + $0x8] sm:$0xf]
    %v1558 = vld [vmem:[%s6 + $0xc] sm:$0xf]
    %v1559 = vld [vmem:[%s6 + $0x10] sm:$0xf]
    %v1560 = vld [vmem:[%s6 + $0x14] sm:$0xf]
    %v1561 = vld [vmem:[%s6 + $0x18] sm:$0xf]
    %v1562 = vld [vmem:[%s6 + $0x1c] sm:$0xf]
    %v1563 = vld [vmem:[%s6 + $0x20] sm:$0xf]
    %v1564 = vld [vmem:[%s6 + $0x24] sm:$0xf]
    %v1565 = vld [vmem:[%s6 + $0x28] sm:$0xf]
    %v1566 = vld [vmem:[%s6 + $0x2c] sm:$0xf]
    %v1567 = vld [vmem:[%s6 + $0x30] sm:$0xf]
    %v1568 = vld [vmem:[%s6 + $0x34] sm:$0xf]
    %v1569 = vld [vmem:[%s6 + $0x38] sm:$0xf]
    %v1570 = vld [vmem:[%s6 + $0x3c] sm:$0xf]
    %v1571 = vld [vmem:[%s6 + $0x40] sm:$0xf]
    %v1572 = vld [vmem:[%s6 + $0x44] sm:$0xf]
    %v1573 = vld [vmem:[%s6 + $0x48] sm:$0xf]
    %v1574 = vld [vmem:[%s6 + $0x4c] sm:$0xf]
    %v1575 = vld [vmem:[%s6 + $0x50] sm:$0xf]
    %v1576 = vld [vmem:[%s6 + $0x54] sm:$0xf]
    %v1577 = vld [vmem:[%s6 + $0x58] sm:$0xf]
    %v1578 = vld [vmem:[%s6 + $0x5c] sm:$0xf]
    %v1579 = vld [vmem:[%s6 + $0x60] sm:$0xf]
    %v1580 = vld [vmem:[%s6 + $0x64] sm:$0xf]
    %v1581 = vld [vmem:[%s6 + $0x68] sm:$0xf]
    %v1582 = vld [vmem:[%s6 + $0x6c] sm:$0xf]
    %v1583 = vld [vmem:[%s6 + $0x70] sm:$0xf]
    %v1584 = vld [vmem:[%s6 + $0x74] sm:$0xf]
    %v1585 = vld [vmem:[%s6 + $0x78] sm:$0xf]
    %v1586 = vld [vmem:[%s6 + $0x7c] sm:$0xf]
    %v1587 = vmul.f32 %v1056, %v291
    %v1588 = vmul.f32 %v1057, %v295
    %v1589 = vmul.f32 %v1058, %v291
    %v1590 = vmul.f32 %v1059, %v295
    %v1591 = vmul.f32 %v1060, %v291
    %v1592 = vmul.f32 %v1061, %v295
    %v1593 = vmul.f32 %v1062, %v291
    %v1594 = vmul.f32 %v1063, %v295
    %v1595 = vmul.f32 %v1064, %v291
    %v1596 = vmul.f32 %v1065, %v295
    %v1597 = vmul.f32 %v1066, %v291
    %v1598 = vmul.f32 %v1067, %v295
    %v1599 = vmul.f32 %v1068, %v291
    %v1600 = vmul.f32 %v1069, %v295
    %v1601 = vmul.f32 %v1070, %v291
    %v1602 = vmul.f32 %v1071, %v295
    %v1603 = vmul.f32 %v1072, %v291
    %v1604 = vmul.f32 %v1073, %v295
    %v1605 = vmul.f32 %v1074, %v291
    %v1606 = vmul.f32 %v1075, %v295
    %v1607 = vmul.f32 %v1076, %v291
    %v1608 = vmul.f32 %v1077, %v295
    %v1609 = vmul.f32 %v1078, %v291
    %v1610 = vmul.f32 %v1079, %v295
    %v1611 = vmul.f32 %v1080, %v291
    %v1612 = vmul.f32 %v1081, %v295
    %v1613 = vmul.f32 %v1082, %v291
    %v1614 = vmul.f32 %v1083, %v295
    %v1615 = vmul.f32 %v1084, %v291
    %v1616 = vmul.f32 %v1085, %v295
    %v1617 = vmul.f32 %v1086, %v291
    %v1618 = vmul.f32 %v1087, %v295
    %v1619 = vadd.f32 %v1587, %v1588
    %1620 = vadd.xlane.f32.xlu0 %v1619
    %v1621 = vpop.xlane.xlu0 %1620
    %v1622 = vadd.f32 %v1589, %v1590
    %1623 = vadd.xlane.f32.xlu0 %v1622
    %v1624 = vpop.xlane.xlu0 %1623
    %v1625 = vadd.f32 %v1591, %v1592
    %1626 = vadd.xlane.f32.xlu0 %v1625
    %v1627 = vpop.xlane.xlu0 %1626
    %v1628 = vadd.f32 %v1593, %v1594
    %1629 = vadd.xlane.f32.xlu0 %v1628
    %v1630 = vpop.xlane.xlu0 %1629
    %v1631 = vadd.f32 %v1595, %v1596
    %1632 = vadd.xlane.f32.xlu0 %v1631
    %v1633 = vpop.xlane.xlu0 %1632
    %v1634 = vadd.f32 %v1597, %v1598
    %1635 = vadd.xlane.f32.xlu0 %v1634
    %v1636 = vpop.xlane.xlu0 %1635
    %v1637 = vadd.f32 %v1599, %v1600
    %1638 = vadd.xlane.f32.xlu0 %v1637
    %v1639 = vpop.xlane.xlu0 %1638
    %v1640 = vadd.f32 %v1601, %v1602
    %1641 = vadd.xlane.f32.xlu0 %v1640
    %v1642 = vpop.xlane.xlu0 %1641
    %v1643 = vadd.f32 %v1603, %v1604
    %1644 = vadd.xlane.f32.xlu0 %v1643
    %v1645 = vpop.xlane.xlu0 %1644
    %v1646 = vadd.f32 %v1605, %v1606
    %1647 = vadd.xlane.f32.xlu0 %v1646
    %v1648 = vpop.xlane.xlu0 %1647
    %v1649 = vadd.f32 %v1607, %v1608
    %1650 = vadd.xlane.f32.xlu0 %v1649
    %v1651 = vpop.xlane.xlu0 %1650
    %v1652 = vadd.f32 %v1609, %v1610
    %1653 = vadd.xlane.f32.xlu0 %v1652
    %v1654 = vpop.xlane.xlu0 %1653
    %v1655 = vadd.f32 %v1611, %v1612
    %1656 = vadd.xlane.f32.xlu0 %v1655
    %v1657 = vpop.xlane.xlu0 %1656
    %v1658 = vadd.f32 %v1613, %v1614
    %1659 = vadd.xlane.f32.xlu0 %v1658
    %v1660 = vpop.xlane.xlu0 %1659
    %v1661 = vadd.f32 %v1615, %v1616
    %1662 = vadd.xlane.f32.xlu0 %v1661
    %v1663 = vpop.xlane.xlu0 %1662
    %v1664 = vadd.f32 %v1617, %v1618
    %1665 = vadd.xlane.f32.xlu0 %v1664
    %v1666 = vpop.xlane.xlu0 %1665
    %v1667 = vmul.f32 %v1523, %v291
    %v1668 = vmul.f32 %v1524, %v295
    %v1669 = vmul.f32 %v1525, %v291
    %v1670 = vmul.f32 %v1526, %v295
    %v1671 = vmul.f32 %v1527, %v291
    %v1672 = vmul.f32 %v1528, %v295
    %v1673 = vmul.f32 %v1529, %v291
    %v1674 = vmul.f32 %v1530, %v295
    %v1675 = vmul.f32 %v1531, %v291
    %v1676 = vmul.f32 %v1532, %v295
    %v1677 = vmul.f32 %v1533, %v291
    %v1678 = vmul.f32 %v1534, %v295
    %v1679 = vmul.f32 %v1535, %v291
    %v1680 = vmul.f32 %v1536, %v295
    %v1681 = vmul.f32 %v1537, %v291
    %v1682 = vmul.f32 %v1538, %v295
    %v1683 = vmul.f32 %v1539, %v291
    %v1684 = vmul.f32 %v1540, %v295
    %v1685 = vmul.f32 %v1541, %v291
    %v1686 = vmul.f32 %v1542, %v295
    %v1687 = vmul.f32 %v1543, %v291
    %v1688 = vmul.f32 %v1544, %v295
    %v1689 = vmul.f32 %v1545, %v291
    %v1690 = vmul.f32 %v1546, %v295
    %v1691 = vmul.f32 %v1547, %v291
    %v1692 = vmul.f32 %v1548, %v295
    %v1693 = vmul.f32 %v1549, %v291
    %v1694 = vmul.f32 %v1550, %v295
    %v1695 = vmul.f32 %v1551, %v291
    %v1696 = vmul.f32 %v1552, %v295
    %v1697 = vmul.f32 %v1553, %v291
    %v1698 = vmul.f32 %v1554, %v295
    %v1699 = vadd.f32 %v1667, %v1668
    %1700 = vadd.xlane.f32.xlu0 %v1699
    %v1701 = vpop.xlane.xlu0 %1700
    %v1702 = vadd.f32 %v1669, %v1670
    %1703 = vadd.xlane.f32.xlu0 %v1702
    %v1704 = vpop.xlane.xlu0 %1703
    %v1705 = vadd.f32 %v1671, %v1672
    %1706 = vadd.xlane.f32.xlu0 %v1705
    %v1707 = vpop.xlane.xlu0 %1706
    %v1708 = vadd.f32 %v1673, %v1674
    %1709 = vadd.xlane.f32.xlu0 %v1708
    %v1710 = vpop.xlane.xlu0 %1709
    %v1711 = vadd.f32 %v1675, %v1676
    %1712 = vadd.xlane.f32.xlu0 %v1711
    %v1713 = vpop.xlane.xlu0 %1712
    %v1714 = vadd.f32 %v1677, %v1678
    %1715 = vadd.xlane.f32.xlu0 %v1714
    %v1716 = vpop.xlane.xlu0 %1715
    %v1717 = vadd.f32 %v1679, %v1680
    %1718 = vadd.xlane.f32.xlu0 %v1717
    %v1719 = vpop.xlane.xlu0 %1718
    %v1720 = vadd.f32 %v1681, %v1682
    %1721 = vadd.xlane.f32.xlu0 %v1720
    %v1722 = vpop.xlane.xlu0 %1721
    %v1723 = vadd.f32 %v1683, %v1684
    %1724 = vadd.xlane.f32.xlu0 %v1723
    %v1725 = vpop.xlane.xlu0 %1724
    %v1726 = vadd.f32 %v1685, %v1686
    %1727 = vadd.xlane.f32.xlu0 %v1726
    %v1728 = vpop.xlane.xlu0 %1727
    %v1729 = vadd.f32 %v1687, %v1688
    %1730 = vadd.xlane.f32.xlu0 %v1729
    %v1731 = vpop.xlane.xlu0 %1730
    %v1732 = vadd.f32 %v1689, %v1690
    %1733 = vadd.xlane.f32.xlu0 %v1732
    %v1734 = vpop.xlane.xlu0 %1733
    %v1735 = vadd.f32 %v1691, %v1692
    %1736 = vadd.xlane.f32.xlu0 %v1735
    %v1737 = vpop.xlane.xlu0 %1736
    %v1738 = vadd.f32 %v1693, %v1694
    %1739 = vadd.xlane.f32.xlu0 %v1738
    %v1740 = vpop.xlane.xlu0 %1739
    %v1741 = vadd.f32 %v1695, %v1696
    %1742 = vadd.xlane.f32.xlu0 %v1741
    %v1743 = vpop.xlane.xlu0 %1742
    %v1744 = vadd.f32 %v1697, %v1698
    %1745 = vadd.xlane.f32.xlu0 %v1744
    %v1746 = vpop.xlane.xlu0 %1745
    %v1763 = vlaneseq
    %v1764 = vshrl.u32 %v1763, 7
    %v1765 = vsub.s32 %v1089, %v1764
    %v1766 = vrot.slane %v1621, %v1765
    %v1767 = vadd.s32 %v1089, 4294967288
    %v1768 = vlaneseq
    %v1769 = vshrl.u32 %v1768, 7
    %v1770 = vsub.s32 %v1767, %v1769
    %v1771 = vrot.slane %v1624, %v1770
    %vm1772 = vcmask 130112
    %v1773 = vsel %vm1772, %v1771, %v1766
    %v1774 = vadd.s32 %v1089, 4294967280
    %v1775 = vlaneseq
    %v1776 = vshrl.u32 %v1775, 7
    %v1777 = vsub.s32 %v1774, %v1776
    %v1778 = vrot.slane %v1627, %v1777
    %vm1779 = vcmask 195712
    %v1780 = vsel %vm1779, %v1778, %v1773
    %v1781 = vadd.s32 %v1089, 4294967272
    %v1782 = vlaneseq
    %v1783 = vshrl.u32 %v1782, 7
    %v1784 = vsub.s32 %v1781, %v1783
    %v1785 = vrot.slane %v1630, %v1784
    %vm1786 = vcmask 261312
    %v1787 = vsel %vm1786, %v1785, %v1780
    %v1788 = vadd.s32 %v1089, 4294967264
    %v1789 = vlaneseq
    %v1790 = vshrl.u32 %v1789, 7
    %v1791 = vsub.s32 %v1788, %v1790
    %v1792 = vrot.slane %v1633, %v1791
    %vm1793 = vcmask 326912
    %v1794 = vsel %vm1793, %v1792, %v1787
    %v1795 = vadd.s32 %v1089, 4294967256
    %v1796 = vlaneseq
    %v1797 = vshrl.u32 %v1796, 7
    %v1798 = vsub.s32 %v1795, %v1797
    %v1799 = vrot.slane %v1636, %v1798
    %vm1800 = vcmask 392512
    %v1801 = vsel %vm1800, %v1799, %v1794
    %v1802 = vadd.s32 %v1089, 4294967248
    %v1803 = vlaneseq
    %v1804 = vshrl.u32 %v1803, 7
    %v1805 = vsub.s32 %v1802, %v1804
    %v1806 = vrot.slane %v1639, %v1805
    %vm1807 = vcmask 458112
    %v1808 = vsel %vm1807, %v1806, %v1801
    %v1809 = vadd.s32 %v1089, 4294967240
    %v1810 = vlaneseq
    %v1811 = vshrl.u32 %v1810, 7
    %v1812 = vsub.s32 %v1809, %v1811
    %v1813 = vrot.slane %v1642, %v1812
    %vm1814 = vcmask 523712
    %v1815 = vsel %vm1814, %v1813, %v1808
    %v1816 = vlaneseq
    %v1817 = vshrl.u32 %v1816, 7
    %v1818 = vsub.s32 %v1089, %v1817
    %v1819 = vrot.slane %v1645, %v1818
    %v1820 = vlaneseq
    %v1821 = vshrl.u32 %v1820, 7
    %v1822 = vsub.s32 %v1767, %v1821
    %v1823 = vrot.slane %v1648, %v1822
    %v1824 = vsel %vm1772, %v1823, %v1819
    %v1825 = vlaneseq
    %v1826 = vshrl.u32 %v1825, 7
    %v1827 = vsub.s32 %v1774, %v1826
    %v1828 = vrot.slane %v1651, %v1827
    %v1829 = vsel %vm1779, %v1828, %v1824
    %v1830 = vlaneseq
    %v1831 = vshrl.u32 %v1830, 7
    %v1832 = vsub.s32 %v1781, %v1831
    %v1833 = vrot.slane %v1654, %v1832
    %v1834 = vsel %vm1786, %v1833, %v1829
    %v1835 = vlaneseq
    %v1836 = vshrl.u32 %v1835, 7
    %v1837 = vsub.s32 %v1788, %v1836
    %v1838 = vrot.slane %v1657, %v1837
    %v1839 = vsel %vm1793, %v1838, %v1834
    %v1840 = vlaneseq
    %v1841 = vshrl.u32 %v1840, 7
    %v1842 = vsub.s32 %v1795, %v1841
    %v1843 = vrot.slane %v1660, %v1842
    %v1844 = vsel %vm1800, %v1843, %v1839
    %v1845 = vlaneseq
    %v1846 = vshrl.u32 %v1845, 7
    %v1847 = vsub.s32 %v1802, %v1846
    %v1848 = vrot.slane %v1663, %v1847
    %v1849 = vsel %vm1807, %v1848, %v1844
    %v1850 = vlaneseq
    %v1851 = vshrl.u32 %v1850, 7
    %v1852 = vsub.s32 %v1809, %v1851
    %v1853 = vrot.slane %v1666, %v1852
    %v1854 = vsel %vm1814, %v1853, %v1849
    %vm1855 = vcmask 1041409
    %v1856 = vsel %vm1855, %v1854, %v1815
    %1858 = vst.msk [vmem:[%s7] sm:$0x3] %vm37, %v1856
    %v1875 = vlaneseq
    %v1876 = vshrl.u32 %v1875, 7
    %v1877 = vsub.s32 %v1089, %v1876
    %v1878 = vrot.slane %v1701, %v1877
    %v1879 = vlaneseq
    %v1880 = vshrl.u32 %v1879, 7
    %v1881 = vsub.s32 %v1767, %v1880
    %v1882 = vrot.slane %v1704, %v1881
    %v1883 = vsel %vm1772, %v1882, %v1878
    %v1884 = vlaneseq
    %v1885 = vshrl.u32 %v1884, 7
    %v1886 = vsub.s32 %v1774, %v1885
    %v1887 = vrot.slane %v1707, %v1886
    %v1888 = vsel %vm1779, %v1887, %v1883
    %v1889 = vlaneseq
    %v1890 = vshrl.u32 %v1889, 7
    %v1891 = vsub.s32 %v1781, %v1890
    %v1892 = vrot.slane %v1710, %v1891
    %v1893 = vsel %vm1786, %v1892, %v1888
    %v1894 = vlaneseq
    %v1895 = vshrl.u32 %v1894, 7
    %v1896 = vsub.s32 %v1788, %v1895
    %v1897 = vrot.slane %v1713, %v1896
    %v1898 = vsel %vm1793, %v1897, %v1893
    %v1899 = vlaneseq
    %v1900 = vshrl.u32 %v1899, 7
    %v1901 = vsub.s32 %v1795, %v1900
    %v1902 = vrot.slane %v1716, %v1901
    %v1903 = vsel %vm1800, %v1902, %v1898
    %v1904 = vlaneseq
    %v1905 = vshrl.u32 %v1904, 7
    %v1906 = vsub.s32 %v1802, %v1905
    %v1907 = vrot.slane %v1719, %v1906
    %v1908 = vsel %vm1807, %v1907, %v1903
    %v1909 = vlaneseq
    %v1910 = vshrl.u32 %v1909, 7
    %v1911 = vsub.s32 %v1809, %v1910
    %v1912 = vrot.slane %v1722, %v1911
    %v1913 = vsel %vm1814, %v1912, %v1908
    %v1914 = vlaneseq
    %v1915 = vshrl.u32 %v1914, 7
    %v1916 = vsub.s32 %v1089, %v1915
    %v1917 = vrot.slane %v1725, %v1916
    %v1918 = vlaneseq
    %v1919 = vshrl.u32 %v1918, 7
    %v1920 = vsub.s32 %v1767, %v1919
    %v1921 = vrot.slane %v1728, %v1920
    %v1922 = vsel %vm1772, %v1921, %v1917
    %v1923 = vlaneseq
    %v1924 = vshrl.u32 %v1923, 7
    %v1925 = vsub.s32 %v1774, %v1924
    %v1926 = vrot.slane %v1731, %v1925
    %v1927 = vsel %vm1779, %v1926, %v1922
    %v1928 = vlaneseq
    %v1929 = vshrl.u32 %v1928, 7
    %v1930 = vsub.s32 %v1781, %v1929
    %v1931 = vrot.slane %v1734, %v1930
    %v1932 = vsel %vm1786, %v1931, %v1927
    %v1933 = vlaneseq
    %v1934 = vshrl.u32 %v1933, 7
    %v1935 = vsub.s32 %v1788, %v1934
    %v1936 = vrot.slane %v1737, %v1935
    %v1937 = vsel %vm1793, %v1936, %v1932
    %v1938 = vlaneseq
    %v1939 = vshrl.u32 %v1938, 7
    %v1940 = vsub.s32 %v1795, %v1939
    %v1941 = vrot.slane %v1740, %v1940
    %v1942 = vsel %vm1800, %v1941, %v1937
    %v1943 = vlaneseq
    %v1944 = vshrl.u32 %v1943, 7
    %v1945 = vsub.s32 %v1802, %v1944
    %v1946 = vrot.slane %v1743, %v1945
    %v1947 = vsel %vm1807, %v1946, %v1942
    %v1948 = vlaneseq
    %v1949 = vshrl.u32 %v1948, 7
    %v1950 = vsub.s32 %v1809, %v1949
    %v1951 = vrot.slane %v1746, %v1950
    %v1952 = vsel %vm1814, %v1951, %v1947
    %v1953 = vsel %vm1855, %v1952, %v1913
    %1955 = vst.msk [vmem:[%s8] sm:$0x3] %vm37, %v1953
    %vm1956 = vcmask 1043459
    %v1957 = vsel %vm1956, %v1952, %v1913
    %vm1959 = vcmask 1041408
    %v1960 = vsel %vm1959, %v1856, %v1957
    %v1961 = vpack.c.bf16 %v1960, %v1960
    %v1962 = vmul.f32 %v1056, %v411
    %v1963 = vmul.f32 %v1057, %v415
    %v1964 = vmul.f32 %v1058, %v411
    %v1965 = vmul.f32 %v1059, %v415
    %v1966 = vmul.f32 %v1060, %v411
    %v1967 = vmul.f32 %v1061, %v415
    %v1968 = vmul.f32 %v1062, %v411
    %v1969 = vmul.f32 %v1063, %v415
    %v1970 = vmul.f32 %v1064, %v411
    %v1971 = vmul.f32 %v1065, %v415
    %v1972 = vmul.f32 %v1066, %v411
    %v1973 = vmul.f32 %v1067, %v415
    %v1974 = vmul.f32 %v1068, %v411
    %v1975 = vmul.f32 %v1069, %v415
    %v1976 = vmul.f32 %v1070, %v411
    %v1977 = vmul.f32 %v1071, %v415
    %v1978 = vmul.f32 %v1072, %v411
    %v1979 = vmul.f32 %v1073, %v415
    %v1980 = vmul.f32 %v1074, %v411
    %v1981 = vmul.f32 %v1075, %v415
    %v1982 = vmul.f32 %v1076, %v411
    %v1983 = vmul.f32 %v1077, %v415
    %v1984 = vmul.f32 %v1078, %v411
    %v1985 = vmul.f32 %v1079, %v415
    %v1986 = vmul.f32 %v1080, %v411
    %v1987 = vmul.f32 %v1081, %v415
    %v1988 = vmul.f32 %v1082, %v411
    %v1989 = vmul.f32 %v1083, %v415
    %v1990 = vmul.f32 %v1084, %v411
    %v1991 = vmul.f32 %v1085, %v415
    %v1992 = vmul.f32 %v1086, %v411
    %v1993 = vmul.f32 %v1087, %v415
    %v1994 = vadd.f32 %v1962, %v1963
    %1995 = vadd.xlane.f32.xlu0 %v1994
    %v1996 = vpop.xlane.xlu0 %1995
    %v1997 = vadd.f32 %v1964, %v1965
    %1998 = vadd.xlane.f32.xlu0 %v1997
    %v1999 = vpop.xlane.xlu0 %1998
    %v2000 = vadd.f32 %v1966, %v1967
    %2001 = vadd.xlane.f32.xlu0 %v2000
    %v2002 = vpop.xlane.xlu0 %2001
    %v2003 = vadd.f32 %v1968, %v1969
    %2004 = vadd.xlane.f32.xlu0 %v2003
    %v2005 = vpop.xlane.xlu0 %2004
    %v2006 = vadd.f32 %v1970, %v1971
    %2007 = vadd.xlane.f32.xlu0 %v2006
    %v2008 = vpop.xlane.xlu0 %2007
    %v2009 = vadd.f32 %v1972, %v1973
    %2010 = vadd.xlane.f32.xlu0 %v2009
    %v2011 = vpop.xlane.xlu0 %2010
    %v2012 = vadd.f32 %v1974, %v1975
    %2013 = vadd.xlane.f32.xlu0 %v2012
    %v2014 = vpop.xlane.xlu0 %2013
    %v2015 = vadd.f32 %v1976, %v1977
    %2016 = vadd.xlane.f32.xlu0 %v2015
    %v2017 = vpop.xlane.xlu0 %2016
    %v2018 = vadd.f32 %v1978, %v1979
    %2019 = vadd.xlane.f32.xlu0 %v2018
    %v2020 = vpop.xlane.xlu0 %2019
    %v2021 = vadd.f32 %v1980, %v1981
    %2022 = vadd.xlane.f32.xlu0 %v2021
    %v2023 = vpop.xlane.xlu0 %2022
    %v2024 = vadd.f32 %v1982, %v1983
    %2025 = vadd.xlane.f32.xlu0 %v2024
    %v2026 = vpop.xlane.xlu0 %2025
    %v2027 = vadd.f32 %v1984, %v1985
    %2028 = vadd.xlane.f32.xlu0 %v2027
    %v2029 = vpop.xlane.xlu0 %2028
    %v2030 = vadd.f32 %v1986, %v1987
    %2031 = vadd.xlane.f32.xlu0 %v2030
    %v2032 = vpop.xlane.xlu0 %2031
    %v2033 = vadd.f32 %v1988, %v1989
    %2034 = vadd.xlane.f32.xlu0 %v2033
    %v2035 = vpop.xlane.xlu0 %2034
    %v2036 = vadd.f32 %v1990, %v1991
    %2037 = vadd.xlane.f32.xlu0 %v2036
    %v2038 = vpop.xlane.xlu0 %2037
    %v2039 = vadd.f32 %v1992, %v1993
    %2040 = vadd.xlane.f32.xlu0 %v2039
    %v2041 = vpop.xlane.xlu0 %2040
    %v2042 = vmul.f32 %v1523, %v411
    %v2043 = vmul.f32 %v1524, %v415
    %v2044 = vmul.f32 %v1525, %v411
    %v2045 = vmul.f32 %v1526, %v415
    %v2046 = vmul.f32 %v1527, %v411
    %v2047 = vmul.f32 %v1528, %v415
    %v2048 = vmul.f32 %v1529, %v411
    %v2049 = vmul.f32 %v1530, %v415
    %v2050 = vmul.f32 %v1531, %v411
    %v2051 = vmul.f32 %v1532, %v415
    %v2052 = vmul.f32 %v1533, %v411
    %v2053 = vmul.f32 %v1534, %v415
    %v2054 = vmul.f32 %v1535, %v411
    %v2055 = vmul.f32 %v1536, %v415
    %v2056 = vmul.f32 %v1537, %v411
    %v2057 = vmul.f32 %v1538, %v415
    %v2058 = vmul.f32 %v1539, %v411
    %v2059 = vmul.f32 %v1540, %v415
    %v2060 = vmul.f32 %v1541, %v411
    %v2061 = vmul.f32 %v1542, %v415
    %v2062 = vmul.f32 %v1543, %v411
    %v2063 = vmul.f32 %v1544, %v415
    %v2064 = vmul.f32 %v1545, %v411
    %v2065 = vmul.f32 %v1546, %v415
    %v2066 = vmul.f32 %v1547, %v411
    %v2067 = vmul.f32 %v1548, %v415
    %v2068 = vmul.f32 %v1549, %v411
    %v2069 = vmul.f32 %v1550, %v415
    %v2070 = vmul.f32 %v1551, %v411
    %v2071 = vmul.f32 %v1552, %v415
    %v2072 = vmul.f32 %v1553, %v411
    %v2073 = vmul.f32 %v1554, %v415
    %v2074 = vadd.f32 %v2042, %v2043
    %2075 = vadd.xlane.f32.xlu0 %v2074
    %v2076 = vpop.xlane.xlu0 %2075
    %v2077 = vadd.f32 %v2044, %v2045
    %2078 = vadd.xlane.f32.xlu0 %v2077
    %v2079 = vpop.xlane.xlu0 %2078
    %v2080 = vadd.f32 %v2046, %v2047
    %2081 = vadd.xlane.f32.xlu0 %v2080
    %v2082 = vpop.xlane.xlu0 %2081
    %v2083 = vadd.f32 %v2048, %v2049
    %2084 = vadd.xlane.f32.xlu0 %v2083
    %v2085 = vpop.xlane.xlu0 %2084
    %v2086 = vadd.f32 %v2050, %v2051
    %2087 = vadd.xlane.f32.xlu0 %v2086
    %v2088 = vpop.xlane.xlu0 %2087
    %v2089 = vadd.f32 %v2052, %v2053
    %2090 = vadd.xlane.f32.xlu0 %v2089
    %v2091 = vpop.xlane.xlu0 %2090
    %v2092 = vadd.f32 %v2054, %v2055
    %2093 = vadd.xlane.f32.xlu0 %v2092
    %v2094 = vpop.xlane.xlu0 %2093
    %v2095 = vadd.f32 %v2056, %v2057
    %2096 = vadd.xlane.f32.xlu0 %v2095
    %v2097 = vpop.xlane.xlu0 %2096
    %v2098 = vadd.f32 %v2058, %v2059
    %2099 = vadd.xlane.f32.xlu0 %v2098
    %v2100 = vpop.xlane.xlu0 %2099
    %v2101 = vadd.f32 %v2060, %v2061
    %2102 = vadd.xlane.f32.xlu0 %v2101
    %v2103 = vpop.xlane.xlu0 %2102
    %v2104 = vadd.f32 %v2062, %v2063
    %2105 = vadd.xlane.f32.xlu0 %v2104
    %v2106 = vpop.xlane.xlu0 %2105
    %v2107 = vadd.f32 %v2064, %v2065
    %2108 = vadd.xlane.f32.xlu0 %v2107
    %v2109 = vpop.xlane.xlu0 %2108
    %v2110 = vadd.f32 %v2066, %v2067
    %2111 = vadd.xlane.f32.xlu0 %v2110
    %v2112 = vpop.xlane.xlu0 %2111
    %v2113 = vadd.f32 %v2068, %v2069
    %2114 = vadd.xlane.f32.xlu0 %v2113
    %v2115 = vpop.xlane.xlu0 %2114
    %v2116 = vadd.f32 %v2070, %v2071
    %2117 = vadd.xlane.f32.xlu0 %v2116
    %v2118 = vpop.xlane.xlu0 %2117
    %v2119 = vadd.f32 %v2072, %v2073
    %2120 = vadd.xlane.f32.xlu0 %v2119
    %v2121 = vpop.xlane.xlu0 %2120
    %v2138 = vlaneseq
    %v2139 = vshrl.u32 %v2138, 7
    %v2140 = vsub.s32 %v1089, %v2139
    %v2141 = vrot.slane %v1996, %v2140
    %v2142 = vlaneseq
    %v2143 = vshrl.u32 %v2142, 7
    %v2144 = vsub.s32 %v1767, %v2143
    %v2145 = vrot.slane %v1999, %v2144
    %v2146 = vsel %vm1772, %v2145, %v2141
    %v2147 = vlaneseq
    %v2148 = vshrl.u32 %v2147, 7
    %v2149 = vsub.s32 %v1774, %v2148
    %v2150 = vrot.slane %v2002, %v2149
    %v2151 = vsel %vm1779, %v2150, %v2146
    %v2152 = vlaneseq
    %v2153 = vshrl.u32 %v2152, 7
    %v2154 = vsub.s32 %v1781, %v2153
    %v2155 = vrot.slane %v2005, %v2154
    %v2156 = vsel %vm1786, %v2155, %v2151
    %v2157 = vlaneseq
    %v2158 = vshrl.u32 %v2157, 7
    %v2159 = vsub.s32 %v1788, %v2158
    %v2160 = vrot.slane %v2008, %v2159
    %v2161 = vsel %vm1793, %v2160, %v2156
    %v2162 = vlaneseq
    %v2163 = vshrl.u32 %v2162, 7
    %v2164 = vsub.s32 %v1795, %v2163
    %v2165 = vrot.slane %v2011, %v2164
    %v2166 = vsel %vm1800, %v2165, %v2161
    %v2167 = vlaneseq
    %v2168 = vshrl.u32 %v2167, 7
    %v2169 = vsub.s32 %v1802, %v2168
    %v2170 = vrot.slane %v2014, %v2169
    %v2171 = vsel %vm1807, %v2170, %v2166
    %v2172 = vlaneseq
    %v2173 = vshrl.u32 %v2172, 7
    %v2174 = vsub.s32 %v1809, %v2173
    %v2175 = vrot.slane %v2017, %v2174
    %v2176 = vsel %vm1814, %v2175, %v2171
    %v2177 = vlaneseq
    %v2178 = vshrl.u32 %v2177, 7
    %v2179 = vsub.s32 %v1089, %v2178
    %v2180 = vrot.slane %v2020, %v2179
    %v2181 = vlaneseq
    %v2182 = vshrl.u32 %v2181, 7
    %v2183 = vsub.s32 %v1767, %v2182
    %v2184 = vrot.slane %v2023, %v2183
    %v2185 = vsel %vm1772, %v2184, %v2180
    %v2186 = vlaneseq
    %v2187 = vshrl.u32 %v2186, 7
    %v2188 = vsub.s32 %v1774, %v2187
    %v2189 = vrot.slane %v2026, %v2188
    %v2190 = vsel %vm1779, %v2189, %v2185
    %v2191 = vlaneseq
    %v2192 = vshrl.u32 %v2191, 7
    %v2193 = vsub.s32 %v1781, %v2192
    %v2194 = vrot.slane %v2029, %v2193
    %v2195 = vsel %vm1786, %v2194, %v2190
    %v2196 = vlaneseq
    %v2197 = vshrl.u32 %v2196, 7
    %v2198 = vsub.s32 %v1788, %v2197
    %v2199 = vrot.slane %v2032, %v2198
    %v2200 = vsel %vm1793, %v2199, %v2195
    %v2201 = vlaneseq
    %v2202 = vshrl.u32 %v2201, 7
    %v2203 = vsub.s32 %v1795, %v2202
    %v2204 = vrot.slane %v2035, %v2203
    %v2205 = vsel %vm1800, %v2204, %v2200
    %v2206 = vlaneseq
    %v2207 = vshrl.u32 %v2206, 7
    %v2208 = vsub.s32 %v1802, %v2207
    %v2209 = vrot.slane %v2038, %v2208
    %v2210 = vsel %vm1807, %v2209, %v2205
    %v2211 = vlaneseq
    %v2212 = vshrl.u32 %v2211, 7
    %v2213 = vsub.s32 %v1809, %v2212
    %v2214 = vrot.slane %v2041, %v2213
    %v2215 = vsel %vm1814, %v2214, %v2210
    %v2216 = vsel %vm1855, %v2215, %v2176
    %s2218 = scalar_lea.vmem %s7, 2
    %2219 = vst.msk [vmem:[%s2218] sm:$0x3] %vm37, %v2216
    %v2236 = vlaneseq
    %v2237 = vshrl.u32 %v2236, 7
    %v2238 = vsub.s32 %v1089, %v2237
    %v2239 = vrot.slane %v2076, %v2238
    %v2240 = vlaneseq
    %v2241 = vshrl.u32 %v2240, 7
    %v2242 = vsub.s32 %v1767, %v2241
    %v2243 = vrot.slane %v2079, %v2242
    %v2244 = vsel %vm1772, %v2243, %v2239
    %v2245 = vlaneseq
    %v2246 = vshrl.u32 %v2245, 7
    %v2247 = vsub.s32 %v1774, %v2246
    %v2248 = vrot.slane %v2082, %v2247
    %v2249 = vsel %vm1779, %v2248, %v2244
    %v2250 = vlaneseq
    %v2251 = vshrl.u32 %v2250, 7
    %v2252 = vsub.s32 %v1781, %v2251
    %v2253 = vrot.slane %v2085, %v2252
    %v2254 = vsel %vm1786, %v2253, %v2249
    %v2255 = vlaneseq
    %v2256 = vshrl.u32 %v2255, 7
    %v2257 = vsub.s32 %v1788, %v2256
    %v2258 = vrot.slane %v2088, %v2257
    %v2259 = vsel %vm1793, %v2258, %v2254
    %v2260 = vlaneseq
    %v2261 = vshrl.u32 %v2260, 7
    %v2262 = vsub.s32 %v1795, %v2261
    %v2263 = vrot.slane %v2091, %v2262
    %v2264 = vsel %vm1800, %v2263, %v2259
    %v2265 = vlaneseq
    %v2266 = vshrl.u32 %v2265, 7
    %v2267 = vsub.s32 %v1802, %v2266
    %v2268 = vrot.slane %v2094, %v2267
    %v2269 = vsel %vm1807, %v2268, %v2264
    %v2270 = vlaneseq
    %v2271 = vshrl.u32 %v2270, 7
    %v2272 = vsub.s32 %v1809, %v2271
    %v2273 = vrot.slane %v2097, %v2272
    %v2274 = vsel %vm1814, %v2273, %v2269
    %v2275 = vlaneseq
    %v2276 = vshrl.u32 %v2275, 7
    %v2277 = vsub.s32 %v1089, %v2276
    %v2278 = vrot.slane %v2100, %v2277
    %v2279 = vlaneseq
    %v2280 = vshrl.u32 %v2279, 7
    %v2281 = vsub.s32 %v1767, %v2280
    %v2282 = vrot.slane %v2103, %v2281
    %v2283 = vsel %vm1772, %v2282, %v2278
    %v2284 = vlaneseq
    %v2285 = vshrl.u32 %v2284, 7
    %v2286 = vsub.s32 %v1774, %v2285
    %v2287 = vrot.slane %v2106, %v2286
    %v2288 = vsel %vm1779, %v2287, %v2283
    %v2289 = vlaneseq
    %v2290 = vshrl.u32 %v2289, 7
    %v2291 = vsub.s32 %v1781, %v2290
    %v2292 = vrot.slane %v2109, %v2291
    %v2293 = vsel %vm1786, %v2292, %v2288
    %v2294 = vlaneseq
    %v2295 = vshrl.u32 %v2294, 7
    %v2296 = vsub.s32 %v1788, %v2295
    %v2297 = vrot.slane %v2112, %v2296
    %v2298 = vsel %vm1793, %v2297, %v2293
    %v2299 = vlaneseq
    %v2300 = vshrl.u32 %v2299, 7
    %v2301 = vsub.s32 %v1795, %v2300
    %v2302 = vrot.slane %v2115, %v2301
    %v2303 = vsel %vm1800, %v2302, %v2298
    %v2304 = vlaneseq
    %v2305 = vshrl.u32 %v2304, 7
    %v2306 = vsub.s32 %v1802, %v2305
    %v2307 = vrot.slane %v2118, %v2306
    %v2308 = vsel %vm1807, %v2307, %v2303
    %v2309 = vlaneseq
    %v2310 = vshrl.u32 %v2309, 7
    %v2311 = vsub.s32 %v1809, %v2310
    %v2312 = vrot.slane %v2121, %v2311
    %v2313 = vsel %vm1814, %v2312, %v2308
    %v2314 = vsel %vm1855, %v2313, %v2274
    %s2316 = scalar_lea.vmem %s8, 2
    %2317 = vst.msk [vmem:[%s2316] sm:$0x3] %vm37, %v2314
    %v2318 = vsel %vm1956, %v2313, %v2274
    %v2320 = vsel %vm1959, %v2216, %v2318
    %v2321 = vpack.c.bf16 %v2320, %v2320
    %v2330 = vunpack.c.l.b16 %v1563
    %v2331 = vunpack.c.l.b16 %v1564
    %v2332 = vunpack.c.l.b16 %v1565
    %v2333 = vunpack.c.l.b16 %v1566
    %v2334 = vunpack.c.l.b16 %v1567
    %v2335 = vunpack.c.l.b16 %v1568
    %v2336 = vunpack.c.l.b16 %v1569
    %v2337 = vunpack.c.l.b16 %v1570
    %v2338 = vpack.c.b16 %v2331, %v2330
    %v2339 = vpack.c.b16 %v2333, %v2332
    %v2340 = vpack.c.b16 %v2335, %v2334
    %v2341 = vpack.c.b16 %v2337, %v2336
    %vm2346 = vcmask 523264
    %v2348 = vsel %vm2346, %v2321, 0
    %2350 = vmatprep.subr.bf16.mxu0 0
    %2351 = vmatpush1.bf16.msra.mxu0 0
    %2352 = vmatprep.subr.bf16.mxu0 0
    %2353 = vmatpush1.bf16.msra.mxu0 0
    %2354 = vmatprep.subr.bf16.mxu0 0
    %2355 = vmatpush1.bf16.msra.mxu0 0
    %2356 = vmatprep.subr.bf16.mxu0 0
    %2357 = vmatpush1.bf16.msra.mxu0 0
    %2358 = vmatprep.subr.bf16.mxu0 0
    %2359 = vmatpush1.bf16.msra.mxu0 %v2341
    %2360 = vmatprep.subr.bf16.mxu0 0
    %2361 = vmatpush1.bf16.msra.mxu0 %v2340
    %2362 = vmatprep.subr.bf16.mxu0 0
    %2363 = vmatpush1.bf16.msra.mxu0 %v2339
    %2364 = vmatprep.subr.bf16.mxu0 0
    %2365 = vmatpush1.bf16.msra.mxu0 %v2338
    %2366 = vmatprep.subr.bf16.mxu0 0
    %2367 = vmatpush2.bf16.msra.mxu0 0
    %2368 = vmatprep.subr.bf16.mxu0 0
    %2369 = vmatpush2.bf16.msra.mxu0 0
    %2370 = vmatprep.subr.bf16.mxu0 0
    %2371 = vmatpush2.bf16.msra.mxu0 0
    %2372 = vmatprep.subr.bf16.mxu0 0
    %2373 = vmatpush2.bf16.msra.mxu0 0
    %2374 = vmatprep.subr.bf16.mxu0 0
    %2375 = vmatpush2.bf16.msra.mxu0 0
    %2376 = vmatprep.subr.bf16.mxu0 0
    %2377 = vmatpush2.bf16.msra.mxu0 0
    %2378 = vmatprep.subr.bf16.mxu0 0
    %2379 = vmatpush2.bf16.msra.mxu0 0
    %2380 = vmatprep.subr.bf16.mxu0 0
    %2381 = vmatpush2.bf16.msra.mxu0 0
    %2382 = vmatprep.mubr.bf16.mxu0 0
    %2383 = vmatmul.mubr.bf16.gmra.mxu0 %v2348
    %v2384 = vpop.f32.mrf.mxu0
    %v2385 = vadd.f32 0.0, %v2384
    %v2386 = vpop.f32.mrf.mxu0
    %v2387 = vpop.f32.mrf.mxu0
    %v2388 = vpop.f32.mrf.mxu0
    %2389 = vdwg.mxu0
    %v2398 = vunpack.c.l.b16 %v1555
    %v2399 = vunpack.c.l.b16 %v1556
    %v2400 = vunpack.c.l.b16 %v1557
    %v2401 = vunpack.c.l.b16 %v1558
    %v2402 = vunpack.c.l.b16 %v1559
    %v2403 = vunpack.c.l.b16 %v1560
    %v2404 = vunpack.c.l.b16 %v1561
    %v2405 = vunpack.c.l.b16 %v1562
    %v2406 = vpack.c.b16 %v2399, %v2398
    %v2407 = vpack.c.b16 %v2401, %v2400
    %v2408 = vpack.c.b16 %v2403, %v2402
    %v2409 = vpack.c.b16 %v2405, %v2404
    %v2415 = vsel %vm2346, %v1961, 0
    %2417 = vmatprep.subr.bf16.mxu0 0
    %2418 = vmatpush1.bf16.msra.mxu0 0
    %2419 = vmatprep.subr.bf16.mxu0 0
    %2420 = vmatpush1.bf16.msra.mxu0 0
    %2421 = vmatprep.subr.bf16.mxu0 0
    %2422 = vmatpush1.bf16.msra.mxu0 0
    %2423 = vmatprep.subr.bf16.mxu0 0
    %2424 = vmatpush1.bf16.msra.mxu0 0
    %2425 = vmatprep.subr.bf16.mxu0 0
    %2426 = vmatpush1.bf16.msra.mxu0 %v2409
    %2427 = vmatprep.subr.bf16.mxu0 0
    %2428 = vmatpush1.bf16.msra.mxu0 %v2408
    %2429 = vmatprep.subr.bf16.mxu0 0
    %2430 = vmatpush1.bf16.msra.mxu0 %v2407
    %2431 = vmatprep.subr.bf16.mxu0 0
    %2432 = vmatpush1.bf16.msra.mxu0 %v2406
    %2433 = vmatprep.subr.bf16.mxu0 0
    %2434 = vmatpush2.bf16.msra.mxu0 0
    %2435 = vmatprep.subr.bf16.mxu0 0
    %2436 = vmatpush2.bf16.msra.mxu0 0
    %2437 = vmatprep.subr.bf16.mxu0 0
    %2438 = vmatpush2.bf16.msra.mxu0 0
    %2439 = vmatprep.subr.bf16.mxu0 0
    %2440 = vmatpush2.bf16.msra.mxu0 0
    %2441 = vmatprep.subr.bf16.mxu0 0
    %2442 = vmatpush2.bf16.msra.mxu0 0
    %2443 = vmatprep.subr.bf16.mxu0 0
    %2444 = vmatpush2.bf16.msra.mxu0 0
    %2445 = vmatprep.subr.bf16.mxu0 0
    %2446 = vmatpush2.bf16.msra.mxu0 0
    %2447 = vmatprep.subr.bf16.mxu0 0
    %2448 = vmatpush2.bf16.msra.mxu0 0
    %2449 = vmatprep.mubr.bf16.mxu0 0
    %2450 = vmatmul.mubr.bf16.gmra.mxu0 %v2415
    %v2451 = vpop.f32.mrf.mxu0
    %v2452 = vadd.f32 %v2385, %v2451
    %v2453 = vpop.f32.mrf.mxu0
    %v2454 = vpop.f32.mrf.mxu0
    %v2455 = vpop.f32.mrf.mxu0
    %2456 = vdwg.mxu0
    %v2457 = vmul.f32 %v1056, %v563
    %v2458 = vmul.f32 %v1057, %v567
    %v2459 = vmul.f32 %v1058, %v563
    %v2460 = vmul.f32 %v1059, %v567
    %v2461 = vmul.f32 %v1060, %v563
    %v2462 = vmul.f32 %v1061, %v567
    %v2463 = vmul.f32 %v1062, %v563
    %v2464 = vmul.f32 %v1063, %v567
    %v2465 = vmul.f32 %v1064, %v563
    %v2466 = vmul.f32 %v1065, %v567
    %v2467 = vmul.f32 %v1066, %v563
    %v2468 = vmul.f32 %v1067, %v567
    %v2469 = vmul.f32 %v1068, %v563
    %v2470 = vmul.f32 %v1069, %v567
    %v2471 = vmul.f32 %v1070, %v563
    %v2472 = vmul.f32 %v1071, %v567
    %v2473 = vmul.f32 %v1072, %v563
    %v2474 = vmul.f32 %v1073, %v567
    %v2475 = vmul.f32 %v1074, %v563
    %v2476 = vmul.f32 %v1075, %v567
    %v2477 = vmul.f32 %v1076, %v563
    %v2478 = vmul.f32 %v1077, %v567
    %v2479 = vmul.f32 %v1078, %v563
    %v2480 = vmul.f32 %v1079, %v567
    %v2481 = vmul.f32 %v1080, %v563
    %v2482 = vmul.f32 %v1081, %v567
    %v2483 = vmul.f32 %v1082, %v563
    %v2484 = vmul.f32 %v1083, %v567
    %v2485 = vmul.f32 %v1084, %v563
    %v2486 = vmul.f32 %v1085, %v567
    %v2487 = vmul.f32 %v1086, %v563
    %v2488 = vmul.f32 %v1087, %v567
    %v2489 = vadd.f32 %v2457, %v2458
    %2490 = vadd.xlane.f32.xlu0 %v2489
    %v2491 = vpop.xlane.xlu0 %2490
    %v2492 = vadd.f32 %v2459, %v2460
    %2493 = vadd.xlane.f32.xlu0 %v2492
    %v2494 = vpop.xlane.xlu0 %2493
    %v2495 = vadd.f32 %v2461, %v2462
    %2496 = vadd.xlane.f32.xlu0 %v2495
    %v2497 = vpop.xlane.xlu0 %2496
    %v2498 = vadd.f32 %v2463, %v2464
    %2499 = vadd.xlane.f32.xlu0 %v2498
    %v2500 = vpop.xlane.xlu0 %2499
    %v2501 = vadd.f32 %v2465, %v2466
    %2502 = vadd.xlane.f32.xlu0 %v2501
    %v2503 = vpop.xlane.xlu0 %2502
    %v2504 = vadd.f32 %v2467, %v2468
    %2505 = vadd.xlane.f32.xlu0 %v2504
    %v2506 = vpop.xlane.xlu0 %2505
    %v2507 = vadd.f32 %v2469, %v2470
    %2508 = vadd.xlane.f32.xlu0 %v2507
    %v2509 = vpop.xlane.xlu0 %2508
    %v2510 = vadd.f32 %v2471, %v2472
    %2511 = vadd.xlane.f32.xlu0 %v2510
    %v2512 = vpop.xlane.xlu0 %2511
    %v2513 = vadd.f32 %v2473, %v2474
    %2514 = vadd.xlane.f32.xlu0 %v2513
    %v2515 = vpop.xlane.xlu0 %2514
    %v2516 = vadd.f32 %v2475, %v2476
    %2517 = vadd.xlane.f32.xlu0 %v2516
    %v2518 = vpop.xlane.xlu0 %2517
    %v2519 = vadd.f32 %v2477, %v2478
    %2520 = vadd.xlane.f32.xlu0 %v2519
    %v2521 = vpop.xlane.xlu0 %2520
    %v2522 = vadd.f32 %v2479, %v2480
    %2523 = vadd.xlane.f32.xlu0 %v2522
    %v2524 = vpop.xlane.xlu0 %2523
    %v2525 = vadd.f32 %v2481, %v2482
    %2526 = vadd.xlane.f32.xlu0 %v2525
    %v2527 = vpop.xlane.xlu0 %2526
    %v2528 = vadd.f32 %v2483, %v2484
    %2529 = vadd.xlane.f32.xlu0 %v2528
    %v2530 = vpop.xlane.xlu0 %2529
    %v2531 = vadd.f32 %v2485, %v2486
    %2532 = vadd.xlane.f32.xlu0 %v2531
    %v2533 = vpop.xlane.xlu0 %2532
    %v2534 = vadd.f32 %v2487, %v2488
    %2535 = vadd.xlane.f32.xlu0 %v2534
    %v2536 = vpop.xlane.xlu0 %2535
    %v2537 = vmul.f32 %v1523, %v563
    %v2538 = vmul.f32 %v1524, %v567
    %v2539 = vmul.f32 %v1525, %v563
    %v2540 = vmul.f32 %v1526, %v567
    %v2541 = vmul.f32 %v1527, %v563
    %v2542 = vmul.f32 %v1528, %v567
    %v2543 = vmul.f32 %v1529, %v563
    %v2544 = vmul.f32 %v1530, %v567
    %v2545 = vmul.f32 %v1531, %v563
    %v2546 = vmul.f32 %v1532, %v567
    %v2547 = vmul.f32 %v1533, %v563
    %v2548 = vmul.f32 %v1534, %v567
    %v2549 = vmul.f32 %v1535, %v563
    %v2550 = vmul.f32 %v1536, %v567
    %v2551 = vmul.f32 %v1537, %v563
    %v2552 = vmul.f32 %v1538, %v567
    %v2553 = vmul.f32 %v1539, %v563
    %v2554 = vmul.f32 %v1540, %v567
    %v2555 = vmul.f32 %v1541, %v563
    %v2556 = vmul.f32 %v1542, %v567
    %v2557 = vmul.f32 %v1543, %v563
    %v2558 = vmul.f32 %v1544, %v567
    %v2559 = vmul.f32 %v1545, %v563
    %v2560 = vmul.f32 %v1546, %v567
    %v2561 = vmul.f32 %v1547, %v563
    %v2562 = vmul.f32 %v1548, %v567
    %v2563 = vmul.f32 %v1549, %v563
    %v2564 = vmul.f32 %v1550, %v567
    %v2565 = vmul.f32 %v1551, %v563
    %v2566 = vmul.f32 %v1552, %v567
    %v2567 = vmul.f32 %v1553, %v563
    %v2568 = vmul.f32 %v1554, %v567
    %v2569 = vadd.f32 %v2537, %v2538
    %2570 = vadd.xlane.f32.xlu0 %v2569
    %v2571 = vpop.xlane.xlu0 %2570
    %v2572 = vadd.f32 %v2539, %v2540
    %2573 = vadd.xlane.f32.xlu0 %v2572
    %v2574 = vpop.xlane.xlu0 %2573
    %v2575 = vadd.f32 %v2541, %v2542
    %2576 = vadd.xlane.f32.xlu0 %v2575
    %v2577 = vpop.xlane.xlu0 %2576
    %v2578 = vadd.f32 %v2543, %v2544
    %2579 = vadd.xlane.f32.xlu0 %v2578
    %v2580 = vpop.xlane.xlu0 %2579
    %v2581 = vadd.f32 %v2545, %v2546
    %2582 = vadd.xlane.f32.xlu0 %v2581
    %v2583 = vpop.xlane.xlu0 %2582
    %v2584 = vadd.f32 %v2547, %v2548
    %2585 = vadd.xlane.f32.xlu0 %v2584
    %v2586 = vpop.xlane.xlu0 %2585
    %v2587 = vadd.f32 %v2549, %v2550
    %2588 = vadd.xlane.f32.xlu0 %v2587
    %v2589 = vpop.xlane.xlu0 %2588
    %v2590 = vadd.f32 %v2551, %v2552
    %2591 = vadd.xlane.f32.xlu0 %v2590
    %v2592 = vpop.xlane.xlu0 %2591
    %v2593 = vadd.f32 %v2553, %v2554
    %2594 = vadd.xlane.f32.xlu0 %v2593
    %v2595 = vpop.xlane.xlu0 %2594
    %v2596 = vadd.f32 %v2555, %v2556
    %2597 = vadd.xlane.f32.xlu0 %v2596
    %v2598 = vpop.xlane.xlu0 %2597
    %v2599 = vadd.f32 %v2557, %v2558
    %2600 = vadd.xlane.f32.xlu0 %v2599
    %v2601 = vpop.xlane.xlu0 %2600
    %v2602 = vadd.f32 %v2559, %v2560
    %2603 = vadd.xlane.f32.xlu0 %v2602
    %v2604 = vpop.xlane.xlu0 %2603
    %v2605 = vadd.f32 %v2561, %v2562
    %2606 = vadd.xlane.f32.xlu0 %v2605
    %v2607 = vpop.xlane.xlu0 %2606
    %v2608 = vadd.f32 %v2563, %v2564
    %2609 = vadd.xlane.f32.xlu0 %v2608
    %v2610 = vpop.xlane.xlu0 %2609
    %v2611 = vadd.f32 %v2565, %v2566
    %2612 = vadd.xlane.f32.xlu0 %v2611
    %v2613 = vpop.xlane.xlu0 %2612
    %v2614 = vadd.f32 %v2567, %v2568
    %2615 = vadd.xlane.f32.xlu0 %v2614
    %v2616 = vpop.xlane.xlu0 %2615
    %v2633 = vlaneseq
    %v2634 = vshrl.u32 %v2633, 7
    %v2635 = vsub.s32 %v1089, %v2634
    %v2636 = vrot.slane %v2491, %v2635
    %v2637 = vlaneseq
    %v2638 = vshrl.u32 %v2637, 7
    %v2639 = vsub.s32 %v1767, %v2638
    %v2640 = vrot.slane %v2494, %v2639
    %v2641 = vsel %vm1772, %v2640, %v2636
    %v2642 = vlaneseq
    %v2643 = vshrl.u32 %v2642, 7
    %v2644 = vsub.s32 %v1774, %v2643
    %v2645 = vrot.slane %v2497, %v2644
    %v2646 = vsel %vm1779, %v2645, %v2641
    %v2647 = vlaneseq
    %v2648 = vshrl.u32 %v2647, 7
    %v2649 = vsub.s32 %v1781, %v2648
    %v2650 = vrot.slane %v2500, %v2649
    %v2651 = vsel %vm1786, %v2650, %v2646
    %v2652 = vlaneseq
    %v2653 = vshrl.u32 %v2652, 7
    %v2654 = vsub.s32 %v1788, %v2653
    %v2655 = vrot.slane %v2503, %v2654
    %v2656 = vsel %vm1793, %v2655, %v2651
    %v2657 = vlaneseq
    %v2658 = vshrl.u32 %v2657, 7
    %v2659 = vsub.s32 %v1795, %v2658
    %v2660 = vrot.slane %v2506, %v2659
    %v2661 = vsel %vm1800, %v2660, %v2656
    %v2662 = vlaneseq
    %v2663 = vshrl.u32 %v2662, 7
    %v2664 = vsub.s32 %v1802, %v2663
    %v2665 = vrot.slane %v2509, %v2664
    %v2666 = vsel %vm1807, %v2665, %v2661
    %v2667 = vlaneseq
    %v2668 = vshrl.u32 %v2667, 7
    %v2669 = vsub.s32 %v1809, %v2668
    %v2670 = vrot.slane %v2512, %v2669
    %v2671 = vsel %vm1814, %v2670, %v2666
    %v2672 = vlaneseq
    %v2673 = vshrl.u32 %v2672, 7
    %v2674 = vsub.s32 %v1089, %v2673
    %v2675 = vrot.slane %v2515, %v2674
    %v2676 = vlaneseq
    %v2677 = vshrl.u32 %v2676, 7
    %v2678 = vsub.s32 %v1767, %v2677
    %v2679 = vrot.slane %v2518, %v2678
    %v2680 = vsel %vm1772, %v2679, %v2675
    %v2681 = vlaneseq
    %v2682 = vshrl.u32 %v2681, 7
    %v2683 = vsub.s32 %v1774, %v2682
    %v2684 = vrot.slane %v2521, %v2683
    %v2685 = vsel %vm1779, %v2684, %v2680
    %v2686 = vlaneseq
    %v2687 = vshrl.u32 %v2686, 7
    %v2688 = vsub.s32 %v1781, %v2687
    %v2689 = vrot.slane %v2524, %v2688
    %v2690 = vsel %vm1786, %v2689, %v2685
    %v2691 = vlaneseq
    %v2692 = vshrl.u32 %v2691, 7
    %v2693 = vsub.s32 %v1788, %v2692
    %v2694 = vrot.slane %v2527, %v2693
    %v2695 = vsel %vm1793, %v2694, %v2690
    %v2696 = vlaneseq
    %v2697 = vshrl.u32 %v2696, 7
    %v2698 = vsub.s32 %v1795, %v2697
    %v2699 = vrot.slane %v2530, %v2698
    %v2700 = vsel %vm1800, %v2699, %v2695
    %v2701 = vlaneseq
    %v2702 = vshrl.u32 %v2701, 7
    %v2703 = vsub.s32 %v1802, %v2702
    %v2704 = vrot.slane %v2533, %v2703
    %v2705 = vsel %vm1807, %v2704, %v2700
    %v2706 = vlaneseq
    %v2707 = vshrl.u32 %v2706, 7
    %v2708 = vsub.s32 %v1809, %v2707
    %v2709 = vrot.slane %v2536, %v2708
    %v2710 = vsel %vm1814, %v2709, %v2705
    %v2711 = vsel %vm1855, %v2710, %v2671
    %s2713 = scalar_lea.vmem %s7, 4
    %2714 = vst.msk [vmem:[%s2713] sm:$0x3] %vm37, %v2711
    %v2731 = vlaneseq
    %v2732 = vshrl.u32 %v2731, 7
    %v2733 = vsub.s32 %v1089, %v2732
    %v2734 = vrot.slane %v2571, %v2733
    %v2735 = vlaneseq
    %v2736 = vshrl.u32 %v2735, 7
    %v2737 = vsub.s32 %v1767, %v2736
    %v2738 = vrot.slane %v2574, %v2737
    %v2739 = vsel %vm1772, %v2738, %v2734
    %v2740 = vlaneseq
    %v2741 = vshrl.u32 %v2740, 7
    %v2742 = vsub.s32 %v1774, %v2741
    %v2743 = vrot.slane %v2577, %v2742
    %v2744 = vsel %vm1779, %v2743, %v2739
    %v2745 = vlaneseq
    %v2746 = vshrl.u32 %v2745, 7
    %v2747 = vsub.s32 %v1781, %v2746
    %v2748 = vrot.slane %v2580, %v2747
    %v2749 = vsel %vm1786, %v2748, %v2744
    %v2750 = vlaneseq
    %v2751 = vshrl.u32 %v2750, 7
    %v2752 = vsub.s32 %v1788, %v2751
    %v2753 = vrot.slane %v2583, %v2752
    %v2754 = vsel %vm1793, %v2753, %v2749
    %v2755 = vlaneseq
    %v2756 = vshrl.u32 %v2755, 7
    %v2757 = vsub.s32 %v1795, %v2756
    %v2758 = vrot.slane %v2586, %v2757
    %v2759 = vsel %vm1800, %v2758, %v2754
    %v2760 = vlaneseq
    %v2761 = vshrl.u32 %v2760, 7
    %v2762 = vsub.s32 %v1802, %v2761
    %v2763 = vrot.slane %v2589, %v2762
    %v2764 = vsel %vm1807, %v2763, %v2759
    %v2765 = vlaneseq
    %v2766 = vshrl.u32 %v2765, 7
    %v2767 = vsub.s32 %v1809, %v2766
    %v2768 = vrot.slane %v2592, %v2767
    %v2769 = vsel %vm1814, %v2768, %v2764
    %v2770 = vlaneseq
    %v2771 = vshrl.u32 %v2770, 7
    %v2772 = vsub.s32 %v1089, %v2771
    %v2773 = vrot.slane %v2595, %v2772
    %v2774 = vlaneseq
    %v2775 = vshrl.u32 %v2774, 7
    %v2776 = vsub.s32 %v1767, %v2775
    %v2777 = vrot.slane %v2598, %v2776
    %v2778 = vsel %vm1772, %v2777, %v2773
    %v2779 = vlaneseq
    %v2780 = vshrl.u32 %v2779, 7
    %v2781 = vsub.s32 %v1774, %v2780
    %v2782 = vrot.slane %v2601, %v2781
    %v2783 = vsel %vm1779, %v2782, %v2778
    %v2784 = vlaneseq
    %v2785 = vshrl.u32 %v2784, 7
    %v2786 = vsub.s32 %v1781, %v2785
    %v2787 = vrot.slane %v2604, %v2786
    %v2788 = vsel %vm1786, %v2787, %v2783
    %v2789 = vlaneseq
    %v2790 = vshrl.u32 %v2789, 7
    %v2791 = vsub.s32 %v1788, %v2790
    %v2792 = vrot.slane %v2607, %v2791
    %v2793 = vsel %vm1793, %v2792, %v2788
    %v2794 = vlaneseq
    %v2795 = vshrl.u32 %v2794, 7
    %v2796 = vsub.s32 %v1795, %v2795
    %v2797 = vrot.slane %v2610, %v2796
    %v2798 = vsel %vm1800, %v2797, %v2793
    %v2799 = vlaneseq
    %v2800 = vshrl.u32 %v2799, 7
    %v2801 = vsub.s32 %v1802, %v2800
    %v2802 = vrot.slane %v2613, %v2801
    %v2803 = vsel %vm1807, %v2802, %v2798
    %v2804 = vlaneseq
    %v2805 = vshrl.u32 %v2804, 7
    %v2806 = vsub.s32 %v1809, %v2805
    %v2807 = vrot.slane %v2616, %v2806
    %v2808 = vsel %vm1814, %v2807, %v2803
    %v2809 = vsel %vm1855, %v2808, %v2769
    %s2811 = scalar_lea.vmem %s8, 4
    %2812 = vst.msk [vmem:[%s2811] sm:$0x3] %vm37, %v2809
    %v2813 = vsel %vm1956, %v2808, %v2769
    %v2815 = vsel %vm1959, %v2711, %v2813
    %v2816 = vpack.c.bf16 %v2815, %v2815
    %v2825 = vunpack.c.l.b16 %v1571
    %v2826 = vunpack.c.l.b16 %v1572
    %v2827 = vunpack.c.l.b16 %v1573
    %v2828 = vunpack.c.l.b16 %v1574
    %v2829 = vunpack.c.l.b16 %v1575
    %v2830 = vunpack.c.l.b16 %v1576
    %v2831 = vunpack.c.l.b16 %v1577
    %v2832 = vunpack.c.l.b16 %v1578
    %v2833 = vpack.c.b16 %v2826, %v2825
    %v2834 = vpack.c.b16 %v2828, %v2827
    %v2835 = vpack.c.b16 %v2830, %v2829
    %v2836 = vpack.c.b16 %v2832, %v2831
    %v2842 = vsel %vm2346, %v2816, 0
    %2844 = vmatprep.subr.bf16.mxu0 0
    %2845 = vmatpush1.bf16.msra.mxu0 0
    %2846 = vmatprep.subr.bf16.mxu0 0
    %2847 = vmatpush1.bf16.msra.mxu0 0
    %2848 = vmatprep.subr.bf16.mxu0 0
    %2849 = vmatpush1.bf16.msra.mxu0 0
    %2850 = vmatprep.subr.bf16.mxu0 0
    %2851 = vmatpush1.bf16.msra.mxu0 0
    %2852 = vmatprep.subr.bf16.mxu0 0
    %2853 = vmatpush1.bf16.msra.mxu0 %v2836
    %2854 = vmatprep.subr.bf16.mxu0 0
    %2855 = vmatpush1.bf16.msra.mxu0 %v2835
    %2856 = vmatprep.subr.bf16.mxu0 0
    %2857 = vmatpush1.bf16.msra.mxu0 %v2834
    %2858 = vmatprep.subr.bf16.mxu0 0
    %2859 = vmatpush1.bf16.msra.mxu0 %v2833
    %2860 = vmatprep.subr.bf16.mxu0 0
    %2861 = vmatpush2.bf16.msra.mxu0 0
    %2862 = vmatprep.subr.bf16.mxu0 0
    %2863 = vmatpush2.bf16.msra.mxu0 0
    %2864 = vmatprep.subr.bf16.mxu0 0
    %2865 = vmatpush2.bf16.msra.mxu0 0
    %2866 = vmatprep.subr.bf16.mxu0 0
    %2867 = vmatpush2.bf16.msra.mxu0 0
    %2868 = vmatprep.subr.bf16.mxu0 0
    %2869 = vmatpush2.bf16.msra.mxu0 0
    %2870 = vmatprep.subr.bf16.mxu0 0
    %2871 = vmatpush2.bf16.msra.mxu0 0
    %2872 = vmatprep.subr.bf16.mxu0 0
    %2873 = vmatpush2.bf16.msra.mxu0 0
    %2874 = vmatprep.subr.bf16.mxu0 0
    %2875 = vmatpush2.bf16.msra.mxu0 0
    %2876 = vmatprep.mubr.bf16.mxu0 0
    %2877 = vmatmul.mubr.bf16.gmra.mxu0 %v2842
    %v2878 = vpop.f32.mrf.mxu0
    %v2879 = vadd.f32 0.0, %v2878
    %v2880 = vpop.f32.mrf.mxu0
    %v2881 = vpop.f32.mrf.mxu0
    %v2882 = vpop.f32.mrf.mxu0
    %2883 = vdwg.mxu0
    %v2884 = vadd.f32 %v2452, %v2879
    %v2885 = vmul.f32 %v1056, %v715
    %v2886 = vmul.f32 %v1057, %v719
    %v2887 = vmul.f32 %v1058, %v715
    %v2888 = vmul.f32 %v1059, %v719
    %v2889 = vmul.f32 %v1060, %v715
    %v2890 = vmul.f32 %v1061, %v719
    %v2891 = vmul.f32 %v1062, %v715
    %v2892 = vmul.f32 %v1063, %v719
    %v2893 = vmul.f32 %v1064, %v715
    %v2894 = vmul.f32 %v1065, %v719
    %v2895 = vmul.f32 %v1066, %v715
    %v2896 = vmul.f32 %v1067, %v719
    %v2897 = vmul.f32 %v1068, %v715
    %v2898 = vmul.f32 %v1069, %v719
    %v2899 = vmul.f32 %v1070, %v715
    %v2900 = vmul.f32 %v1071, %v719
    %v2901 = vmul.f32 %v1072, %v715
    %v2902 = vmul.f32 %v1073, %v719
    %v2903 = vmul.f32 %v1074, %v715
    %v2904 = vmul.f32 %v1075, %v719
    %v2905 = vmul.f32 %v1076, %v715
    %v2906 = vmul.f32 %v1077, %v719
    %v2907 = vmul.f32 %v1078, %v715
    %v2908 = vmul.f32 %v1079, %v719
    %v2909 = vmul.f32 %v1080, %v715
    %v2910 = vmul.f32 %v1081, %v719
    %v2911 = vmul.f32 %v1082, %v715
    %v2912 = vmul.f32 %v1083, %v719
    %v2913 = vmul.f32 %v1084, %v715
    %v2914 = vmul.f32 %v1085, %v719
    %v2915 = vmul.f32 %v1086, %v715
    %v2916 = vmul.f32 %v1087, %v719
    %v2917 = vadd.f32 %v2885, %v2886
    %2918 = vadd.xlane.f32.xlu0 %v2917
    %v2919 = vpop.xlane.xlu0 %2918
    %v2920 = vadd.f32 %v2887, %v2888
    %2921 = vadd.xlane.f32.xlu0 %v2920
    %v2922 = vpop.xlane.xlu0 %2921
    %v2923 = vadd.f32 %v2889, %v2890
    %2924 = vadd.xlane.f32.xlu0 %v2923
    %v2925 = vpop.xlane.xlu0 %2924
    %v2926 = vadd.f32 %v2891, %v2892
    %2927 = vadd.xlane.f32.xlu0 %v2926
    %v2928 = vpop.xlane.xlu0 %2927
    %v2929 = vadd.f32 %v2893, %v2894
    %2930 = vadd.xlane.f32.xlu0 %v2929
    %v2931 = vpop.xlane.xlu0 %2930
    %v2932 = vadd.f32 %v2895, %v2896
    %2933 = vadd.xlane.f32.xlu0 %v2932
    %v2934 = vpop.xlane.xlu0 %2933
    %v2935 = vadd.f32 %v2897, %v2898
    %2936 = vadd.xlane.f32.xlu0 %v2935
    %v2937 = vpop.xlane.xlu0 %2936
    %v2938 = vadd.f32 %v2899, %v2900
    %2939 = vadd.xlane.f32.xlu0 %v2938
    %v2940 = vpop.xlane.xlu0 %2939
    %v2941 = vadd.f32 %v2901, %v2902
    %2942 = vadd.xlane.f32.xlu0 %v2941
    %v2943 = vpop.xlane.xlu0 %2942
    %v2944 = vadd.f32 %v2903, %v2904
    %2945 = vadd.xlane.f32.xlu0 %v2944
    %v2946 = vpop.xlane.xlu0 %2945
    %v2947 = vadd.f32 %v2905, %v2906
    %2948 = vadd.xlane.f32.xlu0 %v2947
    %v2949 = vpop.xlane.xlu0 %2948
    %v2950 = vadd.f32 %v2907, %v2908
    %2951 = vadd.xlane.f32.xlu0 %v2950
    %v2952 = vpop.xlane.xlu0 %2951
    %v2953 = vadd.f32 %v2909, %v2910
    %2954 = vadd.xlane.f32.xlu0 %v2953
    %v2955 = vpop.xlane.xlu0 %2954
    %v2956 = vadd.f32 %v2911, %v2912
    %2957 = vadd.xlane.f32.xlu0 %v2956
    %v2958 = vpop.xlane.xlu0 %2957
    %v2959 = vadd.f32 %v2913, %v2914
    %2960 = vadd.xlane.f32.xlu0 %v2959
    %v2961 = vpop.xlane.xlu0 %2960
    %v2962 = vadd.f32 %v2915, %v2916
    %2963 = vadd.xlane.f32.xlu0 %v2962
    %v2964 = vpop.xlane.xlu0 %2963
    %v2965 = vmul.f32 %v1523, %v715
    %v2966 = vmul.f32 %v1524, %v719
    %v2967 = vmul.f32 %v1525, %v715
    %v2968 = vmul.f32 %v1526, %v719
    %v2969 = vmul.f32 %v1527, %v715
    %v2970 = vmul.f32 %v1528, %v719
    %v2971 = vmul.f32 %v1529, %v715
    %v2972 = vmul.f32 %v1530, %v719
    %v2973 = vmul.f32 %v1531, %v715
    %v2974 = vmul.f32 %v1532, %v719
    %v2975 = vmul.f32 %v1533, %v715
    %v2976 = vmul.f32 %v1534, %v719
    %v2977 = vmul.f32 %v1535, %v715
    %v2978 = vmul.f32 %v1536, %v719
    %v2979 = vmul.f32 %v1537, %v715
    %v2980 = vmul.f32 %v1538, %v719
    %v2981 = vmul.f32 %v1539, %v715
    %v2982 = vmul.f32 %v1540, %v719
    %v2983 = vmul.f32 %v1541, %v715
    %v2984 = vmul.f32 %v1542, %v719
    %v2985 = vmul.f32 %v1543, %v715
    %v2986 = vmul.f32 %v1544, %v719
    %v2987 = vmul.f32 %v1545, %v715
    %v2988 = vmul.f32 %v1546, %v719
    %v2989 = vmul.f32 %v1547, %v715
    %v2990 = vmul.f32 %v1548, %v719
    %v2991 = vmul.f32 %v1549, %v715
    %v2992 = vmul.f32 %v1550, %v719
    %v2993 = vmul.f32 %v1551, %v715
    %v2994 = vmul.f32 %v1552, %v719
    %v2995 = vmul.f32 %v1553, %v715
    %v2996 = vmul.f32 %v1554, %v719
    %v2997 = vadd.f32 %v2965, %v2966
    %2998 = vadd.xlane.f32.xlu0 %v2997
    %v2999 = vpop.xlane.xlu0 %2998
    %v3000 = vadd.f32 %v2967, %v2968
    %3001 = vadd.xlane.f32.xlu0 %v3000
    %v3002 = vpop.xlane.xlu0 %3001
    %v3003 = vadd.f32 %v2969, %v2970
    %3004 = vadd.xlane.f32.xlu0 %v3003
    %v3005 = vpop.xlane.xlu0 %3004
    %v3006 = vadd.f32 %v2971, %v2972
    %3007 = vadd.xlane.f32.xlu0 %v3006
    %v3008 = vpop.xlane.xlu0 %3007
    %v3009 = vadd.f32 %v2973, %v2974
    %3010 = vadd.xlane.f32.xlu0 %v3009
    %v3011 = vpop.xlane.xlu0 %3010
    %v3012 = vadd.f32 %v2975, %v2976
    %3013 = vadd.xlane.f32.xlu0 %v3012
    %v3014 = vpop.xlane.xlu0 %3013
    %v3015 = vadd.f32 %v2977, %v2978
    %3016 = vadd.xlane.f32.xlu0 %v3015
    %v3017 = vpop.xlane.xlu0 %3016
    %v3018 = vadd.f32 %v2979, %v2980
    %3019 = vadd.xlane.f32.xlu0 %v3018
    %v3020 = vpop.xlane.xlu0 %3019
    %v3021 = vadd.f32 %v2981, %v2982
    %3022 = vadd.xlane.f32.xlu0 %v3021
    %v3023 = vpop.xlane.xlu0 %3022
    %v3024 = vadd.f32 %v2983, %v2984
    %3025 = vadd.xlane.f32.xlu0 %v3024
    %v3026 = vpop.xlane.xlu0 %3025
    %v3027 = vadd.f32 %v2985, %v2986
    %3028 = vadd.xlane.f32.xlu0 %v3027
    %v3029 = vpop.xlane.xlu0 %3028
    %v3030 = vadd.f32 %v2987, %v2988
    %3031 = vadd.xlane.f32.xlu0 %v3030
    %v3032 = vpop.xlane.xlu0 %3031
    %v3033 = vadd.f32 %v2989, %v2990
    %3034 = vadd.xlane.f32.xlu0 %v3033
    %v3035 = vpop.xlane.xlu0 %3034
    %v3036 = vadd.f32 %v2991, %v2992
    %3037 = vadd.xlane.f32.xlu0 %v3036
    %v3038 = vpop.xlane.xlu0 %3037
    %v3039 = vadd.f32 %v2993, %v2994
    %3040 = vadd.xlane.f32.xlu0 %v3039
    %v3041 = vpop.xlane.xlu0 %3040
    %v3042 = vadd.f32 %v2995, %v2996
    %3043 = vadd.xlane.f32.xlu0 %v3042
    %v3044 = vpop.xlane.xlu0 %3043
    %v3061 = vlaneseq
    %v3062 = vshrl.u32 %v3061, 7
    %v3063 = vsub.s32 %v1089, %v3062
    %v3064 = vrot.slane %v2919, %v3063
    %v3065 = vlaneseq
    %v3066 = vshrl.u32 %v3065, 7
    %v3067 = vsub.s32 %v1767, %v3066
    %v3068 = vrot.slane %v2922, %v3067
    %v3069 = vsel %vm1772, %v3068, %v3064
    %v3070 = vlaneseq
    %v3071 = vshrl.u32 %v3070, 7
    %v3072 = vsub.s32 %v1774, %v3071
    %v3073 = vrot.slane %v2925, %v3072
    %v3074 = vsel %vm1779, %v3073, %v3069
    %v3075 = vlaneseq
    %v3076 = vshrl.u32 %v3075, 7
    %v3077 = vsub.s32 %v1781, %v3076
    %v3078 = vrot.slane %v2928, %v3077
    %v3079 = vsel %vm1786, %v3078, %v3074
    %v3080 = vlaneseq
    %v3081 = vshrl.u32 %v3080, 7
    %v3082 = vsub.s32 %v1788, %v3081
    %v3083 = vrot.slane %v2931, %v3082
    %v3084 = vsel %vm1793, %v3083, %v3079
    %v3085 = vlaneseq
    %v3086 = vshrl.u32 %v3085, 7
    %v3087 = vsub.s32 %v1795, %v3086
    %v3088 = vrot.slane %v2934, %v3087
    %v3089 = vsel %vm1800, %v3088, %v3084
    %v3090 = vlaneseq
    %v3091 = vshrl.u32 %v3090, 7
    %v3092 = vsub.s32 %v1802, %v3091
    %v3093 = vrot.slane %v2937, %v3092
    %v3094 = vsel %vm1807, %v3093, %v3089
    %v3095 = vlaneseq
    %v3096 = vshrl.u32 %v3095, 7
    %v3097 = vsub.s32 %v1809, %v3096
    %v3098 = vrot.slane %v2940, %v3097
    %v3099 = vsel %vm1814, %v3098, %v3094
    %v3100 = vlaneseq
    %v3101 = vshrl.u32 %v3100, 7
    %v3102 = vsub.s32 %v1089, %v3101
    %v3103 = vrot.slane %v2943, %v3102
    %v3104 = vlaneseq
    %v3105 = vshrl.u32 %v3104, 7
    %v3106 = vsub.s32 %v1767, %v3105
    %v3107 = vrot.slane %v2946, %v3106
    %v3108 = vsel %vm1772, %v3107, %v3103
    %v3109 = vlaneseq
    %v3110 = vshrl.u32 %v3109, 7
    %v3111 = vsub.s32 %v1774, %v3110
    %v3112 = vrot.slane %v2949, %v3111
    %v3113 = vsel %vm1779, %v3112, %v3108
    %v3114 = vlaneseq
    %v3115 = vshrl.u32 %v3114, 7
    %v3116 = vsub.s32 %v1781, %v3115
    %v3117 = vrot.slane %v2952, %v3116
    %v3118 = vsel %vm1786, %v3117, %v3113
    %v3119 = vlaneseq
    %v3120 = vshrl.u32 %v3119, 7
    %v3121 = vsub.s32 %v1788, %v3120
    %v3122 = vrot.slane %v2955, %v3121
    %v3123 = vsel %vm1793, %v3122, %v3118
    %v3124 = vlaneseq
    %v3125 = vshrl.u32 %v3124, 7
    %v3126 = vsub.s32 %v1795, %v3125
    %v3127 = vrot.slane %v2958, %v3126
    %v3128 = vsel %vm1800, %v3127, %v3123
    %v3129 = vlaneseq
    %v3130 = vshrl.u32 %v3129, 7
    %v3131 = vsub.s32 %v1802, %v3130
    %v3132 = vrot.slane %v2961, %v3131
    %v3133 = vsel %vm1807, %v3132, %v3128
    %v3134 = vlaneseq
    %v3135 = vshrl.u32 %v3134, 7
    %v3136 = vsub.s32 %v1809, %v3135
    %v3137 = vrot.slane %v2964, %v3136
    %v3138 = vsel %vm1814, %v3137, %v3133
    %v3139 = vsel %vm1855, %v3138, %v3099
    %s3141 = scalar_lea.vmem %s7, 6
    %3142 = vst.msk [vmem:[%s3141] sm:$0x3] %vm37, %v3139
    %v3159 = vlaneseq
    %v3160 = vshrl.u32 %v3159, 7
    %v3161 = vsub.s32 %v1089, %v3160
    %v3162 = vrot.slane %v2999, %v3161
    %v3163 = vlaneseq
    %v3164 = vshrl.u32 %v3163, 7
    %v3165 = vsub.s32 %v1767, %v3164
    %v3166 = vrot.slane %v3002, %v3165
    %v3167 = vsel %vm1772, %v3166, %v3162
    %v3168 = vlaneseq
    %v3169 = vshrl.u32 %v3168, 7
    %v3170 = vsub.s32 %v1774, %v3169
    %v3171 = vrot.slane %v3005, %v3170
    %v3172 = vsel %vm1779, %v3171, %v3167
    %v3173 = vlaneseq
    %v3174 = vshrl.u32 %v3173, 7
    %v3175 = vsub.s32 %v1781, %v3174
    %v3176 = vrot.slane %v3008, %v3175
    %v3177 = vsel %vm1786, %v3176, %v3172
    %v3178 = vlaneseq
    %v3179 = vshrl.u32 %v3178, 7
    %v3180 = vsub.s32 %v1788, %v3179
    %v3181 = vrot.slane %v3011, %v3180
    %v3182 = vsel %vm1793, %v3181, %v3177
    %v3183 = vlaneseq
    %v3184 = vshrl.u32 %v3183, 7
    %v3185 = vsub.s32 %v1795, %v3184
    %v3186 = vrot.slane %v3014, %v3185
    %v3187 = vsel %vm1800, %v3186, %v3182
    %v3188 = vlaneseq
    %v3189 = vshrl.u32 %v3188, 7
    %v3190 = vsub.s32 %v1802, %v3189
    %v3191 = vrot.slane %v3017, %v3190
    %v3192 = vsel %vm1807, %v3191, %v3187
    %v3193 = vlaneseq
    %v3194 = vshrl.u32 %v3193, 7
    %v3195 = vsub.s32 %v1809, %v3194
    %v3196 = vrot.slane %v3020, %v3195
    %v3197 = vsel %vm1814, %v3196, %v3192
    %v3198 = vlaneseq
    %v3199 = vshrl.u32 %v3198, 7
    %v3200 = vsub.s32 %v1089, %v3199
    %v3201 = vrot.slane %v3023, %v3200
    %v3202 = vlaneseq
    %v3203 = vshrl.u32 %v3202, 7
    %v3204 = vsub.s32 %v1767, %v3203
    %v3205 = vrot.slane %v3026, %v3204
    %v3206 = vsel %vm1772, %v3205, %v3201
    %v3207 = vlaneseq
    %v3208 = vshrl.u32 %v3207, 7
    %v3209 = vsub.s32 %v1774, %v3208
    %v3210 = vrot.slane %v3029, %v3209
    %v3211 = vsel %vm1779, %v3210, %v3206
    %v3212 = vlaneseq
    %v3213 = vshrl.u32 %v3212, 7
    %v3214 = vsub.s32 %v1781, %v3213
    %v3215 = vrot.slane %v3032, %v3214
    %v3216 = vsel %vm1786, %v3215, %v3211
    %v3217 = vlaneseq
    %v3218 = vshrl.u32 %v3217, 7
    %v3219 = vsub.s32 %v1788, %v3218
    %v3220 = vrot.slane %v3035, %v3219
    %v3221 = vsel %vm1793, %v3220, %v3216
    %v3222 = vlaneseq
    %v3223 = vshrl.u32 %v3222, 7
    %v3224 = vsub.s32 %v1795, %v3223
    %v3225 = vrot.slane %v3038, %v3224
    %v3226 = vsel %vm1800, %v3225, %v3221
    %v3227 = vlaneseq
    %v3228 = vshrl.u32 %v3227, 7
    %v3229 = vsub.s32 %v1802, %v3228
    %v3230 = vrot.slane %v3041, %v3229
    %v3231 = vsel %vm1807, %v3230, %v3226
    %v3232 = vlaneseq
    %v3233 = vshrl.u32 %v3232, 7
    %v3234 = vsub.s32 %v1809, %v3233
    %v3235 = vrot.slane %v3044, %v3234
    %v3236 = vsel %vm1814, %v3235, %v3231
    %v3237 = vsel %vm1855, %v3236, %v3197
    %s3239 = scalar_lea.vmem %s8, 6
    %3240 = vst.msk [vmem:[%s3239] sm:$0x3] %vm37, %v3237
    %v3241 = vsel %vm1956, %v3236, %v3197
    %v3243 = vsel %vm1959, %v3139, %v3241
    %v3244 = vpack.c.bf16 %v3243, %v3243
    %v3253 = vunpack.c.l.b16 %v1579
    %v3254 = vunpack.c.l.b16 %v1580
    %v3255 = vunpack.c.l.b16 %v1581
    %v3256 = vunpack.c.l.b16 %v1582
    %v3257 = vunpack.c.l.b16 %v1583
    %v3258 = vunpack.c.l.b16 %v1584
    %v3259 = vunpack.c.l.b16 %v1585
    %v3260 = vunpack.c.l.b16 %v1586
    %v3261 = vpack.c.b16 %v3254, %v3253
    %v3262 = vpack.c.b16 %v3256, %v3255
    %v3263 = vpack.c.b16 %v3258, %v3257
    %v3264 = vpack.c.b16 %v3260, %v3259
    %v3270 = vsel %vm2346, %v3244, 0
    %3272 = vmatprep.subr.bf16.mxu0 0
    %3273 = vmatpush1.bf16.msra.mxu0 0
    %3274 = vmatprep.subr.bf16.mxu0 0
    %3275 = vmatpush1.bf16.msra.mxu0 0
    %3276 = vmatprep.subr.bf16.mxu0 0
    %3277 = vmatpush1.bf16.msra.mxu0 0
    %3278 = vmatprep.subr.bf16.mxu0 0
    %3279 = vmatpush1.bf16.msra.mxu0 0
    %3280 = vmatprep.subr.bf16.mxu0 0
    %3281 = vmatpush1.bf16.msra.mxu0 %v3264
    %3282 = vmatprep.subr.bf16.mxu0 0
    %3283 = vmatpush1.bf16.msra.mxu0 %v3263
    %3284 = vmatprep.subr.bf16.mxu0 0
    %3285 = vmatpush1.bf16.msra.mxu0 %v3262
    %3286 = vmatprep.subr.bf16.mxu0 0
    %3287 = vmatpush1.bf16.msra.mxu0 %v3261
    %3288 = vmatprep.subr.bf16.mxu0 0
    %3289 = vmatpush2.bf16.msra.mxu0 0
    %3290 = vmatprep.subr.bf16.mxu0 0
    %3291 = vmatpush2.bf16.msra.mxu0 0
    %3292 = vmatprep.subr.bf16.mxu0 0
    %3293 = vmatpush2.bf16.msra.mxu0 0
    %3294 = vmatprep.subr.bf16.mxu0 0
    %3295 = vmatpush2.bf16.msra.mxu0 0
    %3296 = vmatprep.subr.bf16.mxu0 0
    %3297 = vmatpush2.bf16.msra.mxu0 0
    %3298 = vmatprep.subr.bf16.mxu0 0
    %3299 = vmatpush2.bf16.msra.mxu0 0
    %3300 = vmatprep.subr.bf16.mxu0 0
    %3301 = vmatpush2.bf16.msra.mxu0 0
    %3302 = vmatprep.subr.bf16.mxu0 0
    %3303 = vmatpush2.bf16.msra.mxu0 0
    %3304 = vmatprep.mubr.bf16.mxu0 0
    %3305 = vmatmul.mubr.bf16.gmra.mxu0 %v3270
    %v3306 = vpop.f32.mrf.mxu0
    %v3307 = vadd.f32 0.0, %v3306
    %v3308 = vpop.f32.mrf.mxu0
    %v3309 = vpop.f32.mrf.mxu0
    %v3310 = vpop.f32.mrf.mxu0
    %3311 = vdwg.mxu0
    %v3312 = vadd.f32 %v2884, %v3307
    %p3313 = scmp.eq.s32.totalorder 0, 0
    // Predicated region
    $region30: #{baseline_forward.3} parent=1 // pred_check
      %p3314 = pneg %p3313
    $region31: #{baseline_forward.3} parent=1 // pred_check_branch
      %3316 = sbr.rel (%p3314) target = $region33
    $region32: #{baseline_forward.3} parent=1 // pred_region
      %vm3317 = vcmask 123904
      %3318 = vst.msk [vmem:[#allocation2] sm:$0x3] %vm3317, 0.0
      %3319 = vst.msk [vmem:[#allocation4] sm:$0x3] %vm3317, 0.0
    $region33: #{baseline_forward.3} parent=1 // pred_fallthru
      _
    %v3320 = vld [vmem:[#allocation2] sm:$0x3]
    %v3321 = vadd.f32 %v3320, %v3312
    %vm3322 = vcmask 123904
    %3323 = vst.msk [vmem:[#allocation2] sm:$0x3] %vm3322, %v3321
    %v3324 = vld [vmem:[#allocation4] sm:$0x3]
    %v3326 = vrot.slane %v3312, 2
    %v3328 = vadd.f32 %v3324, %v3326
    %3329 = vst.msk [vmem:[#allocation4] sm:$0x3] %vm3322, %v3328
    // Predicated region
    $region34: #{baseline_forward.3} parent=1 // pred_check
      _
    $region35: #{baseline_forward.3} parent=1 // pred_check_branch
      %3331 = sbr.rel (0) target = $region37
    $region36: #{baseline_forward.3} parent=1 // pred_region
      _
    $region37: #{baseline_forward.3} parent=1 // pred_fallthru
      _
    // Predicated region
    $region38: #{baseline_forward.3} parent=1 // pred_check
      _
    $region39: #{baseline_forward.3} parent=1 // pred_check_branch
      %3333 = sbr.rel (0) target = $region41
    $region40: #{baseline_forward.3} parent=1 // pred_region
      _
    $region41: #{baseline_forward.3} parent=1 // pred_fallthru
      _
    // Predicated region
    $region42: #{baseline_forward.3} parent=1 // pred_check
      _
    $region43: #{baseline_forward.3} parent=1 // pred_check_branch
      %3335 = sbr.rel (0) target = $region45
    $region44: #{baseline_forward.3} parent=1 // pred_region
      %s3337 = ssub.s32 32, 32
      %3338 = vsyncadd [#allocation3], %s3337
      %s3340 = sshll.u32 [#allocation2], 4
      %s3341 = int_to_ptr.vmem [resolvable:$true] %s3340
      %3343 = dma.vmem_to_hbm [thread:$0]  %s3341, 32, %s9, [#allocation3]
    $region45: #{baseline_forward.3} parent=1 // pred_fallthru
      _
    // Predicated region
    $region46: #{baseline_forward.3} parent=1 // pred_check
      _
    $region47: #{baseline_forward.3} parent=1 // pred_check_branch
      %3345 = sbr.rel (0) target = $region49
    $region48: #{baseline_forward.3} parent=1 // pred_region
      %s3347 = ssub.s32 32, 32
      %3348 = vsyncadd [#allocation5], %s3347
      %s3350 = sshll.u32 [#allocation4], 4
      %s3351 = int_to_ptr.vmem [resolvable:$true] %s3350
      %3353 = dma.vmem_to_hbm [thread:$0]  %s3351, 32, %s10, [#allocation5]
    $region49: #{baseline_forward.3} parent=1 // pred_fallthru
      _
    // Predicated region
    $region50: #{baseline_forward.3} parent=1 // pred_check
      _
    $region51: #{baseline_forward.3} parent=1 // pred_check_branch
      %3355 = sbr.rel (0) target = $region53
    $region52: #{baseline_forward.3} parent=1 // pred_region
      _
    $region53: #{baseline_forward.3} parent=1 // pred_fallthru
      _
    // Predicated region
    $region54: #{baseline_forward.3} parent=1 // pred_check
      _
    $region55: #{baseline_forward.3} parent=1 // pred_check_branch
      %3357 = sbr.rel (0) target = $region57
    $region56: #{baseline_forward.3} parent=1 // pred_region
      _
    $region57: #{baseline_forward.3} parent=1 // pred_fallthru
      _
    // Predicated region
    $region58: #{baseline_forward.3} parent=1 // pred_check
      _
    $region59: #{baseline_forward.3} parent=1 // pred_check_branch
      %3359 = sbr.rel (0) target = $region61
    $region60: #{baseline_forward.3} parent=1 // pred_region
      %3360 = dma.done [#allocation3], 32
    $region61: #{baseline_forward.3} parent=1 // pred_fallthru
      _
    // Predicated region
    $region62: #{baseline_forward.3} parent=1 // pred_check
      _
    $region63: #{baseline_forward.3} parent=1 // pred_check_branch
      %3362 = sbr.rel (0) target = $region65
    $region64: #{baseline_forward.3} parent=1 // pred_region
      %3363 = dma.done [#allocation5], 32
    $region65: #{baseline_forward.3} parent=1 // pred_fallthru
      _
    %3364 = vsyncpa [#allocation3], 1
    %3365 = vsyncpa [#allocation5], 1

</llo_original>
